<compile_context>
chip_gen: v7x
topology: tpu7x:2x2x1
jax: 0.10.0
libtpu: 0.0.40
codegen_flags: <defaults>
</compile_context>

<pallas_src>
import functools
import numpy as np
import jax
import jax.numpy as jnp
from jax.experimental import pallas as pl
from jax.experimental.pallas import tpu as pltpu

EPS = 1e-5
CPAD = 128                       # every conv output padded to 128 lanes
MATMUL_DTYPE = jnp.bfloat16      # MXU operand dtype; accumulate + epilogue in f32


def _round_up(x, m):
    return (x + m - 1) // m * m


def _vmem():
    return pl.BlockSpec(memory_space=pltpu.MemorySpace.VMEM)


# ---------------------------------------------------------------------------
# Bicubic interpolation operators (PyTorch semantics: align_corners=False,
# a=-0.75, border clamp).  Built host-side with numpy at trace time.
# ---------------------------------------------------------------------------
def _cubic_coeffs(t, a=-0.75):
    def k1(x):  # |x| <= 1
        return ((a + 2.0) * x - (a + 3.0)) * x * x + 1.0

    def k2(x):  # 1 < |x| < 2
        return ((a * x - 5.0 * a) * x + 8.0 * a) * x - 4.0 * a

    return np.array([k2(t + 1.0), k1(t), k1(1.0 - t), k2(2.0 - t)], dtype=np.float64)


def _bicubic_matrix(in_size, scale):
    out_size = in_size * scale
    m = np.zeros((out_size, in_size), dtype=np.float64)
    for o in range(out_size):
        src = (o + 0.5) / scale - 0.5
        i0 = int(np.floor(src))
        t = src - i0
        cs = _cubic_coeffs(t)
        for k in range(4):
            idx = min(max(i0 - 1 + k, 0), in_size - 1)
            m[o, idx] += cs[k]
    return m.astype(np.float32)


def _kron_matrix(h, w, scale):
    """2-D bicubic upsample operator (ho*wo, h*w), row-major pixel order."""
    return jnp.asarray(np.kron(_bicubic_matrix(h, scale), _bicubic_matrix(w, scale)))


# ---------------------------------------------------------------------------
# Standalone bicubic upsample kernel (single matmul per image, optional skip).
# Used for his x12 and for u1 = up2x(pool(e3)) + e3.
# ---------------------------------------------------------------------------
def _upsample_kernel(kron_ref, x_ref, *rest, n, add_skip):
    if add_skip:
        skip_ref, o_ref = rest
    else:
        (o_ref,) = rest
    kron = kron_ref[...]                                  # (Mo, Mi) f32
    for b in range(n):                                    # n = batch (tiny, static)
        y = jnp.dot(kron, x_ref[b], preferred_element_type=jnp.float32)
        if add_skip:
            y = y + skip_ref[b]
        o_ref[b] = y                                      # lane-dense (Mo, 128) store


def bicubic_upsample(x_flat, h, w, scale, skip=None):
    """x_flat: (n, h*w, C) f32  ->  (n, (h*scale)*(w*scale), C) f32 (+ skip)."""
    n, _, c = x_flat.shape
    inputs = [_kron_matrix(h, w, scale), x_flat]
    in_specs = [_vmem(), _vmem()]
    if skip is not None:
        inputs.append(skip)
        in_specs.append(_vmem())
    return pl.pallas_call(
        functools.partial(_upsample_kernel, n=n, add_skip=skip is not None),
        out_shape=jax.ShapeDtypeStruct((n, h * scale * w * scale, c), jnp.float32),
        in_specs=in_specs,
        out_specs=_vmem(),
    )(*inputs)


# ---------------------------------------------------------------------------
# 3x3 conv (single deep-K im2col matmul, bf16 operands, f32 accumulate) fused
# with BatchNorm(batch stats)+ReLU or bias, optional residual add, and an
# optional fused bicubic upsample (+ skip add) of the activation.
# ---------------------------------------------------------------------------
def _conv_kernel(*refs, n, m, bn_relu, residual, fused_up):
    it = iter(refs)
    x_ref = next(it)                         # (n*m, Kpad) bf16 im2col slab
    w_ref = next(it)                         # (Kpad, 128) bf16
    if bn_relu:
        g_ref, bt_ref = next(it), next(it)   # (1, 128) f32
    else:
        b_ref = next(it)                     # (1, 128) f32
    res_ref = next(it) if residual else None
    if fused_up:
        kron_ref, skip_ref = next(it), next(it)
    o_ref = next(it)

    # Single deep-K MXU matmul; batch folded into rows; f32 accumulator.
    acc = jnp.dot(x_ref[...], w_ref[...], preferred_element_type=jnp.float32)

    if bn_relu:
        # Conv bias is exactly cancelled by the BN mean subtraction -> skipped.
        # BatchNorm uses training-mode batch statistics (biased variance),
        # computed from the f32 accumulator (no write-then-reread).
        mean = jnp.mean(acc, axis=0, keepdims=True)
        var = jnp.mean(jnp.square(acc - mean), axis=0, keepdims=True)
        acc = (acc - mean) * jax.lax.rsqrt(var + EPS)
        acc = jnp.maximum(acc * g_ref[...] + bt_ref[...], 0.0)
    else:
        acc = acc + b_ref[...]

    if residual:
        acc = acc + res_ref[...]

    if fused_up:
        # Fused bicubic upsample + skip of the just-computed activation: one
        # extra MXU matmul per image; the intermediate never hits HBM.
        kron = kron_ref[...]
        for b in range(n):
            blk = acc if n == 1 else jax.lax.slice_in_dim(acc, b * m, (b + 1) * m, axis=0)
            o_ref[b] = jnp.dot(kron, blk, preferred_element_type=jnp.float32) + skip_ref[b]
    else:
        o_ref[...] = acc                     # single lane-dense (M, 128) store


def _im2col(x_nhwc, k_pad):
    """(n,h,w,c) f32 -> (n*h*w, k_pad) bf16 patch slab for a 3x3/s1/p1 conv."""
    n, h, w, c = x_nhwc.shape
    xb = x_nhwc.astype(MATMUL_DTYPE)
    xp = jnp.pad(xb, ((0, 0), (1, 1), (1, 1), (0, 0)))
    taps = [xp[:, dy:dy + h, dx:dx + w, :] for dy in range(3) for dx in range(3)]
    slab = jnp.concatenate(taps, axis=-1).reshape(n * h * w, 9 * c)
    if k_pad > 9 * c:
        slab = jnp.pad(slab, ((0, 0), (0, k_pad - 9 * c)))   # zero pad -> K dense
    return slab


def conv_block(x_nhwc, layer, *, bn_relu=True, residual=None, up_scale=None, up_skip=None):
    """Returns (n*h*w, 128) activation, or (n, (h*s)*(w*s), 128) if up fused."""
    n, h, w, _ = x_nhwc.shape
    k_pad = layer["w"].shape[0]
    slab = _im2col(x_nhwc, k_pad)
    wmat = layer["w"].astype(MATMUL_DTYPE)

    inputs = [slab, wmat]
    if bn_relu:
        inputs += [layer["g"], layer["bt"]]
    else:
        inputs += [layer["b"]]
    if residual is not None:
        inputs.append(residual)
    fused = up_scale is not None
    if fused:
        inputs += [_kron_matrix(h, w, up_scale), up_skip]
        out_shape = jax.ShapeDtypeStruct((n, (h * up_scale) * (w * up_scale), CPAD),
                                         jnp.float32)
    else:
        out_shape = jax.ShapeDtypeStruct((n * h * w, CPAD), jnp.float32)

    return pl.pallas_call(
        functools.partial(_conv_kernel, n=n, m=h * w, bn_relu=bn_relu,
                          residual=residual is not None, fused_up=fused),
        out_shape=out_shape,
        in_specs=[_vmem()] * len(inputs),
        out_specs=_vmem(),
    )(*inputs)


def maxpool2x2(x_nhwc):
    """2x2/stride-2 max pool in the XLA wrapper (composes with next im2col)."""
    n, h, w, c = x_nhwc.shape
    return jnp.max(x_nhwc.reshape(n, h // 2, 2, w // 2, 2, c), axis=(2, 4))


# ---------------------------------------------------------------------------
# Parameters (deterministic, PyTorch-default-like init), pre-padded:
#   weight (round_up(9*cin,128), 128), bias/gamma/beta (1, 128).
# Pad rows/cols are zero (gamma pad = 1) so pad output channels are exactly 0.
# ---------------------------------------------------------------------------
def init_params(key):
    cfgs = [("enc1", 69, 32, True), ("enc2", 32, 64, True), ("enc3", 64, 128, True),
            ("dec1", 128, 64, True), ("dec2", 64, 32, True), ("dec3", 32, 68, False)]
    params = {}
    keys = jax.random.split(key, len(cfgs))
    for k, (name, cin, cout, has_bn) in zip(keys, cfgs):
        kw, kb = jax.random.split(k)
        kin = 9 * cin
        k_pad = _round_up(kin, 128)
        bound = 1.0 / float(np.sqrt(kin))
        w = jax.random.uniform(kw, (kin, cout), jnp.float32, -bound, bound)
        b = jax.random.uniform(kb, (cout,), jnp.float32, -bound, bound)
        layer = {
            "w": jnp.pad(w, ((0, k_pad - kin), (0, CPAD - cout))),
            "b": jnp.pad(b, (0, CPAD - cout)).reshape(1, CPAD),
        }
        if has_bn:
            layer["g"] = jnp.ones((1, CPAD), jnp.float32)    # BN weight init = 1
            layer["bt"] = jnp.zeros((1, CPAD), jnp.float32)  # BN bias   init = 0
        params[name] = layer
    return params


# ---------------------------------------------------------------------------
# Full forward pass (mirrors My_NN.forward); 8 pallas_calls total.
# ---------------------------------------------------------------------------
def my_nn_forward(his_nchw, pan_nchw, params):
    his = jnp.transpose(his_nchw, (0, 2, 3, 1))          # NCHW -> NHWC
    pan = jnp.transpose(pan_nchw, (0, 2, 3, 1))
    n, hh, hw, hc = his.shape                            # hc = 68
    H, W = hh * 12, hw * 12

    # his bicubic x12 as one Kronecker matmul (channels zero-padded to 128).
    his_p = jnp.pad(his, ((0, 0), (0, 0), (0, 0), (0, CPAD - hc)))
    his_up = bicubic_upsample(his_p.reshape(n, hh * hw, CPAD), hh, hw, 12)  # (n, H*W, 128)

    x = jnp.concatenate([pan, his_up[:, :, :hc].reshape(n, H, W, hc)], axis=-1)  # 69 ch

    # ---- Encoder: conv+BN+ReLU kernels; pools done in the XLA wrapper ------
    e1 = conv_block(x, params["enc1"])                                    # [32 real]
    p1 = maxpool2x2(e1.reshape(n, H, W, CPAD)[..., :32])
    e2 = conv_block(p1, params["enc2"])                                   # [64 real]
    p2 = maxpool2x2(e2.reshape(n, H // 2, W // 2, CPAD)[..., :64])
    e3 = conv_block(p2, params["enc3"])                                   # [128 real]
    p3 = maxpool2x2(e3.reshape(n, H // 4, W // 4, CPAD))

    # ---- Decoder ------------------------------------------------------------
    # u1 = up2x(p3) + e3 : one matmul + fused skip add.
    u1 = bicubic_upsample(p3.reshape(n, (H // 8) * (W // 8), CPAD), H // 8, W // 8, 2,
                          skip=e3.reshape(n, (H // 4) * (W // 4), CPAD))
    # d1 = conv(u1); u2 = up2x(d1) + e2 : upsample fused into the conv kernel.
    u2 = conv_block(u1.reshape(n, H // 4, W // 4, CPAD), params["dec1"],
                    up_scale=2, up_skip=e2.reshape(n, (H // 2) * (W // 2), CPAD))
    # d2 = conv(u2); u3 = up2x(d2) + e1.
    u3 = conv_block(u2[:, :, :64].reshape(n, H // 2, W // 2, 64), params["dec2"],
                    up_scale=2, up_skip=e1.reshape(n, H * W, CPAD))
    # Final conv (bias only) with the his_up residual fused.
    out = conv_block(u3[:, :, :32].reshape(n, H, W, 32), params["dec3"],
                     bn_relu=False, residual=his_up.reshape(n * H * W, CPAD))

    out = out[:, :hc].reshape(n, H, W, hc)
    return jnp.transpose(out, (0, 3, 1, 2))              # back to NCHW


if __name__ == "__main__":
    key = jax.random.PRNGKey(0)
    k_his, k_pan, k_par = jax.random.split(key, 3)
    # his: (N, 68, h, w); pan: (N, 1, 12h, 12w)
    his = jax.random.normal(k_his, (1, 68, 2, 2), jnp.float32)
    pan = jax.random.normal(k_pan, (1, 1, 24, 24), jnp.float32)
    params = init_params(k_par)

    fwd = jax.jit(my_nn_forward)
    out = jax.block_until_ready(fwd(his, pan, params))
    assert out.shape == (1, 68, 24, 24), out.shape
    assert bool(jnp.all(jnp.isfinite(out))), "non-finite output"
    print("KERNEL_OK")
</pallas_src>

<mosaic_0001>
module attributes {stable_mosaic.version = 11 : i64} {
  func.func @_upsample_kernel(%arg0: memref<576x4xf32, #tpu.memory_space<vmem>>, %arg1: memref<1x4x128xf32, #tpu.memory_space<vmem>>, %arg2: memref<1x576x128xf32, #tpu.memory_space<vmem>>) attributes {dimension_semantics = [], scalar_prefetch = 0 : i64, scratch_operands = 0 : i64, tpu.core_type = #tpu.core_type<tc>} {
    %c0 = arith.constant 0 : index
    %c0_0 = arith.constant 0 : index
    %0 = vector.load %arg0[%c0, %c0_0] : memref<576x4xf32, #tpu.memory_space<vmem>>, vector<576x4xf32>
    %c0_1 = arith.constant 0 : index
    %c0_2 = arith.constant 0 : index
    %c0_3 = arith.constant 0 : index
    %1 = vector.load %arg1[%c0_1, %c0_2, %c0_3] : memref<1x4x128xf32, #tpu.memory_space<vmem>>, vector<1x4x128xf32>
    %2 = vector.shape_cast %1 : vector<1x4x128xf32> to vector<4x128xf32>
    %cst = arith.constant dense<0.000000e+00> : vector<576x128xf32>
    %3 = tpu.matmul %0, %2, %cst {dimension_numbers = #tpu.dot_dimension_numbers<[1], [0], [0], [1], [0, 0, 1, 1], [], []>} : vector<576x4xf32>, vector<4x128xf32>, vector<576x128xf32> -> vector<576x128xf32>
    %c0_4 = arith.constant 0 : index
    %c0_5 = arith.constant 0 : index
    %c0_6 = arith.constant 0 : index
    %4 = vector.load %arg2[%c0_4, %c0_5, %c0_6] : memref<1x576x128xf32, #tpu.memory_space<vmem>>, vector<1x576x128xf32>
    %5 = vector.shape_cast %4 : vector<1x576x128xf32> to vector<576x128xf32>
    %6 = vector.shape_cast %3 : vector<576x128xf32> to vector<1x576x128xf32>
    tpu.vector_store %arg2[%c0_4, %c0_5, %c0_6], %6 {strides = array<i32>} : memref<1x576x128xf32, #tpu.memory_space<vmem>>, vector<1x576x128xf32>,
    return
  }
}

module attributes {stable_mosaic.version = 11 : i64} {
  func.func @_conv_kernel(%arg0: memref<576x640xbf16, #tpu.memory_space<vmem>>, %arg1: memref<640x128xbf16, #tpu.memory_space<vmem>>, %arg2: memref<1x128xf32, #tpu.memory_space<vmem>>, %arg3: memref<1x128xf32, #tpu.memory_space<vmem>>, %arg4: memref<576x128xf32, #tpu.memory_space<vmem>>) attributes {dimension_semantics = [], scalar_prefetch = 0 : i64, scratch_operands = 0 : i64, tpu.core_type = #tpu.core_type<tc>} {
    %c0 = arith.constant 0 : index
    %c0_0 = arith.constant 0 : index
    %0 = vector.load %arg0[%c0, %c0_0] : memref<576x640xbf16, #tpu.memory_space<vmem>>, vector<576x640xbf16>
    %c0_1 = arith.constant 0 : index
    %c0_2 = arith.constant 0 : index
    %1 = vector.load %arg1[%c0_1, %c0_2] : memref<640x128xbf16, #tpu.memory_space<vmem>>, vector<640x128xbf16>
    %cst = arith.constant dense<0.000000e+00> : vector<576x128xf32>
    %2 = tpu.matmul %0, %1, %cst {dimension_numbers = #tpu.dot_dimension_numbers<[1], [0], [0], [1], [0, 0, 1, 1], [], []>} : vector<576x640xbf16>, vector<640x128xbf16>, vector<576x128xf32> -> vector<576x128xf32>
    %cst_3 = arith.constant dense<0.000000e+00> : vector<128xf32>
    %3 = vector.multi_reduction <add>, %2, %cst_3 [0] : vector<576x128xf32> to vector<128xf32>
    %4 = vector.shape_cast %3 : vector<128xf32> to vector<1x128xf32>
    %cst_4 = arith.constant 5.760000e+02 : f32
    %5 = vector.broadcast %cst_4 : f32 to vector<1x128xf32>
    %6 = arith.divf %4, %5 : vector<1x128xf32>
    %7 = vector.broadcast %6 : vector<1x128xf32> to vector<576x128xf32>
    %8 = arith.subf %2, %7 : vector<576x128xf32>
    %9 = arith.mulf %8, %8 : vector<576x128xf32>
    %cst_5 = arith.constant dense<0.000000e+00> : vector<128xf32>
    %10 = vector.multi_reduction <add>, %9, %cst_5 [0] : vector<576x128xf32> to vector<128xf32>
    %11 = vector.shape_cast %10 : vector<128xf32> to vector<1x128xf32>
    %cst_6 = arith.constant 5.760000e+02 : f32
    %12 = vector.broadcast %cst_6 : f32 to vector<1x128xf32>
    %13 = arith.divf %11, %12 : vector<1x128xf32>
    %14 = vector.broadcast %6 : vector<1x128xf32> to vector<576x128xf32>
    %15 = arith.subf %2, %14 : vector<576x128xf32>
    %cst_7 = arith.constant 9.99999974E-6 : f32
    %16 = vector.broadcast %cst_7 : f32 to vector<1x128xf32>
    %17 = arith.addf %13, %16 : vector<1x128xf32>
    %18 = math.rsqrt %17 : vector<1x128xf32>
    %19 = vector.broadcast %18 : vector<1x128xf32> to vector<576x128xf32>
    %20 = arith.mulf %15, %19 : vector<576x128xf32>
    %c0_8 = arith.constant 0 : index
    %c0_9 = arith.constant 0 : index
    %21 = vector.load %arg2[%c0_8, %c0_9] : memref<1x128xf32, #tpu.memory_space<vmem>>, vector<1x128xf32>
    %22 = vector.broadcast %21 : vector<1x128xf32> to vector<576x128xf32>
    %23 = arith.mulf %20, %22 : vector<576x128xf32>
    %c0_10 = arith.constant 0 : index
    %c0_11 = arith.constant 0 : index
    %24 = vector.load %arg3[%c0_10, %c0_11] : memref<1x128xf32, #tpu.memory_space<vmem>>, vector<1x128xf32>
    %25 = vector.broadcast %24 : vector<1x128xf32> to vector<576x128xf32>
    %26 = arith.addf %23, %25 : vector<576x128xf32>
    %cst_12 = arith.constant 0.000000e+00 : f32
    %27 = vector.broadcast %cst_12 : f32 to vector<576x128xf32>
    %28 = arith.maximumf %26, %27 : vector<576x128xf32>
    %c0_13 = arith.constant 0 : index
    %c0_14 = arith.constant 0 : index
    %29 = vector.load %arg4[%c0_13, %c0_14] : memref<576x128xf32, #tpu.memory_space<vmem>>, vector<576x128xf32>
    tpu.vector_store %arg4[%c0_13, %c0_14], %28 {strides = array<i32>} : memref<576x128xf32, #tpu.memory_space<vmem>>, vector<576x128xf32>,
    return
  }
}

module attributes {stable_mosaic.version = 11 : i64} {
  func.func @_conv_kernel(%arg0: memref<144x384xbf16, #tpu.memory_space<vmem>>, %arg1: memref<384x128xbf16, #tpu.memory_space<vmem>>, %arg2: memref<1x128xf32, #tpu.memory_space<vmem>>, %arg3: memref<1x128xf32, #tpu.memory_space<vmem>>, %arg4: memref<144x128xf32, #tpu.memory_space<vmem>>) attributes {dimension_semantics = [], scalar_prefetch = 0 : i64, scratch_operands = 0 : i64, tpu.core_type = #tpu.core_type<tc>} {
    %c0 = arith.constant 0 : index
    %c0_0 = arith.constant 0 : index
    %0 = vector.load %arg0[%c0, %c0_0] : memref<144x384xbf16, #tpu.memory_space<vmem>>, vector<144x384xbf16>
    %c0_1 = arith.constant 0 : index
    %c0_2 = arith.constant 0 : index
    %1 = vector.load %arg1[%c0_1, %c0_2] : memref<384x128xbf16, #tpu.memory_space<vmem>>, vector<384x128xbf16>
    %cst = arith.constant dense<0.000000e+00> : vector<144x128xf32>
    %2 = tpu.matmul %0, %1, %cst {dimension_numbers = #tpu.dot_dimension_numbers<[1], [0], [0], [1], [0, 0, 1, 1], [], []>} : vector<144x384xbf16>, vector<384x128xbf16>, vector<144x128xf32> -> vector<144x128xf32>
    %cst_3 = arith.constant dense<0.000000e+00> : vector<128xf32>
    %3 = vector.multi_reduction <add>, %2, %cst_3 [0] : vector<144x128xf32> to vector<128xf32>
    %4 = vector.shape_cast %3 : vector<128xf32> to vector<1x128xf32>
    %cst_4 = arith.constant 1.440000e+02 : f32
    %5 = vector.broadcast %cst_4 : f32 to vector<1x128xf32>
    %6 = arith.divf %4, %5 : vector<1x128xf32>
    %7 = vector.broadcast %6 : vector<1x128xf32> to vector<144x128xf32>
    %8 = arith.subf %2, %7 : vector<144x128xf32>
    %9 = arith.mulf %8, %8 : vector<144x128xf32>
    %cst_5 = arith.constant dense<0.000000e+00> : vector<128xf32>
    %10 = vector.multi_reduction <add>, %9, %cst_5 [0] : vector<144x128xf32> to vector<128xf32>
    %11 = vector.shape_cast %10 : vector<128xf32> to vector<1x128xf32>
    %cst_6 = arith.constant 1.440000e+02 : f32
    %12 = vector.broadcast %cst_6 : f32 to vector<1x128xf32>
    %13 = arith.divf %11, %12 : vector<1x128xf32>
    %14 = vector.broadcast %6 : vector<1x128xf32> to vector<144x128xf32>
    %15 = arith.subf %2, %14 : vector<144x128xf32>
    %cst_7 = arith.constant 9.99999974E-6 : f32
    %16 = vector.broadcast %cst_7 : f32 to vector<1x128xf32>
    %17 = arith.addf %13, %16 : vector<1x128xf32>
    %18 = math.rsqrt %17 : vector<1x128xf32>
    %19 = vector.broadcast %18 : vector<1x128xf32> to vector<144x128xf32>
    %20 = arith.mulf %15, %19 : vector<144x128xf32>
    %c0_8 = arith.constant 0 : index
    %c0_9 = arith.constant 0 : index
    %21 = vector.load %arg2[%c0_8, %c0_9] : memref<1x128xf32, #tpu.memory_space<vmem>>, vector<1x128xf32>
    %22 = vector.broadcast %21 : vector<1x128xf32> to vector<144x128xf32>
    %23 = arith.mulf %20, %22 : vector<144x128xf32>
    %c0_10 = arith.constant 0 : index
    %c0_11 = arith.constant 0 : index
    %24 = vector.load %arg3[%c0_10, %c0_11] : memref<1x128xf32, #tpu.memory_space<vmem>>, vector<1x128xf32>
    %25 = vector.broadcast %24 : vector<1x128xf32> to vector<144x128xf32>
    %26 = arith.addf %23, %25 : vector<144x128xf32>
    %cst_12 = arith.constant 0.000000e+00 : f32
    %27 = vector.broadcast %cst_12 : f32 to vector<144x128xf32>
    %28 = arith.maximumf %26, %27 : vector<144x128xf32>
    %c0_13 = arith.constant 0 : index
    %c0_14 = arith.constant 0 : index
    %29 = vector.load %arg4[%c0_13, %c0_14] : memref<144x128xf32, #tpu.memory_space<vmem>>, vector<144x128xf32>
    tpu.vector_store %arg4[%c0_13, %c0_14], %28 {strides = array<i32>} : memref<144x128xf32, #tpu.memory_space<vmem>>, vector<144x128xf32>,
    return
  }
}

module attributes {stable_mosaic.version = 11 : i64} {
  func.func @_conv_kernel(%arg0: memref<36x640xbf16, #tpu.memory_space<vmem>>, %arg1: memref<640x128xbf16, #tpu.memory_space<vmem>>, %arg2: memref<1x128xf32, #tpu.memory_space<vmem>>, %arg3: memref<1x128xf32, #tpu.memory_space<vmem>>, %arg4: memref<36x128xf32, #tpu.memory_space<vmem>>) attributes {dimension_semantics = [], scalar_prefetch = 0 : i64, scratch_operands = 0 : i64, tpu.core_type = #tpu.core_type<tc>} {
    %c0 = arith.constant 0 : index
    %c0_0 = arith.constant 0 : index
    %0 = vector.load %arg0[%c0, %c0_0] : memref<36x640xbf16, #tpu.memory_space<vmem>>, vector<36x640xbf16>
    %c0_1 = arith.constant 0 : index
    %c0_2 = arith.constant 0 : index
    %1 = vector.load %arg1[%c0_1, %c0_2] : memref<640x128xbf16, #tpu.memory_space<vmem>>, vector<640x128xbf16>
    %cst = arith.constant dense<0.000000e+00> : vector<36x128xf32>
    %2 = tpu.matmul %0, %1, %cst {dimension_numbers = #tpu.dot_dimension_numbers<[1], [0], [0], [1], [0, 0, 1, 1], [], []>} : vector<36x640xbf16>, vector<640x128xbf16>, vector<36x128xf32> -> vector<36x128xf32>
    %cst_3 = arith.constant dense<0.000000e+00> : vector<128xf32>
    %3 = vector.multi_reduction <add>, %2, %cst_3 [0] : vector<36x128xf32> to vector<128xf32>
    %4 = vector.shape_cast %3 : vector<128xf32> to vector<1x128xf32>
    %cst_4 = arith.constant 3.600000e+01 : f32
    %5 = vector.broadcast %cst_4 : f32 to vector<1x128xf32>
    %6 = arith.divf %4, %5 : vector<1x128xf32>
    %7 = vector.broadcast %6 : vector<1x128xf32> to vector<36x128xf32>
    %8 = arith.subf %2, %7 : vector<36x128xf32>
    %9 = arith.mulf %8, %8 : vector<36x128xf32>
    %cst_5 = arith.constant dense<0.000000e+00> : vector<128xf32>
    %10 = vector.multi_reduction <add>, %9, %cst_5 [0] : vector<36x128xf32> to vector<128xf32>
    %11 = vector.shape_cast %10 : vector<128xf32> to vector<1x128xf32>
    %cst_6 = arith.constant 3.600000e+01 : f32
    %12 = vector.broadcast %cst_6 : f32 to vector<1x128xf32>
    %13 = arith.divf %11, %12 : vector<1x128xf32>
    %14 = vector.broadcast %6 : vector<1x128xf32> to vector<36x128xf32>
    %15 = arith.subf %2, %14 : vector<36x128xf32>
    %cst_7 = arith.constant 9.99999974E-6 : f32
    %16 = vector.broadcast %cst_7 : f32 to vector<1x128xf32>
    %17 = arith.addf %13, %16 : vector<1x128xf32>
    %18 = math.rsqrt %17 : vector<1x128xf32>
    %19 = vector.broadcast %18 : vector<1x128xf32> to vector<36x128xf32>
    %20 = arith.mulf %15, %19 : vector<36x128xf32>
    %c0_8 = arith.constant 0 : index
    %c0_9 = arith.constant 0 : index
    %21 = vector.load %arg2[%c0_8, %c0_9] : memref<1x128xf32, #tpu.memory_space<vmem>>, vector<1x128xf32>
    %22 = vector.broadcast %21 : vector<1x128xf32> to vector<36x128xf32>
    %23 = arith.mulf %20, %22 : vector<36x128xf32>
    %c0_10 = arith.constant 0 : index
    %c0_11 = arith.constant 0 : index
    %24 = vector.load %arg3[%c0_10, %c0_11] : memref<1x128xf32, #tpu.memory_space<vmem>>, vector<1x128xf32>
    %25 = vector.broadcast %24 : vector<1x128xf32> to vector<36x128xf32>
    %26 = arith.addf %23, %25 : vector<36x128xf32>
    %cst_12 = arith.constant 0.000000e+00 : f32
    %27 = vector.broadcast %cst_12 : f32 to vector<36x128xf32>
    %28 = arith.maximumf %26, %27 : vector<36x128xf32>
    %c0_13 = arith.constant 0 : index
    %c0_14 = arith.constant 0 : index
    %29 = vector.load %arg4[%c0_13, %c0_14] : memref<36x128xf32, #tpu.memory_space<vmem>>, vector<36x128xf32>
    tpu.vector_store %arg4[%c0_13, %c0_14], %28 {strides = array<i32>} : memref<36x128xf32, #tpu.memory_space<vmem>>, vector<36x128xf32>,
    return
  }
}

module attributes {stable_mosaic.version = 11 : i64} {
  func.func @_upsample_kernel(%arg0: memref<36x9xf32, #tpu.memory_space<vmem>>, %arg1: memref<1x9x128xf32, #tpu.memory_space<vmem>>, %arg2: memref<1x36x128xf32, #tpu.memory_space<vmem>>, %arg3: memref<1x36x128xf32, #tpu.memory_space<vmem>>) attributes {dimension_semantics = [], scalar_prefetch = 0 : i64, scratch_operands = 0 : i64, tpu.core_type = #tpu.core_type<tc>} {
    %c0 = arith.constant 0 : index
    %c0_0 = arith.constant 0 : index
    %0 = vector.load %arg0[%c0, %c0_0] : memref<36x9xf32, #tpu.memory_space<vmem>>, vector<36x9xf32>
    %c0_1 = arith.constant 0 : index
    %c0_2 = arith.constant 0 : index
    %c0_3 = arith.constant 0 : index
    %1 = vector.load %arg1[%c0_1, %c0_2, %c0_3] : memref<1x9x128xf32, #tpu.memory_space<vmem>>, vector<1x9x128xf32>
    %2 = vector.shape_cast %1 : vector<1x9x128xf32> to vector<9x128xf32>
    %cst = arith.constant dense<0.000000e+00> : vector<36x128xf32>
    %3 = tpu.matmul %0, %2, %cst {dimension_numbers = #tpu.dot_dimension_numbers<[1], [0], [0], [1], [0, 0, 1, 1], [], []>} : vector<36x9xf32>, vector<9x128xf32>, vector<36x128xf32> -> vector<36x128xf32>
    %c0_4 = arith.constant 0 : index
    %c0_5 = arith.constant 0 : index
    %c0_6 = arith.constant 0 : index
    %4 = vector.load %arg2[%c0_4, %c0_5, %c0_6] : memref<1x36x128xf32, #tpu.memory_space<vmem>>, vector<1x36x128xf32>
    %5 = vector.shape_cast %4 : vector<1x36x128xf32> to vector<36x128xf32>
    %6 = arith.addf %3, %5 : vector<36x128xf32>
    %c0_7 = arith.constant 0 : index
    %c0_8 = arith.constant 0 : index
    %c0_9 = arith.constant 0 : index
    %7 = vector.load %arg3[%c0_7, %c0_8, %c0_9] : memref<1x36x128xf32, #tpu.memory_space<vmem>>, vector<1x36x128xf32>
    %8 = vector.shape_cast %7 : vector<1x36x128xf32> to vector<36x128xf32>
    %9 = vector.shape_cast %6 : vector<36x128xf32> to vector<1x36x128xf32>
    tpu.vector_store %arg3[%c0_7, %c0_8, %c0_9], %9 {strides = array<i32>} : memref<1x36x128xf32, #tpu.memory_space<vmem>>, vector<1x36x128xf32>,
    return
  }
}

module attributes {stable_mosaic.version = 11 : i64} {
  func.func @_conv_kernel(%arg0: memref<36x1152xbf16, #tpu.memory_space<vmem>>, %arg1: memref<1152x128xbf16, #tpu.memory_space<vmem>>, %arg2: memref<1x128xf32, #tpu.memory_space<vmem>>, %arg3: memref<1x128xf32, #tpu.memory_space<vmem>>, %arg4: memref<144x36xf32, #tpu.memory_space<vmem>>, %arg5: memref<1x144x128xf32, #tpu.memory_space<vmem>>, %arg6: memref<1x144x128xf32, #tpu.memory_space<vmem>>) attributes {dimension_semantics = [], scalar_prefetch = 0 : i64, scratch_operands = 0 : i64, tpu.core_type = #tpu.core_type<tc>} {
    %c0 = arith.constant 0 : index
    %c0_0 = arith.constant 0 : index
    %0 = vector.load %arg0[%c0, %c0_0] : memref<36x1152xbf16, #tpu.memory_space<vmem>>, vector<36x1152xbf16>
    %c0_1 = arith.constant 0 : index
    %c0_2 = arith.constant 0 : index
    %1 = vector.load %arg1[%c0_1, %c0_2] : memref<1152x128xbf16, #tpu.memory_space<vmem>>, vector<1152x128xbf16>
    %cst = arith.constant dense<0.000000e+00> : vector<36x128xf32>
    %2 = tpu.matmul %0, %1, %cst {dimension_numbers = #tpu.dot_dimension_numbers<[1], [0], [0], [1], [0, 0, 1, 1], [], []>} : vector<36x1152xbf16>, vector<1152x128xbf16>, vector<36x128xf32> -> vector<36x128xf32>
    %cst_3 = arith.constant dense<0.000000e+00> : vector<128xf32>
    %3 = vector.multi_reduction <add>, %2, %cst_3 [0] : vector<36x128xf32> to vector<128xf32>
    %4 = vector.shape_cast %3 : vector<128xf32> to vector<1x128xf32>
    %cst_4 = arith.constant 3.600000e+01 : f32
    %5 = vector.broadcast %cst_4 : f32 to vector<1x128xf32>
    %6 = arith.divf %4, %5 : vector<1x128xf32>
    %7 = vector.broadcast %6 : vector<1x128xf32> to vector<36x128xf32>
    %8 = arith.subf %2, %7 : vector<36x128xf32>
    %9 = arith.mulf %8, %8 : vector<36x128xf32>
    %cst_5 = arith.constant dense<0.000000e+00> : vector<128xf32>
    %10 = vector.multi_reduction <add>, %9, %cst_5 [0] : vector<36x128xf32> to vector<128xf32>
    %11 = vector.shape_cast %10 : vector<128xf32> to vector<1x128xf32>
    %cst_6 = arith.constant 3.600000e+01 : f32
    %12 = vector.broadcast %cst_6 : f32 to vector<1x128xf32>
    %13 = arith.divf %11, %12 : vector<1x128xf32>
    %14 = vector.broadcast %6 : vector<1x128xf32> to vector<36x128xf32>
    %15 = arith.subf %2, %14 : vector<36x128xf32>
    %cst_7 = arith.constant 9.99999974E-6 : f32
    %16 = vector.broadcast %cst_7 : f32 to vector<1x128xf32>
    %17 = arith.addf %13, %16 : vector<1x128xf32>
    %18 = math.rsqrt %17 : vector<1x128xf32>
    %19 = vector.broadcast %18 : vector<1x128xf32> to vector<36x128xf32>
    %20 = arith.mulf %15, %19 : vector<36x128xf32>
    %c0_8 = arith.constant 0 : index
    %c0_9 = arith.constant 0 : index
    %21 = vector.load %arg2[%c0_8, %c0_9] : memref<1x128xf32, #tpu.memory_space<vmem>>, vector<1x128xf32>
    %22 = vector.broadcast %21 : vector<1x128xf32> to vector<36x128xf32>
    %23 = arith.mulf %20, %22 : vector<36x128xf32>
    %c0_10 = arith.constant 0 : index
    %c0_11 = arith.constant 0 : index
    %24 = vector.load %arg3[%c0_10, %c0_11] : memref<1x128xf32, #tpu.memory_space<vmem>>, vector<1x128xf32>
    %25 = vector.broadcast %24 : vector<1x128xf32> to vector<36x128xf32>
    %26 = arith.addf %23, %25 : vector<36x128xf32>
    %cst_12 = arith.constant 0.000000e+00 : f32
    %27 = vector.broadcast %cst_12 : f32 to vector<36x128xf32>
    %28 = arith.maximumf %26, %27 : vector<36x128xf32>
    %c0_13 = arith.constant 0 : index
    %c0_14 = arith.constant 0 : index
    %29 = vector.load %arg4[%c0_13, %c0_14] : memref<144x36xf32, #tpu.memory_space<vmem>>, vector<144x36xf32>
    %cst_15 = arith.constant dense<0.000000e+00> : vector<144x128xf32>
    %30 = tpu.matmul %29, %28, %cst_15 {dimension_numbers = #tpu.dot_dimension_numbers<[1], [0], [0], [1], [0, 0, 1, 1], [], []>} : vector<144x36xf32>, vector<36x128xf32>, vector<144x128xf32> -> vector<144x128xf32>
    %c0_16 = arith.constant 0 : index
    %c0_17 = arith.constant 0 : index
    %c0_18 = arith.constant 0 : index
    %31 = vector.load %arg5[%c0_16, %c0_17, %c0_18] : memref<1x144x128xf32, #tpu.memory_space<vmem>>, vector<1x144x128xf32>
    %32 = vector.shape_cast %31 : vector<1x144x128xf32> to vector<144x128xf32>
    %33 = arith.addf %30, %32 : vector<144x128xf32>
    %c0_19 = arith.constant 0 : index
    %c0_20 = arith.constant 0 : index
    %c0_21 = arith.constant 0 : index
    %34 = vector.load %arg6[%c0_19, %c0_20, %c0_21] : memref<1x144x128xf32, #tpu.memory_space<vmem>>, vector<1x144x128xf32>
    %35 = vector.shape_cast %34 : vector<1x144x128xf32> to vector<144x128xf32>
    %36 = vector.shape_cast %33 : vector<144x128xf32> to vector<1x144x128xf32>
    tpu.vector_store %arg6[%c0_19, %c0_20, %c0_21], %36 {strides = array<i32>} : memref<1x144x128xf32, #tpu.memory_space<vmem>>, vector<1x144x128xf32>,
    return
  }
}

module attributes {stable_mosaic.version = 11 : i64} {
  func.func @_conv_kernel(%arg0: memref<144x640xbf16, #tpu.memory_space<vmem>>, %arg1: memref<640x128xbf16, #tpu.memory_space<vmem>>, %arg2: memref<1x128xf32, #tpu.memory_space<vmem>>, %arg3: memref<1x128xf32, #tpu.memory_space<vmem>>, %arg4: memref<576x144xf32, #tpu.memory_space<vmem>>, %arg5: memref<1x576x128xf32, #tpu.memory_space<vmem>>, %arg6: memref<1x576x128xf32, #tpu.memory_space<vmem>>) attributes {dimension_semantics = [], scalar_prefetch = 0 : i64, scratch_operands = 0 : i64, tpu.core_type = #tpu.core_type<tc>} {
    %c0 = arith.constant 0 : index
    %c0_0 = arith.constant 0 : index
    %0 = vector.load %arg0[%c0, %c0_0] : memref<144x640xbf16, #tpu.memory_space<vmem>>, vector<144x640xbf16>
    %c0_1 = arith.constant 0 : index
    %c0_2 = arith.constant 0 : index
    %1 = vector.load %arg1[%c0_1, %c0_2] : memref<640x128xbf16, #tpu.memory_space<vmem>>, vector<640x128xbf16>
    %cst = arith.constant dense<0.000000e+00> : vector<144x128xf32>
    %2 = tpu.matmul %0, %1, %cst {dimension_numbers = #tpu.dot_dimension_numbers<[1], [0], [0], [1], [0, 0, 1, 1], [], []>} : vector<144x640xbf16>, vector<640x128xbf16>, vector<144x128xf32> -> vector<144x128xf32>
    %cst_3 = arith.constant dense<0.000000e+00> : vector<128xf32>
    %3 = vector.multi_reduction <add>, %2, %cst_3 [0] : vector<144x128xf32> to vector<128xf32>
    %4 = vector.shape_cast %3 : vector<128xf32> to vector<1x128xf32>
    %cst_4 = arith.constant 1.440000e+02 : f32
    %5 = vector.broadcast %cst_4 : f32 to vector<1x128xf32>
    %6 = arith.divf %4, %5 : vector<1x128xf32>
    %7 = vector.broadcast %6 : vector<1x128xf32> to vector<144x128xf32>
    %8 = arith.subf %2, %7 : vector<144x128xf32>
    %9 = arith.mulf %8, %8 : vector<144x128xf32>
    %cst_5 = arith.constant dense<0.000000e+00> : vector<128xf32>
    %10 = vector.multi_reduction <add>, %9, %cst_5 [0] : vector<144x128xf32> to vector<128xf32>
    %11 = vector.shape_cast %10 : vector<128xf32> to vector<1x128xf32>
    %cst_6 = arith.constant 1.440000e+02 : f32
    %12 = vector.broadcast %cst_6 : f32 to vector<1x128xf32>
    %13 = arith.divf %11, %12 : vector<1x128xf32>
    %14 = vector.broadcast %6 : vector<1x128xf32> to vector<144x128xf32>
    %15 = arith.subf %2, %14 : vector<144x128xf32>
    %cst_7 = arith.constant 9.99999974E-6 : f32
    %16 = vector.broadcast %cst_7 : f32 to vector<1x128xf32>
    %17 = arith.addf %13, %16 : vector<1x128xf32>
    %18 = math.rsqrt %17 : vector<1x128xf32>
    %19 = vector.broadcast %18 : vector<1x128xf32> to vector<144x128xf32>
    %20 = arith.mulf %15, %19 : vector<144x128xf32>
    %c0_8 = arith.constant 0 : index
    %c0_9 = arith.constant 0 : index
    %21 = vector.load %arg2[%c0_8, %c0_9] : memref<1x128xf32, #tpu.memory_space<vmem>>, vector<1x128xf32>
    %22 = vector.broadcast %21 : vector<1x128xf32> to vector<144x128xf32>
    %23 = arith.mulf %20, %22 : vector<144x128xf32>
    %c0_10 = arith.constant 0 : index
    %c0_11 = arith.constant 0 : index
    %24 = vector.load %arg3[%c0_10, %c0_11] : memref<1x128xf32, #tpu.memory_space<vmem>>, vector<1x128xf32>
    %25 = vector.broadcast %24 : vector<1x128xf32> to vector<144x128xf32>
    %26 = arith.addf %23, %25 : vector<144x128xf32>
    %cst_12 = arith.constant 0.000000e+00 : f32
    %27 = vector.broadcast %cst_12 : f32 to vector<144x128xf32>
    %28 = arith.maximumf %26, %27 : vector<144x128xf32>
    %c0_13 = arith.constant 0 : index
    %c0_14 = arith.constant 0 : index
    %29 = vector.load %arg4[%c0_13, %c0_14] : memref<576x144xf32, #tpu.memory_space<vmem>>, vector<576x144xf32>
    %cst_15 = arith.constant dense<0.000000e+00> : vector<576x128xf32>
    %30 = tpu.matmul %29, %28, %cst_15 {dimension_numbers = #tpu.dot_dimension_numbers<[1], [0], [0], [1], [0, 0, 1, 1], [], []>} : vector<576x144xf32>, vector<144x128xf32>, vector<576x128xf32> -> vector<576x128xf32>
    %c0_16 = arith.constant 0 : index
    %c0_17 = arith.constant 0 : index
    %c0_18 = arith.constant 0 : index
    %31 = vector.load %arg5[%c0_16, %c0_17, %c0_18] : memref<1x576x128xf32, #tpu.memory_space<vmem>>, vector<1x576x128xf32>
    %32 = vector.shape_cast %31 : vector<1x576x128xf32> to vector<576x128xf32>
    %33 = arith.addf %30, %32 : vector<576x128xf32>
    %c0_19 = arith.constant 0 : index
    %c0_20 = arith.constant 0 : index
    %c0_21 = arith.constant 0 : index
    %34 = vector.load %arg6[%c0_19, %c0_20, %c0_21] : memref<1x576x128xf32, #tpu.memory_space<vmem>>, vector<1x576x128xf32>
    %35 = vector.shape_cast %34 : vector<1x576x128xf32> to vector<576x128xf32>
    %36 = vector.shape_cast %33 : vector<576x128xf32> to vector<1x576x128xf32>
    tpu.vector_store %arg6[%c0_19, %c0_20, %c0_21], %36 {strides = array<i32>} : memref<1x576x128xf32, #tpu.memory_space<vmem>>, vector<1x576x128xf32>,
    return
  }
}

module attributes {stable_mosaic.version = 11 : i64} {
  func.func @_conv_kernel(%arg0: memref<576x384xbf16, #tpu.memory_space<vmem>>, %arg1: memref<384x128xbf16, #tpu.memory_space<vmem>>, %arg2: memref<1x128xf32, #tpu.memory_space<vmem>>, %arg3: memref<576x128xf32, #tpu.memory_space<vmem>>, %arg4: memref<576x128xf32, #tpu.memory_space<vmem>>) attributes {dimension_semantics = [], scalar_prefetch = 0 : i64, scratch_operands = 0 : i64, tpu.core_type = #tpu.core_type<tc>} {
    %c0 = arith.constant 0 : index
    %c0_0 = arith.constant 0 : index
    %0 = vector.load %arg0[%c0, %c0_0] : memref<576x384xbf16, #tpu.memory_space<vmem>>, vector<576x384xbf16>
    %c0_1 = arith.constant 0 : index
    %c0_2 = arith.constant 0 : index
    %1 = vector.load %arg1[%c0_1, %c0_2] : memref<384x128xbf16, #tpu.memory_space<vmem>>, vector<384x128xbf16>
    %cst = arith.constant dense<0.000000e+00> : vector<576x128xf32>
    %2 = tpu.matmul %0, %1, %cst {dimension_numbers = #tpu.dot_dimension_numbers<[1], [0], [0], [1], [0, 0, 1, 1], [], []>} : vector<576x384xbf16>, vector<384x128xbf16>, vector<576x128xf32> -> vector<576x128xf32>
    %c0_3 = arith.constant 0 : index
    %c0_4 = arith.constant 0 : index
    %3 = vector.load %arg2[%c0_3, %c0_4] : memref<1x128xf32, #tpu.memory_space<vmem>>, vector<1x128xf32>
    %4 = vector.broadcast %3 : vector<1x128xf32> to vector<576x128xf32>
    %5 = arith.addf %2, %4 : vector<576x128xf32>
    %c0_5 = arith.constant 0 : index
    %c0_6 = arith.constant 0 : index
    %6 = vector.load %arg3[%c0_5, %c0_6] : memref<576x128xf32, #tpu.memory_space<vmem>>, vector<576x128xf32>
    %7 = arith.addf %5, %6 : vector<576x128xf32>
    %c0_7 = arith.constant 0 : index
    %c0_8 = arith.constant 0 : index
    %8 = vector.load %arg4[%c0_7, %c0_8] : memref<576x128xf32, #tpu.memory_space<vmem>>, vector<576x128xf32>
    tpu.vector_store %arg4[%c0_7, %c0_8], %7 {strides = array<i32>} : memref<576x128xf32, #tpu.memory_space<vmem>>, vector<576x128xf32>,
    return
  }
}

</mosaic_0001>

<llo_original>
// kernel: my_nn_forward.8
$region0: #{my_nn_forward.8}
  #allocation0 [shape = 'u32[]', space=smem, size = 0x4, offset = 0x4, fixed_abs, tag = 'smem constant byte address 0x4 - core index']
  #allocation1 [shape = 'u32[144,128]{1,0:T(1,128)}', space=vmem, size = 0x12000, scoped, tag = 'internal scratch']
  %s0 = inlined_call_operand.hbm [shape: f32[576,4], index: 0, kind: input, shape index: {}]
  %s1 = inlined_call_operand.vmem [shape: f32[1,4,128], index: 1, kind: input, shape index: {}]
  %s2 = inlined_call_operand.vmem [shape: f32[1,576,128], index: 2, kind: output, shape index: {}]
  %s3 = sld [smem:[#allocation0]]
  $region22: #{my_nn_forward.8} parent=0
    _
  %s5 = ssub.s32 1, %s3
  %s6 = scalar_select 0, %s5, %s3
  $region1: #{my_nn_forward.8} parent=0
    #allocation2 [shape = 'u8[294912]{0}', space=vmem, size = 0x48000, scoped, tag = 'input window, operand 0, single buffered']
    #allocation3 [shape = 's32[1]{0}', space=sflag, size = 0x4, scoped, tag = 'scoped memory for my_nn_forward.8']
    %7 = vsyncpa [#allocation3], 0
    // Predicated region
    $region2: #{my_nn_forward.8} parent=1 // pred_check
      _
    $region3: #{my_nn_forward.8} parent=1 // pred_check_branch
      %9 = sbr.rel (0) target = $region5
    $region4: #{my_nn_forward.8} parent=1 // pred_region
      %s11 = ssub.s32 9216, 9216
      %12 = vsyncadd [#allocation3], %s11
      %s13 = sshll.u32 [#allocation2], 4
      %s14 = int_to_ptr.vmem [resolvable:$true] %s13
      %19 = dma.hbm_to_vmem [thread:$0]  %s0, 9216, %s14, [#allocation3], 128, 128, 8
    $region5: #{my_nn_forward.8} parent=1 // pred_fallthru
      _
    // Predicated region
    $region6: #{my_nn_forward.8} parent=1 // pred_check
      _
    $region7: #{my_nn_forward.8} parent=1 // pred_check_branch
      %21 = sbr.rel (0) target = $region9
    $region8: #{my_nn_forward.8} parent=1 // pred_region
      _
    $region9: #{my_nn_forward.8} parent=1 // pred_fallthru
      _
    // Predicated region
    $region10: #{my_nn_forward.8} parent=1 // pred_check
      _
    $region11: #{my_nn_forward.8} parent=1 // pred_check_branch
      %23 = sbr.rel (0) target = $region13
    $region12: #{my_nn_forward.8} parent=1 // pred_region
      %24 = dma.done [#allocation3], 9216
    $region13: #{my_nn_forward.8} parent=1 // pred_fallthru
      _
    %v25 = vld [vmem:[#allocation2] sm:$0xff]
    %v26 = vld [vmem:[#allocation2 + $0x8] sm:$0xff]
    %v27 = vld [vmem:[#allocation2 + $0x10] sm:$0xff]
    %v28 = vld [vmem:[#allocation2 + $0x18] sm:$0xff]
    %v29 = vld [vmem:[#allocation2 + $0x20] sm:$0xff]
    %v30 = vld [vmem:[#allocation2 + $0x28] sm:$0xff]
    %v31 = vld [vmem:[#allocation2 + $0x30] sm:$0xff]
    %v32 = vld [vmem:[#allocation2 + $0x38] sm:$0xff]
    %v33 = vld [vmem:[#allocation2 + $0x40] sm:$0xff]
    %v34 = vld [vmem:[#allocation2 + $0x48] sm:$0xff]
    %v35 = vld [vmem:[#allocation2 + $0x50] sm:$0xff]
    %v36 = vld [vmem:[#allocation2 + $0x58] sm:$0xff]
    %v37 = vld [vmem:[#allocation2 + $0x60] sm:$0xff]
    %v38 = vld [vmem:[#allocation2 + $0x68] sm:$0xff]
    %v39 = vld [vmem:[#allocation2 + $0x70] sm:$0xff]
    %v40 = vld [vmem:[#allocation2 + $0x78] sm:$0xff]
    %v41 = vld [vmem:[#allocation2 + $0x80] sm:$0xff]
    %v42 = vld [vmem:[#allocation2 + $0x88] sm:$0xff]
    %v43 = vld [vmem:[#allocation2 + $0x90] sm:$0xff]
    %v44 = vld [vmem:[#allocation2 + $0x98] sm:$0xff]
    %v45 = vld [vmem:[#allocation2 + $0xa0] sm:$0xff]
    %v46 = vld [vmem:[#allocation2 + $0xa8] sm:$0xff]
    %v47 = vld [vmem:[#allocation2 + $0xb0] sm:$0xff]
    %v48 = vld [vmem:[#allocation2 + $0xb8] sm:$0xff]
    %v49 = vld [vmem:[#allocation2 + $0xc0] sm:$0xff]
    %v50 = vld [vmem:[#allocation2 + $0xc8] sm:$0xff]
    %v51 = vld [vmem:[#allocation2 + $0xd0] sm:$0xff]
    %v52 = vld [vmem:[#allocation2 + $0xd8] sm:$0xff]
    %v53 = vld [vmem:[#allocation2 + $0xe0] sm:$0xff]
    %v54 = vld [vmem:[#allocation2 + $0xe8] sm:$0xff]
    %v55 = vld [vmem:[#allocation2 + $0xf0] sm:$0xff]
    %v56 = vld [vmem:[#allocation2 + $0xf8] sm:$0xff]
    %v57 = vld [vmem:[#allocation2 + $0x100] sm:$0xff]
    %v58 = vld [vmem:[#allocation2 + $0x108] sm:$0xff]
    %v59 = vld [vmem:[#allocation2 + $0x110] sm:$0xff]
    %v60 = vld [vmem:[#allocation2 + $0x118] sm:$0xff]
    %v61 = vld [vmem:[#allocation2 + $0x120] sm:$0xff]
    %v62 = vld [vmem:[#allocation2 + $0x128] sm:$0xff]
    %v63 = vld [vmem:[#allocation2 + $0x130] sm:$0xff]
    %v64 = vld [vmem:[#allocation2 + $0x138] sm:$0xff]
    %v65 = vld [vmem:[#allocation2 + $0x140] sm:$0xff]
    %v66 = vld [vmem:[#allocation2 + $0x148] sm:$0xff]
    %v67 = vld [vmem:[#allocation2 + $0x150] sm:$0xff]
    %v68 = vld [vmem:[#allocation2 + $0x158] sm:$0xff]
    %v69 = vld [vmem:[#allocation2 + $0x160] sm:$0xff]
    %v70 = vld [vmem:[#allocation2 + $0x168] sm:$0xff]
    %v71 = vld [vmem:[#allocation2 + $0x170] sm:$0xff]
    %v72 = vld [vmem:[#allocation2 + $0x178] sm:$0xff]
    %v73 = vld [vmem:[#allocation2 + $0x180] sm:$0xff]
    %v74 = vld [vmem:[#allocation2 + $0x188] sm:$0xff]
    %v75 = vld [vmem:[#allocation2 + $0x190] sm:$0xff]
    %v76 = vld [vmem:[#allocation2 + $0x198] sm:$0xff]
    %v77 = vld [vmem:[#allocation2 + $0x1a0] sm:$0xff]
    %v78 = vld [vmem:[#allocation2 + $0x1a8] sm:$0xff]
    %v79 = vld [vmem:[#allocation2 + $0x1b0] sm:$0xff]
    %v80 = vld [vmem:[#allocation2 + $0x1b8] sm:$0xff]
    %v81 = vld [vmem:[#allocation2 + $0x1c0] sm:$0xff]
    %v82 = vld [vmem:[#allocation2 + $0x1c8] sm:$0xff]
    %v83 = vld [vmem:[#allocation2 + $0x1d0] sm:$0xff]
    %v84 = vld [vmem:[#allocation2 + $0x1d8] sm:$0xff]
    %v85 = vld [vmem:[#allocation2 + $0x1e0] sm:$0xff]
    %v86 = vld [vmem:[#allocation2 + $0x1e8] sm:$0xff]
    %v87 = vld [vmem:[#allocation2 + $0x1f0] sm:$0xff]
    %v88 = vld [vmem:[#allocation2 + $0x1f8] sm:$0xff]
    %v89 = vld [vmem:[#allocation2 + $0x200] sm:$0xff]
    %v90 = vld [vmem:[#allocation2 + $0x208] sm:$0xff]
    %v91 = vld [vmem:[#allocation2 + $0x210] sm:$0xff]
    %v92 = vld [vmem:[#allocation2 + $0x218] sm:$0xff]
    %v93 = vld [vmem:[#allocation2 + $0x220] sm:$0xff]
    %v94 = vld [vmem:[#allocation2 + $0x228] sm:$0xff]
    %v95 = vld [vmem:[#allocation2 + $0x230] sm:$0xff]
    %v96 = vld [vmem:[#allocation2 + $0x238] sm:$0xff]
    %v97 = vld [vmem:[%s1] sm:$0xf]
    %vm98 = vcmask 31744
    %v100 = vsel %vm98, %v25, 0
    %v103 = vsel %vm98, %v26, 0
    %v106 = vsel %vm98, %v27, 0
    %v109 = vsel %vm98, %v28, 0
    %v112 = vsel %vm98, %v29, 0
    %v115 = vsel %vm98, %v30, 0
    %v118 = vsel %vm98, %v31, 0
    %v121 = vsel %vm98, %v32, 0
    %v124 = vsel %vm98, %v33, 0
    %v127 = vsel %vm98, %v34, 0
    %v130 = vsel %vm98, %v35, 0
    %v133 = vsel %vm98, %v36, 0
    %v136 = vsel %vm98, %v37, 0
    %v139 = vsel %vm98, %v38, 0
    %v142 = vsel %vm98, %v39, 0
    %v145 = vsel %vm98, %v40, 0
    %v148 = vsel %vm98, %v41, 0
    %v151 = vsel %vm98, %v42, 0
    %v154 = vsel %vm98, %v43, 0
    %v157 = vsel %vm98, %v44, 0
    %v160 = vsel %vm98, %v45, 0
    %v163 = vsel %vm98, %v46, 0
    %v166 = vsel %vm98, %v47, 0
    %v169 = vsel %vm98, %v48, 0
    %v172 = vsel %vm98, %v49, 0
    %v175 = vsel %vm98, %v50, 0
    %v178 = vsel %vm98, %v51, 0
    %v181 = vsel %vm98, %v52, 0
    %v184 = vsel %vm98, %v53, 0
    %v187 = vsel %vm98, %v54, 0
    %v190 = vsel %vm98, %v55, 0
    %v193 = vsel %vm98, %v56, 0
    %v196 = vsel %vm98, %v57, 0
    %v199 = vsel %vm98, %v58, 0
    %v202 = vsel %vm98, %v59, 0
    %v205 = vsel %vm98, %v60, 0
    %v208 = vsel %vm98, %v61, 0
    %v211 = vsel %vm98, %v62, 0
    %v214 = vsel %vm98, %v63, 0
    %v217 = vsel %vm98, %v64, 0
    %v220 = vsel %vm98, %v65, 0
    %v223 = vsel %vm98, %v66, 0
    %v226 = vsel %vm98, %v67, 0
    %v229 = vsel %vm98, %v68, 0
    %v232 = vsel %vm98, %v69, 0
    %v235 = vsel %vm98, %v70, 0
    %v238 = vsel %vm98, %v71, 0
    %v241 = vsel %vm98, %v72, 0
    %v244 = vsel %vm98, %v73, 0
    %v247 = vsel %vm98, %v74, 0
    %v250 = vsel %vm98, %v75, 0
    %v253 = vsel %vm98, %v76, 0
    %v256 = vsel %vm98, %v77, 0
    %v259 = vsel %vm98, %v78, 0
    %v262 = vsel %vm98, %v79, 0
    %v265 = vsel %vm98, %v80, 0
    %v268 = vsel %vm98, %v81, 0
    %v271 = vsel %vm98, %v82, 0
    %v274 = vsel %vm98, %v83, 0
    %v277 = vsel %vm98, %v84, 0
    %v280 = vsel %vm98, %v85, 0
    %v283 = vsel %vm98, %v86, 0
    %v286 = vsel %vm98, %v87, 0
    %v289 = vsel %vm98, %v88, 0
    %v292 = vsel %vm98, %v89, 0
    %v295 = vsel %vm98, %v90, 0
    %v298 = vsel %vm98, %v91, 0
    %v301 = vsel %vm98, %v92, 0
    %v304 = vsel %vm98, %v93, 0
    %v307 = vsel %vm98, %v94, 0
    %v310 = vsel %vm98, %v95, 0
    %v313 = vsel %vm98, %v96, 0
    %vm315 = vcmask 1043456
    %v317 = vsel %vm315, %v97, 0
    %319 = vmatprep.subr.mxu0 0.0
    %320 = vmatpush1.msra.mxu0 %v317
    %321 = vmatprep.subr.mxu0 0.0
    %322 = vmatpush1.msra.mxu0 0.0
    %323 = vmatprep.subr.mxu0 0.0
    %324 = vmatpush1.msra.mxu0 0.0
    %325 = vmatprep.subr.mxu0 0.0
    %326 = vmatpush1.msra.mxu0 0.0
    %327 = vmatprep.subr.mxu0 0.0
    %328 = vmatpush1.msra.mxu0 0.0
    %329 = vmatprep.subr.mxu0 0.0
    %330 = vmatpush1.msra.mxu0 0.0
    %331 = vmatprep.subr.mxu0 0.0
    %332 = vmatpush1.msra.mxu0 0.0
    %333 = vmatprep.subr.mxu0 0.0
    %334 = vmatpush1.msra.mxu0 0.0
    %335 = vmatprep.subr.mxu0 0.0
    %336 = vmatpush1.msra.mxu0 0.0
    %337 = vmatprep.subr.mxu0 0.0
    %338 = vmatpush1.msra.mxu0 0.0
    %339 = vmatprep.subr.mxu0 0.0
    %340 = vmatpush1.msra.mxu0 0.0
    %341 = vmatprep.subr.mxu0 0.0
    %342 = vmatpush1.msra.mxu0 0.0
    %343 = vmatprep.subr.mxu0 0.0
    %344 = vmatpush1.msra.mxu0 0.0
    %345 = vmatprep.subr.mxu0 0.0
    %346 = vmatpush1.msra.mxu0 0.0
    %347 = vmatprep.subr.mxu0 0.0
    %348 = vmatpush1.msra.mxu0 0.0
    %349 = vmatprep.subr.mxu0 0.0
    %350 = vmatpush1.msra.mxu0 0.0
    %351 = vmatprep.subr.mxu0 0.0
    %352 = vmatpush1.msra.mxu0 0.0
    %353 = vmatprep.subr.mxu0 0.0
    %354 = vmatpush1.msra.mxu0 0.0
    %355 = vmatprep.subr.mxu0 0.0
    %356 = vmatpush1.msra.mxu0 0.0
    %357 = vmatprep.subr.mxu0 0.0
    %358 = vmatpush1.msra.mxu0 0.0
    %359 = vmatprep.subr.mxu0 0.0
    %360 = vmatpush1.msra.mxu0 0.0
    %361 = vmatprep.subr.mxu0 0.0
    %362 = vmatpush1.msra.mxu0 0.0
    %363 = vmatprep.subr.mxu0 0.0
    %364 = vmatpush1.msra.mxu0 0.0
    %365 = vmatprep.subr.mxu0 0.0
    %366 = vmatpush1.msra.mxu0 0.0
    %367 = vmatprep.subr.mxu0 0.0
    %368 = vmatpush1.msra.mxu0 0.0
    %369 = vmatprep.subr.mxu0 0.0
    %370 = vmatpush1.msra.mxu0 0.0
    %371 = vmatprep.subr.mxu0 0.0
    %372 = vmatpush1.msra.mxu0 0.0
    %373 = vmatprep.subr.mxu0 0.0
    %374 = vmatpush1.msra.mxu0 0.0
    %375 = vmatprep.subr.mxu0 0.0
    %376 = vmatpush1.msra.mxu0 0.0
    %377 = vmatprep.subr.mxu0 0.0
    %378 = vmatpush1.msra.mxu0 0.0
    %379 = vmatprep.subr.mxu0 0.0
    %380 = vmatpush1.msra.mxu0 0.0
    %381 = vmatprep.subr.mxu0 0.0
    %382 = vmatpush1.msra.mxu0 0.0
    %383 = vmatprep.mubr.f32.mxu0 0.0
    %384 = vmatmul.mubr.f32.gmra.mrb[0].mxu0 %v100
    %v385 = vpop.f32.mrb[0].mxu0
    %v386 = vadd.f32 0.0, %v385
    %v387 = vpop.f32.mrb[0].mxu0
    %388 = vmatprep.mubr.f32.mxu0 0.0
    %389 = vmatmul.mubr.f32.gmra.mrb[0].mxu0 %v103
    %v390 = vpop.f32.mrb[0].mxu0
    %v391 = vadd.f32 0.0, %v390
    %v392 = vpop.f32.mrb[0].mxu0
    %393 = vmatprep.mubr.f32.mxu0 0.0
    %394 = vmatmul.mubr.f32.gmra.mrb[0].mxu0 %v106
    %v395 = vpop.f32.mrb[0].mxu0
    %v396 = vadd.f32 0.0, %v395
    %v397 = vpop.f32.mrb[0].mxu0
    %398 = vmatprep.mubr.f32.mxu0 0.0
    %399 = vmatmul.mubr.f32.gmra.mrb[0].mxu0 %v109
    %v400 = vpop.f32.mrb[0].mxu0
    %v401 = vadd.f32 0.0, %v400
    %v402 = vpop.f32.mrb[0].mxu0
    %403 = vmatprep.mubr.f32.mxu0 0.0
    %404 = vmatmul.mubr.f32.gmra.mrb[0].mxu0 %v112
    %v405 = vpop.f32.mrb[0].mxu0
    %v406 = vadd.f32 0.0, %v405
    %v407 = vpop.f32.mrb[0].mxu0
    %408 = vmatprep.mubr.f32.mxu0 0.0
    %409 = vmatmul.mubr.f32.gmra.mrb[0].mxu0 %v115
    %v410 = vpop.f32.mrb[0].mxu0
    %v411 = vadd.f32 0.0, %v410
    %v412 = vpop.f32.mrb[0].mxu0
    %413 = vmatprep.mubr.f32.mxu0 0.0
    %414 = vmatmul.mubr.f32.gmra.mrb[0].mxu0 %v118
    %v415 = vpop.f32.mrb[0].mxu0
    %v416 = vadd.f32 0.0, %v415
    %v417 = vpop.f32.mrb[0].mxu0
    %418 = vmatprep.mubr.f32.mxu0 0.0
    %419 = vmatmul.mubr.f32.gmra.mrb[0].mxu0 %v121
    %v420 = vpop.f32.mrb[0].mxu0
    %v421 = vadd.f32 0.0, %v420
    %v422 = vpop.f32.mrb[0].mxu0
    %423 = vmatprep.mubr.f32.mxu0 0.0
    %424 = vmatmul.mubr.f32.gmra.mrb[0].mxu0 %v124
    %v425 = vpop.f32.mrb[0].mxu0
    %v426 = vadd.f32 0.0, %v425
    %v427 = vpop.f32.mrb[0].mxu0
    %428 = vmatprep.mubr.f32.mxu0 0.0
    %429 = vmatmul.mubr.f32.gmra.mrb[0].mxu0 %v127
    %v430 = vpop.f32.mrb[0].mxu0
    %v431 = vadd.f32 0.0, %v430
    %v432 = vpop.f32.mrb[0].mxu0
    %433 = vmatprep.mubr.f32.mxu0 0.0
    %434 = vmatmul.mubr.f32.gmra.mrb[0].mxu0 %v130
    %v435 = vpop.f32.mrb[0].mxu0
    %v436 = vadd.f32 0.0, %v435
    %v437 = vpop.f32.mrb[0].mxu0
    %438 = vmatprep.mubr.f32.mxu0 0.0
    %439 = vmatmul.mubr.f32.gmra.mrb[0].mxu0 %v133
    %v440 = vpop.f32.mrb[0].mxu0
    %v441 = vadd.f32 0.0, %v440
    %v442 = vpop.f32.mrb[0].mxu0
    %443 = vmatprep.mubr.f32.mxu0 0.0
    %444 = vmatmul.mubr.f32.gmra.mrb[0].mxu0 %v136
    %v445 = vpop.f32.mrb[0].mxu0
    %v446 = vadd.f32 0.0, %v445
    %v447 = vpop.f32.mrb[0].mxu0
    %448 = vmatprep.mubr.f32.mxu0 0.0
    %449 = vmatmul.mubr.f32.gmra.mrb[0].mxu0 %v139
    %v450 = vpop.f32.mrb[0].mxu0
    %v451 = vadd.f32 0.0, %v450
    %v452 = vpop.f32.mrb[0].mxu0
    %453 = vmatprep.mubr.f32.mxu0 0.0
    %454 = vmatmul.mubr.f32.gmra.mrb[0].mxu0 %v142
    %v455 = vpop.f32.mrb[0].mxu0
    %v456 = vadd.f32 0.0, %v455
    %v457 = vpop.f32.mrb[0].mxu0
    %458 = vmatprep.mubr.f32.mxu0 0.0
    %459 = vmatmul.mubr.f32.gmra.mrb[0].mxu0 %v145
    %v460 = vpop.f32.mrb[0].mxu0
    %v461 = vadd.f32 0.0, %v460
    %v462 = vpop.f32.mrb[0].mxu0
    %463 = vmatprep.mubr.f32.mxu0 0.0
    %464 = vmatmul.mubr.f32.gmra.mrb[0].mxu0 %v148
    %v465 = vpop.f32.mrb[0].mxu0
    %v466 = vadd.f32 0.0, %v465
    %v467 = vpop.f32.mrb[0].mxu0
    %468 = vmatprep.mubr.f32.mxu0 0.0
    %469 = vmatmul.mubr.f32.gmra.mrb[0].mxu0 %v151
    %v470 = vpop.f32.mrb[0].mxu0
    %v471 = vadd.f32 0.0, %v470
    %v472 = vpop.f32.mrb[0].mxu0
    %473 = vmatprep.mubr.f32.mxu0 0.0
    %474 = vmatmul.mubr.f32.gmra.mrb[0].mxu0 %v154
    %v475 = vpop.f32.mrb[0].mxu0
    %v476 = vadd.f32 0.0, %v475
    %v477 = vpop.f32.mrb[0].mxu0
    %478 = vmatprep.mubr.f32.mxu0 0.0
    %479 = vmatmul.mubr.f32.gmra.mrb[0].mxu0 %v157
    %v480 = vpop.f32.mrb[0].mxu0
    %v481 = vadd.f32 0.0, %v480
    %v482 = vpop.f32.mrb[0].mxu0
    %483 = vmatprep.mubr.f32.mxu0 0.0
    %484 = vmatmul.mubr.f32.gmra.mrb[0].mxu0 %v160
    %v485 = vpop.f32.mrb[0].mxu0
    %v486 = vadd.f32 0.0, %v485
    %v487 = vpop.f32.mrb[0].mxu0
    %488 = vmatprep.mubr.f32.mxu0 0.0
    %489 = vmatmul.mubr.f32.gmra.mrb[0].mxu0 %v163
    %v490 = vpop.f32.mrb[0].mxu0
    %v491 = vadd.f32 0.0, %v490
    %v492 = vpop.f32.mrb[0].mxu0
    %493 = vmatprep.mubr.f32.mxu0 0.0
    %494 = vmatmul.mubr.f32.gmra.mrb[0].mxu0 %v166
    %v495 = vpop.f32.mrb[0].mxu0
    %v496 = vadd.f32 0.0, %v495
    %v497 = vpop.f32.mrb[0].mxu0
    %498 = vmatprep.mubr.f32.mxu0 0.0
    %499 = vmatmul.mubr.f32.gmra.mrb[0].mxu0 %v169
    %v500 = vpop.f32.mrb[0].mxu0
    %v501 = vadd.f32 0.0, %v500
    %v502 = vpop.f32.mrb[0].mxu0
    %503 = vmatprep.mubr.f32.mxu0 0.0
    %504 = vmatmul.mubr.f32.gmra.mrb[0].mxu0 %v172
    %v505 = vpop.f32.mrb[0].mxu0
    %v506 = vadd.f32 0.0, %v505
    %v507 = vpop.f32.mrb[0].mxu0
    %508 = vmatprep.mubr.f32.mxu0 0.0
    %509 = vmatmul.mubr.f32.gmra.mrb[0].mxu0 %v175
    %v510 = vpop.f32.mrb[0].mxu0
    %v511 = vadd.f32 0.0, %v510
    %v512 = vpop.f32.mrb[0].mxu0
    %513 = vmatprep.mubr.f32.mxu0 0.0
    %514 = vmatmul.mubr.f32.gmra.mrb[0].mxu0 %v178
    %v515 = vpop.f32.mrb[0].mxu0
    %v516 = vadd.f32 0.0, %v515
    %v517 = vpop.f32.mrb[0].mxu0
    %518 = vmatprep.mubr.f32.mxu0 0.0
    %519 = vmatmul.mubr.f32.gmra.mrb[0].mxu0 %v181
    %v520 = vpop.f32.mrb[0].mxu0
    %v521 = vadd.f32 0.0, %v520
    %v522 = vpop.f32.mrb[0].mxu0
    %523 = vmatprep.mubr.f32.mxu0 0.0
    %524 = vmatmul.mubr.f32.gmra.mrb[0].mxu0 %v184
    %v525 = vpop.f32.mrb[0].mxu0
    %v526 = vadd.f32 0.0, %v525
    %v527 = vpop.f32.mrb[0].mxu0
    %528 = vmatprep.mubr.f32.mxu0 0.0
    %529 = vmatmul.mubr.f32.gmra.mrb[0].mxu0 %v187
    %v530 = vpop.f32.mrb[0].mxu0
    %v531 = vadd.f32 0.0, %v530
    %v532 = vpop.f32.mrb[0].mxu0
    %533 = vmatprep.mubr.f32.mxu0 0.0
    %534 = vmatmul.mubr.f32.gmra.mrb[0].mxu0 %v190
    %v535 = vpop.f32.mrb[0].mxu0
    %v536 = vadd.f32 0.0, %v535
    %v537 = vpop.f32.mrb[0].mxu0
    %538 = vmatprep.mubr.f32.mxu0 0.0
    %539 = vmatmul.mubr.f32.gmra.mrb[0].mxu0 %v193
    %v540 = vpop.f32.mrb[0].mxu0
    %v541 = vadd.f32 0.0, %v540
    %v542 = vpop.f32.mrb[0].mxu0
    %543 = vmatprep.mubr.f32.mxu0 0.0
    %544 = vmatmul.mubr.f32.gmra.mrb[0].mxu0 %v196
    %v545 = vpop.f32.mrb[0].mxu0
    %v546 = vadd.f32 0.0, %v545
    %v547 = vpop.f32.mrb[0].mxu0
    %548 = vmatprep.mubr.f32.mxu0 0.0
    %549 = vmatmul.mubr.f32.gmra.mrb[0].mxu0 %v199
    %v550 = vpop.f32.mrb[0].mxu0
    %v551 = vadd.f32 0.0, %v550
    %v552 = vpop.f32.mrb[0].mxu0
    %553 = vmatprep.mubr.f32.mxu0 0.0
    %554 = vmatmul.mubr.f32.gmra.mrb[0].mxu0 %v202
    %v555 = vpop.f32.mrb[0].mxu0
    %v556 = vadd.f32 0.0, %v555
    %v557 = vpop.f32.mrb[0].mxu0
    %558 = vmatprep.mubr.f32.mxu0 0.0
    %559 = vmatmul.mubr.f32.gmra.mrb[0].mxu0 %v205
    %v560 = vpop.f32.mrb[0].mxu0
    %v561 = vadd.f32 0.0, %v560
    %v562 = vpop.f32.mrb[0].mxu0
    %563 = vmatprep.mubr.f32.mxu0 0.0
    %564 = vmatmul.mubr.f32.gmra.mrb[0].mxu0 %v208
    %v565 = vpop.f32.mrb[0].mxu0
    %v566 = vadd.f32 0.0, %v565
    %v567 = vpop.f32.mrb[0].mxu0
    %568 = vmatprep.mubr.f32.mxu0 0.0
    %569 = vmatmul.mubr.f32.gmra.mrb[0].mxu0 %v211
    %v570 = vpop.f32.mrb[0].mxu0
    %v571 = vadd.f32 0.0, %v570
    %v572 = vpop.f32.mrb[0].mxu0
    %573 = vmatprep.mubr.f32.mxu0 0.0
    %574 = vmatmul.mubr.f32.gmra.mrb[0].mxu0 %v214
    %v575 = vpop.f32.mrb[0].mxu0
    %v576 = vadd.f32 0.0, %v575
    %v577 = vpop.f32.mrb[0].mxu0
    %578 = vmatprep.mubr.f32.mxu0 0.0
    %579 = vmatmul.mubr.f32.gmra.mrb[0].mxu0 %v217
    %v580 = vpop.f32.mrb[0].mxu0
    %v581 = vadd.f32 0.0, %v580
    %v582 = vpop.f32.mrb[0].mxu0
    %583 = vmatprep.mubr.f32.mxu0 0.0
    %584 = vmatmul.mubr.f32.gmra.mrb[0].mxu0 %v220
    %v585 = vpop.f32.mrb[0].mxu0
    %v586 = vadd.f32 0.0, %v585
    %v587 = vpop.f32.mrb[0].mxu0
    %588 = vmatprep.mubr.f32.mxu0 0.0
    %589 = vmatmul.mubr.f32.gmra.mrb[0].mxu0 %v223
    %v590 = vpop.f32.mrb[0].mxu0
    %v591 = vadd.f32 0.0, %v590
    %v592 = vpop.f32.mrb[0].mxu0
    %593 = vmatprep.mubr.f32.mxu0 0.0
    %594 = vmatmul.mubr.f32.gmra.mrb[0].mxu0 %v226
    %v595 = vpop.f32.mrb[0].mxu0
    %v596 = vadd.f32 0.0, %v595
    %v597 = vpop.f32.mrb[0].mxu0
    %598 = vmatprep.mubr.f32.mxu0 0.0
    %599 = vmatmul.mubr.f32.gmra.mrb[0].mxu0 %v229
    %v600 = vpop.f32.mrb[0].mxu0
    %v601 = vadd.f32 0.0, %v600
    %v602 = vpop.f32.mrb[0].mxu0
    %603 = vmatprep.mubr.f32.mxu0 0.0
    %604 = vmatmul.mubr.f32.gmra.mrb[0].mxu0 %v232
    %v605 = vpop.f32.mrb[0].mxu0
    %v606 = vadd.f32 0.0, %v605
    %v607 = vpop.f32.mrb[0].mxu0
    %608 = vmatprep.mubr.f32.mxu0 0.0
    %609 = vmatmul.mubr.f32.gmra.mrb[0].mxu0 %v235
    %v610 = vpop.f32.mrb[0].mxu0
    %v611 = vadd.f32 0.0, %v610
    %v612 = vpop.f32.mrb[0].mxu0
    %613 = vmatprep.mubr.f32.mxu0 0.0
    %614 = vmatmul.mubr.f32.gmra.mrb[0].mxu0 %v238
    %v615 = vpop.f32.mrb[0].mxu0
    %v616 = vadd.f32 0.0, %v615
    %v617 = vpop.f32.mrb[0].mxu0
    %618 = vmatprep.mubr.f32.mxu0 0.0
    %619 = vmatmul.mubr.f32.gmra.mrb[0].mxu0 %v241
    %v620 = vpop.f32.mrb[0].mxu0
    %v621 = vadd.f32 0.0, %v620
    %v622 = vpop.f32.mrb[0].mxu0
    %623 = vmatprep.mubr.f32.mxu0 0.0
    %624 = vmatmul.mubr.f32.gmra.mrb[0].mxu0 %v244
    %v625 = vpop.f32.mrb[0].mxu0
    %v626 = vadd.f32 0.0, %v625
    %v627 = vpop.f32.mrb[0].mxu0
    %628 = vmatprep.mubr.f32.mxu0 0.0
    %629 = vmatmul.mubr.f32.gmra.mrb[0].mxu0 %v247
    %v630 = vpop.f32.mrb[0].mxu0
    %v631 = vadd.f32 0.0, %v630
    %v632 = vpop.f32.mrb[0].mxu0
    %633 = vmatprep.mubr.f32.mxu0 0.0
    %634 = vmatmul.mubr.f32.gmra.mrb[0].mxu0 %v250
    %v635 = vpop.f32.mrb[0].mxu0
    %v636 = vadd.f32 0.0, %v635
    %v637 = vpop.f32.mrb[0].mxu0
    %638 = vmatprep.mubr.f32.mxu0 0.0
    %639 = vmatmul.mubr.f32.gmra.mrb[0].mxu0 %v253
    %v640 = vpop.f32.mrb[0].mxu0
    %v641 = vadd.f32 0.0, %v640
    %v642 = vpop.f32.mrb[0].mxu0
    %643 = vmatprep.mubr.f32.mxu0 0.0
    %644 = vmatmul.mubr.f32.gmra.mrb[0].mxu0 %v256
    %v645 = vpop.f32.mrb[0].mxu0
    %v646 = vadd.f32 0.0, %v645
    %v647 = vpop.f32.mrb[0].mxu0
    %648 = vmatprep.mubr.f32.mxu0 0.0
    %649 = vmatmul.mubr.f32.gmra.mrb[0].mxu0 %v259
    %v650 = vpop.f32.mrb[0].mxu0
    %v651 = vadd.f32 0.0, %v650
    %v652 = vpop.f32.mrb[0].mxu0
    %653 = vmatprep.mubr.f32.mxu0 0.0
    %654 = vmatmul.mubr.f32.gmra.mrb[0].mxu0 %v262
    %v655 = vpop.f32.mrb[0].mxu0
    %v656 = vadd.f32 0.0, %v655
    %v657 = vpop.f32.mrb[0].mxu0
    %658 = vmatprep.mubr.f32.mxu0 0.0
    %659 = vmatmul.mubr.f32.gmra.mrb[0].mxu0 %v265
    %v660 = vpop.f32.mrb[0].mxu0
    %v661 = vadd.f32 0.0, %v660
    %v662 = vpop.f32.mrb[0].mxu0
    %663 = vmatprep.mubr.f32.mxu0 0.0
    %664 = vmatmul.mubr.f32.gmra.mrb[0].mxu0 %v268
    %v665 = vpop.f32.mrb[0].mxu0
    %v666 = vadd.f32 0.0, %v665
    %v667 = vpop.f32.mrb[0].mxu0
    %668 = vmatprep.mubr.f32.mxu0 0.0
    %669 = vmatmul.mubr.f32.gmra.mrb[0].mxu0 %v271
    %v670 = vpop.f32.mrb[0].mxu0
    %v671 = vadd.f32 0.0, %v670
    %v672 = vpop.f32.mrb[0].mxu0
    %673 = vmatprep.mubr.f32.mxu0 0.0
    %674 = vmatmul.mubr.f32.gmra.mrb[0].mxu0 %v274
    %v675 = vpop.f32.mrb[0].mxu0
    %v676 = vadd.f32 0.0, %v675
    %v677 = vpop.f32.mrb[0].mxu0
    %678 = vmatprep.mubr.f32.mxu0 0.0
    %679 = vmatmul.mubr.f32.gmra.mrb[0].mxu0 %v277
    %v680 = vpop.f32.mrb[0].mxu0
    %v681 = vadd.f32 0.0, %v680
    %v682 = vpop.f32.mrb[0].mxu0
    %683 = vmatprep.mubr.f32.mxu0 0.0
    %684 = vmatmul.mubr.f32.gmra.mrb[0].mxu0 %v280
    %v685 = vpop.f32.mrb[0].mxu0
    %v686 = vadd.f32 0.0, %v685
    %v687 = vpop.f32.mrb[0].mxu0
    %688 = vmatprep.mubr.f32.mxu0 0.0
    %689 = vmatmul.mubr.f32.gmra.mrb[0].mxu0 %v283
    %v690 = vpop.f32.mrb[0].mxu0
    %v691 = vadd.f32 0.0, %v690
    %v692 = vpop.f32.mrb[0].mxu0
    %693 = vmatprep.mubr.f32.mxu0 0.0
    %694 = vmatmul.mubr.f32.gmra.mrb[0].mxu0 %v286
    %v695 = vpop.f32.mrb[0].mxu0
    %v696 = vadd.f32 0.0, %v695
    %v697 = vpop.f32.mrb[0].mxu0
    %698 = vmatprep.mubr.f32.mxu0 0.0
    %699 = vmatmul.mubr.f32.gmra.mrb[0].mxu0 %v289
    %v700 = vpop.f32.mrb[0].mxu0
    %v701 = vadd.f32 0.0, %v700
    %v702 = vpop.f32.mrb[0].mxu0
    %703 = vmatprep.mubr.f32.mxu0 0.0
    %704 = vmatmul.mubr.f32.gmra.mrb[0].mxu0 %v292
    %v705 = vpop.f32.mrb[0].mxu0
    %v706 = vadd.f32 0.0, %v705
    %v707 = vpop.f32.mrb[0].mxu0
    %708 = vmatprep.mubr.f32.mxu0 0.0
    %709 = vmatmul.mubr.f32.gmra.mrb[0].mxu0 %v295
    %v710 = vpop.f32.mrb[0].mxu0
    %v711 = vadd.f32 0.0, %v710
    %v712 = vpop.f32.mrb[0].mxu0
    %713 = vmatprep.mubr.f32.mxu0 0.0
    %714 = vmatmul.mubr.f32.gmra.mrb[0].mxu0 %v298
    %v715 = vpop.f32.mrb[0].mxu0
    %v716 = vadd.f32 0.0, %v715
    %v717 = vpop.f32.mrb[0].mxu0
    %718 = vmatprep.mubr.f32.mxu0 0.0
    %719 = vmatmul.mubr.f32.gmra.mrb[0].mxu0 %v301
    %v720 = vpop.f32.mrb[0].mxu0
    %v721 = vadd.f32 0.0, %v720
    %v722 = vpop.f32.mrb[0].mxu0
    %723 = vmatprep.mubr.f32.mxu0 0.0
    %724 = vmatmul.mubr.f32.gmra.mrb[0].mxu0 %v304
    %v725 = vpop.f32.mrb[0].mxu0
    %v726 = vadd.f32 0.0, %v725
    %v727 = vpop.f32.mrb[0].mxu0
    %728 = vmatprep.mubr.f32.mxu0 0.0
    %729 = vmatmul.mubr.f32.gmra.mrb[0].mxu0 %v307
    %v730 = vpop.f32.mrb[0].mxu0
    %v731 = vadd.f32 0.0, %v730
    %v732 = vpop.f32.mrb[0].mxu0
    %733 = vmatprep.mubr.f32.mxu0 0.0
    %734 = vmatmul.mubr.f32.gmra.mrb[0].mxu0 %v310
    %v735 = vpop.f32.mrb[0].mxu0
    %v736 = vadd.f32 0.0, %v735
    %v737 = vpop.f32.mrb[0].mxu0
    %738 = vmatprep.mubr.f32.mxu0 0.0
    %739 = vmatmul.mubr.f32.gmra.mrb[0].mxu0 %v313
    %v740 = vpop.f32.mrb[0].mxu0
    %v741 = vadd.f32 0.0, %v740
    %v742 = vpop.f32.mrb[0].mxu0
    %743 = vdwg.mxu0
    %744 = vst [vmem:[%s2] sm:$0xff] %v386
    %745 = vst [vmem:[%s2 + $0x8] sm:$0xff] %v391
    %746 = vst [vmem:[%s2 + $0x10] sm:$0xff] %v396
    %747 = vst [vmem:[%s2 + $0x18] sm:$0xff] %v401
    %748 = vst [vmem:[%s2 + $0x20] sm:$0xff] %v406
    %749 = vst [vmem:[%s2 + $0x28] sm:$0xff] %v411
    %750 = vst [vmem:[%s2 + $0x30] sm:$0xff] %v416
    %751 = vst [vmem:[%s2 + $0x38] sm:$0xff] %v421
    %752 = vst [vmem:[%s2 + $0x40] sm:$0xff] %v426
    %753 = vst [vmem:[%s2 + $0x48] sm:$0xff] %v431
    %754 = vst [vmem:[%s2 + $0x50] sm:$0xff] %v436
    %755 = vst [vmem:[%s2 + $0x58] sm:$0xff] %v441
    %756 = vst [vmem:[%s2 + $0x60] sm:$0xff] %v446
    %757 = vst [vmem:[%s2 + $0x68] sm:$0xff] %v451
    %758 = vst [vmem:[%s2 + $0x70] sm:$0xff] %v456
    %759 = vst [vmem:[%s2 + $0x78] sm:$0xff] %v461
    %760 = vst [vmem:[%s2 + $0x80] sm:$0xff] %v466
    %761 = vst [vmem:[%s2 + $0x88] sm:$0xff] %v471
    %762 = vst [vmem:[%s2 + $0x90] sm:$0xff] %v476
    %763 = vst [vmem:[%s2 + $0x98] sm:$0xff] %v481
    %764 = vst [vmem:[%s2 + $0xa0] sm:$0xff] %v486
    %765 = vst [vmem:[%s2 + $0xa8] sm:$0xff] %v491
    %766 = vst [vmem:[%s2 + $0xb0] sm:$0xff] %v496
    %767 = vst [vmem:[%s2 + $0xb8] sm:$0xff] %v501
    %768 = vst [vmem:[%s2 + $0xc0] sm:$0xff] %v506
    %769 = vst [vmem:[%s2 + $0xc8] sm:$0xff] %v511
    %770 = vst [vmem:[%s2 + $0xd0] sm:$0xff] %v516
    %771 = vst [vmem:[%s2 + $0xd8] sm:$0xff] %v521
    %772 = vst [vmem:[%s2 + $0xe0] sm:$0xff] %v526
    %773 = vst [vmem:[%s2 + $0xe8] sm:$0xff] %v531
    %774 = vst [vmem:[%s2 + $0xf0] sm:$0xff] %v536
    %775 = vst [vmem:[%s2 + $0xf8] sm:$0xff] %v541
    %776 = vst [vmem:[%s2 + $0x100] sm:$0xff] %v546
    %777 = vst [vmem:[%s2 + $0x108] sm:$0xff] %v551
    %778 = vst [vmem:[%s2 + $0x110] sm:$0xff] %v556
    %779 = vst [vmem:[%s2 + $0x118] sm:$0xff] %v561
    %780 = vst [vmem:[%s2 + $0x120] sm:$0xff] %v566
    %781 = vst [vmem:[%s2 + $0x128] sm:$0xff] %v571
    %782 = vst [vmem:[%s2 + $0x130] sm:$0xff] %v576
    %783 = vst [vmem:[%s2 + $0x138] sm:$0xff] %v581
    %784 = vst [vmem:[%s2 + $0x140] sm:$0xff] %v586
    %785 = vst [vmem:[%s2 + $0x148] sm:$0xff] %v591
    %786 = vst [vmem:[%s2 + $0x150] sm:$0xff] %v596
    %787 = vst [vmem:[%s2 + $0x158] sm:$0xff] %v601
    %788 = vst [vmem:[%s2 + $0x160] sm:$0xff] %v606
    %789 = vst [vmem:[%s2 + $0x168] sm:$0xff] %v611
    %790 = vst [vmem:[%s2 + $0x170] sm:$0xff] %v616
    %791 = vst [vmem:[%s2 + $0x178] sm:$0xff] %v621
    %792 = vst [vmem:[%s2 + $0x180] sm:$0xff] %v626
    %793 = vst [vmem:[%s2 + $0x188] sm:$0xff] %v631
    %794 = vst [vmem:[%s2 + $0x190] sm:$0xff] %v636
    %795 = vst [vmem:[%s2 + $0x198] sm:$0xff] %v641
    %796 = vst [vmem:[%s2 + $0x1a0] sm:$0xff] %v646
    %797 = vst [vmem:[%s2 + $0x1a8] sm:$0xff] %v651
    %798 = vst [vmem:[%s2 + $0x1b0] sm:$0xff] %v656
    %799 = vst [vmem:[%s2 + $0x1b8] sm:$0xff] %v661
    %800 = vst [vmem:[%s2 + $0x1c0] sm:$0xff] %v666
    %801 = vst [vmem:[%s2 + $0x1c8] sm:$0xff] %v671
    %802 = vst [vmem:[%s2 + $0x1d0] sm:$0xff] %v676
    %803 = vst [vmem:[%s2 + $0x1d8] sm:$0xff] %v681
    %804 = vst [vmem:[%s2 + $0x1e0] sm:$0xff] %v686
    %805 = vst [vmem:[%s2 + $0x1e8] sm:$0xff] %v691
    %806 = vst [vmem:[%s2 + $0x1f0] sm:$0xff] %v696
    %807 = vst [vmem:[%s2 + $0x1f8] sm:$0xff] %v701
    %808 = vst [vmem:[%s2 + $0x200] sm:$0xff] %v706
    %809 = vst [vmem:[%s2 + $0x208] sm:$0xff] %v711
    %810 = vst [vmem:[%s2 + $0x210] sm:$0xff] %v716
    %811 = vst [vmem:[%s2 + $0x218] sm:$0xff] %v721
    %812 = vst [vmem:[%s2 + $0x220] sm:$0xff] %v726
    %813 = vst [vmem:[%s2 + $0x228] sm:$0xff] %v731
    %814 = vst [vmem:[%s2 + $0x230] sm:$0xff] %v736
    %815 = vst [vmem:[%s2 + $0x238] sm:$0xff] %v741
    // Predicated region
    $region14: #{my_nn_forward.8} parent=1 // pred_check
      _
    $region15: #{my_nn_forward.8} parent=1 // pred_check_branch
      %817 = sbr.rel (0) target = $region17
    $region16: #{my_nn_forward.8} parent=1 // pred_region
      _
    $region17: #{my_nn_forward.8} parent=1 // pred_fallthru
      _
    // Predicated region
    $region18: #{my_nn_forward.8} parent=1 // pred_check
      _
    $region19: #{my_nn_forward.8} parent=1 // pred_check_branch
      %819 = sbr.rel (0) target = $region21
    $region20: #{my_nn_forward.8} parent=1 // pred_region
      _
    $region21: #{my_nn_forward.8} parent=1 // pred_fallthru
      _
    %820 = vsyncpa [#allocation3], 1

// kernel: my_nn_forward.9
$region0: #{my_nn_forward.9}
  #allocation0 [shape = 'u32[]', space=smem, size = 0x4, offset = 0x4, fixed_abs, tag = 'smem constant byte address 0x4 - core index']
  #allocation1 [shape = 'u32[144,128]{1,0:T(1,128)}', space=vmem, size = 0x12000, scoped, tag = 'internal scratch']
  %s0 = inlined_call_operand.vmem [shape: bf16[576,640], index: 0, kind: input, shape index: {}]
  %s1 = inlined_call_operand.vmem [shape: bf16[640,128], index: 1, kind: input, shape index: {}]
  %s2 = inlined_call_operand.vmem [shape: f32[1,128], index: 2, kind: input, shape index: {}]
  %s3 = inlined_call_operand.vmem [shape: f32[1,128], index: 3, kind: input, shape index: {}]
  %s4 = inlined_call_operand.vmem [shape: f32[576,128], index: 4, kind: output, shape index: {}]
  %s5 = sld [smem:[#allocation0]]
  $region26: #{my_nn_forward.9} parent=0
    _
  %s7 = ssub.s32 1, %s5
  %s8 = scalar_select 0, %s7, %s5
  // Predicated region
  $region2: #{my_nn_forward.9} parent=0 // pred_check
    _
  $region3: #{my_nn_forward.9} parent=0 // pred_check_branch
    %10 = sbr.rel (0) target = $region5
  $region4: #{my_nn_forward.9} parent=0 // pred_region
    _
  $region5: #{my_nn_forward.9} parent=0 // pred_fallthru
    _
  // Predicated region
  $region6: #{my_nn_forward.9} parent=0 // pred_check
    _
  $region7: #{my_nn_forward.9} parent=0 // pred_check_branch
    %12 = sbr.rel (0) target = $region9
  $region8: #{my_nn_forward.9} parent=0 // pred_region
    _
  $region9: #{my_nn_forward.9} parent=0 // pred_fallthru
    _
  // Predicated region
  $region10: #{my_nn_forward.9} parent=0 // pred_check
    _
  $region11: #{my_nn_forward.9} parent=0 // pred_check_branch
    %14 = sbr.rel (0) target = $region13
  $region12: #{my_nn_forward.9} parent=0 // pred_region
    _
  $region13: #{my_nn_forward.9} parent=0 // pred_fallthru
    _
  // Predicated region
  $region14: #{my_nn_forward.9} parent=0 // pred_check
    _
  $region15: #{my_nn_forward.9} parent=0 // pred_check_branch
    %16 = sbr.rel (0) target = $region17
  $region16: #{my_nn_forward.9} parent=0 // pred_region
    _
  $region17: #{my_nn_forward.9} parent=0 // pred_fallthru
    _
  %v18 = vld [vmem:[%s0] sm:$0xff]
  %v19 = vld [vmem:[%s0 + $0x8] sm:$0xff]
  %v20 = vld [vmem:[%s0 + $0x10] sm:$0xf]
  %v21 = vld [vmem:[%s0 + $0x14] sm:$0xff]
  %v22 = vld [vmem:[%s0 + $0x1c] sm:$0xff]
  %v23 = vld [vmem:[%s0 + $0x24] sm:$0xf]
  %v24 = vld [vmem:[%s0 + $0x28] sm:$0xff]
  %v25 = vld [vmem:[%s0 + $0x30] sm:$0xff]
  %v26 = vld [vmem:[%s0 + $0x38] sm:$0xf]
  %v27 = vld [vmem:[%s0 + $0x3c] sm:$0xff]
  %v28 = vld [vmem:[%s0 + $0x44] sm:$0xff]
  %v29 = vld [vmem:[%s0 + $0x4c] sm:$0xf]
  %v30 = vld [vmem:[%s0 + $0x50] sm:$0xff]
  %v31 = vld [vmem:[%s0 + $0x58] sm:$0xff]
  %v32 = vld [vmem:[%s0 + $0x60] sm:$0xf]
  %v33 = vld [vmem:[%s0 + $0x64] sm:$0xff]
  %v34 = vld [vmem:[%s0 + $0x6c] sm:$0xff]
  %v35 = vld [vmem:[%s0 + $0x74] sm:$0xf]
  %v36 = vld [vmem:[%s0 + $0x78] sm:$0xff]
  %v37 = vld [vmem:[%s0 + $0x80] sm:$0xff]
  %v38 = vld [vmem:[%s0 + $0x88] sm:$0xf]
  %v39 = vld [vmem:[%s0 + $0x8c] sm:$0xff]
  %v40 = vld [vmem:[%s0 + $0x94] sm:$0xff]
  %v41 = vld [vmem:[%s0 + $0x9c] sm:$0xf]
  %v42 = vld [vmem:[%s0 + $0xa0] sm:$0xff]
  %v43 = vld [vmem:[%s0 + $0xa8] sm:$0xff]
  %v44 = vld [vmem:[%s0 + $0xb0] sm:$0xf]
  %v45 = vld [vmem:[%s0 + $0xb4] sm:$0xff]
  %v46 = vld [vmem:[%s0 + $0xbc] sm:$0xff]
  %v47 = vld [vmem:[%s0 + $0xc4] sm:$0xf]
  %v48 = vld [vmem:[%s0 + $0xc8] sm:$0xff]
  %v49 = vld [vmem:[%s0 + $0xd0] sm:$0xff]
  %v50 = vld [vmem:[%s0 + $0xd8] sm:$0xf]
  %v51 = vld [vmem:[%s0 + $0xdc] sm:$0xff]
  %v52 = vld [vmem:[%s0 + $0xe4] sm:$0xff]
  %v53 = vld [vmem:[%s0 + $0xec] sm:$0xf]
  %v54 = vld [vmem:[%s0 + $0xf0] sm:$0xff]
  %v55 = vld [vmem:[%s0 + $0xf8] sm:$0xff]
  %v56 = vld [vmem:[%s0 + $0x100] sm:$0xf]
  %v57 = vld [vmem:[%s0 + $0x104] sm:$0xff]
  %v58 = vld [vmem:[%s0 + $0x10c] sm:$0xff]
  %v59 = vld [vmem:[%s0 + $0x114] sm:$0xf]
  %v60 = vld [vmem:[%s0 + $0x118] sm:$0xff]
  %v61 = vld [vmem:[%s0 + $0x120] sm:$0xff]
  %v62 = vld [vmem:[%s0 + $0x128] sm:$0xf]
  %v63 = vld [vmem:[%s0 + $0x12c] sm:$0xff]
  %v64 = vld [vmem:[%s0 + $0x134] sm:$0xff]
  %v65 = vld [vmem:[%s0 + $0x13c] sm:$0xf]
  %v66 = vld [vmem:[%s0 + $0x140] sm:$0xff]
  %v67 = vld [vmem:[%s0 + $0x148] sm:$0xff]
  %v68 = vld [vmem:[%s0 + $0x150] sm:$0xf]
  %v69 = vld [vmem:[%s0 + $0x154] sm:$0xff]
  %v70 = vld [vmem:[%s0 + $0x15c] sm:$0xff]
  %v71 = vld [vmem:[%s0 + $0x164] sm:$0xf]
  %v72 = vld [vmem:[%s0 + $0x168] sm:$0xff]
  %v73 = vld [vmem:[%s0 + $0x170] sm:$0xff]
  %v74 = vld [vmem:[%s0 + $0x178] sm:$0xf]
  %v75 = vld [vmem:[%s0 + $0x17c] sm:$0xff]
  %v76 = vld [vmem:[%s0 + $0x184] sm:$0xff]
  %v77 = vld [vmem:[%s0 + $0x18c] sm:$0xf]
  %v78 = vld [vmem:[%s0 + $0x190] sm:$0xff]
  %v79 = vld [vmem:[%s0 + $0x198] sm:$0xff]
  %v80 = vld [vmem:[%s0 + $0x1a0] sm:$0xf]
  %v81 = vld [vmem:[%s0 + $0x1a4] sm:$0xff]
  %v82 = vld [vmem:[%s0 + $0x1ac] sm:$0xff]
  %v83 = vld [vmem:[%s0 + $0x1b4] sm:$0xf]
  %v84 = vld [vmem:[%s0 + $0x1b8] sm:$0xff]
  %v85 = vld [vmem:[%s0 + $0x1c0] sm:$0xff]
  %v86 = vld [vmem:[%s0 + $0x1c8] sm:$0xf]
  %v87 = vld [vmem:[%s0 + $0x1cc] sm:$0xff]
  %v88 = vld [vmem:[%s0 + $0x1d4] sm:$0xff]
  %v89 = vld [vmem:[%s0 + $0x1dc] sm:$0xf]
  %v90 = vld [vmem:[%s0 + $0x1e0] sm:$0xff]
  %v91 = vld [vmem:[%s0 + $0x1e8] sm:$0xff]
  %v92 = vld [vmem:[%s0 + $0x1f0] sm:$0xf]
  %v93 = vld [vmem:[%s0 + $0x1f4] sm:$0xff]
  %v94 = vld [vmem:[%s0 + $0x1fc] sm:$0xff]
  %v95 = vld [vmem:[%s0 + $0x204] sm:$0xf]
  %v96 = vld [vmem:[%s0 + $0x208] sm:$0xff]
  %v97 = vld [vmem:[%s0 + $0x210] sm:$0xff]
  %v98 = vld [vmem:[%s0 + $0x218] sm:$0xf]
  %v99 = vld [vmem:[%s0 + $0x21c] sm:$0xff]
  %v100 = vld [vmem:[%s0 + $0x224] sm:$0xff]
  %v101 = vld [vmem:[%s0 + $0x22c] sm:$0xf]
  %v102 = vld [vmem:[%s0 + $0x230] sm:$0xff]
  %v103 = vld [vmem:[%s0 + $0x238] sm:$0xff]
  %v104 = vld [vmem:[%s0 + $0x240] sm:$0xf]
  %v105 = vld [vmem:[%s0 + $0x244] sm:$0xff]
  %v106 = vld [vmem:[%s0 + $0x24c] sm:$0xff]
  %v107 = vld [vmem:[%s0 + $0x254] sm:$0xf]
  %v108 = vld [vmem:[%s0 + $0x258] sm:$0xff]
  %v109 = vld [vmem:[%s0 + $0x260] sm:$0xff]
  %v110 = vld [vmem:[%s0 + $0x268] sm:$0xf]
  %v111 = vld [vmem:[%s0 + $0x26c] sm:$0xff]
  %v112 = vld [vmem:[%s0 + $0x274] sm:$0xff]
  %v113 = vld [vmem:[%s0 + $0x27c] sm:$0xf]
  %v114 = vld [vmem:[%s0 + $0x280] sm:$0xff]
  %v115 = vld [vmem:[%s0 + $0x288] sm:$0xff]
  %v116 = vld [vmem:[%s0 + $0x290] sm:$0xf]
  %v117 = vld [vmem:[%s0 + $0x294] sm:$0xff]
  %v118 = vld [vmem:[%s0 + $0x29c] sm:$0xff]
  %v119 = vld [vmem:[%s0 + $0x2a4] sm:$0xf]
  %v120 = vld [vmem:[%s0 + $0x2a8] sm:$0xff]
  %v121 = vld [vmem:[%s0 + $0x2b0] sm:$0xff]
  %v122 = vld [vmem:[%s0 + $0x2b8] sm:$0xf]
  %v123 = vld [vmem:[%s0 + $0x2bc] sm:$0xff]
  %v124 = vld [vmem:[%s0 + $0x2c4] sm:$0xff]
  %v125 = vld [vmem:[%s0 + $0x2cc] sm:$0xf]
  %v126 = vld [vmem:[%s0 + $0x2d0] sm:$0xff]
  %v127 = vld [vmem:[%s0 + $0x2d8] sm:$0xff]
  %v128 = vld [vmem:[%s0 + $0x2e0] sm:$0xf]
  %v129 = vld [vmem:[%s0 + $0x2e4] sm:$0xff]
  %v130 = vld [vmem:[%s0 + $0x2ec] sm:$0xff]
  %v131 = vld [vmem:[%s0 + $0x2f4] sm:$0xf]
  %v132 = vld [vmem:[%s0 + $0x2f8] sm:$0xff]
  %v133 = vld [vmem:[%s0 + $0x300] sm:$0xff]
  %v134 = vld [vmem:[%s0 + $0x308] sm:$0xf]
  %v135 = vld [vmem:[%s0 + $0x30c] sm:$0xff]
  %v136 = vld [vmem:[%s0 + $0x314] sm:$0xff]
  %v137 = vld [vmem:[%s0 + $0x31c] sm:$0xf]
  %v138 = vld [vmem:[%s0 + $0x320] sm:$0xff]
  %v139 = vld [vmem:[%s0 + $0x328] sm:$0xff]
  %v140 = vld [vmem:[%s0 + $0x330] sm:$0xf]
  %v141 = vld [vmem:[%s0 + $0x334] sm:$0xff]
  %v142 = vld [vmem:[%s0 + $0x33c] sm:$0xff]
  %v143 = vld [vmem:[%s0 + $0x344] sm:$0xf]
  %v144 = vld [vmem:[%s0 + $0x348] sm:$0xff]
  %v145 = vld [vmem:[%s0 + $0x350] sm:$0xff]
  %v146 = vld [vmem:[%s0 + $0x358] sm:$0xf]
  %v147 = vld [vmem:[%s0 + $0x35c] sm:$0xff]
  %v148 = vld [vmem:[%s0 + $0x364] sm:$0xff]
  %v149 = vld [vmem:[%s0 + $0x36c] sm:$0xf]
  %v150 = vld [vmem:[%s0 + $0x370] sm:$0xff]
  %v151 = vld [vmem:[%s0 + $0x378] sm:$0xff]
  %v152 = vld [vmem:[%s0 + $0x380] sm:$0xf]
  %v153 = vld [vmem:[%s0 + $0x384] sm:$0xff]
  %v154 = vld [vmem:[%s0 + $0x38c] sm:$0xff]
  %v155 = vld [vmem:[%s0 + $0x394] sm:$0xf]
  %v156 = vld [vmem:[%s0 + $0x398] sm:$0xff]
  %v157 = vld [vmem:[%s0 + $0x3a0] sm:$0xff]
  %v158 = vld [vmem:[%s0 + $0x3a8] sm:$0xf]
  %v159 = vld [vmem:[%s0 + $0x3ac] sm:$0xff]
  %v160 = vld [vmem:[%s0 + $0x3b4] sm:$0xff]
  %v161 = vld [vmem:[%s0 + $0x3bc] sm:$0xf]
  %v162 = vld [vmem:[%s0 + $0x3c0] sm:$0xff]
  %v163 = vld [vmem:[%s0 + $0x3c8] sm:$0xff]
  %v164 = vld [vmem:[%s0 + $0x3d0] sm:$0xf]
  %v165 = vld [vmem:[%s0 + $0x3d4] sm:$0xff]
  %v166 = vld [vmem:[%s0 + $0x3dc] sm:$0xff]
  %v167 = vld [vmem:[%s0 + $0x3e4] sm:$0xf]
  %v168 = vld [vmem:[%s0 + $0x3e8] sm:$0xff]
  %v169 = vld [vmem:[%s0 + $0x3f0] sm:$0xff]
  %v170 = vld [vmem:[%s0 + $0x3f8] sm:$0xf]
  %v171 = vld [vmem:[%s0 + $0x3fc] sm:$0xff]
  %v172 = vld [vmem:[%s0 + $0x404] sm:$0xff]
  %v173 = vld [vmem:[%s0 + $0x40c] sm:$0xf]
  %v174 = vld [vmem:[%s0 + $0x410] sm:$0xff]
  %v175 = vld [vmem:[%s0 + $0x418] sm:$0xff]
  %v176 = vld [vmem:[%s0 + $0x420] sm:$0xf]
  %v177 = vld [vmem:[%s0 + $0x424] sm:$0xff]
  %v178 = vld [vmem:[%s0 + $0x42c] sm:$0xff]
  %v179 = vld [vmem:[%s0 + $0x434] sm:$0xf]
  %v180 = vld [vmem:[%s0 + $0x438] sm:$0xff]
  %v181 = vld [vmem:[%s0 + $0x440] sm:$0xff]
  %v182 = vld [vmem:[%s0 + $0x448] sm:$0xf]
  %v183 = vld [vmem:[%s0 + $0x44c] sm:$0xff]
  %v184 = vld [vmem:[%s0 + $0x454] sm:$0xff]
  %v185 = vld [vmem:[%s0 + $0x45c] sm:$0xf]
  %v186 = vld [vmem:[%s0 + $0x460] sm:$0xff]
  %v187 = vld [vmem:[%s0 + $0x468] sm:$0xff]
  %v188 = vld [vmem:[%s0 + $0x470] sm:$0xf]
  %v189 = vld [vmem:[%s0 + $0x474] sm:$0xff]
  %v190 = vld [vmem:[%s0 + $0x47c] sm:$0xff]
  %v191 = vld [vmem:[%s0 + $0x484] sm:$0xf]
  %v192 = vld [vmem:[%s0 + $0x488] sm:$0xff]
  %v193 = vld [vmem:[%s0 + $0x490] sm:$0xff]
  %v194 = vld [vmem:[%s0 + $0x498] sm:$0xf]
  %v195 = vld [vmem:[%s0 + $0x49c] sm:$0xff]
  %v196 = vld [vmem:[%s0 + $0x4a4] sm:$0xff]
  %v197 = vld [vmem:[%s0 + $0x4ac] sm:$0xf]
  %v198 = vld [vmem:[%s0 + $0x4b0] sm:$0xff]
  %v199 = vld [vmem:[%s0 + $0x4b8] sm:$0xff]
  %v200 = vld [vmem:[%s0 + $0x4c0] sm:$0xf]
  %v201 = vld [vmem:[%s0 + $0x4c4] sm:$0xff]
  %v202 = vld [vmem:[%s0 + $0x4cc] sm:$0xff]
  %v203 = vld [vmem:[%s0 + $0x4d4] sm:$0xf]
  %v204 = vld [vmem:[%s0 + $0x4d8] sm:$0xff]
  %v205 = vld [vmem:[%s0 + $0x4e0] sm:$0xff]
  %v206 = vld [vmem:[%s0 + $0x4e8] sm:$0xf]
  %v207 = vld [vmem:[%s0 + $0x4ec] sm:$0xff]
  %v208 = vld [vmem:[%s0 + $0x4f4] sm:$0xff]
  %v209 = vld [vmem:[%s0 + $0x4fc] sm:$0xf]
  %v210 = vld [vmem:[%s0 + $0x500] sm:$0xff]
  %v211 = vld [vmem:[%s0 + $0x508] sm:$0xff]
  %v212 = vld [vmem:[%s0 + $0x510] sm:$0xf]
  %v213 = vld [vmem:[%s0 + $0x514] sm:$0xff]
  %v214 = vld [vmem:[%s0 + $0x51c] sm:$0xff]
  %v215 = vld [vmem:[%s0 + $0x524] sm:$0xf]
  %v216 = vld [vmem:[%s0 + $0x528] sm:$0xff]
  %v217 = vld [vmem:[%s0 + $0x530] sm:$0xff]
  %v218 = vld [vmem:[%s0 + $0x538] sm:$0xf]
  %v219 = vld [vmem:[%s0 + $0x53c] sm:$0xff]
  %v220 = vld [vmem:[%s0 + $0x544] sm:$0xff]
  %v221 = vld [vmem:[%s0 + $0x54c] sm:$0xf]
  %v222 = vld [vmem:[%s0 + $0x550] sm:$0xff]
  %v223 = vld [vmem:[%s0 + $0x558] sm:$0xff]
  %v224 = vld [vmem:[%s0 + $0x560] sm:$0xf]
  %v225 = vld [vmem:[%s0 + $0x564] sm:$0xff]
  %v226 = vld [vmem:[%s0 + $0x56c] sm:$0xff]
  %v227 = vld [vmem:[%s0 + $0x574] sm:$0xf]
  %v228 = vld [vmem:[%s0 + $0x578] sm:$0xff]
  %v229 = vld [vmem:[%s0 + $0x580] sm:$0xff]
  %v230 = vld [vmem:[%s0 + $0x588] sm:$0xf]
  %v231 = vld [vmem:[%s0 + $0x58c] sm:$0xff]
  %v232 = vld [vmem:[%s0 + $0x594] sm:$0xff]
  %v233 = vld [vmem:[%s0 + $0x59c] sm:$0xf]
  %v234 = vld [vmem:[%s1] sm:$0xf]
  %v235 = vld [vmem:[%s1 + $0x4] sm:$0xf]
  %v236 = vld [vmem:[%s1 + $0x8] sm:$0xf]
  %v237 = vld [vmem:[%s1 + $0xc] sm:$0xf]
  %v238 = vld [vmem:[%s1 + $0x10] sm:$0xf]
  %v239 = vld [vmem:[%s1 + $0x14] sm:$0xf]
  %v240 = vld [vmem:[%s1 + $0x18] sm:$0xf]
  %v241 = vld [vmem:[%s1 + $0x1c] sm:$0xf]
  %v242 = vld [vmem:[%s1 + $0x20] sm:$0xf]
  %v243 = vld [vmem:[%s1 + $0x24] sm:$0xf]
  %v244 = vld [vmem:[%s1 + $0x28] sm:$0xf]
  %v245 = vld [vmem:[%s1 + $0x2c] sm:$0xf]
  %v246 = vld [vmem:[%s1 + $0x30] sm:$0xf]
  %v247 = vld [vmem:[%s1 + $0x34] sm:$0xf]
  %v248 = vld [vmem:[%s1 + $0x38] sm:$0xf]
  %v249 = vld [vmem:[%s1 + $0x3c] sm:$0xf]
  %v250 = vld [vmem:[%s1 + $0x40] sm:$0xf]
  %v251 = vld [vmem:[%s1 + $0x44] sm:$0xf]
  %v252 = vld [vmem:[%s1 + $0x48] sm:$0xf]
  %v253 = vld [vmem:[%s1 + $0x4c] sm:$0xf]
  %v254 = vld [vmem:[%s1 + $0x50] sm:$0xf]
  %v255 = vld [vmem:[%s1 + $0x54] sm:$0xf]
  %v256 = vld [vmem:[%s1 + $0x58] sm:$0xf]
  %v257 = vld [vmem:[%s1 + $0x5c] sm:$0xf]
  %v258 = vld [vmem:[%s1 + $0x60] sm:$0xf]
  %v259 = vld [vmem:[%s1 + $0x64] sm:$0xf]
  %v260 = vld [vmem:[%s1 + $0x68] sm:$0xf]
  %v261 = vld [vmem:[%s1 + $0x6c] sm:$0xf]
  %v262 = vld [vmem:[%s1 + $0x70] sm:$0xf]
  %v263 = vld [vmem:[%s1 + $0x74] sm:$0xf]
  %v264 = vld [vmem:[%s1 + $0x78] sm:$0xf]
  %v265 = vld [vmem:[%s1 + $0x7c] sm:$0xf]
  %v266 = vld [vmem:[%s1 + $0x80] sm:$0xf]
  %v267 = vld [vmem:[%s1 + $0x84] sm:$0xf]
  %v268 = vld [vmem:[%s1 + $0x88] sm:$0xf]
  %v269 = vld [vmem:[%s1 + $0x8c] sm:$0xf]
  %v270 = vld [vmem:[%s1 + $0x90] sm:$0xf]
  %v271 = vld [vmem:[%s1 + $0x94] sm:$0xf]
  %v272 = vld [vmem:[%s1 + $0x98] sm:$0xf]
  %v273 = vld [vmem:[%s1 + $0x9c] sm:$0xf]
  %v274 = vld [vmem:[%s1 + $0xa0] sm:$0xf]
  %v275 = vld [vmem:[%s1 + $0xa4] sm:$0xf]
  %v276 = vld [vmem:[%s1 + $0xa8] sm:$0xf]
  %v277 = vld [vmem:[%s1 + $0xac] sm:$0xf]
  %v278 = vld [vmem:[%s1 + $0xb0] sm:$0xf]
  %v279 = vld [vmem:[%s1 + $0xb4] sm:$0xf]
  %v280 = vld [vmem:[%s1 + $0xb8] sm:$0xf]
  %v281 = vld [vmem:[%s1 + $0xbc] sm:$0xf]
  %v282 = vld [vmem:[%s1 + $0xc0] sm:$0xf]
  %v283 = vld [vmem:[%s1 + $0xc4] sm:$0xf]
  %v284 = vld [vmem:[%s1 + $0xc8] sm:$0xf]
  %v285 = vld [vmem:[%s1 + $0xcc] sm:$0xf]
  %v286 = vld [vmem:[%s1 + $0xd0] sm:$0xf]
  %v287 = vld [vmem:[%s1 + $0xd4] sm:$0xf]
  %v288 = vld [vmem:[%s1 + $0xd8] sm:$0xf]
  %v289 = vld [vmem:[%s1 + $0xdc] sm:$0xf]
  %v290 = vld [vmem:[%s1 + $0xe0] sm:$0xf]
  %v291 = vld [vmem:[%s1 + $0xe4] sm:$0xf]
  %v292 = vld [vmem:[%s1 + $0xe8] sm:$0xf]
  %v293 = vld [vmem:[%s1 + $0xec] sm:$0xf]
  %v294 = vld [vmem:[%s1 + $0xf0] sm:$0xf]
  %v295 = vld [vmem:[%s1 + $0xf4] sm:$0xf]
  %v296 = vld [vmem:[%s1 + $0xf8] sm:$0xf]
  %v297 = vld [vmem:[%s1 + $0xfc] sm:$0xf]
  %v298 = vld [vmem:[%s1 + $0x100] sm:$0xf]
  %v299 = vld [vmem:[%s1 + $0x104] sm:$0xf]
  %v300 = vld [vmem:[%s1 + $0x108] sm:$0xf]
  %v301 = vld [vmem:[%s1 + $0x10c] sm:$0xf]
  %v302 = vld [vmem:[%s1 + $0x110] sm:$0xf]
  %v303 = vld [vmem:[%s1 + $0x114] sm:$0xf]
  %v304 = vld [vmem:[%s1 + $0x118] sm:$0xf]
  %v305 = vld [vmem:[%s1 + $0x11c] sm:$0xf]
  %v306 = vld [vmem:[%s1 + $0x120] sm:$0xf]
  %v307 = vld [vmem:[%s1 + $0x124] sm:$0xf]
  %v308 = vld [vmem:[%s1 + $0x128] sm:$0xf]
  %v309 = vld [vmem:[%s1 + $0x12c] sm:$0xf]
  %v310 = vld [vmem:[%s1 + $0x130] sm:$0xf]
  %v311 = vld [vmem:[%s1 + $0x134] sm:$0xf]
  %v312 = vld [vmem:[%s1 + $0x138] sm:$0xf]
  %v313 = vld [vmem:[%s1 + $0x13c] sm:$0xf]
  %v530 = vunpack.c.l.b16 %v18
  %v531 = vunpack.c.h.b16 %v18
  %v532 = vunpack.c.l.b16 %v19
  %v533 = vunpack.c.h.b16 %v19
  %v534 = vunpack.c.l.b16 %v20
  %v535 = vunpack.c.l.b16 %v21
  %v536 = vunpack.c.h.b16 %v21
  %v537 = vunpack.c.l.b16 %v22
  %v538 = vunpack.c.h.b16 %v22
  %v539 = vunpack.c.l.b16 %v23
  %v540 = vunpack.c.l.b16 %v24
  %v541 = vunpack.c.h.b16 %v24
  %v542 = vunpack.c.l.b16 %v25
  %v543 = vunpack.c.h.b16 %v25
  %v544 = vunpack.c.l.b16 %v26
  %v545 = vunpack.c.l.b16 %v27
  %v546 = vunpack.c.h.b16 %v27
  %v547 = vunpack.c.l.b16 %v28
  %v548 = vunpack.c.h.b16 %v28
  %v549 = vunpack.c.l.b16 %v29
  %v550 = vunpack.c.l.b16 %v30
  %v551 = vunpack.c.h.b16 %v30
  %v552 = vunpack.c.l.b16 %v31
  %v553 = vunpack.c.h.b16 %v31
  %v554 = vunpack.c.l.b16 %v32
  %v555 = vunpack.c.l.b16 %v33
  %v556 = vunpack.c.h.b16 %v33
  %v557 = vunpack.c.l.b16 %v34
  %v558 = vunpack.c.h.b16 %v34
  %v559 = vunpack.c.l.b16 %v35
  %v560 = vunpack.c.l.b16 %v36
  %v561 = vunpack.c.h.b16 %v36
  %v562 = vunpack.c.l.b16 %v37
  %v563 = vunpack.c.h.b16 %v37
  %v564 = vunpack.c.l.b16 %v38
  %v565 = vunpack.c.l.b16 %v39
  %v566 = vunpack.c.h.b16 %v39
  %v567 = vunpack.c.l.b16 %v40
  %v568 = vunpack.c.h.b16 %v40
  %v569 = vunpack.c.l.b16 %v41
  %v570 = vunpack.c.l.b16 %v42
  %v571 = vunpack.c.h.b16 %v42
  %v572 = vunpack.c.l.b16 %v43
  %v573 = vunpack.c.h.b16 %v43
  %v574 = vunpack.c.l.b16 %v44
  %v575 = vunpack.c.l.b16 %v45
  %v576 = vunpack.c.h.b16 %v45
  %v577 = vunpack.c.l.b16 %v46
  %v578 = vunpack.c.h.b16 %v46
  %v579 = vunpack.c.l.b16 %v47
  %v580 = vunpack.c.l.b16 %v48
  %v581 = vunpack.c.h.b16 %v48
  %v582 = vunpack.c.l.b16 %v49
  %v583 = vunpack.c.h.b16 %v49
  %v584 = vunpack.c.l.b16 %v50
  %v585 = vunpack.c.l.b16 %v51
  %v586 = vunpack.c.h.b16 %v51
  %v587 = vunpack.c.l.b16 %v52
  %v588 = vunpack.c.h.b16 %v52
  %v589 = vunpack.c.l.b16 %v53
  %v590 = vunpack.c.l.b16 %v54
  %v591 = vunpack.c.h.b16 %v54
  %v592 = vunpack.c.l.b16 %v55
  %v593 = vunpack.c.h.b16 %v55
  %v594 = vunpack.c.l.b16 %v56
  %v595 = vunpack.c.l.b16 %v57
  %v596 = vunpack.c.h.b16 %v57
  %v597 = vunpack.c.l.b16 %v58
  %v598 = vunpack.c.h.b16 %v58
  %v599 = vunpack.c.l.b16 %v59
  %v600 = vunpack.c.l.b16 %v60
  %v601 = vunpack.c.h.b16 %v60
  %v602 = vunpack.c.l.b16 %v61
  %v603 = vunpack.c.h.b16 %v61
  %v604 = vunpack.c.l.b16 %v62
  %v605 = vunpack.c.l.b16 %v63
  %v606 = vunpack.c.h.b16 %v63
  %v607 = vunpack.c.l.b16 %v64
  %v608 = vunpack.c.h.b16 %v64
  %v609 = vunpack.c.l.b16 %v65
  %v610 = vunpack.c.l.b16 %v66
  %v611 = vunpack.c.h.b16 %v66
  %v612 = vunpack.c.l.b16 %v67
  %v613 = vunpack.c.h.b16 %v67
  %v614 = vunpack.c.l.b16 %v68
  %v615 = vunpack.c.l.b16 %v69
  %v616 = vunpack.c.h.b16 %v69
  %v617 = vunpack.c.l.b16 %v70
  %v618 = vunpack.c.h.b16 %v70
  %v619 = vunpack.c.l.b16 %v71
  %v620 = vunpack.c.l.b16 %v72
  %v621 = vunpack.c.h.b16 %v72
  %v622 = vunpack.c.l.b16 %v73
  %v623 = vunpack.c.h.b16 %v73
  %v624 = vunpack.c.l.b16 %v74
  %v625 = vunpack.c.l.b16 %v75
  %v626 = vunpack.c.h.b16 %v75
  %v627 = vunpack.c.l.b16 %v76
  %v628 = vunpack.c.h.b16 %v76
  %v629 = vunpack.c.l.b16 %v77
  %v630 = vunpack.c.l.b16 %v78
  %v631 = vunpack.c.h.b16 %v78
  %v632 = vunpack.c.l.b16 %v79
  %v633 = vunpack.c.h.b16 %v79
  %v634 = vunpack.c.l.b16 %v80
  %v635 = vunpack.c.l.b16 %v81
  %v636 = vunpack.c.h.b16 %v81
  %v637 = vunpack.c.l.b16 %v82
  %v638 = vunpack.c.h.b16 %v82
  %v639 = vunpack.c.l.b16 %v83
  %v640 = vunpack.c.l.b16 %v84
  %v641 = vunpack.c.h.b16 %v84
  %v642 = vunpack.c.l.b16 %v85
  %v643 = vunpack.c.h.b16 %v85
  %v644 = vunpack.c.l.b16 %v86
  %v645 = vunpack.c.l.b16 %v87
  %v646 = vunpack.c.h.b16 %v87
  %v647 = vunpack.c.l.b16 %v88
  %v648 = vunpack.c.h.b16 %v88
  %v649 = vunpack.c.l.b16 %v89
  %v650 = vunpack.c.l.b16 %v90
  %v651 = vunpack.c.h.b16 %v90
  %v652 = vunpack.c.l.b16 %v91
  %v653 = vunpack.c.h.b16 %v91
  %v654 = vunpack.c.l.b16 %v92
  %v655 = vunpack.c.l.b16 %v93
  %v656 = vunpack.c.h.b16 %v93
  %v657 = vunpack.c.l.b16 %v94
  %v658 = vunpack.c.h.b16 %v94
  %v659 = vunpack.c.l.b16 %v95
  %v660 = vunpack.c.l.b16 %v96
  %v661 = vunpack.c.h.b16 %v96
  %v662 = vunpack.c.l.b16 %v97
  %v663 = vunpack.c.h.b16 %v97
  %v664 = vunpack.c.l.b16 %v98
  %v665 = vunpack.c.l.b16 %v99
  %v666 = vunpack.c.h.b16 %v99
  %v667 = vunpack.c.l.b16 %v100
  %v668 = vunpack.c.h.b16 %v100
  %v669 = vunpack.c.l.b16 %v101
  %v670 = vunpack.c.l.b16 %v102
  %v671 = vunpack.c.h.b16 %v102
  %v672 = vunpack.c.l.b16 %v103
  %v673 = vunpack.c.h.b16 %v103
  %v674 = vunpack.c.l.b16 %v104
  %v675 = vunpack.c.l.b16 %v105
  %v676 = vunpack.c.h.b16 %v105
  %v677 = vunpack.c.l.b16 %v106
  %v678 = vunpack.c.h.b16 %v106
  %v679 = vunpack.c.l.b16 %v107
  %v680 = vunpack.c.l.b16 %v108
  %v681 = vunpack.c.h.b16 %v108
  %v682 = vunpack.c.l.b16 %v109
  %v683 = vunpack.c.h.b16 %v109
  %v684 = vunpack.c.l.b16 %v110
  %v685 = vunpack.c.l.b16 %v111
  %v686 = vunpack.c.h.b16 %v111
  %v687 = vunpack.c.l.b16 %v112
  %v688 = vunpack.c.h.b16 %v112
  %v689 = vunpack.c.l.b16 %v113
  %v690 = vunpack.c.l.b16 %v114
  %v691 = vunpack.c.h.b16 %v114
  %v692 = vunpack.c.l.b16 %v115
  %v693 = vunpack.c.h.b16 %v115
  %v694 = vunpack.c.l.b16 %v116
  %v695 = vunpack.c.l.b16 %v117
  %v696 = vunpack.c.h.b16 %v117
  %v697 = vunpack.c.l.b16 %v118
  %v698 = vunpack.c.h.b16 %v118
  %v699 = vunpack.c.l.b16 %v119
  %v700 = vunpack.c.l.b16 %v120
  %v701 = vunpack.c.h.b16 %v120
  %v702 = vunpack.c.l.b16 %v121
  %v703 = vunpack.c.h.b16 %v121
  %v704 = vunpack.c.l.b16 %v122
  %v705 = vunpack.c.l.b16 %v123
  %v706 = vunpack.c.h.b16 %v123
  %v707 = vunpack.c.l.b16 %v124
  %v708 = vunpack.c.h.b16 %v124
  %v709 = vunpack.c.l.b16 %v125
  %v710 = vunpack.c.l.b16 %v126
  %v711 = vunpack.c.h.b16 %v126
  %v712 = vunpack.c.l.b16 %v127
  %v713 = vunpack.c.h.b16 %v127
  %v714 = vunpack.c.l.b16 %v128
  %v715 = vunpack.c.l.b16 %v129
  %v716 = vunpack.c.h.b16 %v129
  %v717 = vunpack.c.l.b16 %v130
  %v718 = vunpack.c.h.b16 %v130
  %v719 = vunpack.c.l.b16 %v131
  %v720 = vunpack.c.l.b16 %v132
  %v721 = vunpack.c.h.b16 %v132
  %v722 = vunpack.c.l.b16 %v133
  %v723 = vunpack.c.h.b16 %v133
  %v724 = vunpack.c.l.b16 %v134
  %v725 = vunpack.c.l.b16 %v135
  %v726 = vunpack.c.h.b16 %v135
  %v727 = vunpack.c.l.b16 %v136
  %v728 = vunpack.c.h.b16 %v136
  %v729 = vunpack.c.l.b16 %v137
  %v730 = vunpack.c.l.b16 %v138
  %v731 = vunpack.c.h.b16 %v138
  %v732 = vunpack.c.l.b16 %v139
  %v733 = vunpack.c.h.b16 %v139
  %v734 = vunpack.c.l.b16 %v140
  %v735 = vunpack.c.l.b16 %v141
  %v736 = vunpack.c.h.b16 %v141
  %v737 = vunpack.c.l.b16 %v142
  %v738 = vunpack.c.h.b16 %v142
  %v739 = vunpack.c.l.b16 %v143
  %v740 = vunpack.c.l.b16 %v144
  %v741 = vunpack.c.h.b16 %v144
  %v742 = vunpack.c.l.b16 %v145
  %v743 = vunpack.c.h.b16 %v145
  %v744 = vunpack.c.l.b16 %v146
  %v745 = vunpack.c.l.b16 %v147
  %v746 = vunpack.c.h.b16 %v147
  %v747 = vunpack.c.l.b16 %v148
  %v748 = vunpack.c.h.b16 %v148
  %v749 = vunpack.c.l.b16 %v149
  %v750 = vunpack.c.l.b16 %v150
  %v751 = vunpack.c.h.b16 %v150
  %v752 = vunpack.c.l.b16 %v151
  %v753 = vunpack.c.h.b16 %v151
  %v754 = vunpack.c.l.b16 %v152
  %v755 = vunpack.c.l.b16 %v153
  %v756 = vunpack.c.h.b16 %v153
  %v757 = vunpack.c.l.b16 %v154
  %v758 = vunpack.c.h.b16 %v154
  %v759 = vunpack.c.l.b16 %v155
  %v760 = vunpack.c.l.b16 %v156
  %v761 = vunpack.c.h.b16 %v156
  %v762 = vunpack.c.l.b16 %v157
  %v763 = vunpack.c.h.b16 %v157
  %v764 = vunpack.c.l.b16 %v158
  %v765 = vunpack.c.l.b16 %v159
  %v766 = vunpack.c.h.b16 %v159
  %v767 = vunpack.c.l.b16 %v160
  %v768 = vunpack.c.h.b16 %v160
  %v769 = vunpack.c.l.b16 %v161
  %v770 = vunpack.c.l.b16 %v162
  %v771 = vunpack.c.h.b16 %v162
  %v772 = vunpack.c.l.b16 %v163
  %v773 = vunpack.c.h.b16 %v163
  %v774 = vunpack.c.l.b16 %v164
  %v775 = vunpack.c.l.b16 %v165
  %v776 = vunpack.c.h.b16 %v165
  %v777 = vunpack.c.l.b16 %v166
  %v778 = vunpack.c.h.b16 %v166
  %v779 = vunpack.c.l.b16 %v167
  %v780 = vunpack.c.l.b16 %v168
  %v781 = vunpack.c.h.b16 %v168
  %v782 = vunpack.c.l.b16 %v169
  %v783 = vunpack.c.h.b16 %v169
  %v784 = vunpack.c.l.b16 %v170
  %v785 = vunpack.c.l.b16 %v171
  %v786 = vunpack.c.h.b16 %v171
  %v787 = vunpack.c.l.b16 %v172
  %v788 = vunpack.c.h.b16 %v172
  %v789 = vunpack.c.l.b16 %v173
  %v790 = vunpack.c.l.b16 %v174
  %v791 = vunpack.c.h.b16 %v174
  %v792 = vunpack.c.l.b16 %v175
  %v793 = vunpack.c.h.b16 %v175
  %v794 = vunpack.c.l.b16 %v176
  %v795 = vunpack.c.l.b16 %v177
  %v796 = vunpack.c.h.b16 %v177
  %v797 = vunpack.c.l.b16 %v178
  %v798 = vunpack.c.h.b16 %v178
  %v799 = vunpack.c.l.b16 %v179
  %v800 = vunpack.c.l.b16 %v180
  %v801 = vunpack.c.h.b16 %v180
  %v802 = vunpack.c.l.b16 %v181
  %v803 = vunpack.c.h.b16 %v181
  %v804 = vunpack.c.l.b16 %v182
  %v805 = vunpack.c.l.b16 %v183
  %v806 = vunpack.c.h.b16 %v183
  %v807 = vunpack.c.l.b16 %v184
  %v808 = vunpack.c.h.b16 %v184
  %v809 = vunpack.c.l.b16 %v185
  %v810 = vunpack.c.l.b16 %v186
  %v811 = vunpack.c.h.b16 %v186
  %v812 = vunpack.c.l.b16 %v187
  %v813 = vunpack.c.h.b16 %v187
  %v814 = vunpack.c.l.b16 %v188
  %v815 = vunpack.c.l.b16 %v189
  %v816 = vunpack.c.h.b16 %v189
  %v817 = vunpack.c.l.b16 %v190
  %v818 = vunpack.c.h.b16 %v190
  %v819 = vunpack.c.l.b16 %v191
  %v820 = vunpack.c.l.b16 %v192
  %v821 = vunpack.c.h.b16 %v192
  %v822 = vunpack.c.l.b16 %v193
  %v823 = vunpack.c.h.b16 %v193
  %v824 = vunpack.c.l.b16 %v194
  %v825 = vunpack.c.l.b16 %v195
  %v826 = vunpack.c.h.b16 %v195
  %v827 = vunpack.c.l.b16 %v196
  %v828 = vunpack.c.h.b16 %v196
  %v829 = vunpack.c.l.b16 %v197
  %v830 = vunpack.c.l.b16 %v198
  %v831 = vunpack.c.h.b16 %v198
  %v832 = vunpack.c.l.b16 %v199
  %v833 = vunpack.c.h.b16 %v199
  %v834 = vunpack.c.l.b16 %v200
  %v835 = vunpack.c.l.b16 %v201
  %v836 = vunpack.c.h.b16 %v201
  %v837 = vunpack.c.l.b16 %v202
  %v838 = vunpack.c.h.b16 %v202
  %v839 = vunpack.c.l.b16 %v203
  %v840 = vunpack.c.l.b16 %v204
  %v841 = vunpack.c.h.b16 %v204
  %v842 = vunpack.c.l.b16 %v205
  %v843 = vunpack.c.h.b16 %v205
  %v844 = vunpack.c.l.b16 %v206
  %v845 = vunpack.c.l.b16 %v207
  %v846 = vunpack.c.h.b16 %v207
  %v847 = vunpack.c.l.b16 %v208
  %v848 = vunpack.c.h.b16 %v208
  %v849 = vunpack.c.l.b16 %v209
  %v850 = vunpack.c.l.b16 %v210
  %v851 = vunpack.c.h.b16 %v210
  %v852 = vunpack.c.l.b16 %v211
  %v853 = vunpack.c.h.b16 %v211
  %v854 = vunpack.c.l.b16 %v212
  %v855 = vunpack.c.l.b16 %v213
  %v856 = vunpack.c.h.b16 %v213
  %v857 = vunpack.c.l.b16 %v214
  %v858 = vunpack.c.h.b16 %v214
  %v859 = vunpack.c.l.b16 %v215
  %v860 = vunpack.c.l.b16 %v216
  %v861 = vunpack.c.h.b16 %v216
  %v862 = vunpack.c.l.b16 %v217
  %v863 = vunpack.c.h.b16 %v217
  %v864 = vunpack.c.l.b16 %v218
  %v865 = vunpack.c.l.b16 %v219
  %v866 = vunpack.c.h.b16 %v219
  %v867 = vunpack.c.l.b16 %v220
  %v868 = vunpack.c.h.b16 %v220
  %v869 = vunpack.c.l.b16 %v221
  %v870 = vunpack.c.l.b16 %v222
  %v871 = vunpack.c.h.b16 %v222
  %v872 = vunpack.c.l.b16 %v223
  %v873 = vunpack.c.h.b16 %v223
  %v874 = vunpack.c.l.b16 %v224
  %v875 = vunpack.c.l.b16 %v225
  %v876 = vunpack.c.h.b16 %v225
  %v877 = vunpack.c.l.b16 %v226
  %v878 = vunpack.c.h.b16 %v226
  %v879 = vunpack.c.l.b16 %v227
  %v880 = vunpack.c.l.b16 %v228
  %v881 = vunpack.c.h.b16 %v228
  %v882 = vunpack.c.l.b16 %v229
  %v883 = vunpack.c.h.b16 %v229
  %v884 = vunpack.c.l.b16 %v230
  %v885 = vunpack.c.l.b16 %v231
  %v886 = vunpack.c.h.b16 %v231
  %v887 = vunpack.c.l.b16 %v232
  %v888 = vunpack.c.h.b16 %v232
  %v889 = vunpack.c.l.b16 %v233
  %v890 = vpack.c.b16 %v535, %v530
  %v891 = vpack.c.b16 %v536, %v531
  %v892 = vpack.c.b16 %v537, %v532
  %v893 = vpack.c.b16 %v538, %v533
  %v894 = vpack.c.b16 %v539, %v534
  %v895 = vpack.c.b16 %v545, %v540
  %v896 = vpack.c.b16 %v546, %v541
  %v897 = vpack.c.b16 %v547, %v542
  %v898 = vpack.c.b16 %v548, %v543
  %v899 = vpack.c.b16 %v549, %v544
  %v900 = vpack.c.b16 %v555, %v550
  %v901 = vpack.c.b16 %v556, %v551
  %v902 = vpack.c.b16 %v557, %v552
  %v903 = vpack.c.b16 %v558, %v553
  %v904 = vpack.c.b16 %v559, %v554
  %v905 = vpack.c.b16 %v565, %v560
  %v906 = vpack.c.b16 %v566, %v561
  %v907 = vpack.c.b16 %v567, %v562
  %v908 = vpack.c.b16 %v568, %v563
  %v909 = vpack.c.b16 %v569, %v564
  %v910 = vpack.c.b16 %v575, %v570
  %v911 = vpack.c.b16 %v576, %v571
  %v912 = vpack.c.b16 %v577, %v572
  %v913 = vpack.c.b16 %v578, %v573
  %v914 = vpack.c.b16 %v579, %v574
  %v915 = vpack.c.b16 %v585, %v580
  %v916 = vpack.c.b16 %v586, %v581
  %v917 = vpack.c.b16 %v587, %v582
  %v918 = vpack.c.b16 %v588, %v583
  %v919 = vpack.c.b16 %v589, %v584
  %v920 = vpack.c.b16 %v595, %v590
  %v921 = vpack.c.b16 %v596, %v591
  %v922 = vpack.c.b16 %v597, %v592
  %v923 = vpack.c.b16 %v598, %v593
  %v924 = vpack.c.b16 %v599, %v594
  %v925 = vpack.c.b16 %v605, %v600
  %v926 = vpack.c.b16 %v606, %v601
  %v927 = vpack.c.b16 %v607, %v602
  %v928 = vpack.c.b16 %v608, %v603
  %v929 = vpack.c.b16 %v609, %v604
  %v930 = vpack.c.b16 %v615, %v610
  %v931 = vpack.c.b16 %v616, %v611
  %v932 = vpack.c.b16 %v617, %v612
  %v933 = vpack.c.b16 %v618, %v613
  %v934 = vpack.c.b16 %v619, %v614
  %v935 = vpack.c.b16 %v625, %v620
  %v936 = vpack.c.b16 %v626, %v621
  %v937 = vpack.c.b16 %v627, %v622
  %v938 = vpack.c.b16 %v628, %v623
  %v939 = vpack.c.b16 %v629, %v624
  %v940 = vpack.c.b16 %v635, %v630
  %v941 = vpack.c.b16 %v636, %v631
  %v942 = vpack.c.b16 %v637, %v632
  %v943 = vpack.c.b16 %v638, %v633
  %v944 = vpack.c.b16 %v639, %v634
  %v945 = vpack.c.b16 %v645, %v640
  %v946 = vpack.c.b16 %v646, %v641
  %v947 = vpack.c.b16 %v647, %v642
  %v948 = vpack.c.b16 %v648, %v643
  %v949 = vpack.c.b16 %v649, %v644
  %v950 = vpack.c.b16 %v655, %v650
  %v951 = vpack.c.b16 %v656, %v651
  %v952 = vpack.c.b16 %v657, %v652
  %v953 = vpack.c.b16 %v658, %v653
  %v954 = vpack.c.b16 %v659, %v654
  %v955 = vpack.c.b16 %v665, %v660
  %v956 = vpack.c.b16 %v666, %v661
  %v957 = vpack.c.b16 %v667, %v662
  %v958 = vpack.c.b16 %v668, %v663
  %v959 = vpack.c.b16 %v669, %v664
  %v960 = vpack.c.b16 %v675, %v670
  %v961 = vpack.c.b16 %v676, %v671
  %v962 = vpack.c.b16 %v677, %v672
  %v963 = vpack.c.b16 %v678, %v673
  %v964 = vpack.c.b16 %v679, %v674
  %v965 = vpack.c.b16 %v685, %v680
  %v966 = vpack.c.b16 %v686, %v681
  %v967 = vpack.c.b16 %v687, %v682
  %v968 = vpack.c.b16 %v688, %v683
  %v969 = vpack.c.b16 %v689, %v684
  %v970 = vpack.c.b16 %v695, %v690
  %v971 = vpack.c.b16 %v696, %v691
  %v972 = vpack.c.b16 %v697, %v692
  %v973 = vpack.c.b16 %v698, %v693
  %v974 = vpack.c.b16 %v699, %v694
  %v975 = vpack.c.b16 %v705, %v700
  %v976 = vpack.c.b16 %v706, %v701
  %v977 = vpack.c.b16 %v707, %v702
  %v978 = vpack.c.b16 %v708, %v703
  %v979 = vpack.c.b16 %v709, %v704
  %v980 = vpack.c.b16 %v715, %v710
  %v981 = vpack.c.b16 %v716, %v711
  %v982 = vpack.c.b16 %v717, %v712
  %v983 = vpack.c.b16 %v718, %v713
  %v984 = vpack.c.b16 %v719, %v714
  %v985 = vpack.c.b16 %v725, %v720
  %v986 = vpack.c.b16 %v726, %v721
  %v987 = vpack.c.b16 %v727, %v722
  %v988 = vpack.c.b16 %v728, %v723
  %v989 = vpack.c.b16 %v729, %v724
  %v990 = vpack.c.b16 %v735, %v730
  %v991 = vpack.c.b16 %v736, %v731
  %v992 = vpack.c.b16 %v737, %v732
  %v993 = vpack.c.b16 %v738, %v733
  %v994 = vpack.c.b16 %v739, %v734
  %v995 = vpack.c.b16 %v745, %v740
  %v996 = vpack.c.b16 %v746, %v741
  %v997 = vpack.c.b16 %v747, %v742
  %v998 = vpack.c.b16 %v748, %v743
  %v999 = vpack.c.b16 %v749, %v744
  %v1000 = vpack.c.b16 %v755, %v750
  %v1001 = vpack.c.b16 %v756, %v751
  %v1002 = vpack.c.b16 %v757, %v752
  %v1003 = vpack.c.b16 %v758, %v753
  %v1004 = vpack.c.b16 %v759, %v754
  %v1005 = vpack.c.b16 %v765, %v760
  %v1006 = vpack.c.b16 %v766, %v761
  %v1007 = vpack.c.b16 %v767, %v762
  %v1008 = vpack.c.b16 %v768, %v763
  %v1009 = vpack.c.b16 %v769, %v764
  %v1010 = vpack.c.b16 %v775, %v770
  %v1011 = vpack.c.b16 %v776, %v771
  %v1012 = vpack.c.b16 %v777, %v772
  %v1013 = vpack.c.b16 %v778, %v773
  %v1014 = vpack.c.b16 %v779, %v774
  %v1015 = vpack.c.b16 %v785, %v780
  %v1016 = vpack.c.b16 %v786, %v781
  %v1017 = vpack.c.b16 %v787, %v782
  %v1018 = vpack.c.b16 %v788, %v783
  %v1019 = vpack.c.b16 %v789, %v784
  %v1020 = vpack.c.b16 %v795, %v790
  %v1021 = vpack.c.b16 %v796, %v791
  %v1022 = vpack.c.b16 %v797, %v792
  %v1023 = vpack.c.b16 %v798, %v793
  %v1024 = vpack.c.b16 %v799, %v794
  %v1025 = vpack.c.b16 %v805, %v800
  %v1026 = vpack.c.b16 %v806, %v801
  %v1027 = vpack.c.b16 %v807, %v802
  %v1028 = vpack.c.b16 %v808, %v803
  %v1029 = vpack.c.b16 %v809, %v804
  %v1030 = vpack.c.b16 %v815, %v810
  %v1031 = vpack.c.b16 %v816, %v811
  %v1032 = vpack.c.b16 %v817, %v812
  %v1033 = vpack.c.b16 %v818, %v813
  %v1034 = vpack.c.b16 %v819, %v814
  %v1035 = vpack.c.b16 %v825, %v820
  %v1036 = vpack.c.b16 %v826, %v821
  %v1037 = vpack.c.b16 %v827, %v822
  %v1038 = vpack.c.b16 %v828, %v823
  %v1039 = vpack.c.b16 %v829, %v824
  %v1040 = vpack.c.b16 %v835, %v830
  %v1041 = vpack.c.b16 %v836, %v831
  %v1042 = vpack.c.b16 %v837, %v832
  %v1043 = vpack.c.b16 %v838, %v833
  %v1044 = vpack.c.b16 %v839, %v834
  %v1045 = vpack.c.b16 %v845, %v840
  %v1046 = vpack.c.b16 %v846, %v841
  %v1047 = vpack.c.b16 %v847, %v842
  %v1048 = vpack.c.b16 %v848, %v843
  %v1049 = vpack.c.b16 %v849, %v844
  %v1050 = vpack.c.b16 %v855, %v850
  %v1051 = vpack.c.b16 %v856, %v851
  %v1052 = vpack.c.b16 %v857, %v852
  %v1053 = vpack.c.b16 %v858, %v853
  %v1054 = vpack.c.b16 %v859, %v854
  %v1055 = vpack.c.b16 %v865, %v860
  %v1056 = vpack.c.b16 %v866, %v861
  %v1057 = vpack.c.b16 %v867, %v862
  %v1058 = vpack.c.b16 %v868, %v863
  %v1059 = vpack.c.b16 %v869, %v864
  %v1060 = vpack.c.b16 %v875, %v870
  %v1061 = vpack.c.b16 %v876, %v871
  %v1062 = vpack.c.b16 %v877, %v872
  %v1063 = vpack.c.b16 %v878, %v873
  %v1064 = vpack.c.b16 %v879, %v874
  %v1065 = vpack.c.b16 %v885, %v880
  %v1066 = vpack.c.b16 %v886, %v881
  %v1067 = vpack.c.b16 %v887, %v882
  %v1068 = vpack.c.b16 %v888, %v883
  %v1069 = vpack.c.b16 %v889, %v884
  %v1330 = vunpack.c.l.b16 %v234
  %v1331 = vunpack.c.l.b16 %v235
  %v1332 = vunpack.c.l.b16 %v236
  %v1333 = vunpack.c.l.b16 %v237
  %v1334 = vunpack.c.l.b16 %v238
  %v1335 = vunpack.c.l.b16 %v239
  %v1336 = vunpack.c.l.b16 %v240
  %v1337 = vunpack.c.l.b16 %v241
  %v1338 = vunpack.c.l.b16 %v242
  %v1339 = vunpack.c.l.b16 %v243
  %v1340 = vunpack.c.l.b16 %v244
  %v1341 = vunpack.c.l.b16 %v245
  %v1342 = vunpack.c.l.b16 %v246
  %v1343 = vunpack.c.l.b16 %v247
  %v1344 = vunpack.c.l.b16 %v248
  %v1345 = vunpack.c.l.b16 %v249
  %v1346 = vunpack.c.l.b16 %v250
  %v1347 = vunpack.c.l.b16 %v251
  %v1348 = vunpack.c.l.b16 %v252
  %v1349 = vunpack.c.l.b16 %v253
  %v1350 = vunpack.c.l.b16 %v254
  %v1351 = vunpack.c.l.b16 %v255
  %v1352 = vunpack.c.l.b16 %v256
  %v1353 = vunpack.c.l.b16 %v257
  %v1354 = vunpack.c.l.b16 %v258
  %v1355 = vunpack.c.l.b16 %v259
  %v1356 = vunpack.c.l.b16 %v260
  %v1357 = vunpack.c.l.b16 %v261
  %v1358 = vunpack.c.l.b16 %v262
  %v1359 = vunpack.c.l.b16 %v263
  %v1360 = vunpack.c.l.b16 %v264
  %v1361 = vunpack.c.l.b16 %v265
  %v1362 = vunpack.c.l.b16 %v266
  %v1363 = vunpack.c.l.b16 %v267
  %v1364 = vunpack.c.l.b16 %v268
  %v1365 = vunpack.c.l.b16 %v269
  %v1366 = vunpack.c.l.b16 %v270
  %v1367 = vunpack.c.l.b16 %v271
  %v1368 = vunpack.c.l.b16 %v272
  %v1369 = vunpack.c.l.b16 %v273
  %v1370 = vunpack.c.l.b16 %v274
  %v1371 = vunpack.c.l.b16 %v275
  %v1372 = vunpack.c.l.b16 %v276
  %v1373 = vunpack.c.l.b16 %v277
  %v1374 = vunpack.c.l.b16 %v278
  %v1375 = vunpack.c.l.b16 %v279
  %v1376 = vunpack.c.l.b16 %v280
  %v1377 = vunpack.c.l.b16 %v281
  %v1378 = vunpack.c.l.b16 %v282
  %v1379 = vunpack.c.l.b16 %v283
  %v1380 = vunpack.c.l.b16 %v284
  %v1381 = vunpack.c.l.b16 %v285
  %v1382 = vunpack.c.l.b16 %v286
  %v1383 = vunpack.c.l.b16 %v287
  %v1384 = vunpack.c.l.b16 %v288
  %v1385 = vunpack.c.l.b16 %v289
  %v1386 = vunpack.c.l.b16 %v290
  %v1387 = vunpack.c.l.b16 %v291
  %v1388 = vunpack.c.l.b16 %v292
  %v1389 = vunpack.c.l.b16 %v293
  %v1390 = vunpack.c.l.b16 %v294
  %v1391 = vunpack.c.l.b16 %v295
  %v1392 = vunpack.c.l.b16 %v296
  %v1393 = vunpack.c.l.b16 %v297
  %v1394 = vunpack.c.l.b16 %v298
  %v1395 = vunpack.c.l.b16 %v299
  %v1396 = vunpack.c.l.b16 %v300
  %v1397 = vunpack.c.l.b16 %v301
  %v1398 = vunpack.c.l.b16 %v302
  %v1399 = vunpack.c.l.b16 %v303
  %v1400 = vunpack.c.l.b16 %v304
  %v1401 = vunpack.c.l.b16 %v305
  %v1402 = vunpack.c.l.b16 %v306
  %v1403 = vunpack.c.l.b16 %v307
  %v1404 = vunpack.c.l.b16 %v308
  %v1405 = vunpack.c.l.b16 %v309
  %v1406 = vunpack.c.l.b16 %v310
  %v1407 = vunpack.c.l.b16 %v311
  %v1408 = vunpack.c.l.b16 %v312
  %v1409 = vunpack.c.l.b16 %v313
  %v1410 = vpack.c.b16 %v1331, %v1330
  %v1411 = vpack.c.b16 %v1333, %v1332
  %v1412 = vpack.c.b16 %v1335, %v1334
  %v1413 = vpack.c.b16 %v1337, %v1336
  %v1414 = vpack.c.b16 %v1339, %v1338
  %v1415 = vpack.c.b16 %v1341, %v1340
  %v1416 = vpack.c.b16 %v1343, %v1342
  %v1417 = vpack.c.b16 %v1345, %v1344
  %v1418 = vpack.c.b16 %v1347, %v1346
  %v1419 = vpack.c.b16 %v1349, %v1348
  %v1420 = vpack.c.b16 %v1351, %v1350
  %v1421 = vpack.c.b16 %v1353, %v1352
  %v1422 = vpack.c.b16 %v1355, %v1354
  %v1423 = vpack.c.b16 %v1357, %v1356
  %v1424 = vpack.c.b16 %v1359, %v1358
  %v1425 = vpack.c.b16 %v1361, %v1360
  %v1426 = vpack.c.b16 %v1363, %v1362
  %v1427 = vpack.c.b16 %v1365, %v1364
  %v1428 = vpack.c.b16 %v1367, %v1366
  %v1429 = vpack.c.b16 %v1369, %v1368
  %v1430 = vpack.c.b16 %v1371, %v1370
  %v1431 = vpack.c.b16 %v1373, %v1372
  %v1432 = vpack.c.b16 %v1375, %v1374
  %v1433 = vpack.c.b16 %v1377, %v1376
  %v1434 = vpack.c.b16 %v1379, %v1378
  %v1435 = vpack.c.b16 %v1381, %v1380
  %v1436 = vpack.c.b16 %v1383, %v1382
  %v1437 = vpack.c.b16 %v1385, %v1384
  %v1438 = vpack.c.b16 %v1387, %v1386
  %v1439 = vpack.c.b16 %v1389, %v1388
  %v1440 = vpack.c.b16 %v1391, %v1390
  %v1441 = vpack.c.b16 %v1393, %v1392
  %v1442 = vpack.c.b16 %v1395, %v1394
  %v1443 = vpack.c.b16 %v1397, %v1396
  %v1444 = vpack.c.b16 %v1399, %v1398
  %v1445 = vpack.c.b16 %v1401, %v1400
  %v1446 = vpack.c.b16 %v1403, %v1402
  %v1447 = vpack.c.b16 %v1405, %v1404
  %v1448 = vpack.c.b16 %v1407, %v1406
  %v1449 = vpack.c.b16 %v1409, %v1408
  %1490 = vmatprep.subr.bf16.mxu0 0
  %1491 = vmatpush1.bf16.msra.mxu0 %v1410
  %1492 = vmatprep.subr.bf16.mxu0 0
  %1493 = vmatpush1.bf16.msra.mxu0 %v1411
  %1494 = vmatprep.subr.bf16.mxu0 0
  %1495 = vmatpush1.bf16.msra.mxu0 %v1412
  %1496 = vmatprep.subr.bf16.mxu0 0
  %1497 = vmatpush1.bf16.msra.mxu0 %v1413
  %1498 = vmatprep.subr.bf16.mxu0 0
  %1499 = vmatpush1.bf16.msra.mxu0 %v1414
  %1500 = vmatprep.subr.bf16.mxu0 0
  %1501 = vmatpush1.bf16.msra.mxu0 %v1415
  %1502 = vmatprep.subr.bf16.mxu0 0
  %1503 = vmatpush1.bf16.msra.mxu0 %v1416
  %1504 = vmatprep.subr.bf16.mxu0 0
  %1505 = vmatpush1.bf16.msra.mxu0 %v1417
  %1506 = vmatprep.subr.bf16.mxu0 0
  %1507 = vmatpush1.bf16.msra.mxu0 %v1418
  %1508 = vmatprep.subr.bf16.mxu0 0
  %1509 = vmatpush1.bf16.msra.mxu0 %v1419
  %1510 = vmatprep.subr.bf16.mxu0 0
  %1511 = vmatpush1.bf16.msra.mxu0 %v1420
  %1512 = vmatprep.subr.bf16.mxu0 0
  %1513 = vmatpush1.bf16.msra.mxu0 %v1421
  %1514 = vmatprep.subr.bf16.mxu0 0
  %1515 = vmatpush1.bf16.msra.mxu0 %v1422
  %1516 = vmatprep.subr.bf16.mxu0 0
  %1517 = vmatpush1.bf16.msra.mxu0 %v1423
  %1518 = vmatprep.subr.bf16.mxu0 0
  %1519 = vmatpush1.bf16.msra.mxu0 %v1424
  %1520 = vmatprep.subr.bf16.mxu0 0
  %1521 = vmatpush1.bf16.msra.mxu0 %v1425
  %1522 = vmatprep.mubr.bf16.mxu0 %v891
  %1523 = vmatmul.mubr.bf16.gmra.mrb[0].mxu0 %v890
  %v1524 = vpop.f32.mrb[0].mxu0
  %v1525 = vadd.f32 0.0, %v1524
  %v1526 = vpop.f32.mrb[0].mxu0
  %v1527 = vpop.f32.mrb[0].mxu0
  %v1528 = vadd.f32 0.0, %v1527
  %v1529 = vpop.f32.mrb[0].mxu0
  %1530 = vmatprep.mubr.bf16.mxu0 %v896
  %1531 = vmatmul.mubr.bf16.gmra.mrb[0].mxu0 %v895
  %v1532 = vpop.f32.mrb[0].mxu0
  %v1533 = vadd.f32 0.0, %v1532
  %v1534 = vpop.f32.mrb[0].mxu0
  %v1535 = vpop.f32.mrb[0].mxu0
  %v1536 = vadd.f32 0.0, %v1535
  %v1537 = vpop.f32.mrb[0].mxu0
  %1538 = vmatprep.mubr.bf16.mxu0 %v901
  %1539 = vmatmul.mubr.bf16.gmra.mrb[0].mxu0 %v900
  %v1540 = vpop.f32.mrb[0].mxu0
  %v1541 = vadd.f32 0.0, %v1540
  %v1542 = vpop.f32.mrb[0].mxu0
  %v1543 = vpop.f32.mrb[0].mxu0
  %v1544 = vadd.f32 0.0, %v1543
  %v1545 = vpop.f32.mrb[0].mxu0
  %1546 = vmatprep.mubr.bf16.mxu0 %v906
  %1547 = vmatmul.mubr.bf16.gmra.mrb[0].mxu0 %v905
  %v1548 = vpop.f32.mrb[0].mxu0
  %v1549 = vadd.f32 0.0, %v1548
  %v1550 = vpop.f32.mrb[0].mxu0
  %v1551 = vpop.f32.mrb[0].mxu0
  %v1552 = vadd.f32 0.0, %v1551
  %v1553 = vpop.f32.mrb[0].mxu0
  %1554 = vmatprep.mubr.bf16.mxu0 %v911
  %1555 = vmatmul.mubr.bf16.gmra.mrb[0].mxu0 %v910
  %v1556 = vpop.f32.mrb[0].mxu0
  %v1557 = vadd.f32 0.0, %v1556
  %v1558 = vpop.f32.mrb[0].mxu0
  %v1559 = vpop.f32.mrb[0].mxu0
  %v1560 = vadd.f32 0.0, %v1559
  %v1561 = vpop.f32.mrb[0].mxu0
  %1562 = vmatprep.mubr.bf16.mxu0 %v916
  %1563 = vmatmul.mubr.bf16.gmra.mrb[0].mxu0 %v915
  %v1564 = vpop.f32.mrb[0].mxu0
  %v1565 = vadd.f32 0.0, %v1564
  %v1566 = vpop.f32.mrb[0].mxu0
  %v1567 = vpop.f32.mrb[0].mxu0
  %v1568 = vadd.f32 0.0, %v1567
  %v1569 = vpop.f32.mrb[0].mxu0
  %1570 = vmatprep.mubr.bf16.mxu0 %v921
  %1571 = vmatmul.mubr.bf16.gmra.mrb[0].mxu0 %v920
  %v1572 = vpop.f32.mrb[0].mxu0
  %v1573 = vadd.f32 0.0, %v1572
  %v1574 = vpop.f32.mrb[0].mxu0
  %v1575 = vpop.f32.mrb[0].mxu0
  %v1576 = vadd.f32 0.0, %v1575
  %v1577 = vpop.f32.mrb[0].mxu0
  %1578 = vmatprep.mubr.bf16.mxu0 %v926
  %1579 = vmatmul.mubr.bf16.gmra.mrb[0].mxu0 %v925
  %v1580 = vpop.f32.mrb[0].mxu0
  %v1581 = vadd.f32 0.0, %v1580
  %v1582 = vpop.f32.mrb[0].mxu0
  %v1583 = vpop.f32.mrb[0].mxu0
  %v1584 = vadd.f32 0.0, %v1583
  %v1585 = vpop.f32.mrb[0].mxu0
  %1586 = vmatprep.mubr.bf16.mxu0 %v931
  %1587 = vmatmul.mubr.bf16.gmra.mrb[0].mxu0 %v930
  %v1588 = vpop.f32.mrb[0].mxu0
  %v1589 = vadd.f32 0.0, %v1588
  %v1590 = vpop.f32.mrb[0].mxu0
  %v1591 = vpop.f32.mrb[0].mxu0
  %v1592 = vadd.f32 0.0, %v1591
  %v1593 = vpop.f32.mrb[0].mxu0
  %1594 = vmatprep.mubr.bf16.mxu0 %v936
  %1595 = vmatmul.mubr.bf16.gmra.mrb[0].mxu0 %v935
  %v1596 = vpop.f32.mrb[0].mxu0
  %v1597 = vadd.f32 0.0, %v1596
  %v1598 = vpop.f32.mrb[0].mxu0
  %v1599 = vpop.f32.mrb[0].mxu0
  %v1600 = vadd.f32 0.0, %v1599
  %v1601 = vpop.f32.mrb[0].mxu0
  %1602 = vmatprep.mubr.bf16.mxu0 %v941
  %1603 = vmatmul.mubr.bf16.gmra.mrb[0].mxu0 %v940
  %v1604 = vpop.f32.mrb[0].mxu0
  %v1605 = vadd.f32 0.0, %v1604
  %v1606 = vpop.f32.mrb[0].mxu0
  %v1607 = vpop.f32.mrb[0].mxu0
  %v1608 = vadd.f32 0.0, %v1607
  %v1609 = vpop.f32.mrb[0].mxu0
  %1610 = vmatprep.mubr.bf16.mxu0 %v946
  %1611 = vmatmul.mubr.bf16.gmra.mrb[0].mxu0 %v945
  %v1612 = vpop.f32.mrb[0].mxu0
  %v1613 = vadd.f32 0.0, %v1612
  %v1614 = vpop.f32.mrb[0].mxu0
  %v1615 = vpop.f32.mrb[0].mxu0
  %v1616 = vadd.f32 0.0, %v1615
  %v1617 = vpop.f32.mrb[0].mxu0
  %1618 = vmatprep.mubr.bf16.mxu0 %v951
  %1619 = vmatmul.mubr.bf16.gmra.mrb[0].mxu0 %v950
  %v1620 = vpop.f32.mrb[0].mxu0
  %v1621 = vadd.f32 0.0, %v1620
  %v1622 = vpop.f32.mrb[0].mxu0
  %v1623 = vpop.f32.mrb[0].mxu0
  %v1624 = vadd.f32 0.0, %v1623
  %v1625 = vpop.f32.mrb[0].mxu0
  %1626 = vmatprep.mubr.bf16.mxu0 %v956
  %1627 = vmatmul.mubr.bf16.gmra.mrb[0].mxu0 %v955
  %v1628 = vpop.f32.mrb[0].mxu0
  %v1629 = vadd.f32 0.0, %v1628
  %v1630 = vpop.f32.mrb[0].mxu0
  %v1631 = vpop.f32.mrb[0].mxu0
  %v1632 = vadd.f32 0.0, %v1631
  %v1633 = vpop.f32.mrb[0].mxu0
  %1634 = vmatprep.mubr.bf16.mxu0 %v961
  %1635 = vmatmul.mubr.bf16.gmra.mrb[0].mxu0 %v960
  %v1636 = vpop.f32.mrb[0].mxu0
  %v1637 = vadd.f32 0.0, %v1636
  %v1638 = vpop.f32.mrb[0].mxu0
  %v1639 = vpop.f32.mrb[0].mxu0
  %v1640 = vadd.f32 0.0, %v1639
  %v1641 = vpop.f32.mrb[0].mxu0
  %1642 = vmatprep.mubr.bf16.mxu0 %v966
  %1643 = vmatmul.mubr.bf16.gmra.mrb[0].mxu0 %v965
  %v1644 = vpop.f32.mrb[0].mxu0
  %v1645 = vadd.f32 0.0, %v1644
  %v1646 = vpop.f32.mrb[0].mxu0
  %v1647 = vpop.f32.mrb[0].mxu0
  %v1648 = vadd.f32 0.0, %v1647
  %v1649 = vpop.f32.mrb[0].mxu0
  %1650 = vmatprep.mubr.bf16.mxu0 %v971
  %1651 = vmatmul.mubr.bf16.gmra.mrb[0].mxu0 %v970
  %v1652 = vpop.f32.mrb[0].mxu0
  %v1653 = vadd.f32 0.0, %v1652
  %v1654 = vpop.f32.mrb[0].mxu0
  %v1655 = vpop.f32.mrb[0].mxu0
  %v1656 = vadd.f32 0.0, %v1655
  %v1657 = vpop.f32.mrb[0].mxu0
  %1658 = vmatprep.mubr.bf16.mxu0 %v976
  %1659 = vmatmul.mubr.bf16.gmra.mrb[0].mxu0 %v975
  %v1660 = vpop.f32.mrb[0].mxu0
  %v1661 = vadd.f32 0.0, %v1660
  %v1662 = vpop.f32.mrb[0].mxu0
  %v1663 = vpop.f32.mrb[0].mxu0
  %v1664 = vadd.f32 0.0, %v1663
  %v1665 = vpop.f32.mrb[0].mxu0
  %1666 = vmatprep.mubr.bf16.mxu0 %v981
  %1667 = vmatmul.mubr.bf16.gmra.mrb[0].mxu0 %v980
  %v1668 = vpop.f32.mrb[0].mxu0
  %v1669 = vadd.f32 0.0, %v1668
  %v1670 = vpop.f32.mrb[0].mxu0
  %v1671 = vpop.f32.mrb[0].mxu0
  %v1672 = vadd.f32 0.0, %v1671
  %v1673 = vpop.f32.mrb[0].mxu0
  %1674 = vmatprep.mubr.bf16.mxu0 %v986
  %1675 = vmatmul.mubr.bf16.gmra.mrb[0].mxu0 %v985
  %v1676 = vpop.f32.mrb[0].mxu0
  %v1677 = vadd.f32 0.0, %v1676
  %v1678 = vpop.f32.mrb[0].mxu0
  %v1679 = vpop.f32.mrb[0].mxu0
  %v1680 = vadd.f32 0.0, %v1679
  %v1681 = vpop.f32.mrb[0].mxu0
  %1682 = vmatprep.mubr.bf16.mxu0 %v991
  %1683 = vmatmul.mubr.bf16.gmra.mrb[0].mxu0 %v990
  %v1684 = vpop.f32.mrb[0].mxu0
  %v1685 = vadd.f32 0.0, %v1684
  %v1686 = vpop.f32.mrb[0].mxu0
  %v1687 = vpop.f32.mrb[0].mxu0
  %v1688 = vadd.f32 0.0, %v1687
  %v1689 = vpop.f32.mrb[0].mxu0
  %1690 = vmatprep.mubr.bf16.mxu0 %v996
  %1691 = vmatmul.mubr.bf16.gmra.mrb[0].mxu0 %v995
  %v1692 = vpop.f32.mrb[0].mxu0
  %v1693 = vadd.f32 0.0, %v1692
  %v1694 = vpop.f32.mrb[0].mxu0
  %v1695 = vpop.f32.mrb[0].mxu0
  %v1696 = vadd.f32 0.0, %v1695
  %v1697 = vpop.f32.mrb[0].mxu0
  %1698 = vmatprep.mubr.bf16.mxu0 %v1001
  %1699 = vmatmul.mubr.bf16.gmra.mrb[0].mxu0 %v1000
  %v1700 = vpop.f32.mrb[0].mxu0
  %v1701 = vadd.f32 0.0, %v1700
  %v1702 = vpop.f32.mrb[0].mxu0
  %v1703 = vpop.f32.mrb[0].mxu0
  %v1704 = vadd.f32 0.0, %v1703
  %v1705 = vpop.f32.mrb[0].mxu0
  %1706 = vmatprep.mubr.bf16.mxu0 %v1006
  %1707 = vmatmul.mubr.bf16.gmra.mrb[0].mxu0 %v1005
  %v1708 = vpop.f32.mrb[0].mxu0
  %v1709 = vadd.f32 0.0, %v1708
  %v1710 = vpop.f32.mrb[0].mxu0
  %v1711 = vpop.f32.mrb[0].mxu0
  %v1712 = vadd.f32 0.0, %v1711
  %v1713 = vpop.f32.mrb[0].mxu0
  %1714 = vmatprep.mubr.bf16.mxu0 %v1011
  %1715 = vmatmul.mubr.bf16.gmra.mrb[0].mxu0 %v1010
  %v1716 = vpop.f32.mrb[0].mxu0
  %v1717 = vadd.f32 0.0, %v1716
  %v1718 = vpop.f32.mrb[0].mxu0
  %v1719 = vpop.f32.mrb[0].mxu0
  %v1720 = vadd.f32 0.0, %v1719
  %v1721 = vpop.f32.mrb[0].mxu0
  %1722 = vmatprep.mubr.bf16.mxu0 %v1016
  %1723 = vmatmul.mubr.bf16.gmra.mrb[0].mxu0 %v1015
  %v1724 = vpop.f32.mrb[0].mxu0
  %v1725 = vadd.f32 0.0, %v1724
  %v1726 = vpop.f32.mrb[0].mxu0
  %v1727 = vpop.f32.mrb[0].mxu0
  %v1728 = vadd.f32 0.0, %v1727
  %v1729 = vpop.f32.mrb[0].mxu0
  %1730 = vmatprep.mubr.bf16.mxu0 %v1021
  %1731 = vmatmul.mubr.bf16.gmra.mrb[0].mxu0 %v1020
  %v1732 = vpop.f32.mrb[0].mxu0
  %v1733 = vadd.f32 0.0, %v1732
  %v1734 = vpop.f32.mrb[0].mxu0
  %v1735 = vpop.f32.mrb[0].mxu0
  %v1736 = vadd.f32 0.0, %v1735
  %v1737 = vpop.f32.mrb[0].mxu0
  %1738 = vmatprep.mubr.bf16.mxu0 %v1026
  %1739 = vmatmul.mubr.bf16.gmra.mrb[0].mxu0 %v1025
  %v1740 = vpop.f32.mrb[0].mxu0
  %v1741 = vadd.f32 0.0, %v1740
  %v1742 = vpop.f32.mrb[0].mxu0
  %v1743 = vpop.f32.mrb[0].mxu0
  %v1744 = vadd.f32 0.0, %v1743
  %v1745 = vpop.f32.mrb[0].mxu0
  %1746 = vmatprep.mubr.bf16.mxu0 %v1031
  %1747 = vmatmul.mubr.bf16.gmra.mrb[0].mxu0 %v1030
  %v1748 = vpop.f32.mrb[0].mxu0
  %v1749 = vadd.f32 0.0, %v1748
  %v1750 = vpop.f32.mrb[0].mxu0
  %v1751 = vpop.f32.mrb[0].mxu0
  %v1752 = vadd.f32 0.0, %v1751
  %v1753 = vpop.f32.mrb[0].mxu0
  %1754 = vmatprep.mubr.bf16.mxu0 %v1036
  %1755 = vmatmul.mubr.bf16.gmra.mrb[0].mxu0 %v1035
  %v1756 = vpop.f32.mrb[0].mxu0
  %v1757 = vadd.f32 0.0, %v1756
  %v1758 = vpop.f32.mrb[0].mxu0
  %v1759 = vpop.f32.mrb[0].mxu0
  %v1760 = vadd.f32 0.0, %v1759
  %v1761 = vpop.f32.mrb[0].mxu0
  %1762 = vmatprep.mubr.bf16.mxu0 %v1041
  %1763 = vmatmul.mubr.bf16.gmra.mrb[0].mxu0 %v1040
  %v1764 = vpop.f32.mrb[0].mxu0
  %v1765 = vadd.f32 0.0, %v1764
  %v1766 = vpop.f32.mrb[0].mxu0
  %v1767 = vpop.f32.mrb[0].mxu0
  %v1768 = vadd.f32 0.0, %v1767
  %v1769 = vpop.f32.mrb[0].mxu0
  %1770 = vmatprep.mubr.bf16.mxu0 %v1046
  %1771 = vmatmul.mubr.bf16.gmra.mrb[0].mxu0 %v1045
  %v1772 = vpop.f32.mrb[0].mxu0
  %v1773 = vadd.f32 0.0, %v1772
  %v1774 = vpop.f32.mrb[0].mxu0
  %v1775 = vpop.f32.mrb[0].mxu0
  %v1776 = vadd.f32 0.0, %v1775
  %v1777 = vpop.f32.mrb[0].mxu0
  %1778 = vmatprep.mubr.bf16.mxu0 %v1051
  %1779 = vmatmul.mubr.bf16.gmra.mrb[0].mxu0 %v1050
  %v1780 = vpop.f32.mrb[0].mxu0
  %v1781 = vadd.f32 0.0, %v1780
  %v1782 = vpop.f32.mrb[0].mxu0
  %v1783 = vpop.f32.mrb[0].mxu0
  %v1784 = vadd.f32 0.0, %v1783
  %v1785 = vpop.f32.mrb[0].mxu0
  %1786 = vmatprep.mubr.bf16.mxu0 %v1056
  %1787 = vmatmul.mubr.bf16.gmra.mrb[0].mxu0 %v1055
  %v1788 = vpop.f32.mrb[0].mxu0
  %v1789 = vadd.f32 0.0, %v1788
  %v1790 = vpop.f32.mrb[0].mxu0
  %v1791 = vpop.f32.mrb[0].mxu0
  %v1792 = vadd.f32 0.0, %v1791
  %v1793 = vpop.f32.mrb[0].mxu0
  %1794 = vmatprep.mubr.bf16.mxu0 %v1061
  %1795 = vmatmul.mubr.bf16.gmra.mrb[0].mxu0 %v1060
  %v1796 = vpop.f32.mrb[0].mxu0
  %v1797 = vadd.f32 0.0, %v1796
  %v1798 = vpop.f32.mrb[0].mxu0
  %v1799 = vpop.f32.mrb[0].mxu0
  %v1800 = vadd.f32 0.0, %v1799
  %v1801 = vpop.f32.mrb[0].mxu0
  %1802 = vmatprep.mubr.bf16.mxu0 %v1066
  %1803 = vmatmul.mubr.bf16.gmra.mrb[0].mxu0 %v1065
  %v1804 = vpop.f32.mrb[0].mxu0
  %v1805 = vadd.f32 0.0, %v1804
  %v1806 = vpop.f32.mrb[0].mxu0
  %v1807 = vpop.f32.mrb[0].mxu0
  %v1808 = vadd.f32 0.0, %v1807
  %v1809 = vpop.f32.mrb[0].mxu0
  %1810 = vdwg.mxu0
  %1811 = vmatprep.subr.bf16.mxu0 0
  %1812 = vmatpush1.bf16.msra.mxu0 %v1426
  %1813 = vmatprep.subr.bf16.mxu0 0
  %1814 = vmatpush1.bf16.msra.mxu0 %v1427
  %1815 = vmatprep.subr.bf16.mxu0 0
  %1816 = vmatpush1.bf16.msra.mxu0 %v1428
  %1817 = vmatprep.subr.bf16.mxu0 0
  %1818 = vmatpush1.bf16.msra.mxu0 %v1429
  %1819 = vmatprep.subr.bf16.mxu0 0
  %1820 = vmatpush1.bf16.msra.mxu0 %v1430
  %1821 = vmatprep.subr.bf16.mxu0 0
  %1822 = vmatpush1.bf16.msra.mxu0 %v1431
  %1823 = vmatprep.subr.bf16.mxu0 0
  %1824 = vmatpush1.bf16.msra.mxu0 %v1432
  %1825 = vmatprep.subr.bf16.mxu0 0
  %1826 = vmatpush1.bf16.msra.mxu0 %v1433
  %1827 = vmatprep.subr.bf16.mxu0 0
  %1828 = vmatpush1.bf16.msra.mxu0 %v1434
  %1829 = vmatprep.subr.bf16.mxu0 0
  %1830 = vmatpush1.bf16.msra.mxu0 %v1435
  %1831 = vmatprep.subr.bf16.mxu0 0
  %1832 = vmatpush1.bf16.msra.mxu0 %v1436
  %1833 = vmatprep.subr.bf16.mxu0 0
  %1834 = vmatpush1.bf16.msra.mxu0 %v1437
  %1835 = vmatprep.subr.bf16.mxu0 0
  %1836 = vmatpush1.bf16.msra.mxu0 %v1438
  %1837 = vmatprep.subr.bf16.mxu0 0
  %1838 = vmatpush1.bf16.msra.mxu0 %v1439
  %1839 = vmatprep.subr.bf16.mxu0 0
  %1840 = vmatpush1.bf16.msra.mxu0 %v1440
  %1841 = vmatprep.subr.bf16.mxu0 0
  %1842 = vmatpush1.bf16.msra.mxu0 %v1441
  %1843 = vmatprep.mubr.bf16.mxu0 %v893
  %1844 = vmatmul.mubr.bf16.gmra.mrb[0].mxu0 %v892
  %v1845 = vpop.f32.mrb[0].mxu0
  %v1846 = vadd.f32 %v1525, %v1845
  %v1847 = vpop.f32.mrb[0].mxu0
  %v1848 = vpop.f32.mrb[0].mxu0
  %v1849 = vadd.f32 %v1528, %v1848
  %v1850 = vpop.f32.mrb[0].mxu0
  %1851 = vmatprep.mubr.bf16.mxu0 %v898
  %1852 = vmatmul.mubr.bf16.gmra.mrb[0].mxu0 %v897
  %v1853 = vpop.f32.mrb[0].mxu0
  %v1854 = vadd.f32 %v1533, %v1853
  %v1855 = vpop.f32.mrb[0].mxu0
  %v1856 = vpop.f32.mrb[0].mxu0
  %v1857 = vadd.f32 %v1536, %v1856
  %v1858 = vpop.f32.mrb[0].mxu0
  %1859 = vmatprep.mubr.bf16.mxu0 %v903
  %1860 = vmatmul.mubr.bf16.gmra.mrb[0].mxu0 %v902
  %v1861 = vpop.f32.mrb[0].mxu0
  %v1862 = vadd.f32 %v1541, %v1861
  %v1863 = vpop.f32.mrb[0].mxu0
  %v1864 = vpop.f32.mrb[0].mxu0
  %v1865 = vadd.f32 %v1544, %v1864
  %v1866 = vpop.f32.mrb[0].mxu0
  %1867 = vmatprep.mubr.bf16.mxu0 %v908
  %1868 = vmatmul.mubr.bf16.gmra.mrb[0].mxu0 %v907
  %v1869 = vpop.f32.mrb[0].mxu0
  %v1870 = vadd.f32 %v1549, %v1869
  %v1871 = vpop.f32.mrb[0].mxu0
  %v1872 = vpop.f32.mrb[0].mxu0
  %v1873 = vadd.f32 %v1552, %v1872
  %v1874 = vpop.f32.mrb[0].mxu0
  %1875 = vmatprep.mubr.bf16.mxu0 %v913
  %1876 = vmatmul.mubr.bf16.gmra.mrb[0].mxu0 %v912
  %v1877 = vpop.f32.mrb[0].mxu0
  %v1878 = vadd.f32 %v1557, %v1877
  %v1879 = vpop.f32.mrb[0].mxu0
  %v1880 = vpop.f32.mrb[0].mxu0
  %v1881 = vadd.f32 %v1560, %v1880
  %v1882 = vpop.f32.mrb[0].mxu0
  %1883 = vmatprep.mubr.bf16.mxu0 %v918
  %1884 = vmatmul.mubr.bf16.gmra.mrb[0].mxu0 %v917
  %v1885 = vpop.f32.mrb[0].mxu0
  %v1886 = vadd.f32 %v1565, %v1885
  %v1887 = vpop.f32.mrb[0].mxu0
  %v1888 = vpop.f32.mrb[0].mxu0
  %v1889 = vadd.f32 %v1568, %v1888
  %v1890 = vpop.f32.mrb[0].mxu0
  %1891 = vmatprep.mubr.bf16.mxu0 %v923
  %1892 = vmatmul.mubr.bf16.gmra.mrb[0].mxu0 %v922
  %v1893 = vpop.f32.mrb[0].mxu0
  %v1894 = vadd.f32 %v1573, %v1893
  %v1895 = vpop.f32.mrb[0].mxu0
  %v1896 = vpop.f32.mrb[0].mxu0
  %v1897 = vadd.f32 %v1576, %v1896
  %v1898 = vpop.f32.mrb[0].mxu0
  %1899 = vmatprep.mubr.bf16.mxu0 %v928
  %1900 = vmatmul.mubr.bf16.gmra.mrb[0].mxu0 %v927
  %v1901 = vpop.f32.mrb[0].mxu0
  %v1902 = vadd.f32 %v1581, %v1901
  %v1903 = vpop.f32.mrb[0].mxu0
  %v1904 = vpop.f32.mrb[0].mxu0
  %v1905 = vadd.f32 %v1584, %v1904
  %v1906 = vpop.f32.mrb[0].mxu0
  %1907 = vmatprep.mubr.bf16.mxu0 %v933
  %1908 = vmatmul.mubr.bf16.gmra.mrb[0].mxu0 %v932
  %v1909 = vpop.f32.mrb[0].mxu0
  %v1910 = vadd.f32 %v1589, %v1909
  %v1911 = vpop.f32.mrb[0].mxu0
  %v1912 = vpop.f32.mrb[0].mxu0
  %v1913 = vadd.f32 %v1592, %v1912
  %v1914 = vpop.f32.mrb[0].mxu0
  %1915 = vmatprep.mubr.bf16.mxu0 %v938
  %1916 = vmatmul.mubr.bf16.gmra.mrb[0].mxu0 %v937
  %v1917 = vpop.f32.mrb[0].mxu0
  %v1918 = vadd.f32 %v1597, %v1917
  %v1919 = vpop.f32.mrb[0].mxu0
  %v1920 = vpop.f32.mrb[0].mxu0
  %v1921 = vadd.f32 %v1600, %v1920
  %v1922 = vpop.f32.mrb[0].mxu0
  %1923 = vmatprep.mubr.bf16.mxu0 %v943
  %1924 = vmatmul.mubr.bf16.gmra.mrb[0].mxu0 %v942
  %v1925 = vpop.f32.mrb[0].mxu0
  %v1926 = vadd.f32 %v1605, %v1925
  %v1927 = vpop.f32.mrb[0].mxu0
  %v1928 = vpop.f32.mrb[0].mxu0
  %v1929 = vadd.f32 %v1608, %v1928
  %v1930 = vpop.f32.mrb[0].mxu0
  %1931 = vmatprep.mubr.bf16.mxu0 %v948
  %1932 = vmatmul.mubr.bf16.gmra.mrb[0].mxu0 %v947
  %v1933 = vpop.f32.mrb[0].mxu0
  %v1934 = vadd.f32 %v1613, %v1933
  %v1935 = vpop.f32.mrb[0].mxu0
  %v1936 = vpop.f32.mrb[0].mxu0
  %v1937 = vadd.f32 %v1616, %v1936
  %v1938 = vpop.f32.mrb[0].mxu0
  %1939 = vmatprep.mubr.bf16.mxu0 %v953
  %1940 = vmatmul.mubr.bf16.gmra.mrb[0].mxu0 %v952
  %v1941 = vpop.f32.mrb[0].mxu0
  %v1942 = vadd.f32 %v1621, %v1941
  %v1943 = vpop.f32.mrb[0].mxu0
  %v1944 = vpop.f32.mrb[0].mxu0
  %v1945 = vadd.f32 %v1624, %v1944
  %v1946 = vpop.f32.mrb[0].mxu0
  %1947 = vmatprep.mubr.bf16.mxu0 %v958
  %1948 = vmatmul.mubr.bf16.gmra.mrb[0].mxu0 %v957
  %v1949 = vpop.f32.mrb[0].mxu0
  %v1950 = vadd.f32 %v1629, %v1949
  %v1951 = vpop.f32.mrb[0].mxu0
  %v1952 = vpop.f32.mrb[0].mxu0
  %v1953 = vadd.f32 %v1632, %v1952
  %v1954 = vpop.f32.mrb[0].mxu0
  %1955 = vmatprep.mubr.bf16.mxu0 %v963
  %1956 = vmatmul.mubr.bf16.gmra.mrb[0].mxu0 %v962
  %v1957 = vpop.f32.mrb[0].mxu0
  %v1958 = vadd.f32 %v1637, %v1957
  %v1959 = vpop.f32.mrb[0].mxu0
  %v1960 = vpop.f32.mrb[0].mxu0
  %v1961 = vadd.f32 %v1640, %v1960
  %v1962 = vpop.f32.mrb[0].mxu0
  %1963 = vmatprep.mubr.bf16.mxu0 %v968
  %1964 = vmatmul.mubr.bf16.gmra.mrb[0].mxu0 %v967
  %v1965 = vpop.f32.mrb[0].mxu0
  %v1966 = vadd.f32 %v1645, %v1965
  %v1967 = vpop.f32.mrb[0].mxu0
  %v1968 = vpop.f32.mrb[0].mxu0
  %v1969 = vadd.f32 %v1648, %v1968
  %v1970 = vpop.f32.mrb[0].mxu0
  %1971 = vmatprep.mubr.bf16.mxu0 %v973
  %1972 = vmatmul.mubr.bf16.gmra.mrb[0].mxu0 %v972
  %v1973 = vpop.f32.mrb[0].mxu0
  %v1974 = vadd.f32 %v1653, %v1973
  %v1975 = vpop.f32.mrb[0].mxu0
  %v1976 = vpop.f32.mrb[0].mxu0
  %v1977 = vadd.f32 %v1656, %v1976
  %v1978 = vpop.f32.mrb[0].mxu0
  %1979 = vmatprep.mubr.bf16.mxu0 %v978
  %1980 = vmatmul.mubr.bf16.gmra.mrb[0].mxu0 %v977
  %v1981 = vpop.f32.mrb[0].mxu0
  %v1982 = vadd.f32 %v1661, %v1981
  %v1983 = vpop.f32.mrb[0].mxu0
  %v1984 = vpop.f32.mrb[0].mxu0
  %v1985 = vadd.f32 %v1664, %v1984
  %v1986 = vpop.f32.mrb[0].mxu0
  %1987 = vmatprep.mubr.bf16.mxu0 %v983
  %1988 = vmatmul.mubr.bf16.gmra.mrb[0].mxu0 %v982
  %v1989 = vpop.f32.mrb[0].mxu0
  %v1990 = vadd.f32 %v1669, %v1989
  %v1991 = vpop.f32.mrb[0].mxu0
  %v1992 = vpop.f32.mrb[0].mxu0
  %v1993 = vadd.f32 %v1672, %v1992
  %v1994 = vpop.f32.mrb[0].mxu0
  %1995 = vmatprep.mubr.bf16.mxu0 %v988
  %1996 = vmatmul.mubr.bf16.gmra.mrb[0].mxu0 %v987
  %v1997 = vpop.f32.mrb[0].mxu0
  %v1998 = vadd.f32 %v1677, %v1997
  %v1999 = vpop.f32.mrb[0].mxu0
  %v2000 = vpop.f32.mrb[0].mxu0
  %v2001 = vadd.f32 %v1680, %v2000
  %v2002 = vpop.f32.mrb[0].mxu0
  %2003 = vmatprep.mubr.bf16.mxu0 %v993
  %2004 = vmatmul.mubr.bf16.gmra.mrb[0].mxu0 %v992
  %v2005 = vpop.f32.mrb[0].mxu0
  %v2006 = vadd.f32 %v1685, %v2005
  %v2007 = vpop.f32.mrb[0].mxu0
  %v2008 = vpop.f32.mrb[0].mxu0
  %v2009 = vadd.f32 %v1688, %v2008
  %v2010 = vpop.f32.mrb[0].mxu0
  %2011 = vmatprep.mubr.bf16.mxu0 %v998
  %2012 = vmatmul.mubr.bf16.gmra.mrb[0].mxu0 %v997
  %v2013 = vpop.f32.mrb[0].mxu0
  %v2014 = vadd.f32 %v1693, %v2013
  %v2015 = vpop.f32.mrb[0].mxu0
  %v2016 = vpop.f32.mrb[0].mxu0
  %v2017 = vadd.f32 %v1696, %v2016
  %v2018 = vpop.f32.mrb[0].mxu0
  %2019 = vmatprep.mubr.bf16.mxu0 %v1003
  %2020 = vmatmul.mubr.bf16.gmra.mrb[0].mxu0 %v1002
  %v2021 = vpop.f32.mrb[0].mxu0
  %v2022 = vadd.f32 %v1701, %v2021
  %v2023 = vpop.f32.mrb[0].mxu0
  %v2024 = vpop.f32.mrb[0].mxu0
  %v2025 = vadd.f32 %v1704, %v2024
  %v2026 = vpop.f32.mrb[0].mxu0
  %2027 = vmatprep.mubr.bf16.mxu0 %v1008
  %2028 = vmatmul.mubr.bf16.gmra.mrb[0].mxu0 %v1007
  %v2029 = vpop.f32.mrb[0].mxu0
  %v2030 = vadd.f32 %v1709, %v2029
  %v2031 = vpop.f32.mrb[0].mxu0
  %v2032 = vpop.f32.mrb[0].mxu0
  %v2033 = vadd.f32 %v1712, %v2032
  %v2034 = vpop.f32.mrb[0].mxu0
  %2035 = vmatprep.mubr.bf16.mxu0 %v1013
  %2036 = vmatmul.mubr.bf16.gmra.mrb[0].mxu0 %v1012
  %v2037 = vpop.f32.mrb[0].mxu0
  %v2038 = vadd.f32 %v1717, %v2037
  %v2039 = vpop.f32.mrb[0].mxu0
  %v2040 = vpop.f32.mrb[0].mxu0
  %v2041 = vadd.f32 %v1720, %v2040
  %v2042 = vpop.f32.mrb[0].mxu0
  %2043 = vmatprep.mubr.bf16.mxu0 %v1018
  %2044 = vmatmul.mubr.bf16.gmra.mrb[0].mxu0 %v1017
  %v2045 = vpop.f32.mrb[0].mxu0
  %v2046 = vadd.f32 %v1725, %v2045
  %v2047 = vpop.f32.mrb[0].mxu0
  %v2048 = vpop.f32.mrb[0].mxu0
  %v2049 = vadd.f32 %v1728, %v2048
  %v2050 = vpop.f32.mrb[0].mxu0
  %2051 = vmatprep.mubr.bf16.mxu0 %v1023
  %2052 = vmatmul.mubr.bf16.gmra.mrb[0].mxu0 %v1022
  %v2053 = vpop.f32.mrb[0].mxu0
  %v2054 = vadd.f32 %v1733, %v2053
  %v2055 = vpop.f32.mrb[0].mxu0
  %v2056 = vpop.f32.mrb[0].mxu0
  %v2057 = vadd.f32 %v1736, %v2056
  %v2058 = vpop.f32.mrb[0].mxu0
  %2059 = vmatprep.mubr.bf16.mxu0 %v1028
  %2060 = vmatmul.mubr.bf16.gmra.mrb[0].mxu0 %v1027
  %v2061 = vpop.f32.mrb[0].mxu0
  %v2062 = vadd.f32 %v1741, %v2061
  %v2063 = vpop.f32.mrb[0].mxu0
  %v2064 = vpop.f32.mrb[0].mxu0
  %v2065 = vadd.f32 %v1744, %v2064
  %v2066 = vpop.f32.mrb[0].mxu0
  %2067 = vmatprep.mubr.bf16.mxu0 %v1033
  %2068 = vmatmul.mubr.bf16.gmra.mrb[0].mxu0 %v1032
  %v2069 = vpop.f32.mrb[0].mxu0
  %v2070 = vadd.f32 %v1749, %v2069
  %v2071 = vpop.f32.mrb[0].mxu0
  %v2072 = vpop.f32.mrb[0].mxu0
  %v2073 = vadd.f32 %v1752, %v2072
  %v2074 = vpop.f32.mrb[0].mxu0
  %2075 = vmatprep.mubr.bf16.mxu0 %v1038
  %2076 = vmatmul.mubr.bf16.gmra.mrb[0].mxu0 %v1037
  %v2077 = vpop.f32.mrb[0].mxu0
  %v2078 = vadd.f32 %v1757, %v2077
  %v2079 = vpop.f32.mrb[0].mxu0
  %v2080 = vpop.f32.mrb[0].mxu0
  %v2081 = vadd.f32 %v1760, %v2080
  %v2082 = vpop.f32.mrb[0].mxu0
  %2083 = vmatprep.mubr.bf16.mxu0 %v1043
  %2084 = vmatmul.mubr.bf16.gmra.mrb[0].mxu0 %v1042
  %v2085 = vpop.f32.mrb[0].mxu0
  %v2086 = vadd.f32 %v1765, %v2085
  %v2087 = vpop.f32.mrb[0].mxu0
  %v2088 = vpop.f32.mrb[0].mxu0
  %v2089 = vadd.f32 %v1768, %v2088
  %v2090 = vpop.f32.mrb[0].mxu0
  %2091 = vmatprep.mubr.bf16.mxu0 %v1048
  %2092 = vmatmul.mubr.bf16.gmra.mrb[0].mxu0 %v1047
  %v2093 = vpop.f32.mrb[0].mxu0
  %v2094 = vadd.f32 %v1773, %v2093
  %v2095 = vpop.f32.mrb[0].mxu0
  %v2096 = vpop.f32.mrb[0].mxu0
  %v2097 = vadd.f32 %v1776, %v2096
  %v2098 = vpop.f32.mrb[0].mxu0
  %2099 = vmatprep.mubr.bf16.mxu0 %v1053
  %2100 = vmatmul.mubr.bf16.gmra.mrb[0].mxu0 %v1052
  %v2101 = vpop.f32.mrb[0].mxu0
  %v2102 = vadd.f32 %v1781, %v2101
  %v2103 = vpop.f32.mrb[0].mxu0
  %v2104 = vpop.f32.mrb[0].mxu0
  %v2105 = vadd.f32 %v1784, %v2104
  %v2106 = vpop.f32.mrb[0].mxu0
  %2107 = vmatprep.mubr.bf16.mxu0 %v1058
  %2108 = vmatmul.mubr.bf16.gmra.mrb[0].mxu0 %v1057
  %v2109 = vpop.f32.mrb[0].mxu0
  %v2110 = vadd.f32 %v1789, %v2109
  %v2111 = vpop.f32.mrb[0].mxu0
  %v2112 = vpop.f32.mrb[0].mxu0
  %v2113 = vadd.f32 %v1792, %v2112
  %v2114 = vpop.f32.mrb[0].mxu0
  %2115 = vmatprep.mubr.bf16.mxu0 %v1063
  %2116 = vmatmul.mubr.bf16.gmra.mrb[0].mxu0 %v1062
  %v2117 = vpop.f32.mrb[0].mxu0
  %v2118 = vadd.f32 %v1797, %v2117
  %v2119 = vpop.f32.mrb[0].mxu0
  %v2120 = vpop.f32.mrb[0].mxu0
  %v2121 = vadd.f32 %v1800, %v2120
  %v2122 = vpop.f32.mrb[0].mxu0
  %2123 = vmatprep.mubr.bf16.mxu0 %v1068
  %2124 = vmatmul.mubr.bf16.gmra.mrb[0].mxu0 %v1067
  %v2125 = vpop.f32.mrb[0].mxu0
  %v2126 = vadd.f32 %v1805, %v2125
  %v2127 = vpop.f32.mrb[0].mxu0
  %v2128 = vpop.f32.mrb[0].mxu0
  %v2129 = vadd.f32 %v1808, %v2128
  %v2130 = vpop.f32.mrb[0].mxu0
  %2131 = vdwg.mxu0
  %2132 = vmatprep.subr.bf16.mxu0 0
  %2133 = vmatpush1.bf16.msra.mxu0 %v1442
  %2134 = vmatprep.subr.bf16.mxu0 0
  %2135 = vmatpush1.bf16.msra.mxu0 %v1443
  %2136 = vmatprep.subr.bf16.mxu0 0
  %2137 = vmatpush1.bf16.msra.mxu0 %v1444
  %2138 = vmatprep.subr.bf16.mxu0 0
  %2139 = vmatpush1.bf16.msra.mxu0 %v1445
  %2140 = vmatprep.subr.bf16.mxu0 0
  %2141 = vmatpush1.bf16.msra.mxu0 %v1446
  %2142 = vmatprep.subr.bf16.mxu0 0
  %2143 = vmatpush1.bf16.msra.mxu0 %v1447
  %2144 = vmatprep.subr.bf16.mxu0 0
  %2145 = vmatpush1.bf16.msra.mxu0 %v1448
  %2146 = vmatprep.subr.bf16.mxu0 0
  %2147 = vmatpush1.bf16.msra.mxu0 %v1449
  %2148 = vmatprep.subr.bf16.mxu0 0
  %2149 = vmatpush1.bf16.msra.mxu0 0
  %2150 = vmatprep.subr.bf16.mxu0 0
  %2151 = vmatpush1.bf16.msra.mxu0 0
  %2152 = vmatprep.subr.bf16.mxu0 0
  %2153 = vmatpush1.bf16.msra.mxu0 0
  %2154 = vmatprep.subr.bf16.mxu0 0
  %2155 = vmatpush1.bf16.msra.mxu0 0
  %2156 = vmatprep.subr.bf16.mxu0 0
  %2157 = vmatpush1.bf16.msra.mxu0 0
  %2158 = vmatprep.subr.bf16.mxu0 0
  %2159 = vmatpush1.bf16.msra.mxu0 0
  %2160 = vmatprep.subr.bf16.mxu0 0
  %2161 = vmatpush1.bf16.msra.mxu0 0
  %2162 = vmatprep.subr.bf16.mxu0 0
  %2163 = vmatpush1.bf16.msra.mxu0 0
  %2164 = vmatprep.mubr.bf16.mxu0 0
  %2165 = vmatmul.mubr.bf16.gmra.mrb[0].mxu0 %v894
  %v2166 = vpop.f32.mrb[0].mxu0
  %v2167 = vadd.f32 %v1846, %v2166
  %v2168 = vpop.f32.mrb[0].mxu0
  %v2169 = vpop.f32.mrb[0].mxu0
  %v2170 = vadd.f32 %v1849, %v2169
  %v2171 = vpop.f32.mrb[0].mxu0
  %2172 = vmatprep.mubr.bf16.mxu0 0
  %2173 = vmatmul.mubr.bf16.gmra.mrb[0].mxu0 %v899
  %v2174 = vpop.f32.mrb[0].mxu0
  %v2175 = vadd.f32 %v1854, %v2174
  %v2176 = vpop.f32.mrb[0].mxu0
  %v2177 = vpop.f32.mrb[0].mxu0
  %v2178 = vadd.f32 %v1857, %v2177
  %v2179 = vpop.f32.mrb[0].mxu0
  %2180 = vmatprep.mubr.bf16.mxu0 0
  %2181 = vmatmul.mubr.bf16.gmra.mrb[0].mxu0 %v904
  %v2182 = vpop.f32.mrb[0].mxu0
  %v2183 = vadd.f32 %v1862, %v2182
  %v2184 = vpop.f32.mrb[0].mxu0
  %v2185 = vpop.f32.mrb[0].mxu0
  %v2186 = vadd.f32 %v1865, %v2185
  %v2187 = vpop.f32.mrb[0].mxu0
  %2188 = vmatprep.mubr.bf16.mxu0 0
  %2189 = vmatmul.mubr.bf16.gmra.mrb[0].mxu0 %v909
  %v2190 = vpop.f32.mrb[0].mxu0
  %v2191 = vadd.f32 %v1870, %v2190
  %v2192 = vpop.f32.mrb[0].mxu0
  %v2193 = vpop.f32.mrb[0].mxu0
  %v2194 = vadd.f32 %v1873, %v2193
  %v2195 = vpop.f32.mrb[0].mxu0
  %2196 = vmatprep.mubr.bf16.mxu0 0
  %2197 = vmatmul.mubr.bf16.gmra.mrb[0].mxu0 %v914
  %v2198 = vpop.f32.mrb[0].mxu0
  %v2199 = vadd.f32 %v1878, %v2198
  %v2200 = vpop.f32.mrb[0].mxu0
  %v2201 = vpop.f32.mrb[0].mxu0
  %v2202 = vadd.f32 %v1881, %v2201
  %v2203 = vpop.f32.mrb[0].mxu0
  %2204 = vmatprep.mubr.bf16.mxu0 0
  %2205 = vmatmul.mubr.bf16.gmra.mrb[0].mxu0 %v919
  %v2206 = vpop.f32.mrb[0].mxu0
  %v2207 = vadd.f32 %v1886, %v2206
  %v2208 = vpop.f32.mrb[0].mxu0
  %v2209 = vpop.f32.mrb[0].mxu0
  %v2210 = vadd.f32 %v1889, %v2209
  %v2211 = vpop.f32.mrb[0].mxu0
  %2212 = vmatprep.mubr.bf16.mxu0 0
  %2213 = vmatmul.mubr.bf16.gmra.mrb[0].mxu0 %v924
  %v2214 = vpop.f32.mrb[0].mxu0
  %v2215 = vadd.f32 %v1894, %v2214
  %v2216 = vpop.f32.mrb[0].mxu0
  %v2217 = vpop.f32.mrb[0].mxu0
  %v2218 = vadd.f32 %v1897, %v2217
  %v2219 = vpop.f32.mrb[0].mxu0
  %2220 = vmatprep.mubr.bf16.mxu0 0
  %2221 = vmatmul.mubr.bf16.gmra.mrb[0].mxu0 %v929
  %v2222 = vpop.f32.mrb[0].mxu0
  %v2223 = vadd.f32 %v1902, %v2222
  %v2224 = vpop.f32.mrb[0].mxu0
  %v2225 = vpop.f32.mrb[0].mxu0
  %v2226 = vadd.f32 %v1905, %v2225
  %v2227 = vpop.f32.mrb[0].mxu0
  %2228 = vmatprep.mubr.bf16.mxu0 0
  %2229 = vmatmul.mubr.bf16.gmra.mrb[0].mxu0 %v934
  %v2230 = vpop.f32.mrb[0].mxu0
  %v2231 = vadd.f32 %v1910, %v2230
  %v2232 = vpop.f32.mrb[0].mxu0
  %v2233 = vpop.f32.mrb[0].mxu0
  %v2234 = vadd.f32 %v1913, %v2233
  %v2235 = vpop.f32.mrb[0].mxu0
  %2236 = vmatprep.mubr.bf16.mxu0 0
  %2237 = vmatmul.mubr.bf16.gmra.mrb[0].mxu0 %v939
  %v2238 = vpop.f32.mrb[0].mxu0
  %v2239 = vadd.f32 %v1918, %v2238
  %v2240 = vpop.f32.mrb[0].mxu0
  %v2241 = vpop.f32.mrb[0].mxu0
  %v2242 = vadd.f32 %v1921, %v2241
  %v2243 = vpop.f32.mrb[0].mxu0
  %2244 = vmatprep.mubr.bf16.mxu0 0
  %2245 = vmatmul.mubr.bf16.gmra.mrb[0].mxu0 %v944
  %v2246 = vpop.f32.mrb[0].mxu0
  %v2247 = vadd.f32 %v1926, %v2246
  %v2248 = vpop.f32.mrb[0].mxu0
  %v2249 = vpop.f32.mrb[0].mxu0
  %v2250 = vadd.f32 %v1929, %v2249
  %v2251 = vpop.f32.mrb[0].mxu0
  %2252 = vmatprep.mubr.bf16.mxu0 0
  %2253 = vmatmul.mubr.bf16.gmra.mrb[0].mxu0 %v949
  %v2254 = vpop.f32.mrb[0].mxu0
  %v2255 = vadd.f32 %v1934, %v2254
  %v2256 = vpop.f32.mrb[0].mxu0
  %v2257 = vpop.f32.mrb[0].mxu0
  %v2258 = vadd.f32 %v1937, %v2257
  %v2259 = vpop.f32.mrb[0].mxu0
  %2260 = vmatprep.mubr.bf16.mxu0 0
  %2261 = vmatmul.mubr.bf16.gmra.mrb[0].mxu0 %v954
  %v2262 = vpop.f32.mrb[0].mxu0
  %v2263 = vadd.f32 %v1942, %v2262
  %v2264 = vpop.f32.mrb[0].mxu0
  %v2265 = vpop.f32.mrb[0].mxu0
  %v2266 = vadd.f32 %v1945, %v2265
  %v2267 = vpop.f32.mrb[0].mxu0
  %2268 = vmatprep.mubr.bf16.mxu0 0
  %2269 = vmatmul.mubr.bf16.gmra.mrb[0].mxu0 %v959
  %v2270 = vpop.f32.mrb[0].mxu0
  %v2271 = vadd.f32 %v1950, %v2270
  %v2272 = vpop.f32.mrb[0].mxu0
  %v2273 = vpop.f32.mrb[0].mxu0
  %v2274 = vadd.f32 %v1953, %v2273
  %v2275 = vpop.f32.mrb[0].mxu0
  %2276 = vmatprep.mubr.bf16.mxu0 0
  %2277 = vmatmul.mubr.bf16.gmra.mrb[0].mxu0 %v964
  %v2278 = vpop.f32.mrb[0].mxu0
  %v2279 = vadd.f32 %v1958, %v2278
  %v2280 = vpop.f32.mrb[0].mxu0
  %v2281 = vpop.f32.mrb[0].mxu0
  %v2282 = vadd.f32 %v1961, %v2281
  %v2283 = vpop.f32.mrb[0].mxu0
  %2284 = vmatprep.mubr.bf16.mxu0 0
  %2285 = vmatmul.mubr.bf16.gmra.mrb[0].mxu0 %v969
  %v2286 = vpop.f32.mrb[0].mxu0
  %v2287 = vadd.f32 %v1966, %v2286
  %v2288 = vpop.f32.mrb[0].mxu0
  %v2289 = vpop.f32.mrb[0].mxu0
  %v2290 = vadd.f32 %v1969, %v2289
  %v2291 = vpop.f32.mrb[0].mxu0
  %2292 = vmatprep.mubr.bf16.mxu0 0
  %2293 = vmatmul.mubr.bf16.gmra.mrb[0].mxu0 %v974
  %v2294 = vpop.f32.mrb[0].mxu0
  %v2295 = vadd.f32 %v1974, %v2294
  %v2296 = vpop.f32.mrb[0].mxu0
  %v2297 = vpop.f32.mrb[0].mxu0
  %v2298 = vadd.f32 %v1977, %v2297
  %v2299 = vpop.f32.mrb[0].mxu0
  %2300 = vmatprep.mubr.bf16.mxu0 0
  %2301 = vmatmul.mubr.bf16.gmra.mrb[0].mxu0 %v979
  %v2302 = vpop.f32.mrb[0].mxu0
  %v2303 = vadd.f32 %v1982, %v2302
  %v2304 = vpop.f32.mrb[0].mxu0
  %v2305 = vpop.f32.mrb[0].mxu0
  %v2306 = vadd.f32 %v1985, %v2305
  %v2307 = vpop.f32.mrb[0].mxu0
  %2308 = vmatprep.mubr.bf16.mxu0 0
  %2309 = vmatmul.mubr.bf16.gmra.mrb[0].mxu0 %v984
  %v2310 = vpop.f32.mrb[0].mxu0
  %v2311 = vadd.f32 %v1990, %v2310
  %v2312 = vpop.f32.mrb[0].mxu0
  %v2313 = vpop.f32.mrb[0].mxu0
  %v2314 = vadd.f32 %v1993, %v2313
  %v2315 = vpop.f32.mrb[0].mxu0
  %2316 = vmatprep.mubr.bf16.mxu0 0
  %2317 = vmatmul.mubr.bf16.gmra.mrb[0].mxu0 %v989
  %v2318 = vpop.f32.mrb[0].mxu0
  %v2319 = vadd.f32 %v1998, %v2318
  %v2320 = vpop.f32.mrb[0].mxu0
  %v2321 = vpop.f32.mrb[0].mxu0
  %v2322 = vadd.f32 %v2001, %v2321
  %v2323 = vpop.f32.mrb[0].mxu0
  %2324 = vmatprep.mubr.bf16.mxu0 0
  %2325 = vmatmul.mubr.bf16.gmra.mrb[0].mxu0 %v994
  %v2326 = vpop.f32.mrb[0].mxu0
  %v2327 = vadd.f32 %v2006, %v2326
  %v2328 = vpop.f32.mrb[0].mxu0
  %v2329 = vpop.f32.mrb[0].mxu0
  %v2330 = vadd.f32 %v2009, %v2329
  %v2331 = vpop.f32.mrb[0].mxu0
  %2332 = vmatprep.mubr.bf16.mxu0 0
  %2333 = vmatmul.mubr.bf16.gmra.mrb[0].mxu0 %v999
  %v2334 = vpop.f32.mrb[0].mxu0
  %v2335 = vadd.f32 %v2014, %v2334
  %v2336 = vpop.f32.mrb[0].mxu0
  %v2337 = vpop.f32.mrb[0].mxu0
  %v2338 = vadd.f32 %v2017, %v2337
  %v2339 = vpop.f32.mrb[0].mxu0
  %2340 = vmatprep.mubr.bf16.mxu0 0
  %2341 = vmatmul.mubr.bf16.gmra.mrb[0].mxu0 %v1004
  %v2342 = vpop.f32.mrb[0].mxu0
  %v2343 = vadd.f32 %v2022, %v2342
  %v2344 = vpop.f32.mrb[0].mxu0
  %v2345 = vpop.f32.mrb[0].mxu0
  %v2346 = vadd.f32 %v2025, %v2345
  %v2347 = vpop.f32.mrb[0].mxu0
  %2348 = vmatprep.mubr.bf16.mxu0 0
  %2349 = vmatmul.mubr.bf16.gmra.mrb[0].mxu0 %v1009
  %v2350 = vpop.f32.mrb[0].mxu0
  %v2351 = vadd.f32 %v2030, %v2350
  %v2352 = vpop.f32.mrb[0].mxu0
  %v2353 = vpop.f32.mrb[0].mxu0
  %v2354 = vadd.f32 %v2033, %v2353
  %v2355 = vpop.f32.mrb[0].mxu0
  %2356 = vmatprep.mubr.bf16.mxu0 0
  %2357 = vmatmul.mubr.bf16.gmra.mrb[0].mxu0 %v1014
  %v2358 = vpop.f32.mrb[0].mxu0
  %v2359 = vadd.f32 %v2038, %v2358
  %v2360 = vpop.f32.mrb[0].mxu0
  %v2361 = vpop.f32.mrb[0].mxu0
  %v2362 = vadd.f32 %v2041, %v2361
  %v2363 = vpop.f32.mrb[0].mxu0
  %2364 = vmatprep.mubr.bf16.mxu0 0
  %2365 = vmatmul.mubr.bf16.gmra.mrb[0].mxu0 %v1019
  %v2366 = vpop.f32.mrb[0].mxu0
  %v2367 = vadd.f32 %v2046, %v2366
  %v2368 = vpop.f32.mrb[0].mxu0
  %v2369 = vpop.f32.mrb[0].mxu0
  %v2370 = vadd.f32 %v2049, %v2369
  %v2371 = vpop.f32.mrb[0].mxu0
  %2372 = vmatprep.mubr.bf16.mxu0 0
  %2373 = vmatmul.mubr.bf16.gmra.mrb[0].mxu0 %v1024
  %v2374 = vpop.f32.mrb[0].mxu0
  %v2375 = vadd.f32 %v2054, %v2374
  %v2376 = vpop.f32.mrb[0].mxu0
  %v2377 = vpop.f32.mrb[0].mxu0
  %v2378 = vadd.f32 %v2057, %v2377
  %v2379 = vpop.f32.mrb[0].mxu0
  %2380 = vmatprep.mubr.bf16.mxu0 0
  %2381 = vmatmul.mubr.bf16.gmra.mrb[0].mxu0 %v1029
  %v2382 = vpop.f32.mrb[0].mxu0
  %v2383 = vadd.f32 %v2062, %v2382
  %v2384 = vpop.f32.mrb[0].mxu0
  %v2385 = vpop.f32.mrb[0].mxu0
  %v2386 = vadd.f32 %v2065, %v2385
  %v2387 = vpop.f32.mrb[0].mxu0
  %2388 = vmatprep.mubr.bf16.mxu0 0
  %2389 = vmatmul.mubr.bf16.gmra.mrb[0].mxu0 %v1034
  %v2390 = vpop.f32.mrb[0].mxu0
  %v2391 = vadd.f32 %v2070, %v2390
  %v2392 = vpop.f32.mrb[0].mxu0
  %v2393 = vpop.f32.mrb[0].mxu0
  %v2394 = vadd.f32 %v2073, %v2393
  %v2395 = vpop.f32.mrb[0].mxu0
  %2396 = vmatprep.mubr.bf16.mxu0 0
  %2397 = vmatmul.mubr.bf16.gmra.mrb[0].mxu0 %v1039
  %v2398 = vpop.f32.mrb[0].mxu0
  %v2399 = vadd.f32 %v2078, %v2398
  %v2400 = vpop.f32.mrb[0].mxu0
  %v2401 = vpop.f32.mrb[0].mxu0
  %v2402 = vadd.f32 %v2081, %v2401
  %v2403 = vpop.f32.mrb[0].mxu0
  %2404 = vmatprep.mubr.bf16.mxu0 0
  %2405 = vmatmul.mubr.bf16.gmra.mrb[0].mxu0 %v1044
  %v2406 = vpop.f32.mrb[0].mxu0
  %v2407 = vadd.f32 %v2086, %v2406
  %v2408 = vpop.f32.mrb[0].mxu0
  %v2409 = vpop.f32.mrb[0].mxu0
  %v2410 = vadd.f32 %v2089, %v2409
  %v2411 = vpop.f32.mrb[0].mxu0
  %2412 = vmatprep.mubr.bf16.mxu0 0
  %2413 = vmatmul.mubr.bf16.gmra.mrb[0].mxu0 %v1049
  %v2414 = vpop.f32.mrb[0].mxu0
  %v2415 = vadd.f32 %v2094, %v2414
  %v2416 = vpop.f32.mrb[0].mxu0
  %v2417 = vpop.f32.mrb[0].mxu0
  %v2418 = vadd.f32 %v2097, %v2417
  %v2419 = vpop.f32.mrb[0].mxu0
  %2420 = vmatprep.mubr.bf16.mxu0 0
  %2421 = vmatmul.mubr.bf16.gmra.mrb[0].mxu0 %v1054
  %v2422 = vpop.f32.mrb[0].mxu0
  %v2423 = vadd.f32 %v2102, %v2422
  %v2424 = vpop.f32.mrb[0].mxu0
  %v2425 = vpop.f32.mrb[0].mxu0
  %v2426 = vadd.f32 %v2105, %v2425
  %v2427 = vpop.f32.mrb[0].mxu0
  %2428 = vmatprep.mubr.bf16.mxu0 0
  %2429 = vmatmul.mubr.bf16.gmra.mrb[0].mxu0 %v1059
  %v2430 = vpop.f32.mrb[0].mxu0
  %v2431 = vadd.f32 %v2110, %v2430
  %v2432 = vpop.f32.mrb[0].mxu0
  %v2433 = vpop.f32.mrb[0].mxu0
  %v2434 = vadd.f32 %v2113, %v2433
  %v2435 = vpop.f32.mrb[0].mxu0
  %2436 = vmatprep.mubr.bf16.mxu0 0
  %2437 = vmatmul.mubr.bf16.gmra.mrb[0].mxu0 %v1064
  %v2438 = vpop.f32.mrb[0].mxu0
  %v2439 = vadd.f32 %v2118, %v2438
  %v2440 = vpop.f32.mrb[0].mxu0
  %v2441 = vpop.f32.mrb[0].mxu0
  %v2442 = vadd.f32 %v2121, %v2441
  %v2443 = vpop.f32.mrb[0].mxu0
  %2444 = vmatprep.mubr.bf16.mxu0 0
  %2445 = vmatmul.mubr.bf16.gmra.mrb[0].mxu0 %v1069
  %v2446 = vpop.f32.mrb[0].mxu0
  %v2447 = vadd.f32 %v2126, %v2446
  %v2448 = vpop.f32.mrb[0].mxu0
  %v2449 = vpop.f32.mrb[0].mxu0
  %v2450 = vadd.f32 %v2129, %v2449
  %v2451 = vpop.f32.mrb[0].mxu0
  %2452 = vdwg.mxu0
  %v2453 = vadd.f32 %v2167, %v2170
  %v2454 = vadd.f32 %v2453, %v2175
  %v2455 = vadd.f32 %v2454, %v2178
  %v2456 = vadd.f32 %v2455, %v2183
  %v2457 = vadd.f32 %v2456, %v2186
  %v2458 = vadd.f32 %v2457, %v2191
  %v2459 = vadd.f32 %v2458, %v2194
  %v2460 = vadd.f32 %v2459, %v2199
  %v2461 = vadd.f32 %v2460, %v2202
  %v2462 = vadd.f32 %v2461, %v2207
  %v2463 = vadd.f32 %v2462, %v2210
  %v2464 = vadd.f32 %v2463, %v2215
  %v2465 = vadd.f32 %v2464, %v2218
  %v2466 = vadd.f32 %v2465, %v2223
  %v2467 = vadd.f32 %v2466, %v2226
  %v2468 = vadd.f32 %v2467, %v2231
  %v2469 = vadd.f32 %v2468, %v2234
  %v2470 = vadd.f32 %v2469, %v2239
  %v2471 = vadd.f32 %v2470, %v2242
  %v2472 = vadd.f32 %v2471, %v2247
  %v2473 = vadd.f32 %v2472, %v2250
  %v2474 = vadd.f32 %v2473, %v2255
  %v2475 = vadd.f32 %v2474, %v2258
  %v2476 = vadd.f32 %v2475, %v2263
  %v2477 = vadd.f32 %v2476, %v2266
  %v2478 = vadd.f32 %v2477, %v2271
  %v2479 = vadd.f32 %v2478, %v2274
  %v2480 = vadd.f32 %v2479, %v2279
  %v2481 = vadd.f32 %v2480, %v2282
  %v2482 = vadd.f32 %v2481, %v2287
  %v2483 = vadd.f32 %v2482, %v2290
  %v2484 = vadd.f32 %v2483, %v2295
  %v2485 = vadd.f32 %v2484, %v2298
  %v2486 = vadd.f32 %v2485, %v2303
  %v2487 = vadd.f32 %v2486, %v2306
  %v2488 = vadd.f32 %v2487, %v2311
  %v2489 = vadd.f32 %v2488, %v2314
  %v2490 = vadd.f32 %v2489, %v2319
  %v2491 = vadd.f32 %v2490, %v2322
  %v2492 = vadd.f32 %v2491, %v2327
  %v2493 = vadd.f32 %v2492, %v2330
  %v2494 = vadd.f32 %v2493, %v2335
  %v2495 = vadd.f32 %v2494, %v2338
  %v2496 = vadd.f32 %v2495, %v2343
  %v2497 = vadd.f32 %v2496, %v2346
  %v2498 = vadd.f32 %v2497, %v2351
  %v2499 = vadd.f32 %v2498, %v2354
  %v2500 = vadd.f32 %v2499, %v2359
  %v2501 = vadd.f32 %v2500, %v2362
  %v2502 = vadd.f32 %v2501, %v2367
  %v2503 = vadd.f32 %v2502, %v2370
  %v2504 = vadd.f32 %v2503, %v2375
  %v2505 = vadd.f32 %v2504, %v2378
  %v2506 = vadd.f32 %v2505, %v2383
  %v2507 = vadd.f32 %v2506, %v2386
  %v2508 = vadd.f32 %v2507, %v2391
  %v2509 = vadd.f32 %v2508, %v2394
  %v2510 = vadd.f32 %v2509, %v2399
  %v2511 = vadd.f32 %v2510, %v2402
  %v2512 = vadd.f32 %v2511, %v2407
  %v2513 = vadd.f32 %v2512, %v2410
  %v2514 = vadd.f32 %v2513, %v2415
  %v2515 = vadd.f32 %v2514, %v2418
  %v2516 = vadd.f32 %v2515, %v2423
  %v2517 = vadd.f32 %v2516, %v2426
  %v2518 = vadd.f32 %v2517, %v2431
  %v2519 = vadd.f32 %v2518, %v2434
  %v2520 = vadd.f32 %v2519, %v2439
  %v2521 = vadd.f32 %v2520, %v2442
  %v2522 = vadd.f32 %v2521, %v2447
  %v2523 = vadd.f32 %v2522, %v2450
  %v2524 = vrot.slane %v2523, 4
  %v2525 = vadd.f32 %v2523, %v2524
  %v2526 = vrot.slane %v2525, 2
  %v2527 = vadd.f32 %v2525, %v2526
  %v2528 = vrot.slane %v2527, 1
  %v2529 = vadd.f32 %v2527, %v2528
  %v2530 = vrcp.pop 576.0
  %v2531 = vmul.f32 %v2529, %v2530
  %v2532 = vsub.f32 %v2167, %v2531
  %v2533 = vsub.f32 %v2170, %v2531
  %v2534 = vsub.f32 %v2175, %v2531
  %v2535 = vsub.f32 %v2178, %v2531
  %v2536 = vsub.f32 %v2183, %v2531
  %v2537 = vsub.f32 %v2186, %v2531
  %v2538 = vsub.f32 %v2191, %v2531
  %v2539 = vsub.f32 %v2194, %v2531
  %v2540 = vsub.f32 %v2199, %v2531
  %v2541 = vsub.f32 %v2202, %v2531
  %v2542 = vsub.f32 %v2207, %v2531
  %v2543 = vsub.f32 %v2210, %v2531
  %v2544 = vsub.f32 %v2215, %v2531
  %v2545 = vsub.f32 %v2218, %v2531
  %v2546 = vsub.f32 %v2223, %v2531
  %v2547 = vsub.f32 %v2226, %v2531
  %v2548 = vsub.f32 %v2231, %v2531
  %v2549 = vsub.f32 %v2234, %v2531
  %v2550 = vsub.f32 %v2239, %v2531
  %v2551 = vsub.f32 %v2242, %v2531
  %v2552 = vsub.f32 %v2247, %v2531
  %v2553 = vsub.f32 %v2250, %v2531
  %v2554 = vsub.f32 %v2255, %v2531
  %v2555 = vsub.f32 %v2258, %v2531
  %v2556 = vsub.f32 %v2263, %v2531
  %v2557 = vsub.f32 %v2266, %v2531
  %v2558 = vsub.f32 %v2271, %v2531
  %v2559 = vsub.f32 %v2274, %v2531
  %v2560 = vsub.f32 %v2279, %v2531
  %v2561 = vsub.f32 %v2282, %v2531
  %v2562 = vsub.f32 %v2287, %v2531
  %v2563 = vsub.f32 %v2290, %v2531
  %v2564 = vsub.f32 %v2295, %v2531
  %v2565 = vsub.f32 %v2298, %v2531
  %v2566 = vsub.f32 %v2303, %v2531
  %v2567 = vsub.f32 %v2306, %v2531
  %v2568 = vsub.f32 %v2311, %v2531
  %v2569 = vsub.f32 %v2314, %v2531
  %v2570 = vsub.f32 %v2319, %v2531
  %v2571 = vsub.f32 %v2322, %v2531
  %v2572 = vsub.f32 %v2327, %v2531
  %v2573 = vsub.f32 %v2330, %v2531
  %v2574 = vsub.f32 %v2335, %v2531
  %v2575 = vsub.f32 %v2338, %v2531
  %v2576 = vsub.f32 %v2343, %v2531
  %v2577 = vsub.f32 %v2346, %v2531
  %v2578 = vsub.f32 %v2351, %v2531
  %v2579 = vsub.f32 %v2354, %v2531
  %v2580 = vsub.f32 %v2359, %v2531
  %v2581 = vsub.f32 %v2362, %v2531
  %v2582 = vsub.f32 %v2367, %v2531
  %v2583 = vsub.f32 %v2370, %v2531
  %v2584 = vsub.f32 %v2375, %v2531
  %v2585 = vsub.f32 %v2378, %v2531
  %v2586 = vsub.f32 %v2383, %v2531
  %v2587 = vsub.f32 %v2386, %v2531
  %v2588 = vsub.f32 %v2391, %v2531
  %v2589 = vsub.f32 %v2394, %v2531
  %v2590 = vsub.f32 %v2399, %v2531
  %v2591 = vsub.f32 %v2402, %v2531
  %v2592 = vsub.f32 %v2407, %v2531
  %v2593 = vsub.f32 %v2410, %v2531
  %v2594 = vsub.f32 %v2415, %v2531
  %v2595 = vsub.f32 %v2418, %v2531
  %v2596 = vsub.f32 %v2423, %v2531
  %v2597 = vsub.f32 %v2426, %v2531
  %v2598 = vsub.f32 %v2431, %v2531
  %v2599 = vsub.f32 %v2434, %v2531
  %v2600 = vsub.f32 %v2439, %v2531
  %v2601 = vsub.f32 %v2442, %v2531
  %v2602 = vsub.f32 %v2447, %v2531
  %v2603 = vsub.f32 %v2450, %v2531
  %v2604 = vmul.f32 %v2532, %v2532
  %v2605 = vmul.f32 %v2533, %v2533
  %v2606 = vmul.f32 %v2534, %v2534
  %v2607 = vmul.f32 %v2535, %v2535
  %v2608 = vmul.f32 %v2536, %v2536
  %v2609 = vmul.f32 %v2537, %v2537
  %v2610 = vmul.f32 %v2538, %v2538
  %v2611 = vmul.f32 %v2539, %v2539
  %v2612 = vmul.f32 %v2540, %v2540
  %v2613 = vmul.f32 %v2541, %v2541
  %v2614 = vmul.f32 %v2542, %v2542
  %v2615 = vmul.f32 %v2543, %v2543
  %v2616 = vmul.f32 %v2544, %v2544
  %v2617 = vmul.f32 %v2545, %v2545
  %v2618 = vmul.f32 %v2546, %v2546
  %v2619 = vmul.f32 %v2547, %v2547
  %v2620 = vmul.f32 %v2548, %v2548
  %v2621 = vmul.f32 %v2549, %v2549
  %v2622 = vmul.f32 %v2550, %v2550
  %v2623 = vmul.f32 %v2551, %v2551
  %v2624 = vmul.f32 %v2552, %v2552
  %v2625 = vmul.f32 %v2553, %v2553
  %v2626 = vmul.f32 %v2554, %v2554
  %v2627 = vmul.f32 %v2555, %v2555
  %v2628 = vmul.f32 %v2556, %v2556
  %v2629 = vmul.f32 %v2557, %v2557
  %v2630 = vmul.f32 %v2558, %v2558
  %v2631 = vmul.f32 %v2559, %v2559
  %v2632 = vmul.f32 %v2560, %v2560
  %v2633 = vmul.f32 %v2561, %v2561
  %v2634 = vmul.f32 %v2562, %v2562
  %v2635 = vmul.f32 %v2563, %v2563
  %v2636 = vmul.f32 %v2564, %v2564
  %v2637 = vmul.f32 %v2565, %v2565
  %v2638 = vmul.f32 %v2566, %v2566
  %v2639 = vmul.f32 %v2567, %v2567
  %v2640 = vmul.f32 %v2568, %v2568
  %v2641 = vmul.f32 %v2569, %v2569
  %v2642 = vmul.f32 %v2570, %v2570
  %v2643 = vmul.f32 %v2571, %v2571
  %v2644 = vmul.f32 %v2572, %v2572
  %v2645 = vmul.f32 %v2573, %v2573
  %v2646 = vmul.f32 %v2574, %v2574
  %v2647 = vmul.f32 %v2575, %v2575
  %v2648 = vmul.f32 %v2576, %v2576
  %v2649 = vmul.f32 %v2577, %v2577
  %v2650 = vmul.f32 %v2578, %v2578
  %v2651 = vmul.f32 %v2579, %v2579
  %v2652 = vmul.f32 %v2580, %v2580
  %v2653 = vmul.f32 %v2581, %v2581
  %v2654 = vmul.f32 %v2582, %v2582
  %v2655 = vmul.f32 %v2583, %v2583
  %v2656 = vmul.f32 %v2584, %v2584
  %v2657 = vmul.f32 %v2585, %v2585
  %v2658 = vmul.f32 %v2586, %v2586
  %v2659 = vmul.f32 %v2587, %v2587
  %v2660 = vmul.f32 %v2588, %v2588
  %v2661 = vmul.f32 %v2589, %v2589
  %v2662 = vmul.f32 %v2590, %v2590
  %v2663 = vmul.f32 %v2591, %v2591
  %v2664 = vmul.f32 %v2592, %v2592
  %v2665 = vmul.f32 %v2593, %v2593
  %v2666 = vmul.f32 %v2594, %v2594
  %v2667 = vmul.f32 %v2595, %v2595
  %v2668 = vmul.f32 %v2596, %v2596
  %v2669 = vmul.f32 %v2597, %v2597
  %v2670 = vmul.f32 %v2598, %v2598
  %v2671 = vmul.f32 %v2599, %v2599
  %v2672 = vmul.f32 %v2600, %v2600
  %v2673 = vmul.f32 %v2601, %v2601
  %v2674 = vmul.f32 %v2602, %v2602
  %v2675 = vmul.f32 %v2603, %v2603
  %v2676 = vadd.f32 %v2604, %v2605
  %v2677 = vadd.f32 %v2676, %v2606
  %v2678 = vadd.f32 %v2677, %v2607
  %v2679 = vadd.f32 %v2678, %v2608
  %v2680 = vadd.f32 %v2679, %v2609
  %v2681 = vadd.f32 %v2680, %v2610
  %v2682 = vadd.f32 %v2681, %v2611
  %v2683 = vadd.f32 %v2682, %v2612
  %v2684 = vadd.f32 %v2683, %v2613
  %v2685 = vadd.f32 %v2684, %v2614
  %v2686 = vadd.f32 %v2685, %v2615
  %v2687 = vadd.f32 %v2686, %v2616
  %v2688 = vadd.f32 %v2687, %v2617
  %v2689 = vadd.f32 %v2688, %v2618
  %v2690 = vadd.f32 %v2689, %v2619
  %v2691 = vadd.f32 %v2690, %v2620
  %v2692 = vadd.f32 %v2691, %v2621
  %v2693 = vadd.f32 %v2692, %v2622
  %v2694 = vadd.f32 %v2693, %v2623
  %v2695 = vadd.f32 %v2694, %v2624
  %v2696 = vadd.f32 %v2695, %v2625
  %v2697 = vadd.f32 %v2696, %v2626
  %v2698 = vadd.f32 %v2697, %v2627
  %v2699 = vadd.f32 %v2698, %v2628
  %v2700 = vadd.f32 %v2699, %v2629
  %v2701 = vadd.f32 %v2700, %v2630
  %v2702 = vadd.f32 %v2701, %v2631
  %v2703 = vadd.f32 %v2702, %v2632
  %v2704 = vadd.f32 %v2703, %v2633
  %v2705 = vadd.f32 %v2704, %v2634
  %v2706 = vadd.f32 %v2705, %v2635
  %v2707 = vadd.f32 %v2706, %v2636
  %v2708 = vadd.f32 %v2707, %v2637
  %v2709 = vadd.f32 %v2708, %v2638
  %v2710 = vadd.f32 %v2709, %v2639
  %v2711 = vadd.f32 %v2710, %v2640
  %v2712 = vadd.f32 %v2711, %v2641
  %v2713 = vadd.f32 %v2712, %v2642
  %v2714 = vadd.f32 %v2713, %v2643
  %v2715 = vadd.f32 %v2714, %v2644
  %v2716 = vadd.f32 %v2715, %v2645
  %v2717 = vadd.f32 %v2716, %v2646
  %v2718 = vadd.f32 %v2717, %v2647
  %v2719 = vadd.f32 %v2718, %v2648
  %v2720 = vadd.f32 %v2719, %v2649
  %v2721 = vadd.f32 %v2720, %v2650
  %v2722 = vadd.f32 %v2721, %v2651
  %v2723 = vadd.f32 %v2722, %v2652
  %v2724 = vadd.f32 %v2723, %v2653
  %v2725 = vadd.f32 %v2724, %v2654
  %v2726 = vadd.f32 %v2725, %v2655
  %v2727 = vadd.f32 %v2726, %v2656
  %v2728 = vadd.f32 %v2727, %v2657
  %v2729 = vadd.f32 %v2728, %v2658
  %v2730 = vadd.f32 %v2729, %v2659
  %v2731 = vadd.f32 %v2730, %v2660
  %v2732 = vadd.f32 %v2731, %v2661
  %v2733 = vadd.f32 %v2732, %v2662
  %v2734 = vadd.f32 %v2733, %v2663
  %v2735 = vadd.f32 %v2734, %v2664
  %v2736 = vadd.f32 %v2735, %v2665
  %v2737 = vadd.f32 %v2736, %v2666
  %v2738 = vadd.f32 %v2737, %v2667
  %v2739 = vadd.f32 %v2738, %v2668
  %v2740 = vadd.f32 %v2739, %v2669
  %v2741 = vadd.f32 %v2740, %v2670
  %v2742 = vadd.f32 %v2741, %v2671
  %v2743 = vadd.f32 %v2742, %v2672
  %v2744 = vadd.f32 %v2743, %v2673
  %v2745 = vadd.f32 %v2744, %v2674
  %v2746 = vadd.f32 %v2745, %v2675
  %v2747 = vrot.slane %v2746, 4
  %v2748 = vadd.f32 %v2746, %v2747
  %v2749 = vrot.slane %v2748, 2
  %v2750 = vadd.f32 %v2748, %v2749
  %v2751 = vrot.slane %v2750, 1
  %v2752 = vadd.f32 %v2750, %v2751
  %v2753 = vmul.f32 %v2752, %v2530
  %v2754 = vadd.f32 %v2753, 1e-05
  %v2755 = vrsqrt.pop %v2754
  %v2756 = vmul.f32 %v2532, %v2755
  %v2757 = vmul.f32 %v2533, %v2755
  %v2758 = vmul.f32 %v2534, %v2755
  %v2759 = vmul.f32 %v2535, %v2755
  %v2760 = vmul.f32 %v2536, %v2755
  %v2761 = vmul.f32 %v2537, %v2755
  %v2762 = vmul.f32 %v2538, %v2755
  %v2763 = vmul.f32 %v2539, %v2755
  %v2764 = vmul.f32 %v2540, %v2755
  %v2765 = vmul.f32 %v2541, %v2755
  %v2766 = vmul.f32 %v2542, %v2755
  %v2767 = vmul.f32 %v2543, %v2755
  %v2768 = vmul.f32 %v2544, %v2755
  %v2769 = vmul.f32 %v2545, %v2755
  %v2770 = vmul.f32 %v2546, %v2755
  %v2771 = vmul.f32 %v2547, %v2755
  %v2772 = vmul.f32 %v2548, %v2755
  %v2773 = vmul.f32 %v2549, %v2755
  %v2774 = vmul.f32 %v2550, %v2755
  %v2775 = vmul.f32 %v2551, %v2755
  %v2776 = vmul.f32 %v2552, %v2755
  %v2777 = vmul.f32 %v2553, %v2755
  %v2778 = vmul.f32 %v2554, %v2755
  %v2779 = vmul.f32 %v2555, %v2755
  %v2780 = vmul.f32 %v2556, %v2755
  %v2781 = vmul.f32 %v2557, %v2755
  %v2782 = vmul.f32 %v2558, %v2755
  %v2783 = vmul.f32 %v2559, %v2755
  %v2784 = vmul.f32 %v2560, %v2755
  %v2785 = vmul.f32 %v2561, %v2755
  %v2786 = vmul.f32 %v2562, %v2755
  %v2787 = vmul.f32 %v2563, %v2755
  %v2788 = vmul.f32 %v2564, %v2755
  %v2789 = vmul.f32 %v2565, %v2755
  %v2790 = vmul.f32 %v2566, %v2755
  %v2791 = vmul.f32 %v2567, %v2755
  %v2792 = vmul.f32 %v2568, %v2755
  %v2793 = vmul.f32 %v2569, %v2755
  %v2794 = vmul.f32 %v2570, %v2755
  %v2795 = vmul.f32 %v2571, %v2755
  %v2796 = vmul.f32 %v2572, %v2755
  %v2797 = vmul.f32 %v2573, %v2755
  %v2798 = vmul.f32 %v2574, %v2755
  %v2799 = vmul.f32 %v2575, %v2755
  %v2800 = vmul.f32 %v2576, %v2755
  %v2801 = vmul.f32 %v2577, %v2755
  %v2802 = vmul.f32 %v2578, %v2755
  %v2803 = vmul.f32 %v2579, %v2755
  %v2804 = vmul.f32 %v2580, %v2755
  %v2805 = vmul.f32 %v2581, %v2755
  %v2806 = vmul.f32 %v2582, %v2755
  %v2807 = vmul.f32 %v2583, %v2755
  %v2808 = vmul.f32 %v2584, %v2755
  %v2809 = vmul.f32 %v2585, %v2755
  %v2810 = vmul.f32 %v2586, %v2755
  %v2811 = vmul.f32 %v2587, %v2755
  %v2812 = vmul.f32 %v2588, %v2755
  %v2813 = vmul.f32 %v2589, %v2755
  %v2814 = vmul.f32 %v2590, %v2755
  %v2815 = vmul.f32 %v2591, %v2755
  %v2816 = vmul.f32 %v2592, %v2755
  %v2817 = vmul.f32 %v2593, %v2755
  %v2818 = vmul.f32 %v2594, %v2755
  %v2819 = vmul.f32 %v2595, %v2755
  %v2820 = vmul.f32 %v2596, %v2755
  %v2821 = vmul.f32 %v2597, %v2755
  %v2822 = vmul.f32 %v2598, %v2755
  %v2823 = vmul.f32 %v2599, %v2755
  %v2824 = vmul.f32 %v2600, %v2755
  %v2825 = vmul.f32 %v2601, %v2755
  %v2826 = vmul.f32 %v2602, %v2755
  %v2827 = vmul.f32 %v2603, %v2755
  %v2828 = vld [vmem:[%s2] sm:$0x1]
  %v2830 = vlaneseq
  %v2831 = vshrl.u32 %v2830, 7
  %v2832 = vsub.s32 0, %v2831
  %v2833 = vrot.slane %v2828, %v2832
  %v2835 = vmul.f32 %v2756, %v2833
  %v2836 = vmul.f32 %v2757, %v2833
  %v2837 = vmul.f32 %v2758, %v2833
  %v2838 = vmul.f32 %v2759, %v2833
  %v2839 = vmul.f32 %v2760, %v2833
  %v2840 = vmul.f32 %v2761, %v2833
  %v2841 = vmul.f32 %v2762, %v2833
  %v2842 = vmul.f32 %v2763, %v2833
  %v2843 = vmul.f32 %v2764, %v2833
  %v2844 = vmul.f32 %v2765, %v2833
  %v2845 = vmul.f32 %v2766, %v2833
  %v2846 = vmul.f32 %v2767, %v2833
  %v2847 = vmul.f32 %v2768, %v2833
  %v2848 = vmul.f32 %v2769, %v2833
  %v2849 = vmul.f32 %v2770, %v2833
  %v2850 = vmul.f32 %v2771, %v2833
  %v2851 = vmul.f32 %v2772, %v2833
  %v2852 = vmul.f32 %v2773, %v2833
  %v2853 = vmul.f32 %v2774, %v2833
  %v2854 = vmul.f32 %v2775, %v2833
  %v2855 = vmul.f32 %v2776, %v2833
  %v2856 = vmul.f32 %v2777, %v2833
  %v2857 = vmul.f32 %v2778, %v2833
  %v2858 = vmul.f32 %v2779, %v2833
  %v2859 = vmul.f32 %v2780, %v2833
  %v2860 = vmul.f32 %v2781, %v2833
  %v2861 = vmul.f32 %v2782, %v2833
  %v2862 = vmul.f32 %v2783, %v2833
  %v2863 = vmul.f32 %v2784, %v2833
  %v2864 = vmul.f32 %v2785, %v2833
  %v2865 = vmul.f32 %v2786, %v2833
  %v2866 = vmul.f32 %v2787, %v2833
  %v2867 = vmul.f32 %v2788, %v2833
  %v2868 = vmul.f32 %v2789, %v2833
  %v2869 = vmul.f32 %v2790, %v2833
  %v2870 = vmul.f32 %v2791, %v2833
  %v2871 = vmul.f32 %v2792, %v2833
  %v2872 = vmul.f32 %v2793, %v2833
  %v2873 = vmul.f32 %v2794, %v2833
  %v2874 = vmul.f32 %v2795, %v2833
  %v2875 = vmul.f32 %v2796, %v2833
  %v2876 = vmul.f32 %v2797, %v2833
  %v2877 = vmul.f32 %v2798, %v2833
  %v2878 = vmul.f32 %v2799, %v2833
  %v2879 = vmul.f32 %v2800, %v2833
  %v2880 = vmul.f32 %v2801, %v2833
  %v2881 = vmul.f32 %v2802, %v2833
  %v2882 = vmul.f32 %v2803, %v2833
  %v2883 = vmul.f32 %v2804, %v2833
  %v2884 = vmul.f32 %v2805, %v2833
  %v2885 = vmul.f32 %v2806, %v2833
  %v2886 = vmul.f32 %v2807, %v2833
  %v2887 = vmul.f32 %v2808, %v2833
  %v2888 = vmul.f32 %v2809, %v2833
  %v2889 = vmul.f32 %v2810, %v2833
  %v2890 = vmul.f32 %v2811, %v2833
  %v2891 = vmul.f32 %v2812, %v2833
  %v2892 = vmul.f32 %v2813, %v2833
  %v2893 = vmul.f32 %v2814, %v2833
  %v2894 = vmul.f32 %v2815, %v2833
  %v2895 = vmul.f32 %v2816, %v2833
  %v2896 = vmul.f32 %v2817, %v2833
  %v2897 = vmul.f32 %v2818, %v2833
  %v2898 = vmul.f32 %v2819, %v2833
  %v2899 = vmul.f32 %v2820, %v2833
  %v2900 = vmul.f32 %v2821, %v2833
  %v2901 = vmul.f32 %v2822, %v2833
  %v2902 = vmul.f32 %v2823, %v2833
  %v2903 = vmul.f32 %v2824, %v2833
  %v2904 = vmul.f32 %v2825, %v2833
  %v2905 = vmul.f32 %v2826, %v2833
  %v2906 = vmul.f32 %v2827, %v2833
  %v2907 = vld [vmem:[%s3] sm:$0x1]
  %v2909 = vlaneseq
  %v2910 = vshrl.u32 %v2909, 7
  %v2911 = vsub.s32 0, %v2910
  %v2912 = vrot.slane %v2907, %v2911
  %v2914 = vadd.f32 %v2835, %v2912
  %v2915 = vadd.f32 %v2836, %v2912
  %v2916 = vadd.f32 %v2837, %v2912
  %v2917 = vadd.f32 %v2838, %v2912
  %v2918 = vadd.f32 %v2839, %v2912
  %v2919 = vadd.f32 %v2840, %v2912
  %v2920 = vadd.f32 %v2841, %v2912
  %v2921 = vadd.f32 %v2842, %v2912
  %v2922 = vadd.f32 %v2843, %v2912
  %v2923 = vadd.f32 %v2844, %v2912
  %v2924 = vadd.f32 %v2845, %v2912
  %v2925 = vadd.f32 %v2846, %v2912
  %v2926 = vadd.f32 %v2847, %v2912
  %v2927 = vadd.f32 %v2848, %v2912
  %v2928 = vadd.f32 %v2849, %v2912
  %v2929 = vadd.f32 %v2850, %v2912
  %v2930 = vadd.f32 %v2851, %v2912
  %v2931 = vadd.f32 %v2852, %v2912
  %v2932 = vadd.f32 %v2853, %v2912
  %v2933 = vadd.f32 %v2854, %v2912
  %v2934 = vadd.f32 %v2855, %v2912
  %v2935 = vadd.f32 %v2856, %v2912
  %v2936 = vadd.f32 %v2857, %v2912
  %v2937 = vadd.f32 %v2858, %v2912
  %v2938 = vadd.f32 %v2859, %v2912
  %v2939 = vadd.f32 %v2860, %v2912
  %v2940 = vadd.f32 %v2861, %v2912
  %v2941 = vadd.f32 %v2862, %v2912
  %v2942 = vadd.f32 %v2863, %v2912
  %v2943 = vadd.f32 %v2864, %v2912
  %v2944 = vadd.f32 %v2865, %v2912
  %v2945 = vadd.f32 %v2866, %v2912
  %v2946 = vadd.f32 %v2867, %v2912
  %v2947 = vadd.f32 %v2868, %v2912
  %v2948 = vadd.f32 %v2869, %v2912
  %v2949 = vadd.f32 %v2870, %v2912
  %v2950 = vadd.f32 %v2871, %v2912
  %v2951 = vadd.f32 %v2872, %v2912
  %v2952 = vadd.f32 %v2873, %v2912
  %v2953 = vadd.f32 %v2874, %v2912
  %v2954 = vadd.f32 %v2875, %v2912
  %v2955 = vadd.f32 %v2876, %v2912
  %v2956 = vadd.f32 %v2877, %v2912
  %v2957 = vadd.f32 %v2878, %v2912
  %v2958 = vadd.f32 %v2879, %v2912
  %v2959 = vadd.f32 %v2880, %v2912
  %v2960 = vadd.f32 %v2881, %v2912
  %v2961 = vadd.f32 %v2882, %v2912
  %v2962 = vadd.f32 %v2883, %v2912
  %v2963 = vadd.f32 %v2884, %v2912
  %v2964 = vadd.f32 %v2885, %v2912
  %v2965 = vadd.f32 %v2886, %v2912
  %v2966 = vadd.f32 %v2887, %v2912
  %v2967 = vadd.f32 %v2888, %v2912
  %v2968 = vadd.f32 %v2889, %v2912
  %v2969 = vadd.f32 %v2890, %v2912
  %v2970 = vadd.f32 %v2891, %v2912
  %v2971 = vadd.f32 %v2892, %v2912
  %v2972 = vadd.f32 %v2893, %v2912
  %v2973 = vadd.f32 %v2894, %v2912
  %v2974 = vadd.f32 %v2895, %v2912
  %v2975 = vadd.f32 %v2896, %v2912
  %v2976 = vadd.f32 %v2897, %v2912
  %v2977 = vadd.f32 %v2898, %v2912
  %v2978 = vadd.f32 %v2899, %v2912
  %v2979 = vadd.f32 %v2900, %v2912
  %v2980 = vadd.f32 %v2901, %v2912
  %v2981 = vadd.f32 %v2902, %v2912
  %v2982 = vadd.f32 %v2903, %v2912
  %v2983 = vadd.f32 %v2904, %v2912
  %v2984 = vadd.f32 %v2905, %v2912
  %v2985 = vadd.f32 %v2906, %v2912
  %v2986 = vmax.f32 %v2914, 0.0
  %v2987 = vmax.f32 %v2915, 0.0
  %v2988 = vmax.f32 %v2916, 0.0
  %v2989 = vmax.f32 %v2917, 0.0
  %v2990 = vmax.f32 %v2918, 0.0
  %v2991 = vmax.f32 %v2919, 0.0
  %v2992 = vmax.f32 %v2920, 0.0
  %v2993 = vmax.f32 %v2921, 0.0
  %v2994 = vmax.f32 %v2922, 0.0
  %v2995 = vmax.f32 %v2923, 0.0
  %v2996 = vmax.f32 %v2924, 0.0
  %v2997 = vmax.f32 %v2925, 0.0
  %v2998 = vmax.f32 %v2926, 0.0
  %v2999 = vmax.f32 %v2927, 0.0
  %v3000 = vmax.f32 %v2928, 0.0
  %v3001 = vmax.f32 %v2929, 0.0
  %v3002 = vmax.f32 %v2930, 0.0
  %v3003 = vmax.f32 %v2931, 0.0
  %v3004 = vmax.f32 %v2932, 0.0
  %v3005 = vmax.f32 %v2933, 0.0
  %v3006 = vmax.f32 %v2934, 0.0
  %v3007 = vmax.f32 %v2935, 0.0
  %v3008 = vmax.f32 %v2936, 0.0
  %v3009 = vmax.f32 %v2937, 0.0
  %v3010 = vmax.f32 %v2938, 0.0
  %v3011 = vmax.f32 %v2939, 0.0
  %v3012 = vmax.f32 %v2940, 0.0
  %v3013 = vmax.f32 %v2941, 0.0
  %v3014 = vmax.f32 %v2942, 0.0
  %v3015 = vmax.f32 %v2943, 0.0
  %v3016 = vmax.f32 %v2944, 0.0
  %v3017 = vmax.f32 %v2945, 0.0
  %v3018 = vmax.f32 %v2946, 0.0
  %v3019 = vmax.f32 %v2947, 0.0
  %v3020 = vmax.f32 %v2948, 0.0
  %v3021 = vmax.f32 %v2949, 0.0
  %v3022 = vmax.f32 %v2950, 0.0
  %v3023 = vmax.f32 %v2951, 0.0
  %v3024 = vmax.f32 %v2952, 0.0
  %v3025 = vmax.f32 %v2953, 0.0
  %v3026 = vmax.f32 %v2954, 0.0
  %v3027 = vmax.f32 %v2955, 0.0
  %v3028 = vmax.f32 %v2956, 0.0
  %v3029 = vmax.f32 %v2957, 0.0
  %v3030 = vmax.f32 %v2958, 0.0
  %v3031 = vmax.f32 %v2959, 0.0
  %v3032 = vmax.f32 %v2960, 0.0
  %v3033 = vmax.f32 %v2961, 0.0
  %v3034 = vmax.f32 %v2962, 0.0
  %v3035 = vmax.f32 %v2963, 0.0
  %v3036 = vmax.f32 %v2964, 0.0
  %v3037 = vmax.f32 %v2965, 0.0
  %v3038 = vmax.f32 %v2966, 0.0
  %v3039 = vmax.f32 %v2967, 0.0
  %v3040 = vmax.f32 %v2968, 0.0
  %v3041 = vmax.f32 %v2969, 0.0
  %v3042 = vmax.f32 %v2970, 0.0
  %v3043 = vmax.f32 %v2971, 0.0
  %v3044 = vmax.f32 %v2972, 0.0
  %v3045 = vmax.f32 %v2973, 0.0
  %v3046 = vmax.f32 %v2974, 0.0
  %v3047 = vmax.f32 %v2975, 0.0
  %v3048 = vmax.f32 %v2976, 0.0
  %v3049 = vmax.f32 %v2977, 0.0
  %v3050 = vmax.f32 %v2978, 0.0
  %v3051 = vmax.f32 %v2979, 0.0
  %v3052 = vmax.f32 %v2980, 0.0
  %v3053 = vmax.f32 %v2981, 0.0
  %v3054 = vmax.f32 %v2982, 0.0
  %v3055 = vmax.f32 %v2983, 0.0
  %v3056 = vmax.f32 %v2984, 0.0
  %v3057 = vmax.f32 %v2985, 0.0
  %3058 = vst [vmem:[%s4] sm:$0xff] %v2986
  %3059 = vst [vmem:[%s4 + $0x8] sm:$0xff] %v2987
  %3060 = vst [vmem:[%s4 + $0x10] sm:$0xff] %v2988
  %3061 = vst [vmem:[%s4 + $0x18] sm:$0xff] %v2989
  %3062 = vst [vmem:[%s4 + $0x20] sm:$0xff] %v2990
  %3063 = vst [vmem:[%s4 + $0x28] sm:$0xff] %v2991
  %3064 = vst [vmem:[%s4 + $0x30] sm:$0xff] %v2992
  %3065 = vst [vmem:[%s4 + $0x38] sm:$0xff] %v2993
  %3066 = vst [vmem:[%s4 + $0x40] sm:$0xff] %v2994
  %3067 = vst [vmem:[%s4 + $0x48] sm:$0xff] %v2995
  %3068 = vst [vmem:[%s4 + $0x50] sm:$0xff] %v2996
  %3069 = vst [vmem:[%s4 + $0x58] sm:$0xff] %v2997
  %3070 = vst [vmem:[%s4 + $0x60] sm:$0xff] %v2998
  %3071 = vst [vmem:[%s4 + $0x68] sm:$0xff] %v2999
  %3072 = vst [vmem:[%s4 + $0x70] sm:$0xff] %v3000
  %3073 = vst [vmem:[%s4 + $0x78] sm:$0xff] %v3001
  %3074 = vst [vmem:[%s4 + $0x80] sm:$0xff] %v3002
  %3075 = vst [vmem:[%s4 + $0x88] sm:$0xff] %v3003
  %3076 = vst [vmem:[%s4 + $0x90] sm:$0xff] %v3004
  %3077 = vst [vmem:[%s4 + $0x98] sm:$0xff] %v3005
  %3078 = vst [vmem:[%s4 + $0xa0] sm:$0xff] %v3006
  %3079 = vst [vmem:[%s4 + $0xa8] sm:$0xff] %v3007
  %3080 = vst [vmem:[%s4 + $0xb0] sm:$0xff] %v3008
  %3081 = vst [vmem:[%s4 + $0xb8] sm:$0xff] %v3009
  %3082 = vst [vmem:[%s4 + $0xc0] sm:$0xff] %v3010
  %3083 = vst [vmem:[%s4 + $0xc8] sm:$0xff] %v3011
  %3084 = vst [vmem:[%s4 + $0xd0] sm:$0xff] %v3012
  %3085 = vst [vmem:[%s4 + $0xd8] sm:$0xff] %v3013
  %3086 = vst [vmem:[%s4 + $0xe0] sm:$0xff] %v3014
  %3087 = vst [vmem:[%s4 + $0xe8] sm:$0xff] %v3015
  %3088 = vst [vmem:[%s4 + $0xf0] sm:$0xff] %v3016
  %3089 = vst [vmem:[%s4 + $0xf8] sm:$0xff] %v3017
  %3090 = vst [vmem:[%s4 + $0x100] sm:$0xff] %v3018
  %3091 = vst [vmem:[%s4 + $0x108] sm:$0xff] %v3019
  %3092 = vst [vmem:[%s4 + $0x110] sm:$0xff] %v3020
  %3093 = vst [vmem:[%s4 + $0x118] sm:$0xff] %v3021
  %3094 = vst [vmem:[%s4 + $0x120] sm:$0xff] %v3022
  %3095 = vst [vmem:[%s4 + $0x128] sm:$0xff] %v3023
  %3096 = vst [vmem:[%s4 + $0x130] sm:$0xff] %v3024
  %3097 = vst [vmem:[%s4 + $0x138] sm:$0xff] %v3025
  %3098 = vst [vmem:[%s4 + $0x140] sm:$0xff] %v3026
  %3099 = vst [vmem:[%s4 + $0x148] sm:$0xff] %v3027
  %3100 = vst [vmem:[%s4 + $0x150] sm:$0xff] %v3028
  %3101 = vst [vmem:[%s4 + $0x158] sm:$0xff] %v3029
  %3102 = vst [vmem:[%s4 + $0x160] sm:$0xff] %v3030
  %3103 = vst [vmem:[%s4 + $0x168] sm:$0xff] %v3031
  %3104 = vst [vmem:[%s4 + $0x170] sm:$0xff] %v3032
  %3105 = vst [vmem:[%s4 + $0x178] sm:$0xff] %v3033
  %3106 = vst [vmem:[%s4 + $0x180] sm:$0xff] %v3034
  %3107 = vst [vmem:[%s4 + $0x188] sm:$0xff] %v3035
  %3108 = vst [vmem:[%s4 + $0x190] sm:$0xff] %v3036
  %3109 = vst [vmem:[%s4 + $0x198] sm:$0xff] %v3037
  %3110 = vst [vmem:[%s4 + $0x1a0] sm:$0xff] %v3038
  %3111 = vst [vmem:[%s4 + $0x1a8] sm:$0xff] %v3039
  %3112 = vst [vmem:[%s4 + $0x1b0] sm:$0xff] %v3040
  %3113 = vst [vmem:[%s4 + $0x1b8] sm:$0xff] %v3041
  %3114 = vst [vmem:[%s4 + $0x1c0] sm:$0xff] %v3042
  %3115 = vst [vmem:[%s4 + $0x1c8] sm:$0xff] %v3043
  %3116 = vst [vmem:[%s4 + $0x1d0] sm:$0xff] %v3044
  %3117 = vst [vmem:[%s4 + $0x1d8] sm:$0xff] %v3045
  %3118 = vst [vmem:[%s4 + $0x1e0] sm:$0xff] %v3046
  %3119 = vst [vmem:[%s4 + $0x1e8] sm:$0xff] %v3047
  %3120 = vst [vmem:[%s4 + $0x1f0] sm:$0xff] %v3048
  %3121 = vst [vmem:[%s4 + $0x1f8] sm:$0xff] %v3049
  %3122 = vst [vmem:[%s4 + $0x200] sm:$0xff] %v3050
  %3123 = vst [vmem:[%s4 + $0x208] sm:$0xff] %v3051
  %3124 = vst [vmem:[%s4 + $0x210] sm:$0xff] %v3052
  %3125 = vst [vmem:[%s4 + $0x218] sm:$0xff] %v3053
  %3126 = vst [vmem:[%s4 + $0x220] sm:$0xff] %v3054
  %3127 = vst [vmem:[%s4 + $0x228] sm:$0xff] %v3055
  %3128 = vst [vmem:[%s4 + $0x230] sm:$0xff] %v3056
  %3129 = vst [vmem:[%s4 + $0x238] sm:$0xff] %v3057
  // Predicated region
  $region18: #{my_nn_forward.9} parent=0 // pred_check
    _
  $region19: #{my_nn_forward.9} parent=0 // pred_check_branch
    %3131 = sbr.rel (0) target = $region21
  $region20: #{my_nn_forward.9} parent=0 // pred_region
    _
  $region21: #{my_nn_forward.9} parent=0 // pred_fallthru
    _
  // Predicated region
  $region22: #{my_nn_forward.9} parent=0 // pred_check
    _
  $region23: #{my_nn_forward.9} parent=0 // pred_check_branch
    %3133 = sbr.rel (0) target = $region25
  $region24: #{my_nn_forward.9} parent=0 // pred_region
    _
  $region25: #{my_nn_forward.9} parent=0 // pred_fallthru
    _

// kernel: my_nn_forward.10
$region0: #{my_nn_forward.10}
  #allocation0 [shape = 'u32[]', space=smem, size = 0x4, offset = 0x4, fixed_abs, tag = 'smem constant byte address 0x4 - core index']
  #allocation1 [shape = 'u32[144,128]{1,0:T(1,128)}', space=vmem, size = 0x12000, scoped, tag = 'internal scratch']
  %s0 = inlined_call_operand.vmem [shape: bf16[144,384], index: 0, kind: input, shape index: {}]
  %s1 = inlined_call_operand.vmem [shape: bf16[384,128], index: 1, kind: input, shape index: {}]
  %s2 = inlined_call_operand.vmem [shape: f32[1,128], index: 2, kind: input, shape index: {}]
  %s3 = inlined_call_operand.vmem [shape: f32[1,128], index: 3, kind: input, shape index: {}]
  %s4 = inlined_call_operand.vmem [shape: f32[144,128], index: 4, kind: output, shape index: {}]
  %s5 = sld [smem:[#allocation0]]
  $region26: #{my_nn_forward.10} parent=0
    _
  %s7 = ssub.s32 1, %s5
  %s8 = scalar_select 0, %s7, %s5
  // Predicated region
  $region2: #{my_nn_forward.10} parent=0 // pred_check
    _
  $region3: #{my_nn_forward.10} parent=0 // pred_check_branch
    %10 = sbr.rel (0) target = $region5
  $region4: #{my_nn_forward.10} parent=0 // pred_region
    _
  $region5: #{my_nn_forward.10} parent=0 // pred_fallthru
    _
  // Predicated region
  $region6: #{my_nn_forward.10} parent=0 // pred_check
    _
  $region7: #{my_nn_forward.10} parent=0 // pred_check_branch
    %12 = sbr.rel (0) target = $region9
  $region8: #{my_nn_forward.10} parent=0 // pred_region
    _
  $region9: #{my_nn_forward.10} parent=0 // pred_fallthru
    _
  // Predicated region
  $region10: #{my_nn_forward.10} parent=0 // pred_check
    _
  $region11: #{my_nn_forward.10} parent=0 // pred_check_branch
    %14 = sbr.rel (0) target = $region13
  $region12: #{my_nn_forward.10} parent=0 // pred_region
    _
  $region13: #{my_nn_forward.10} parent=0 // pred_fallthru
    _
  // Predicated region
  $region14: #{my_nn_forward.10} parent=0 // pred_check
    _
  $region15: #{my_nn_forward.10} parent=0 // pred_check_branch
    %16 = sbr.rel (0) target = $region17
  $region16: #{my_nn_forward.10} parent=0 // pred_region
    _
  $region17: #{my_nn_forward.10} parent=0 // pred_fallthru
    _
  %v18 = vld [vmem:[%s0] sm:$0xff]
  %v19 = vld [vmem:[%s0 + $0x8] sm:$0xf]
  %v20 = vld [vmem:[%s0 + $0xc] sm:$0xff]
  %v21 = vld [vmem:[%s0 + $0x14] sm:$0xf]
  %v22 = vld [vmem:[%s0 + $0x18] sm:$0xff]
  %v23 = vld [vmem:[%s0 + $0x20] sm:$0xf]
  %v24 = vld [vmem:[%s0 + $0x24] sm:$0xff]
  %v25 = vld [vmem:[%s0 + $0x2c] sm:$0xf]
  %v26 = vld [vmem:[%s0 + $0x30] sm:$0xff]
  %v27 = vld [vmem:[%s0 + $0x38] sm:$0xf]
  %v28 = vld [vmem:[%s0 + $0x3c] sm:$0xff]
  %v29 = vld [vmem:[%s0 + $0x44] sm:$0xf]
  %v30 = vld [vmem:[%s0 + $0x48] sm:$0xff]
  %v31 = vld [vmem:[%s0 + $0x50] sm:$0xf]
  %v32 = vld [vmem:[%s0 + $0x54] sm:$0xff]
  %v33 = vld [vmem:[%s0 + $0x5c] sm:$0xf]
  %v34 = vld [vmem:[%s0 + $0x60] sm:$0xff]
  %v35 = vld [vmem:[%s0 + $0x68] sm:$0xf]
  %v36 = vld [vmem:[%s0 + $0x6c] sm:$0xff]
  %v37 = vld [vmem:[%s0 + $0x74] sm:$0xf]
  %v38 = vld [vmem:[%s0 + $0x78] sm:$0xff]
  %v39 = vld [vmem:[%s0 + $0x80] sm:$0xf]
  %v40 = vld [vmem:[%s0 + $0x84] sm:$0xff]
  %v41 = vld [vmem:[%s0 + $0x8c] sm:$0xf]
  %v42 = vld [vmem:[%s0 + $0x90] sm:$0xff]
  %v43 = vld [vmem:[%s0 + $0x98] sm:$0xf]
  %v44 = vld [vmem:[%s0 + $0x9c] sm:$0xff]
  %v45 = vld [vmem:[%s0 + $0xa4] sm:$0xf]
  %v46 = vld [vmem:[%s0 + $0xa8] sm:$0xff]
  %v47 = vld [vmem:[%s0 + $0xb0] sm:$0xf]
  %v48 = vld [vmem:[%s0 + $0xb4] sm:$0xff]
  %v49 = vld [vmem:[%s0 + $0xbc] sm:$0xf]
  %v50 = vld [vmem:[%s0 + $0xc0] sm:$0xff]
  %v51 = vld [vmem:[%s0 + $0xc8] sm:$0xf]
  %v52 = vld [vmem:[%s0 + $0xcc] sm:$0xff]
  %v53 = vld [vmem:[%s0 + $0xd4] sm:$0xf]
  %v54 = vld [vmem:[%s1] sm:$0xf]
  %v55 = vld [vmem:[%s1 + $0x4] sm:$0xf]
  %v56 = vld [vmem:[%s1 + $0x8] sm:$0xf]
  %v57 = vld [vmem:[%s1 + $0xc] sm:$0xf]
  %v58 = vld [vmem:[%s1 + $0x10] sm:$0xf]
  %v59 = vld [vmem:[%s1 + $0x14] sm:$0xf]
  %v60 = vld [vmem:[%s1 + $0x18] sm:$0xf]
  %v61 = vld [vmem:[%s1 + $0x1c] sm:$0xf]
  %v62 = vld [vmem:[%s1 + $0x20] sm:$0xf]
  %v63 = vld [vmem:[%s1 + $0x24] sm:$0xf]
  %v64 = vld [vmem:[%s1 + $0x28] sm:$0xf]
  %v65 = vld [vmem:[%s1 + $0x2c] sm:$0xf]
  %v66 = vld [vmem:[%s1 + $0x30] sm:$0xf]
  %v67 = vld [vmem:[%s1 + $0x34] sm:$0xf]
  %v68 = vld [vmem:[%s1 + $0x38] sm:$0xf]
  %v69 = vld [vmem:[%s1 + $0x3c] sm:$0xf]
  %v70 = vld [vmem:[%s1 + $0x40] sm:$0xf]
  %v71 = vld [vmem:[%s1 + $0x44] sm:$0xf]
  %v72 = vld [vmem:[%s1 + $0x48] sm:$0xf]
  %v73 = vld [vmem:[%s1 + $0x4c] sm:$0xf]
  %v74 = vld [vmem:[%s1 + $0x50] sm:$0xf]
  %v75 = vld [vmem:[%s1 + $0x54] sm:$0xf]
  %v76 = vld [vmem:[%s1 + $0x58] sm:$0xf]
  %v77 = vld [vmem:[%s1 + $0x5c] sm:$0xf]
  %v78 = vld [vmem:[%s1 + $0x60] sm:$0xf]
  %v79 = vld [vmem:[%s1 + $0x64] sm:$0xf]
  %v80 = vld [vmem:[%s1 + $0x68] sm:$0xf]
  %v81 = vld [vmem:[%s1 + $0x6c] sm:$0xf]
  %v82 = vld [vmem:[%s1 + $0x70] sm:$0xf]
  %v83 = vld [vmem:[%s1 + $0x74] sm:$0xf]
  %v84 = vld [vmem:[%s1 + $0x78] sm:$0xf]
  %v85 = vld [vmem:[%s1 + $0x7c] sm:$0xf]
  %v86 = vld [vmem:[%s1 + $0x80] sm:$0xf]
  %v87 = vld [vmem:[%s1 + $0x84] sm:$0xf]
  %v88 = vld [vmem:[%s1 + $0x88] sm:$0xf]
  %v89 = vld [vmem:[%s1 + $0x8c] sm:$0xf]
  %v90 = vld [vmem:[%s1 + $0x90] sm:$0xf]
  %v91 = vld [vmem:[%s1 + $0x94] sm:$0xf]
  %v92 = vld [vmem:[%s1 + $0x98] sm:$0xf]
  %v93 = vld [vmem:[%s1 + $0x9c] sm:$0xf]
  %v94 = vld [vmem:[%s1 + $0xa0] sm:$0xf]
  %v95 = vld [vmem:[%s1 + $0xa4] sm:$0xf]
  %v96 = vld [vmem:[%s1 + $0xa8] sm:$0xf]
  %v97 = vld [vmem:[%s1 + $0xac] sm:$0xf]
  %v98 = vld [vmem:[%s1 + $0xb0] sm:$0xf]
  %v99 = vld [vmem:[%s1 + $0xb4] sm:$0xf]
  %v100 = vld [vmem:[%s1 + $0xb8] sm:$0xf]
  %v101 = vld [vmem:[%s1 + $0xbc] sm:$0xf]
  %v138 = vunpack.c.l.b16 %v18
  %v139 = vunpack.c.h.b16 %v18
  %v140 = vunpack.c.l.b16 %v19
  %v141 = vunpack.c.l.b16 %v20
  %v142 = vunpack.c.h.b16 %v20
  %v143 = vunpack.c.l.b16 %v21
  %v144 = vunpack.c.l.b16 %v22
  %v145 = vunpack.c.h.b16 %v22
  %v146 = vunpack.c.l.b16 %v23
  %v147 = vunpack.c.l.b16 %v24
  %v148 = vunpack.c.h.b16 %v24
  %v149 = vunpack.c.l.b16 %v25
  %v150 = vunpack.c.l.b16 %v26
  %v151 = vunpack.c.h.b16 %v26
  %v152 = vunpack.c.l.b16 %v27
  %v153 = vunpack.c.l.b16 %v28
  %v154 = vunpack.c.h.b16 %v28
  %v155 = vunpack.c.l.b16 %v29
  %v156 = vunpack.c.l.b16 %v30
  %v157 = vunpack.c.h.b16 %v30
  %v158 = vunpack.c.l.b16 %v31
  %v159 = vunpack.c.l.b16 %v32
  %v160 = vunpack.c.h.b16 %v32
  %v161 = vunpack.c.l.b16 %v33
  %v162 = vunpack.c.l.b16 %v34
  %v163 = vunpack.c.h.b16 %v34
  %v164 = vunpack.c.l.b16 %v35
  %v165 = vunpack.c.l.b16 %v36
  %v166 = vunpack.c.h.b16 %v36
  %v167 = vunpack.c.l.b16 %v37
  %v168 = vunpack.c.l.b16 %v38
  %v169 = vunpack.c.h.b16 %v38
  %v170 = vunpack.c.l.b16 %v39
  %v171 = vunpack.c.l.b16 %v40
  %v172 = vunpack.c.h.b16 %v40
  %v173 = vunpack.c.l.b16 %v41
  %v174 = vunpack.c.l.b16 %v42
  %v175 = vunpack.c.h.b16 %v42
  %v176 = vunpack.c.l.b16 %v43
  %v177 = vunpack.c.l.b16 %v44
  %v178 = vunpack.c.h.b16 %v44
  %v179 = vunpack.c.l.b16 %v45
  %v180 = vunpack.c.l.b16 %v46
  %v181 = vunpack.c.h.b16 %v46
  %v182 = vunpack.c.l.b16 %v47
  %v183 = vunpack.c.l.b16 %v48
  %v184 = vunpack.c.h.b16 %v48
  %v185 = vunpack.c.l.b16 %v49
  %v186 = vunpack.c.l.b16 %v50
  %v187 = vunpack.c.h.b16 %v50
  %v188 = vunpack.c.l.b16 %v51
  %v189 = vunpack.c.l.b16 %v52
  %v190 = vunpack.c.h.b16 %v52
  %v191 = vunpack.c.l.b16 %v53
  %v192 = vpack.c.b16 %v141, %v138
  %v193 = vpack.c.b16 %v142, %v139
  %v194 = vpack.c.b16 %v143, %v140
  %v195 = vpack.c.b16 %v147, %v144
  %v196 = vpack.c.b16 %v148, %v145
  %v197 = vpack.c.b16 %v149, %v146
  %v198 = vpack.c.b16 %v153, %v150
  %v199 = vpack.c.b16 %v154, %v151
  %v200 = vpack.c.b16 %v155, %v152
  %v201 = vpack.c.b16 %v159, %v156
  %v202 = vpack.c.b16 %v160, %v157
  %v203 = vpack.c.b16 %v161, %v158
  %v204 = vpack.c.b16 %v165, %v162
  %v205 = vpack.c.b16 %v166, %v163
  %v206 = vpack.c.b16 %v167, %v164
  %v207 = vpack.c.b16 %v171, %v168
  %v208 = vpack.c.b16 %v172, %v169
  %v209 = vpack.c.b16 %v173, %v170
  %v210 = vpack.c.b16 %v177, %v174
  %v211 = vpack.c.b16 %v178, %v175
  %v212 = vpack.c.b16 %v179, %v176
  %v213 = vpack.c.b16 %v183, %v180
  %v214 = vpack.c.b16 %v184, %v181
  %v215 = vpack.c.b16 %v185, %v182
  %v216 = vpack.c.b16 %v189, %v186
  %v217 = vpack.c.b16 %v190, %v187
  %v218 = vpack.c.b16 %v191, %v188
  %v294 = vunpack.c.l.b16 %v54
  %v295 = vunpack.c.l.b16 %v55
  %v296 = vunpack.c.l.b16 %v56
  %v297 = vunpack.c.l.b16 %v57
  %v298 = vunpack.c.l.b16 %v58
  %v299 = vunpack.c.l.b16 %v59
  %v300 = vunpack.c.l.b16 %v60
  %v301 = vunpack.c.l.b16 %v61
  %v302 = vunpack.c.l.b16 %v62
  %v303 = vunpack.c.l.b16 %v63
  %v304 = vunpack.c.l.b16 %v64
  %v305 = vunpack.c.l.b16 %v65
  %v306 = vunpack.c.l.b16 %v66
  %v307 = vunpack.c.l.b16 %v67
  %v308 = vunpack.c.l.b16 %v68
  %v309 = vunpack.c.l.b16 %v69
  %v310 = vunpack.c.l.b16 %v70
  %v311 = vunpack.c.l.b16 %v71
  %v312 = vunpack.c.l.b16 %v72
  %v313 = vunpack.c.l.b16 %v73
  %v314 = vunpack.c.l.b16 %v74
  %v315 = vunpack.c.l.b16 %v75
  %v316 = vunpack.c.l.b16 %v76
  %v317 = vunpack.c.l.b16 %v77
  %v318 = vunpack.c.l.b16 %v78
  %v319 = vunpack.c.l.b16 %v79
  %v320 = vunpack.c.l.b16 %v80
  %v321 = vunpack.c.l.b16 %v81
  %v322 = vunpack.c.l.b16 %v82
  %v323 = vunpack.c.l.b16 %v83
  %v324 = vunpack.c.l.b16 %v84
  %v325 = vunpack.c.l.b16 %v85
  %v326 = vunpack.c.l.b16 %v86
  %v327 = vunpack.c.l.b16 %v87
  %v328 = vunpack.c.l.b16 %v88
  %v329 = vunpack.c.l.b16 %v89
  %v330 = vunpack.c.l.b16 %v90
  %v331 = vunpack.c.l.b16 %v91
  %v332 = vunpack.c.l.b16 %v92
  %v333 = vunpack.c.l.b16 %v93
  %v334 = vunpack.c.l.b16 %v94
  %v335 = vunpack.c.l.b16 %v95
  %v336 = vunpack.c.l.b16 %v96
  %v337 = vunpack.c.l.b16 %v97
  %v338 = vunpack.c.l.b16 %v98
  %v339 = vunpack.c.l.b16 %v99
  %v340 = vunpack.c.l.b16 %v100
  %v341 = vunpack.c.l.b16 %v101
  %v342 = vpack.c.b16 %v295, %v294
  %v343 = vpack.c.b16 %v297, %v296
  %v344 = vpack.c.b16 %v299, %v298
  %v345 = vpack.c.b16 %v301, %v300
  %v346 = vpack.c.b16 %v303, %v302
  %v347 = vpack.c.b16 %v305, %v304
  %v348 = vpack.c.b16 %v307, %v306
  %v349 = vpack.c.b16 %v309, %v308
  %v350 = vpack.c.b16 %v311, %v310
  %v351 = vpack.c.b16 %v313, %v312
  %v352 = vpack.c.b16 %v315, %v314
  %v353 = vpack.c.b16 %v317, %v316
  %v354 = vpack.c.b16 %v319, %v318
  %v355 = vpack.c.b16 %v321, %v320
  %v356 = vpack.c.b16 %v323, %v322
  %v357 = vpack.c.b16 %v325, %v324
  %v358 = vpack.c.b16 %v327, %v326
  %v359 = vpack.c.b16 %v329, %v328
  %v360 = vpack.c.b16 %v331, %v330
  %v361 = vpack.c.b16 %v333, %v332
  %v362 = vpack.c.b16 %v335, %v334
  %v363 = vpack.c.b16 %v337, %v336
  %v364 = vpack.c.b16 %v339, %v338
  %v365 = vpack.c.b16 %v341, %v340
  %390 = vmatprep.subr.bf16.mxu0 0
  %391 = vmatpush1.bf16.msra.mxu0 %v342
  %392 = vmatprep.subr.bf16.mxu0 0
  %393 = vmatpush1.bf16.msra.mxu0 %v343
  %394 = vmatprep.subr.bf16.mxu0 0
  %395 = vmatpush1.bf16.msra.mxu0 %v344
  %396 = vmatprep.subr.bf16.mxu0 0
  %397 = vmatpush1.bf16.msra.mxu0 %v345
  %398 = vmatprep.subr.bf16.mxu0 0
  %399 = vmatpush1.bf16.msra.mxu0 %v346
  %400 = vmatprep.subr.bf16.mxu0 0
  %401 = vmatpush1.bf16.msra.mxu0 %v347
  %402 = vmatprep.subr.bf16.mxu0 0
  %403 = vmatpush1.bf16.msra.mxu0 %v348
  %404 = vmatprep.subr.bf16.mxu0 0
  %405 = vmatpush1.bf16.msra.mxu0 %v349
  %406 = vmatprep.subr.bf16.mxu0 0
  %407 = vmatpush1.bf16.msra.mxu0 %v350
  %408 = vmatprep.subr.bf16.mxu0 0
  %409 = vmatpush1.bf16.msra.mxu0 %v351
  %410 = vmatprep.subr.bf16.mxu0 0
  %411 = vmatpush1.bf16.msra.mxu0 %v352
  %412 = vmatprep.subr.bf16.mxu0 0
  %413 = vmatpush1.bf16.msra.mxu0 %v353
  %414 = vmatprep.subr.bf16.mxu0 0
  %415 = vmatpush1.bf16.msra.mxu0 %v354
  %416 = vmatprep.subr.bf16.mxu0 0
  %417 = vmatpush1.bf16.msra.mxu0 %v355
  %418 = vmatprep.subr.bf16.mxu0 0
  %419 = vmatpush1.bf16.msra.mxu0 %v356
  %420 = vmatprep.subr.bf16.mxu0 0
  %421 = vmatpush1.bf16.msra.mxu0 %v357
  %422 = vmatprep.mubr.bf16.mxu0 %v193
  %423 = vmatmul.mubr.bf16.gmra.mrb[0].mxu0 %v192
  %v424 = vpop.f32.mrb[0].mxu0
  %v425 = vadd.f32 0.0, %v424
  %v426 = vpop.f32.mrb[0].mxu0
  %v427 = vpop.f32.mrb[0].mxu0
  %v428 = vadd.f32 0.0, %v427
  %v429 = vpop.f32.mrb[0].mxu0
  %430 = vmatprep.mubr.bf16.mxu0 %v196
  %431 = vmatmul.mubr.bf16.gmra.mrb[0].mxu0 %v195
  %v432 = vpop.f32.mrb[0].mxu0
  %v433 = vadd.f32 0.0, %v432
  %v434 = vpop.f32.mrb[0].mxu0
  %v435 = vpop.f32.mrb[0].mxu0
  %v436 = vadd.f32 0.0, %v435
  %v437 = vpop.f32.mrb[0].mxu0
  %438 = vmatprep.mubr.bf16.mxu0 %v199
  %439 = vmatmul.mubr.bf16.gmra.mrb[0].mxu0 %v198
  %v440 = vpop.f32.mrb[0].mxu0
  %v441 = vadd.f32 0.0, %v440
  %v442 = vpop.f32.mrb[0].mxu0
  %v443 = vpop.f32.mrb[0].mxu0
  %v444 = vadd.f32 0.0, %v443
  %v445 = vpop.f32.mrb[0].mxu0
  %446 = vmatprep.mubr.bf16.mxu0 %v202
  %447 = vmatmul.mubr.bf16.gmra.mrb[0].mxu0 %v201
  %v448 = vpop.f32.mrb[0].mxu0
  %v449 = vadd.f32 0.0, %v448
  %v450 = vpop.f32.mrb[0].mxu0
  %v451 = vpop.f32.mrb[0].mxu0
  %v452 = vadd.f32 0.0, %v451
  %v453 = vpop.f32.mrb[0].mxu0
  %454 = vmatprep.mubr.bf16.mxu0 %v205
  %455 = vmatmul.mubr.bf16.gmra.mrb[0].mxu0 %v204
  %v456 = vpop.f32.mrb[0].mxu0
  %v457 = vadd.f32 0.0, %v456
  %v458 = vpop.f32.mrb[0].mxu0
  %v459 = vpop.f32.mrb[0].mxu0
  %v460 = vadd.f32 0.0, %v459
  %v461 = vpop.f32.mrb[0].mxu0
  %462 = vmatprep.mubr.bf16.mxu0 %v208
  %463 = vmatmul.mubr.bf16.gmra.mrb[0].mxu0 %v207
  %v464 = vpop.f32.mrb[0].mxu0
  %v465 = vadd.f32 0.0, %v464
  %v466 = vpop.f32.mrb[0].mxu0
  %v467 = vpop.f32.mrb[0].mxu0
  %v468 = vadd.f32 0.0, %v467
  %v469 = vpop.f32.mrb[0].mxu0
  %470 = vmatprep.mubr.bf16.mxu0 %v211
  %471 = vmatmul.mubr.bf16.gmra.mrb[0].mxu0 %v210
  %v472 = vpop.f32.mrb[0].mxu0
  %v473 = vadd.f32 0.0, %v472
  %v474 = vpop.f32.mrb[0].mxu0
  %v475 = vpop.f32.mrb[0].mxu0
  %v476 = vadd.f32 0.0, %v475
  %v477 = vpop.f32.mrb[0].mxu0
  %478 = vmatprep.mubr.bf16.mxu0 %v214
  %479 = vmatmul.mubr.bf16.gmra.mrb[0].mxu0 %v213
  %v480 = vpop.f32.mrb[0].mxu0
  %v481 = vadd.f32 0.0, %v480
  %v482 = vpop.f32.mrb[0].mxu0
  %v483 = vpop.f32.mrb[0].mxu0
  %v484 = vadd.f32 0.0, %v483
  %v485 = vpop.f32.mrb[0].mxu0
  %486 = vmatprep.mubr.bf16.mxu0 %v217
  %487 = vmatmul.mubr.bf16.gmra.mrb[0].mxu0 %v216
  %v488 = vpop.f32.mrb[0].mxu0
  %v489 = vadd.f32 0.0, %v488
  %v490 = vpop.f32.mrb[0].mxu0
  %v491 = vpop.f32.mrb[0].mxu0
  %v492 = vadd.f32 0.0, %v491
  %v493 = vpop.f32.mrb[0].mxu0
  %494 = vdwg.mxu0
  %495 = vmatprep.subr.bf16.mxu0 0
  %496 = vmatpush1.bf16.msra.mxu0 %v358
  %497 = vmatprep.subr.bf16.mxu0 0
  %498 = vmatpush1.bf16.msra.mxu0 %v359
  %499 = vmatprep.subr.bf16.mxu0 0
  %500 = vmatpush1.bf16.msra.mxu0 %v360
  %501 = vmatprep.subr.bf16.mxu0 0
  %502 = vmatpush1.bf16.msra.mxu0 %v361
  %503 = vmatprep.subr.bf16.mxu0 0
  %504 = vmatpush1.bf16.msra.mxu0 %v362
  %505 = vmatprep.subr.bf16.mxu0 0
  %506 = vmatpush1.bf16.msra.mxu0 %v363
  %507 = vmatprep.subr.bf16.mxu0 0
  %508 = vmatpush1.bf16.msra.mxu0 %v364
  %509 = vmatprep.subr.bf16.mxu0 0
  %510 = vmatpush1.bf16.msra.mxu0 %v365
  %511 = vmatprep.subr.bf16.mxu0 0
  %512 = vmatpush1.bf16.msra.mxu0 0
  %513 = vmatprep.subr.bf16.mxu0 0
  %514 = vmatpush1.bf16.msra.mxu0 0
  %515 = vmatprep.subr.bf16.mxu0 0
  %516 = vmatpush1.bf16.msra.mxu0 0
  %517 = vmatprep.subr.bf16.mxu0 0
  %518 = vmatpush1.bf16.msra.mxu0 0
  %519 = vmatprep.subr.bf16.mxu0 0
  %520 = vmatpush1.bf16.msra.mxu0 0
  %521 = vmatprep.subr.bf16.mxu0 0
  %522 = vmatpush1.bf16.msra.mxu0 0
  %523 = vmatprep.subr.bf16.mxu0 0
  %524 = vmatpush1.bf16.msra.mxu0 0
  %525 = vmatprep.subr.bf16.mxu0 0
  %526 = vmatpush1.bf16.msra.mxu0 0
  %527 = vmatprep.mubr.bf16.mxu0 0
  %528 = vmatmul.mubr.bf16.gmra.mrb[0].mxu0 %v194
  %v529 = vpop.f32.mrb[0].mxu0
  %v530 = vadd.f32 %v425, %v529
  %v531 = vpop.f32.mrb[0].mxu0
  %v532 = vpop.f32.mrb[0].mxu0
  %v533 = vadd.f32 %v428, %v532
  %v534 = vpop.f32.mrb[0].mxu0
  %535 = vmatprep.mubr.bf16.mxu0 0
  %536 = vmatmul.mubr.bf16.gmra.mrb[0].mxu0 %v197
  %v537 = vpop.f32.mrb[0].mxu0
  %v538 = vadd.f32 %v433, %v537
  %v539 = vpop.f32.mrb[0].mxu0
  %v540 = vpop.f32.mrb[0].mxu0
  %v541 = vadd.f32 %v436, %v540
  %v542 = vpop.f32.mrb[0].mxu0
  %543 = vmatprep.mubr.bf16.mxu0 0
  %544 = vmatmul.mubr.bf16.gmra.mrb[0].mxu0 %v200
  %v545 = vpop.f32.mrb[0].mxu0
  %v546 = vadd.f32 %v441, %v545
  %v547 = vpop.f32.mrb[0].mxu0
  %v548 = vpop.f32.mrb[0].mxu0
  %v549 = vadd.f32 %v444, %v548
  %v550 = vpop.f32.mrb[0].mxu0
  %551 = vmatprep.mubr.bf16.mxu0 0
  %552 = vmatmul.mubr.bf16.gmra.mrb[0].mxu0 %v203
  %v553 = vpop.f32.mrb[0].mxu0
  %v554 = vadd.f32 %v449, %v553
  %v555 = vpop.f32.mrb[0].mxu0
  %v556 = vpop.f32.mrb[0].mxu0
  %v557 = vadd.f32 %v452, %v556
  %v558 = vpop.f32.mrb[0].mxu0
  %559 = vmatprep.mubr.bf16.mxu0 0
  %560 = vmatmul.mubr.bf16.gmra.mrb[0].mxu0 %v206
  %v561 = vpop.f32.mrb[0].mxu0
  %v562 = vadd.f32 %v457, %v561
  %v563 = vpop.f32.mrb[0].mxu0
  %v564 = vpop.f32.mrb[0].mxu0
  %v565 = vadd.f32 %v460, %v564
  %v566 = vpop.f32.mrb[0].mxu0
  %567 = vmatprep.mubr.bf16.mxu0 0
  %568 = vmatmul.mubr.bf16.gmra.mrb[0].mxu0 %v209
  %v569 = vpop.f32.mrb[0].mxu0
  %v570 = vadd.f32 %v465, %v569
  %v571 = vpop.f32.mrb[0].mxu0
  %v572 = vpop.f32.mrb[0].mxu0
  %v573 = vadd.f32 %v468, %v572
  %v574 = vpop.f32.mrb[0].mxu0
  %575 = vmatprep.mubr.bf16.mxu0 0
  %576 = vmatmul.mubr.bf16.gmra.mrb[0].mxu0 %v212
  %v577 = vpop.f32.mrb[0].mxu0
  %v578 = vadd.f32 %v473, %v577
  %v579 = vpop.f32.mrb[0].mxu0
  %v580 = vpop.f32.mrb[0].mxu0
  %v581 = vadd.f32 %v476, %v580
  %v582 = vpop.f32.mrb[0].mxu0
  %583 = vmatprep.mubr.bf16.mxu0 0
  %584 = vmatmul.mubr.bf16.gmra.mrb[0].mxu0 %v215
  %v585 = vpop.f32.mrb[0].mxu0
  %v586 = vadd.f32 %v481, %v585
  %v587 = vpop.f32.mrb[0].mxu0
  %v588 = vpop.f32.mrb[0].mxu0
  %v589 = vadd.f32 %v484, %v588
  %v590 = vpop.f32.mrb[0].mxu0
  %591 = vmatprep.mubr.bf16.mxu0 0
  %592 = vmatmul.mubr.bf16.gmra.mrb[0].mxu0 %v218
  %v593 = vpop.f32.mrb[0].mxu0
  %v594 = vadd.f32 %v489, %v593
  %v595 = vpop.f32.mrb[0].mxu0
  %v596 = vpop.f32.mrb[0].mxu0
  %v597 = vadd.f32 %v492, %v596
  %v598 = vpop.f32.mrb[0].mxu0
  %599 = vdwg.mxu0
  %v600 = vadd.f32 %v530, %v533
  %v601 = vadd.f32 %v600, %v538
  %v602 = vadd.f32 %v601, %v541
  %v603 = vadd.f32 %v602, %v546
  %v604 = vadd.f32 %v603, %v549
  %v605 = vadd.f32 %v604, %v554
  %v606 = vadd.f32 %v605, %v557
  %v607 = vadd.f32 %v606, %v562
  %v608 = vadd.f32 %v607, %v565
  %v609 = vadd.f32 %v608, %v570
  %v610 = vadd.f32 %v609, %v573
  %v611 = vadd.f32 %v610, %v578
  %v612 = vadd.f32 %v611, %v581
  %v613 = vadd.f32 %v612, %v586
  %v614 = vadd.f32 %v613, %v589
  %v615 = vadd.f32 %v614, %v594
  %v616 = vadd.f32 %v615, %v597
  %v617 = vrot.slane %v616, 4
  %v618 = vadd.f32 %v616, %v617
  %v619 = vrot.slane %v618, 2
  %v620 = vadd.f32 %v618, %v619
  %v621 = vrot.slane %v620, 1
  %v622 = vadd.f32 %v620, %v621
  %v623 = vrcp.pop 144.0
  %v624 = vmul.f32 %v622, %v623
  %v625 = vsub.f32 %v530, %v624
  %v626 = vsub.f32 %v533, %v624
  %v627 = vsub.f32 %v538, %v624
  %v628 = vsub.f32 %v541, %v624
  %v629 = vsub.f32 %v546, %v624
  %v630 = vsub.f32 %v549, %v624
  %v631 = vsub.f32 %v554, %v624
  %v632 = vsub.f32 %v557, %v624
  %v633 = vsub.f32 %v562, %v624
  %v634 = vsub.f32 %v565, %v624
  %v635 = vsub.f32 %v570, %v624
  %v636 = vsub.f32 %v573, %v624
  %v637 = vsub.f32 %v578, %v624
  %v638 = vsub.f32 %v581, %v624
  %v639 = vsub.f32 %v586, %v624
  %v640 = vsub.f32 %v589, %v624
  %v641 = vsub.f32 %v594, %v624
  %v642 = vsub.f32 %v597, %v624
  %v643 = vmul.f32 %v625, %v625
  %v644 = vmul.f32 %v626, %v626
  %v645 = vmul.f32 %v627, %v627
  %v646 = vmul.f32 %v628, %v628
  %v647 = vmul.f32 %v629, %v629
  %v648 = vmul.f32 %v630, %v630
  %v649 = vmul.f32 %v631, %v631
  %v650 = vmul.f32 %v632, %v632
  %v651 = vmul.f32 %v633, %v633
  %v652 = vmul.f32 %v634, %v634
  %v653 = vmul.f32 %v635, %v635
  %v654 = vmul.f32 %v636, %v636
  %v655 = vmul.f32 %v637, %v637
  %v656 = vmul.f32 %v638, %v638
  %v657 = vmul.f32 %v639, %v639
  %v658 = vmul.f32 %v640, %v640
  %v659 = vmul.f32 %v641, %v641
  %v660 = vmul.f32 %v642, %v642
  %v661 = vadd.f32 %v643, %v644
  %v662 = vadd.f32 %v661, %v645
  %v663 = vadd.f32 %v662, %v646
  %v664 = vadd.f32 %v663, %v647
  %v665 = vadd.f32 %v664, %v648
  %v666 = vadd.f32 %v665, %v649
  %v667 = vadd.f32 %v666, %v650
  %v668 = vadd.f32 %v667, %v651
  %v669 = vadd.f32 %v668, %v652
  %v670 = vadd.f32 %v669, %v653
  %v671 = vadd.f32 %v670, %v654
  %v672 = vadd.f32 %v671, %v655
  %v673 = vadd.f32 %v672, %v656
  %v674 = vadd.f32 %v673, %v657
  %v675 = vadd.f32 %v674, %v658
  %v676 = vadd.f32 %v675, %v659
  %v677 = vadd.f32 %v676, %v660
  %v678 = vrot.slane %v677, 4
  %v679 = vadd.f32 %v677, %v678
  %v680 = vrot.slane %v679, 2
  %v681 = vadd.f32 %v679, %v680
  %v682 = vrot.slane %v681, 1
  %v683 = vadd.f32 %v681, %v682
  %v684 = vmul.f32 %v683, %v623
  %v685 = vadd.f32 %v684, 1e-05
  %v686 = vrsqrt.pop %v685
  %v687 = vmul.f32 %v625, %v686
  %v688 = vmul.f32 %v626, %v686
  %v689 = vmul.f32 %v627, %v686
  %v690 = vmul.f32 %v628, %v686
  %v691 = vmul.f32 %v629, %v686
  %v692 = vmul.f32 %v630, %v686
  %v693 = vmul.f32 %v631, %v686
  %v694 = vmul.f32 %v632, %v686
  %v695 = vmul.f32 %v633, %v686
  %v696 = vmul.f32 %v634, %v686
  %v697 = vmul.f32 %v635, %v686
  %v698 = vmul.f32 %v636, %v686
  %v699 = vmul.f32 %v637, %v686
  %v700 = vmul.f32 %v638, %v686
  %v701 = vmul.f32 %v639, %v686
  %v702 = vmul.f32 %v640, %v686
  %v703 = vmul.f32 %v641, %v686
  %v704 = vmul.f32 %v642, %v686
  %v705 = vld [vmem:[%s2] sm:$0x1]
  %v707 = vlaneseq
  %v708 = vshrl.u32 %v707, 7
  %v709 = vsub.s32 0, %v708
  %v710 = vrot.slane %v705, %v709
  %v712 = vmul.f32 %v687, %v710
  %v713 = vmul.f32 %v688, %v710
  %v714 = vmul.f32 %v689, %v710
  %v715 = vmul.f32 %v690, %v710
  %v716 = vmul.f32 %v691, %v710
  %v717 = vmul.f32 %v692, %v710
  %v718 = vmul.f32 %v693, %v710
  %v719 = vmul.f32 %v694, %v710
  %v720 = vmul.f32 %v695, %v710
  %v721 = vmul.f32 %v696, %v710
  %v722 = vmul.f32 %v697, %v710
  %v723 = vmul.f32 %v698, %v710
  %v724 = vmul.f32 %v699, %v710
  %v725 = vmul.f32 %v700, %v710
  %v726 = vmul.f32 %v701, %v710
  %v727 = vmul.f32 %v702, %v710
  %v728 = vmul.f32 %v703, %v710
  %v729 = vmul.f32 %v704, %v710
  %v730 = vld [vmem:[%s3] sm:$0x1]
  %v732 = vlaneseq
  %v733 = vshrl.u32 %v732, 7
  %v734 = vsub.s32 0, %v733
  %v735 = vrot.slane %v730, %v734
  %v737 = vadd.f32 %v712, %v735
  %v738 = vadd.f32 %v713, %v735
  %v739 = vadd.f32 %v714, %v735
  %v740 = vadd.f32 %v715, %v735
  %v741 = vadd.f32 %v716, %v735
  %v742 = vadd.f32 %v717, %v735
  %v743 = vadd.f32 %v718, %v735
  %v744 = vadd.f32 %v719, %v735
  %v745 = vadd.f32 %v720, %v735
  %v746 = vadd.f32 %v721, %v735
  %v747 = vadd.f32 %v722, %v735
  %v748 = vadd.f32 %v723, %v735
  %v749 = vadd.f32 %v724, %v735
  %v750 = vadd.f32 %v725, %v735
  %v751 = vadd.f32 %v726, %v735
  %v752 = vadd.f32 %v727, %v735
  %v753 = vadd.f32 %v728, %v735
  %v754 = vadd.f32 %v729, %v735
  %v755 = vmax.f32 %v737, 0.0
  %v756 = vmax.f32 %v738, 0.0
  %v757 = vmax.f32 %v739, 0.0
  %v758 = vmax.f32 %v740, 0.0
  %v759 = vmax.f32 %v741, 0.0
  %v760 = vmax.f32 %v742, 0.0
  %v761 = vmax.f32 %v743, 0.0
  %v762 = vmax.f32 %v744, 0.0
  %v763 = vmax.f32 %v745, 0.0
  %v764 = vmax.f32 %v746, 0.0
  %v765 = vmax.f32 %v747, 0.0
  %v766 = vmax.f32 %v748, 0.0
  %v767 = vmax.f32 %v749, 0.0
  %v768 = vmax.f32 %v750, 0.0
  %v769 = vmax.f32 %v751, 0.0
  %v770 = vmax.f32 %v752, 0.0
  %v771 = vmax.f32 %v753, 0.0
  %v772 = vmax.f32 %v754, 0.0
  %773 = vst [vmem:[%s4] sm:$0xff] %v755
  %774 = vst [vmem:[%s4 + $0x8] sm:$0xff] %v756
  %775 = vst [vmem:[%s4 + $0x10] sm:$0xff] %v757
  %776 = vst [vmem:[%s4 + $0x18] sm:$0xff] %v758
  %777 = vst [vmem:[%s4 + $0x20] sm:$0xff] %v759
  %778 = vst [vmem:[%s4 + $0x28] sm:$0xff] %v760
  %779 = vst [vmem:[%s4 + $0x30] sm:$0xff] %v761
  %780 = vst [vmem:[%s4 + $0x38] sm:$0xff] %v762
  %781 = vst [vmem:[%s4 + $0x40] sm:$0xff] %v763
  %782 = vst [vmem:[%s4 + $0x48] sm:$0xff] %v764
  %783 = vst [vmem:[%s4 + $0x50] sm:$0xff] %v765
  %784 = vst [vmem:[%s4 + $0x58] sm:$0xff] %v766
  %785 = vst [vmem:[%s4 + $0x60] sm:$0xff] %v767
  %786 = vst [vmem:[%s4 + $0x68] sm:$0xff] %v768
  %787 = vst [vmem:[%s4 + $0x70] sm:$0xff] %v769
  %788 = vst [vmem:[%s4 + $0x78] sm:$0xff] %v770
  %789 = vst [vmem:[%s4 + $0x80] sm:$0xff] %v771
  %790 = vst [vmem:[%s4 + $0x88] sm:$0xff] %v772
  // Predicated region
  $region18: #{my_nn_forward.10} parent=0 // pred_check
    _
  $region19: #{my_nn_forward.10} parent=0 // pred_check_branch
    %792 = sbr.rel (0) target = $region21
  $region20: #{my_nn_forward.10} parent=0 // pred_region
    _
  $region21: #{my_nn_forward.10} parent=0 // pred_fallthru
    _
  // Predicated region
  $region22: #{my_nn_forward.10} parent=0 // pred_check
    _
  $region23: #{my_nn_forward.10} parent=0 // pred_check_branch
    %794 = sbr.rel (0) target = $region25
  $region24: #{my_nn_forward.10} parent=0 // pred_region
    _
  $region25: #{my_nn_forward.10} parent=0 // pred_fallthru
    _

// kernel: my_nn_forward.11
$region0: #{my_nn_forward.11}
  #allocation0 [shape = 'u32[]', space=smem, size = 0x4, offset = 0x4, fixed_abs, tag = 'smem constant byte address 0x4 - core index']
  #allocation1 [shape = 'u32[144,128]{1,0:T(1,128)}', space=vmem, size = 0x12000, scoped, tag = 'internal scratch']
  %s0 = inlined_call_operand.vmem [shape: bf16[36,640], index: 0, kind: input, shape index: {}]
  %s1 = inlined_call_operand.vmem [shape: bf16[640,128], index: 1, kind: input, shape index: {}]
  %s2 = inlined_call_operand.vmem [shape: f32[1,128], index: 2, kind: input, shape index: {}]
  %s3 = inlined_call_operand.vmem [shape: f32[1,128], index: 3, kind: input, shape index: {}]
  %s4 = inlined_call_operand.vmem [shape: f32[36,128], index: 4, kind: output, shape index: {}]
  %s5 = sld [smem:[#allocation0]]
  $region26: #{my_nn_forward.11} parent=0
    _
  %s7 = ssub.s32 1, %s5
  %s8 = scalar_select 0, %s7, %s5
  // Predicated region
  $region2: #{my_nn_forward.11} parent=0 // pred_check
    _
  $region3: #{my_nn_forward.11} parent=0 // pred_check_branch
    %10 = sbr.rel (0) target = $region5
  $region4: #{my_nn_forward.11} parent=0 // pred_region
    _
  $region5: #{my_nn_forward.11} parent=0 // pred_fallthru
    _
  // Predicated region
  $region6: #{my_nn_forward.11} parent=0 // pred_check
    _
  $region7: #{my_nn_forward.11} parent=0 // pred_check_branch
    %12 = sbr.rel (0) target = $region9
  $region8: #{my_nn_forward.11} parent=0 // pred_region
    _
  $region9: #{my_nn_forward.11} parent=0 // pred_fallthru
    _
  // Predicated region
  $region10: #{my_nn_forward.11} parent=0 // pred_check
    _
  $region11: #{my_nn_forward.11} parent=0 // pred_check_branch
    %14 = sbr.rel (0) target = $region13
  $region12: #{my_nn_forward.11} parent=0 // pred_region
    _
  $region13: #{my_nn_forward.11} parent=0 // pred_fallthru
    _
  // Predicated region
  $region14: #{my_nn_forward.11} parent=0 // pred_check
    _
  $region15: #{my_nn_forward.11} parent=0 // pred_check_branch
    %16 = sbr.rel (0) target = $region17
  $region16: #{my_nn_forward.11} parent=0 // pred_region
    _
  $region17: #{my_nn_forward.11} parent=0 // pred_fallthru
    _
  %v18 = vld [vmem:[%s0] sm:$0xff]
  %v19 = vld [vmem:[%s0 + $0x8] sm:$0xff]
  %v20 = vld [vmem:[%s0 + $0x10] sm:$0xf]
  %v21 = vld [vmem:[%s0 + $0x14] sm:$0xff]
  %v22 = vld [vmem:[%s0 + $0x1c] sm:$0xff]
  %v23 = vld [vmem:[%s0 + $0x24] sm:$0xf]
  %v24 = vld [vmem:[%s0 + $0x28] sm:$0xff]
  %v25 = vld [vmem:[%s0 + $0x30] sm:$0xff]
  %v26 = vld [vmem:[%s0 + $0x38] sm:$0xf]
  %v27 = vld [vmem:[%s0 + $0x3c] sm:$0xff]
  %v28 = vld [vmem:[%s0 + $0x44] sm:$0xff]
  %v29 = vld [vmem:[%s0 + $0x4c] sm:$0xf]
  %v30 = vld [vmem:[%s0 + $0x50] sm:$0x33]
  %v31 = vld [vmem:[%s0 + $0x58] sm:$0x33]
  %v32 = vld [vmem:[%s0 + $0x60] sm:$0x3]
  %v33 = vld [vmem:[%s1] sm:$0xf]
  %v34 = vld [vmem:[%s1 + $0x4] sm:$0xf]
  %v35 = vld [vmem:[%s1 + $0x8] sm:$0xf]
  %v36 = vld [vmem:[%s1 + $0xc] sm:$0xf]
  %v37 = vld [vmem:[%s1 + $0x10] sm:$0xf]
  %v38 = vld [vmem:[%s1 + $0x14] sm:$0xf]
  %v39 = vld [vmem:[%s1 + $0x18] sm:$0xf]
  %v40 = vld [vmem:[%s1 + $0x1c] sm:$0xf]
  %v41 = vld [vmem:[%s1 + $0x20] sm:$0xf]
  %v42 = vld [vmem:[%s1 + $0x24] sm:$0xf]
  %v43 = vld [vmem:[%s1 + $0x28] sm:$0xf]
  %v44 = vld [vmem:[%s1 + $0x2c] sm:$0xf]
  %v45 = vld [vmem:[%s1 + $0x30] sm:$0xf]
  %v46 = vld [vmem:[%s1 + $0x34] sm:$0xf]
  %v47 = vld [vmem:[%s1 + $0x38] sm:$0xf]
  %v48 = vld [vmem:[%s1 + $0x3c] sm:$0xf]
  %v49 = vld [vmem:[%s1 + $0x40] sm:$0xf]
  %v50 = vld [vmem:[%s1 + $0x44] sm:$0xf]
  %v51 = vld [vmem:[%s1 + $0x48] sm:$0xf]
  %v52 = vld [vmem:[%s1 + $0x4c] sm:$0xf]
  %v53 = vld [vmem:[%s1 + $0x50] sm:$0xf]
  %v54 = vld [vmem:[%s1 + $0x54] sm:$0xf]
  %v55 = vld [vmem:[%s1 + $0x58] sm:$0xf]
  %v56 = vld [vmem:[%s1 + $0x5c] sm:$0xf]
  %v57 = vld [vmem:[%s1 + $0x60] sm:$0xf]
  %v58 = vld [vmem:[%s1 + $0x64] sm:$0xf]
  %v59 = vld [vmem:[%s1 + $0x68] sm:$0xf]
  %v60 = vld [vmem:[%s1 + $0x6c] sm:$0xf]
  %v61 = vld [vmem:[%s1 + $0x70] sm:$0xf]
  %v62 = vld [vmem:[%s1 + $0x74] sm:$0xf]
  %v63 = vld [vmem:[%s1 + $0x78] sm:$0xf]
  %v64 = vld [vmem:[%s1 + $0x7c] sm:$0xf]
  %v65 = vld [vmem:[%s1 + $0x80] sm:$0xf]
  %v66 = vld [vmem:[%s1 + $0x84] sm:$0xf]
  %v67 = vld [vmem:[%s1 + $0x88] sm:$0xf]
  %v68 = vld [vmem:[%s1 + $0x8c] sm:$0xf]
  %v69 = vld [vmem:[%s1 + $0x90] sm:$0xf]
  %v70 = vld [vmem:[%s1 + $0x94] sm:$0xf]
  %v71 = vld [vmem:[%s1 + $0x98] sm:$0xf]
  %v72 = vld [vmem:[%s1 + $0x9c] sm:$0xf]
  %v73 = vld [vmem:[%s1 + $0xa0] sm:$0xf]
  %v74 = vld [vmem:[%s1 + $0xa4] sm:$0xf]
  %v75 = vld [vmem:[%s1 + $0xa8] sm:$0xf]
  %v76 = vld [vmem:[%s1 + $0xac] sm:$0xf]
  %v77 = vld [vmem:[%s1 + $0xb0] sm:$0xf]
  %v78 = vld [vmem:[%s1 + $0xb4] sm:$0xf]
  %v79 = vld [vmem:[%s1 + $0xb8] sm:$0xf]
  %v80 = vld [vmem:[%s1 + $0xbc] sm:$0xf]
  %v81 = vld [vmem:[%s1 + $0xc0] sm:$0xf]
  %v82 = vld [vmem:[%s1 + $0xc4] sm:$0xf]
  %v83 = vld [vmem:[%s1 + $0xc8] sm:$0xf]
  %v84 = vld [vmem:[%s1 + $0xcc] sm:$0xf]
  %v85 = vld [vmem:[%s1 + $0xd0] sm:$0xf]
  %v86 = vld [vmem:[%s1 + $0xd4] sm:$0xf]
  %v87 = vld [vmem:[%s1 + $0xd8] sm:$0xf]
  %v88 = vld [vmem:[%s1 + $0xdc] sm:$0xf]
  %v89 = vld [vmem:[%s1 + $0xe0] sm:$0xf]
  %v90 = vld [vmem:[%s1 + $0xe4] sm:$0xf]
  %v91 = vld [vmem:[%s1 + $0xe8] sm:$0xf]
  %v92 = vld [vmem:[%s1 + $0xec] sm:$0xf]
  %v93 = vld [vmem:[%s1 + $0xf0] sm:$0xf]
  %v94 = vld [vmem:[%s1 + $0xf4] sm:$0xf]
  %v95 = vld [vmem:[%s1 + $0xf8] sm:$0xf]
  %v96 = vld [vmem:[%s1 + $0xfc] sm:$0xf]
  %v97 = vld [vmem:[%s1 + $0x100] sm:$0xf]
  %v98 = vld [vmem:[%s1 + $0x104] sm:$0xf]
  %v99 = vld [vmem:[%s1 + $0x108] sm:$0xf]
  %v100 = vld [vmem:[%s1 + $0x10c] sm:$0xf]
  %v101 = vld [vmem:[%s1 + $0x110] sm:$0xf]
  %v102 = vld [vmem:[%s1 + $0x114] sm:$0xf]
  %v103 = vld [vmem:[%s1 + $0x118] sm:$0xf]
  %v104 = vld [vmem:[%s1 + $0x11c] sm:$0xf]
  %v105 = vld [vmem:[%s1 + $0x120] sm:$0xf]
  %v106 = vld [vmem:[%s1 + $0x124] sm:$0xf]
  %v107 = vld [vmem:[%s1 + $0x128] sm:$0xf]
  %v108 = vld [vmem:[%s1 + $0x12c] sm:$0xf]
  %v109 = vld [vmem:[%s1 + $0x130] sm:$0xf]
  %v110 = vld [vmem:[%s1 + $0x134] sm:$0xf]
  %v111 = vld [vmem:[%s1 + $0x138] sm:$0xf]
  %v112 = vld [vmem:[%s1 + $0x13c] sm:$0xf]
  %v128 = vunpack.c.l.b16 %v18
  %v129 = vunpack.c.h.b16 %v18
  %v130 = vunpack.c.l.b16 %v19
  %v131 = vunpack.c.h.b16 %v19
  %v132 = vunpack.c.l.b16 %v20
  %v133 = vunpack.c.l.b16 %v21
  %v134 = vunpack.c.h.b16 %v21
  %v135 = vunpack.c.l.b16 %v22
  %v136 = vunpack.c.h.b16 %v22
  %v137 = vunpack.c.l.b16 %v23
  %v138 = vunpack.c.l.b16 %v24
  %v139 = vunpack.c.h.b16 %v24
  %v140 = vunpack.c.l.b16 %v25
  %v141 = vunpack.c.h.b16 %v25
  %v142 = vunpack.c.l.b16 %v26
  %v143 = vunpack.c.l.b16 %v27
  %v144 = vunpack.c.h.b16 %v27
  %v145 = vunpack.c.l.b16 %v28
  %v146 = vunpack.c.h.b16 %v28
  %v147 = vunpack.c.l.b16 %v29
  %v148 = vunpack.c.l.b16 %v30
  %v149 = vunpack.c.h.b16 %v30
  %v150 = vunpack.c.l.b16 %v31
  %v151 = vunpack.c.h.b16 %v31
  %v152 = vunpack.c.l.b16 %v32
  %v153 = vpack.c.b16 %v133, %v128
  %v154 = vpack.c.b16 %v134, %v129
  %v155 = vpack.c.b16 %v135, %v130
  %v156 = vpack.c.b16 %v136, %v131
  %v157 = vpack.c.b16 %v137, %v132
  %v158 = vpack.c.b16 %v143, %v138
  %v159 = vpack.c.b16 %v144, %v139
  %v160 = vpack.c.b16 %v145, %v140
  %v161 = vpack.c.b16 %v146, %v141
  %v162 = vpack.c.b16 %v147, %v142
  %v163 = vpack.c.b16 %v148, %v148
  %v164 = vpack.c.b16 %v149, %v149
  %v165 = vpack.c.b16 %v150, %v150
  %v166 = vpack.c.b16 %v151, %v151
  %v167 = vpack.c.b16 %v152, %v152
  %v263 = vunpack.c.l.b16 %v33
  %v264 = vunpack.c.l.b16 %v34
  %v265 = vunpack.c.l.b16 %v35
  %v266 = vunpack.c.l.b16 %v36
  %v267 = vunpack.c.l.b16 %v37
  %v268 = vunpack.c.l.b16 %v38
  %v269 = vunpack.c.l.b16 %v39
  %v270 = vunpack.c.l.b16 %v40
  %v271 = vunpack.c.l.b16 %v41
  %v272 = vunpack.c.l.b16 %v42
  %v273 = vunpack.c.l.b16 %v43
  %v274 = vunpack.c.l.b16 %v44
  %v275 = vunpack.c.l.b16 %v45
  %v276 = vunpack.c.l.b16 %v46
  %v277 = vunpack.c.l.b16 %v47
  %v278 = vunpack.c.l.b16 %v48
  %v279 = vunpack.c.l.b16 %v49
  %v280 = vunpack.c.l.b16 %v50
  %v281 = vunpack.c.l.b16 %v51
  %v282 = vunpack.c.l.b16 %v52
  %v283 = vunpack.c.l.b16 %v53
  %v284 = vunpack.c.l.b16 %v54
  %v285 = vunpack.c.l.b16 %v55
  %v286 = vunpack.c.l.b16 %v56
  %v287 = vunpack.c.l.b16 %v57
  %v288 = vunpack.c.l.b16 %v58
  %v289 = vunpack.c.l.b16 %v59
  %v290 = vunpack.c.l.b16 %v60
  %v291 = vunpack.c.l.b16 %v61
  %v292 = vunpack.c.l.b16 %v62
  %v293 = vunpack.c.l.b16 %v63
  %v294 = vunpack.c.l.b16 %v64
  %v295 = vunpack.c.l.b16 %v65
  %v296 = vunpack.c.l.b16 %v66
  %v297 = vunpack.c.l.b16 %v67
  %v298 = vunpack.c.l.b16 %v68
  %v299 = vunpack.c.l.b16 %v69
  %v300 = vunpack.c.l.b16 %v70
  %v301 = vunpack.c.l.b16 %v71
  %v302 = vunpack.c.l.b16 %v72
  %v303 = vunpack.c.l.b16 %v73
  %v304 = vunpack.c.l.b16 %v74
  %v305 = vunpack.c.l.b16 %v75
  %v306 = vunpack.c.l.b16 %v76
  %v307 = vunpack.c.l.b16 %v77
  %v308 = vunpack.c.l.b16 %v78
  %v309 = vunpack.c.l.b16 %v79
  %v310 = vunpack.c.l.b16 %v80
  %v311 = vunpack.c.l.b16 %v81
  %v312 = vunpack.c.l.b16 %v82
  %v313 = vunpack.c.l.b16 %v83
  %v314 = vunpack.c.l.b16 %v84
  %v315 = vunpack.c.l.b16 %v85
  %v316 = vunpack.c.l.b16 %v86
  %v317 = vunpack.c.l.b16 %v87
  %v318 = vunpack.c.l.b16 %v88
  %v319 = vunpack.c.l.b16 %v89
  %v320 = vunpack.c.l.b16 %v90
  %v321 = vunpack.c.l.b16 %v91
  %v322 = vunpack.c.l.b16 %v92
  %v323 = vunpack.c.l.b16 %v93
  %v324 = vunpack.c.l.b16 %v94
  %v325 = vunpack.c.l.b16 %v95
  %v326 = vunpack.c.l.b16 %v96
  %v327 = vunpack.c.l.b16 %v97
  %v328 = vunpack.c.l.b16 %v98
  %v329 = vunpack.c.l.b16 %v99
  %v330 = vunpack.c.l.b16 %v100
  %v331 = vunpack.c.l.b16 %v101
  %v332 = vunpack.c.l.b16 %v102
  %v333 = vunpack.c.l.b16 %v103
  %v334 = vunpack.c.l.b16 %v104
  %v335 = vunpack.c.l.b16 %v105
  %v336 = vunpack.c.l.b16 %v106
  %v337 = vunpack.c.l.b16 %v107
  %v338 = vunpack.c.l.b16 %v108
  %v339 = vunpack.c.l.b16 %v109
  %v340 = vunpack.c.l.b16 %v110
  %v341 = vunpack.c.l.b16 %v111
  %v342 = vunpack.c.l.b16 %v112
  %v343 = vpack.c.b16 %v264, %v263
  %v344 = vpack.c.b16 %v266, %v265
  %v345 = vpack.c.b16 %v268, %v267
  %v346 = vpack.c.b16 %v270, %v269
  %v347 = vpack.c.b16 %v272, %v271
  %v348 = vpack.c.b16 %v274, %v273
  %v349 = vpack.c.b16 %v276, %v275
  %v350 = vpack.c.b16 %v278, %v277
  %v351 = vpack.c.b16 %v280, %v279
  %v352 = vpack.c.b16 %v282, %v281
  %v353 = vpack.c.b16 %v284, %v283
  %v354 = vpack.c.b16 %v286, %v285
  %v355 = vpack.c.b16 %v288, %v287
  %v356 = vpack.c.b16 %v290, %v289
  %v357 = vpack.c.b16 %v292, %v291
  %v358 = vpack.c.b16 %v294, %v293
  %v359 = vpack.c.b16 %v296, %v295
  %v360 = vpack.c.b16 %v298, %v297
  %v361 = vpack.c.b16 %v300, %v299
  %v362 = vpack.c.b16 %v302, %v301
  %v363 = vpack.c.b16 %v304, %v303
  %v364 = vpack.c.b16 %v306, %v305
  %v365 = vpack.c.b16 %v308, %v307
  %v366 = vpack.c.b16 %v310, %v309
  %v367 = vpack.c.b16 %v312, %v311
  %v368 = vpack.c.b16 %v314, %v313
  %v369 = vpack.c.b16 %v316, %v315
  %v370 = vpack.c.b16 %v318, %v317
  %v371 = vpack.c.b16 %v320, %v319
  %v372 = vpack.c.b16 %v322, %v321
  %v373 = vpack.c.b16 %v324, %v323
  %v374 = vpack.c.b16 %v326, %v325
  %v375 = vpack.c.b16 %v328, %v327
  %v376 = vpack.c.b16 %v330, %v329
  %v377 = vpack.c.b16 %v332, %v331
  %v378 = vpack.c.b16 %v334, %v333
  %v379 = vpack.c.b16 %v336, %v335
  %v380 = vpack.c.b16 %v338, %v337
  %v381 = vpack.c.b16 %v340, %v339
  %v382 = vpack.c.b16 %v342, %v341
  %423 = vmatprep.subr.bf16.mxu0 0
  %424 = vmatpush1.bf16.msra.mxu0 %v343
  %425 = vmatprep.subr.bf16.mxu0 0
  %426 = vmatpush1.bf16.msra.mxu0 %v344
  %427 = vmatprep.subr.bf16.mxu0 0
  %428 = vmatpush1.bf16.msra.mxu0 %v345
  %429 = vmatprep.subr.bf16.mxu0 0
  %430 = vmatpush1.bf16.msra.mxu0 %v346
  %431 = vmatprep.subr.bf16.mxu0 0
  %432 = vmatpush1.bf16.msra.mxu0 %v347
  %433 = vmatprep.subr.bf16.mxu0 0
  %434 = vmatpush1.bf16.msra.mxu0 %v348
  %435 = vmatprep.subr.bf16.mxu0 0
  %436 = vmatpush1.bf16.msra.mxu0 %v349
  %437 = vmatprep.subr.bf16.mxu0 0
  %438 = vmatpush1.bf16.msra.mxu0 %v350
  %439 = vmatprep.subr.bf16.mxu0 0
  %440 = vmatpush1.bf16.msra.mxu0 %v351
  %441 = vmatprep.subr.bf16.mxu0 0
  %442 = vmatpush1.bf16.msra.mxu0 %v352
  %443 = vmatprep.subr.bf16.mxu0 0
  %444 = vmatpush1.bf16.msra.mxu0 %v353
  %445 = vmatprep.subr.bf16.mxu0 0
  %446 = vmatpush1.bf16.msra.mxu0 %v354
  %447 = vmatprep.subr.bf16.mxu0 0
  %448 = vmatpush1.bf16.msra.mxu0 %v355
  %449 = vmatprep.subr.bf16.mxu0 0
  %450 = vmatpush1.bf16.msra.mxu0 %v356
  %451 = vmatprep.subr.bf16.mxu0 0
  %452 = vmatpush1.bf16.msra.mxu0 %v357
  %453 = vmatprep.subr.bf16.mxu0 0
  %454 = vmatpush1.bf16.msra.mxu0 %v358
  %455 = vmatprep.mubr.bf16.mxu0 %v154
  %456 = vmatmul.mubr.bf16.gmra.mrb[0].mxu0 %v153
  %v457 = vpop.f32.mrb[0].mxu0
  %v458 = vadd.f32 0.0, %v457
  %v459 = vpop.f32.mrb[0].mxu0
  %v460 = vpop.f32.mrb[0].mxu0
  %v461 = vadd.f32 0.0, %v460
  %v462 = vpop.f32.mrb[0].mxu0
  %463 = vmatprep.mubr.bf16.mxu0 %v159
  %464 = vmatmul.mubr.bf16.gmra.mrb[0].mxu0 %v158
  %v465 = vpop.f32.mrb[0].mxu0
  %v466 = vadd.f32 0.0, %v465
  %v467 = vpop.f32.mrb[0].mxu0
  %v468 = vpop.f32.mrb[0].mxu0
  %v469 = vadd.f32 0.0, %v468
  %v470 = vpop.f32.mrb[0].mxu0
  %471 = vmatprep.mubr.bf16.mxu0 %v164
  %472 = vmatmul.mubr.bf16.gmra.mrb[0].mxu0 %v163
  %v473 = vpop.f32.mrb[0].mxu0
  %v474 = vadd.f32 0.0, %v473
  %v475 = vpop.f32.mrb[0].mxu0
  %v476 = vpop.f32.mrb[0].mxu0
  %v477 = vpop.f32.mrb[0].mxu0
  %478 = vdwg.mxu0
  %479 = vmatprep.subr.bf16.mxu0 0
  %480 = vmatpush1.bf16.msra.mxu0 %v359
  %481 = vmatprep.subr.bf16.mxu0 0
  %482 = vmatpush1.bf16.msra.mxu0 %v360
  %483 = vmatprep.subr.bf16.mxu0 0
  %484 = vmatpush1.bf16.msra.mxu0 %v361
  %485 = vmatprep.subr.bf16.mxu0 0
  %486 = vmatpush1.bf16.msra.mxu0 %v362
  %487 = vmatprep.subr.bf16.mxu0 0
  %488 = vmatpush1.bf16.msra.mxu0 %v363
  %489 = vmatprep.subr.bf16.mxu0 0
  %490 = vmatpush1.bf16.msra.mxu0 %v364
  %491 = vmatprep.subr.bf16.mxu0 0
  %492 = vmatpush1.bf16.msra.mxu0 %v365
  %493 = vmatprep.subr.bf16.mxu0 0
  %494 = vmatpush1.bf16.msra.mxu0 %v366
  %495 = vmatprep.subr.bf16.mxu0 0
  %496 = vmatpush1.bf16.msra.mxu0 %v367
  %497 = vmatprep.subr.bf16.mxu0 0
  %498 = vmatpush1.bf16.msra.mxu0 %v368
  %499 = vmatprep.subr.bf16.mxu0 0
  %500 = vmatpush1.bf16.msra.mxu0 %v369
  %501 = vmatprep.subr.bf16.mxu0 0
  %502 = vmatpush1.bf16.msra.mxu0 %v370
  %503 = vmatprep.subr.bf16.mxu0 0
  %504 = vmatpush1.bf16.msra.mxu0 %v371
  %505 = vmatprep.subr.bf16.mxu0 0
  %506 = vmatpush1.bf16.msra.mxu0 %v372
  %507 = vmatprep.subr.bf16.mxu0 0
  %508 = vmatpush1.bf16.msra.mxu0 %v373
  %509 = vmatprep.subr.bf16.mxu0 0
  %510 = vmatpush1.bf16.msra.mxu0 %v374
  %511 = vmatprep.mubr.bf16.mxu0 %v156
  %512 = vmatmul.mubr.bf16.gmra.mrb[0].mxu0 %v155
  %v513 = vpop.f32.mrb[0].mxu0
  %v514 = vadd.f32 %v458, %v513
  %v515 = vpop.f32.mrb[0].mxu0
  %v516 = vpop.f32.mrb[0].mxu0
  %v517 = vadd.f32 %v461, %v516
  %v518 = vpop.f32.mrb[0].mxu0
  %519 = vmatprep.mubr.bf16.mxu0 %v161
  %520 = vmatmul.mubr.bf16.gmra.mrb[0].mxu0 %v160
  %v521 = vpop.f32.mrb[0].mxu0
  %v522 = vadd.f32 %v466, %v521
  %v523 = vpop.f32.mrb[0].mxu0
  %v524 = vpop.f32.mrb[0].mxu0
  %v525 = vadd.f32 %v469, %v524
  %v526 = vpop.f32.mrb[0].mxu0
  %527 = vmatprep.mubr.bf16.mxu0 %v166
  %528 = vmatmul.mubr.bf16.gmra.mrb[0].mxu0 %v165
  %v529 = vpop.f32.mrb[0].mxu0
  %v530 = vadd.f32 %v474, %v529
  %v531 = vpop.f32.mrb[0].mxu0
  %v532 = vpop.f32.mrb[0].mxu0
  %v533 = vpop.f32.mrb[0].mxu0
  %534 = vdwg.mxu0
  %535 = vmatprep.subr.bf16.mxu0 0
  %536 = vmatpush1.bf16.msra.mxu0 %v375
  %537 = vmatprep.subr.bf16.mxu0 0
  %538 = vmatpush1.bf16.msra.mxu0 %v376
  %539 = vmatprep.subr.bf16.mxu0 0
  %540 = vmatpush1.bf16.msra.mxu0 %v377
  %541 = vmatprep.subr.bf16.mxu0 0
  %542 = vmatpush1.bf16.msra.mxu0 %v378
  %543 = vmatprep.subr.bf16.mxu0 0
  %544 = vmatpush1.bf16.msra.mxu0 %v379
  %545 = vmatprep.subr.bf16.mxu0 0
  %546 = vmatpush1.bf16.msra.mxu0 %v380
  %547 = vmatprep.subr.bf16.mxu0 0
  %548 = vmatpush1.bf16.msra.mxu0 %v381
  %549 = vmatprep.subr.bf16.mxu0 0
  %550 = vmatpush1.bf16.msra.mxu0 %v382
  %551 = vmatprep.subr.bf16.mxu0 0
  %552 = vmatpush1.bf16.msra.mxu0 0
  %553 = vmatprep.subr.bf16.mxu0 0
  %554 = vmatpush1.bf16.msra.mxu0 0
  %555 = vmatprep.subr.bf16.mxu0 0
  %556 = vmatpush1.bf16.msra.mxu0 0
  %557 = vmatprep.subr.bf16.mxu0 0
  %558 = vmatpush1.bf16.msra.mxu0 0
  %559 = vmatprep.subr.bf16.mxu0 0
  %560 = vmatpush1.bf16.msra.mxu0 0
  %561 = vmatprep.subr.bf16.mxu0 0
  %562 = vmatpush1.bf16.msra.mxu0 0
  %563 = vmatprep.subr.bf16.mxu0 0
  %564 = vmatpush1.bf16.msra.mxu0 0
  %565 = vmatprep.subr.bf16.mxu0 0
  %566 = vmatpush1.bf16.msra.mxu0 0
  %567 = vmatprep.mubr.bf16.mxu0 0
  %568 = vmatmul.mubr.bf16.gmra.mrb[0].mxu0 %v157
  %v569 = vpop.f32.mrb[0].mxu0
  %v570 = vadd.f32 %v514, %v569
  %v571 = vpop.f32.mrb[0].mxu0
  %v572 = vpop.f32.mrb[0].mxu0
  %v573 = vadd.f32 %v517, %v572
  %v574 = vpop.f32.mrb[0].mxu0
  %575 = vmatprep.mubr.bf16.mxu0 0
  %576 = vmatmul.mubr.bf16.gmra.mrb[0].mxu0 %v162
  %v577 = vpop.f32.mrb[0].mxu0
  %v578 = vadd.f32 %v522, %v577
  %v579 = vpop.f32.mrb[0].mxu0
  %v580 = vpop.f32.mrb[0].mxu0
  %v581 = vadd.f32 %v525, %v580
  %v582 = vpop.f32.mrb[0].mxu0
  %583 = vmatprep.mubr.bf16.mxu0 0
  %584 = vmatmul.mubr.bf16.gmra.mrb[0].mxu0 %v167
  %v585 = vpop.f32.mrb[0].mxu0
  %v586 = vadd.f32 %v530, %v585
  %v587 = vpop.f32.mrb[0].mxu0
  %v588 = vpop.f32.mrb[0].mxu0
  %v589 = vpop.f32.mrb[0].mxu0
  %590 = vdwg.mxu0
  %v591 = vadd.f32 %v570, %v573
  %v592 = vadd.f32 %v591, %v578
  %v593 = vadd.f32 %v592, %v581
  %vm594 = vcmask 1043456
  %v595 = vsel %vm594, %v586, 0.0
  %v596 = vadd.f32 %v593, %v595
  %v597 = vrot.slane %v596, 4
  %v598 = vadd.f32 %v596, %v597
  %v599 = vrot.slane %v598, 2
  %v600 = vadd.f32 %v598, %v599
  %v601 = vrot.slane %v600, 1
  %v602 = vadd.f32 %v600, %v601
  %v603 = vrcp.pop 36.0
  %v604 = vmul.f32 %v602, %v603
  %v605 = vsub.f32 %v570, %v604
  %v606 = vsub.f32 %v573, %v604
  %v607 = vsub.f32 %v578, %v604
  %v608 = vsub.f32 %v581, %v604
  %v609 = vsub.f32 %v586, %v604
  %v610 = vmul.f32 %v605, %v605
  %v611 = vmul.f32 %v606, %v606
  %v612 = vmul.f32 %v607, %v607
  %v613 = vmul.f32 %v608, %v608
  %v614 = vmul.f32 %v609, %v609
  %v615 = vadd.f32 %v610, %v611
  %v616 = vadd.f32 %v615, %v612
  %v617 = vadd.f32 %v616, %v613
  %v618 = vsel %vm594, %v614, 0.0
  %v619 = vadd.f32 %v617, %v618
  %v620 = vrot.slane %v619, 4
  %v621 = vadd.f32 %v619, %v620
  %v622 = vrot.slane %v621, 2
  %v623 = vadd.f32 %v621, %v622
  %v624 = vrot.slane %v623, 1
  %v625 = vadd.f32 %v623, %v624
  %v626 = vmul.f32 %v625, %v603
  %v627 = vadd.f32 %v626, 1e-05
  %v628 = vrsqrt.pop %v627
  %v629 = vmul.f32 %v605, %v628
  %v630 = vmul.f32 %v606, %v628
  %v631 = vmul.f32 %v607, %v628
  %v632 = vmul.f32 %v608, %v628
  %v633 = vmul.f32 %v609, %v628
  %v634 = vld [vmem:[%s2] sm:$0x1]
  %v636 = vlaneseq
  %v637 = vshrl.u32 %v636, 7
  %v638 = vsub.s32 0, %v637
  %v639 = vrot.slane %v634, %v638
  %v641 = vmul.f32 %v629, %v639
  %v642 = vmul.f32 %v630, %v639
  %v643 = vmul.f32 %v631, %v639
  %v644 = vmul.f32 %v632, %v639
  %v645 = vmul.f32 %v633, %v639
  %v646 = vld [vmem:[%s3] sm:$0x1]
  %v648 = vlaneseq
  %v649 = vshrl.u32 %v648, 7
  %v650 = vsub.s32 0, %v649
  %v651 = vrot.slane %v646, %v650
  %v653 = vadd.f32 %v641, %v651
  %v654 = vadd.f32 %v642, %v651
  %v655 = vadd.f32 %v643, %v651
  %v656 = vadd.f32 %v644, %v651
  %v657 = vadd.f32 %v645, %v651
  %v658 = vmax.f32 %v653, 0.0
  %v659 = vmax.f32 %v654, 0.0
  %v660 = vmax.f32 %v655, 0.0
  %v661 = vmax.f32 %v656, 0.0
  %v662 = vmax.f32 %v657, 0.0
  %663 = vst [vmem:[%s4] sm:$0xff] %v658
  %664 = vst [vmem:[%s4 + $0x8] sm:$0xff] %v659
  %665 = vst [vmem:[%s4 + $0x10] sm:$0xff] %v660
  %666 = vst [vmem:[%s4 + $0x18] sm:$0xff] %v661
  %667 = vst [vmem:[%s4 + $0x20] sm:$0xf] %v662
  // Predicated region
  $region18: #{my_nn_forward.11} parent=0 // pred_check
    _
  $region19: #{my_nn_forward.11} parent=0 // pred_check_branch
    %669 = sbr.rel (0) target = $region21
  $region20: #{my_nn_forward.11} parent=0 // pred_region
    _
  $region21: #{my_nn_forward.11} parent=0 // pred_fallthru
    _
  // Predicated region
  $region22: #{my_nn_forward.11} parent=0 // pred_check
    _
  $region23: #{my_nn_forward.11} parent=0 // pred_check_branch
    %671 = sbr.rel (0) target = $region25
  $region24: #{my_nn_forward.11} parent=0 // pred_region
    _
  $region25: #{my_nn_forward.11} parent=0 // pred_fallthru
    _

// kernel: my_nn_forward.12
$region0: #{my_nn_forward.12}
  #allocation0 [shape = 'u32[]', space=smem, size = 0x4, offset = 0x4, fixed_abs, tag = 'smem constant byte address 0x4 - core index']
  #allocation1 [shape = 'u32[144,128]{1,0:T(1,128)}', space=vmem, size = 0x12000, scoped, tag = 'internal scratch']
  %s0 = inlined_call_operand.vmem [shape: f32[36,9], index: 0, kind: input, shape index: {}]
  %s1 = inlined_call_operand.vmem [shape: f32[1,9,128], index: 1, kind: input, shape index: {}]
  %s2 = inlined_call_operand.vmem [shape: f32[1,36,128], index: 2, kind: input, shape index: {}]
  %s3 = inlined_call_operand.vmem [shape: f32[1,36,128], index: 3, kind: output, shape index: {}]
  %s4 = sld [smem:[#allocation0]]
  $region22: #{my_nn_forward.12} parent=0
    _
  %s6 = ssub.s32 1, %s4
  %s7 = scalar_select 0, %s6, %s4
  // Predicated region
  $region2: #{my_nn_forward.12} parent=0 // pred_check
    _
  $region3: #{my_nn_forward.12} parent=0 // pred_check_branch
    %9 = sbr.rel (0) target = $region5
  $region4: #{my_nn_forward.12} parent=0 // pred_region
    _
  $region5: #{my_nn_forward.12} parent=0 // pred_fallthru
    _
  // Predicated region
  $region6: #{my_nn_forward.12} parent=0 // pred_check
    _
  $region7: #{my_nn_forward.12} parent=0 // pred_check_branch
    %11 = sbr.rel (0) target = $region9
  $region8: #{my_nn_forward.12} parent=0 // pred_region
    _
  $region9: #{my_nn_forward.12} parent=0 // pred_fallthru
    _
  // Predicated region
  $region10: #{my_nn_forward.12} parent=0 // pred_check
    _
  $region11: #{my_nn_forward.12} parent=0 // pred_check_branch
    %13 = sbr.rel (0) target = $region13
  $region12: #{my_nn_forward.12} parent=0 // pred_region
    _
  $region13: #{my_nn_forward.12} parent=0 // pred_fallthru
    _
  %v14 = vld [vmem:[%s0] sm:$0xff]
  %v15 = vld [vmem:[%s0 + $0x8] sm:$0xff]
  %v16 = vld [vmem:[%s0 + $0x10] sm:$0xff]
  %v17 = vld [vmem:[%s0 + $0x18] sm:$0xff]
  %v18 = vld [vmem:[%s0 + $0x20] sm:$0xf]
  %v19 = vld [vmem:[%s1] sm:$0xff]
  %v20 = vld [vmem:[%s1 + $0x8] sm:$0x1]
  %v21 = vld [vmem:[%s2] sm:$0xff]
  %v22 = vld [vmem:[%s2 + $0x8] sm:$0xff]
  %v23 = vld [vmem:[%s2 + $0x10] sm:$0xff]
  %v24 = vld [vmem:[%s2 + $0x18] sm:$0xff]
  %v25 = vld [vmem:[%s2 + $0x20] sm:$0xf]
  %vm26 = vcmask 72704
  %v28 = vsel %vm26, %v14, 0
  %v31 = vsel %vm26, %v15, 0
  %v34 = vsel %vm26, %v16, 0
  %v37 = vsel %vm26, %v17, 0
  %v40 = vsel %vm26, %v18, 0
  %vm42 = vcmask 1040384
  %v44 = vsel %vm42, %v20, 0
  %46 = vmatprep.subr.mxu0 0.0
  %47 = vmatpush1.msra.mxu0 %v19
  %48 = vmatprep.subr.mxu0 0.0
  %49 = vmatpush1.msra.mxu0 %v44
  %50 = vmatprep.subr.mxu0 0.0
  %51 = vmatpush1.msra.mxu0 0.0
  %52 = vmatprep.subr.mxu0 0.0
  %53 = vmatpush1.msra.mxu0 0.0
  %54 = vmatprep.subr.mxu0 0.0
  %55 = vmatpush1.msra.mxu0 0.0
  %56 = vmatprep.subr.mxu0 0.0
  %57 = vmatpush1.msra.mxu0 0.0
  %58 = vmatprep.subr.mxu0 0.0
  %59 = vmatpush1.msra.mxu0 0.0
  %60 = vmatprep.subr.mxu0 0.0
  %61 = vmatpush1.msra.mxu0 0.0
  %62 = vmatprep.subr.mxu0 0.0
  %63 = vmatpush1.msra.mxu0 0.0
  %64 = vmatprep.subr.mxu0 0.0
  %65 = vmatpush1.msra.mxu0 0.0
  %66 = vmatprep.subr.mxu0 0.0
  %67 = vmatpush1.msra.mxu0 0.0
  %68 = vmatprep.subr.mxu0 0.0
  %69 = vmatpush1.msra.mxu0 0.0
  %70 = vmatprep.subr.mxu0 0.0
  %71 = vmatpush1.msra.mxu0 0.0
  %72 = vmatprep.subr.mxu0 0.0
  %73 = vmatpush1.msra.mxu0 0.0
  %74 = vmatprep.subr.mxu0 0.0
  %75 = vmatpush1.msra.mxu0 0.0
  %76 = vmatprep.subr.mxu0 0.0
  %77 = vmatpush1.msra.mxu0 0.0
  %78 = vmatprep.subr.mxu0 0.0
  %79 = vmatpush1.msra.mxu0 0.0
  %80 = vmatprep.subr.mxu0 0.0
  %81 = vmatpush1.msra.mxu0 0.0
  %82 = vmatprep.subr.mxu0 0.0
  %83 = vmatpush1.msra.mxu0 0.0
  %84 = vmatprep.subr.mxu0 0.0
  %85 = vmatpush1.msra.mxu0 0.0
  %86 = vmatprep.subr.mxu0 0.0
  %87 = vmatpush1.msra.mxu0 0.0
  %88 = vmatprep.subr.mxu0 0.0
  %89 = vmatpush1.msra.mxu0 0.0
  %90 = vmatprep.subr.mxu0 0.0
  %91 = vmatpush1.msra.mxu0 0.0
  %92 = vmatprep.subr.mxu0 0.0
  %93 = vmatpush1.msra.mxu0 0.0
  %94 = vmatprep.subr.mxu0 0.0
  %95 = vmatpush1.msra.mxu0 0.0
  %96 = vmatprep.subr.mxu0 0.0
  %97 = vmatpush1.msra.mxu0 0.0
  %98 = vmatprep.subr.mxu0 0.0
  %99 = vmatpush1.msra.mxu0 0.0
  %100 = vmatprep.subr.mxu0 0.0
  %101 = vmatpush1.msra.mxu0 0.0
  %102 = vmatprep.subr.mxu0 0.0
  %103 = vmatpush1.msra.mxu0 0.0
  %104 = vmatprep.subr.mxu0 0.0
  %105 = vmatpush1.msra.mxu0 0.0
  %106 = vmatprep.subr.mxu0 0.0
  %107 = vmatpush1.msra.mxu0 0.0
  %108 = vmatprep.subr.mxu0 0.0
  %109 = vmatpush1.msra.mxu0 0.0
  %110 = vmatprep.mubr.f32.mxu0 0.0
  %111 = vmatmul.mubr.f32.gmra.mrb[0].mxu0 %v28
  %v112 = vpop.f32.mrb[0].mxu0
  %v113 = vadd.f32 %v21, %v112
  %v114 = vpop.f32.mrb[0].mxu0
  %115 = vmatprep.mubr.f32.mxu0 0.0
  %116 = vmatmul.mubr.f32.gmra.mrb[0].mxu0 %v31
  %v117 = vpop.f32.mrb[0].mxu0
  %v118 = vadd.f32 %v22, %v117
  %v119 = vpop.f32.mrb[0].mxu0
  %120 = vmatprep.mubr.f32.mxu0 0.0
  %121 = vmatmul.mubr.f32.gmra.mrb[0].mxu0 %v34
  %v122 = vpop.f32.mrb[0].mxu0
  %v123 = vadd.f32 %v23, %v122
  %v124 = vpop.f32.mrb[0].mxu0
  %125 = vmatprep.mubr.f32.mxu0 0.0
  %126 = vmatmul.mubr.f32.gmra.mrb[0].mxu0 %v37
  %v127 = vpop.f32.mrb[0].mxu0
  %v128 = vadd.f32 %v24, %v127
  %v129 = vpop.f32.mrb[0].mxu0
  %130 = vmatprep.mubr.f32.mxu0 0.0
  %131 = vmatmul.mubr.f32.gmra.mrb[0].mxu0 %v40
  %v132 = vpop.f32.mrb[0].mxu0
  %v133 = vadd.f32 %v25, %v132
  %v134 = vpop.f32.mrb[0].mxu0
  %135 = vdwg.mxu0
  %136 = vst [vmem:[%s3] sm:$0xff] %v113
  %137 = vst [vmem:[%s3 + $0x8] sm:$0xff] %v118
  %138 = vst [vmem:[%s3 + $0x10] sm:$0xff] %v123
  %139 = vst [vmem:[%s3 + $0x18] sm:$0xff] %v128
  %140 = vst [vmem:[%s3 + $0x20] sm:$0xf] %v133
  // Predicated region
  $region14: #{my_nn_forward.12} parent=0 // pred_check
    _
  $region15: #{my_nn_forward.12} parent=0 // pred_check_branch
    %142 = sbr.rel (0) target = $region17
  $region16: #{my_nn_forward.12} parent=0 // pred_region
    _
  $region17: #{my_nn_forward.12} parent=0 // pred_fallthru
    _
  // Predicated region
  $region18: #{my_nn_forward.12} parent=0 // pred_check
    _
  $region19: #{my_nn_forward.12} parent=0 // pred_check_branch
    %144 = sbr.rel (0) target = $region21
  $region20: #{my_nn_forward.12} parent=0 // pred_region
    _
  $region21: #{my_nn_forward.12} parent=0 // pred_fallthru
    _

// kernel: my_nn_forward.13
$region0: #{my_nn_forward.13}
  #allocation0 [shape = 'u32[]', space=smem, size = 0x4, offset = 0x4, fixed_abs, tag = 'smem constant byte address 0x4 - core index']
  #allocation1 [shape = 'u32[144,128]{1,0:T(1,128)}', space=vmem, size = 0x12000, scoped, tag = 'internal scratch']
  %s0 = inlined_call_operand.vmem [shape: bf16[36,1152], index: 0, kind: input, shape index: {}]
  %s1 = inlined_call_operand.vmem [shape: bf16[1152,128], index: 1, kind: input, shape index: {}]
  %s2 = inlined_call_operand.vmem [shape: f32[1,128], index: 2, kind: input, shape index: {}]
  %s3 = inlined_call_operand.vmem [shape: f32[1,128], index: 3, kind: input, shape index: {}]
  %s4 = inlined_call_operand.vmem [shape: f32[144,36], index: 4, kind: input, shape index: {}]
  %s5 = inlined_call_operand.vmem [shape: f32[1,144,128], index: 5, kind: input, shape index: {}]
  %s6 = inlined_call_operand.vmem [shape: f32[1,144,128], index: 6, kind: output, shape index: {}]
  %s7 = sld [smem:[#allocation0]]
  $region34: #{my_nn_forward.13} parent=0
    _
  %s9 = ssub.s32 1, %s7
  %s10 = scalar_select 0, %s9, %s7
  // Predicated region
  $region2: #{my_nn_forward.13} parent=0 // pred_check
    _
  $region3: #{my_nn_forward.13} parent=0 // pred_check_branch
    %12 = sbr.rel (0) target = $region5
  $region4: #{my_nn_forward.13} parent=0 // pred_region
    _
  $region5: #{my_nn_forward.13} parent=0 // pred_fallthru
    _
  // Predicated region
  $region6: #{my_nn_forward.13} parent=0 // pred_check
    _
  $region7: #{my_nn_forward.13} parent=0 // pred_check_branch
    %14 = sbr.rel (0) target = $region9
  $region8: #{my_nn_forward.13} parent=0 // pred_region
    _
  $region9: #{my_nn_forward.13} parent=0 // pred_fallthru
    _
  // Predicated region
  $region10: #{my_nn_forward.13} parent=0 // pred_check
    _
  $region11: #{my_nn_forward.13} parent=0 // pred_check_branch
    %16 = sbr.rel (0) target = $region13
  $region12: #{my_nn_forward.13} parent=0 // pred_region
    _
  $region13: #{my_nn_forward.13} parent=0 // pred_fallthru
    _
  // Predicated region
  $region14: #{my_nn_forward.13} parent=0 // pred_check
    _
  $region15: #{my_nn_forward.13} parent=0 // pred_check_branch
    %18 = sbr.rel (0) target = $region17
  $region16: #{my_nn_forward.13} parent=0 // pred_region
    _
  $region17: #{my_nn_forward.13} parent=0 // pred_fallthru
    _
  // Predicated region
  $region18: #{my_nn_forward.13} parent=0 // pred_check
    _
  $region19: #{my_nn_forward.13} parent=0 // pred_check_branch
    %20 = sbr.rel (0) target = $region21
  $region20: #{my_nn_forward.13} parent=0 // pred_region
    _
  $region21: #{my_nn_forward.13} parent=0 // pred_fallthru
    _
  // Predicated region
  $region22: #{my_nn_forward.13} parent=0 // pred_check
    _
  $region23: #{my_nn_forward.13} parent=0 // pred_check_branch
    %22 = sbr.rel (0) target = $region25
  $region24: #{my_nn_forward.13} parent=0 // pred_region
    _
  $region25: #{my_nn_forward.13} parent=0 // pred_fallthru
    _
  %v24 = vld [vmem:[%s0] sm:$0xff]
  %v25 = vld [vmem:[%s0 + $0x8] sm:$0xff]
  %v26 = vld [vmem:[%s0 + $0x10] sm:$0xff]
  %v27 = vld [vmem:[%s0 + $0x18] sm:$0xff]
  %v28 = vld [vmem:[%s0 + $0x20] sm:$0xf]
  %v29 = vld [vmem:[%s0 + $0x24] sm:$0xff]
  %v30 = vld [vmem:[%s0 + $0x2c] sm:$0xff]
  %v31 = vld [vmem:[%s0 + $0x34] sm:$0xff]
  %v32 = vld [vmem:[%s0 + $0x3c] sm:$0xff]
  %v33 = vld [vmem:[%s0 + $0x44] sm:$0xf]
  %v34 = vld [vmem:[%s0 + $0x48] sm:$0xff]
  %v35 = vld [vmem:[%s0 + $0x50] sm:$0xff]
  %v36 = vld [vmem:[%s0 + $0x58] sm:$0xff]
  %v37 = vld [vmem:[%s0 + $0x60] sm:$0xff]
  %v38 = vld [vmem:[%s0 + $0x68] sm:$0xf]
  %v39 = vld [vmem:[%s0 + $0x6c] sm:$0xff]
  %v40 = vld [vmem:[%s0 + $0x74] sm:$0xff]
  %v41 = vld [vmem:[%s0 + $0x7c] sm:$0xff]
  %v42 = vld [vmem:[%s0 + $0x84] sm:$0xff]
  %v43 = vld [vmem:[%s0 + $0x8c] sm:$0xf]
  %v44 = vld [vmem:[%s0 + $0x90] sm:$0x33]
  %v45 = vld [vmem:[%s0 + $0x98] sm:$0x33]
  %v46 = vld [vmem:[%s0 + $0xa0] sm:$0x33]
  %v47 = vld [vmem:[%s0 + $0xa8] sm:$0x33]
  %v48 = vld [vmem:[%s0 + $0xb0] sm:$0x3]
  %v49 = vld [vmem:[%s1] sm:$0xf]
  %v50 = vld [vmem:[%s1 + $0x4] sm:$0xf]
  %v51 = vld [vmem:[%s1 + $0x8] sm:$0xf]
  %v52 = vld [vmem:[%s1 + $0xc] sm:$0xf]
  %v53 = vld [vmem:[%s1 + $0x10] sm:$0xf]
  %v54 = vld [vmem:[%s1 + $0x14] sm:$0xf]
  %v55 = vld [vmem:[%s1 + $0x18] sm:$0xf]
  %v56 = vld [vmem:[%s1 + $0x1c] sm:$0xf]
  %v57 = vld [vmem:[%s1 + $0x20] sm:$0xf]
  %v58 = vld [vmem:[%s1 + $0x24] sm:$0xf]
  %v59 = vld [vmem:[%s1 + $0x28] sm:$0xf]
  %v60 = vld [vmem:[%s1 + $0x2c] sm:$0xf]
  %v61 = vld [vmem:[%s1 + $0x30] sm:$0xf]
  %v62 = vld [vmem:[%s1 + $0x34] sm:$0xf]
  %v63 = vld [vmem:[%s1 + $0x38] sm:$0xf]
  %v64 = vld [vmem:[%s1 + $0x3c] sm:$0xf]
  %v65 = vld [vmem:[%s1 + $0x40] sm:$0xf]
  %v66 = vld [vmem:[%s1 + $0x44] sm:$0xf]
  %v67 = vld [vmem:[%s1 + $0x48] sm:$0xf]
  %v68 = vld [vmem:[%s1 + $0x4c] sm:$0xf]
  %v69 = vld [vmem:[%s1 + $0x50] sm:$0xf]
  %v70 = vld [vmem:[%s1 + $0x54] sm:$0xf]
  %v71 = vld [vmem:[%s1 + $0x58] sm:$0xf]
  %v72 = vld [vmem:[%s1 + $0x5c] sm:$0xf]
  %v73 = vld [vmem:[%s1 + $0x60] sm:$0xf]
  %v74 = vld [vmem:[%s1 + $0x64] sm:$0xf]
  %v75 = vld [vmem:[%s1 + $0x68] sm:$0xf]
  %v76 = vld [vmem:[%s1 + $0x6c] sm:$0xf]
  %v77 = vld [vmem:[%s1 + $0x70] sm:$0xf]
  %v78 = vld [vmem:[%s1 + $0x74] sm:$0xf]
  %v79 = vld [vmem:[%s1 + $0x78] sm:$0xf]
  %v80 = vld [vmem:[%s1 + $0x7c] sm:$0xf]
  %v81 = vld [vmem:[%s1 + $0x80] sm:$0xf]
  %v82 = vld [vmem:[%s1 + $0x84] sm:$0xf]
  %v83 = vld [vmem:[%s1 + $0x88] sm:$0xf]
  %v84 = vld [vmem:[%s1 + $0x8c] sm:$0xf]
  %v85 = vld [vmem:[%s1 + $0x90] sm:$0xf]
  %v86 = vld [vmem:[%s1 + $0x94] sm:$0xf]
  %v87 = vld [vmem:[%s1 + $0x98] sm:$0xf]
  %v88 = vld [vmem:[%s1 + $0x9c] sm:$0xf]
  %v89 = vld [vmem:[%s1 + $0xa0] sm:$0xf]
  %v90 = vld [vmem:[%s1 + $0xa4] sm:$0xf]
  %v91 = vld [vmem:[%s1 + $0xa8] sm:$0xf]
  %v92 = vld [vmem:[%s1 + $0xac] sm:$0xf]
  %v93 = vld [vmem:[%s1 + $0xb0] sm:$0xf]
  %v94 = vld [vmem:[%s1 + $0xb4] sm:$0xf]
  %v95 = vld [vmem:[%s1 + $0xb8] sm:$0xf]
  %v96 = vld [vmem:[%s1 + $0xbc] sm:$0xf]
  %v97 = vld [vmem:[%s1 + $0xc0] sm:$0xf]
  %v98 = vld [vmem:[%s1 + $0xc4] sm:$0xf]
  %v99 = vld [vmem:[%s1 + $0xc8] sm:$0xf]
  %v100 = vld [vmem:[%s1 + $0xcc] sm:$0xf]
  %v101 = vld [vmem:[%s1 + $0xd0] sm:$0xf]
  %v102 = vld [vmem:[%s1 + $0xd4] sm:$0xf]
  %v103 = vld [vmem:[%s1 + $0xd8] sm:$0xf]
  %v104 = vld [vmem:[%s1 + $0xdc] sm:$0xf]
  %v105 = vld [vmem:[%s1 + $0xe0] sm:$0xf]
  %v106 = vld [vmem:[%s1 + $0xe4] sm:$0xf]
  %v107 = vld [vmem:[%s1 + $0xe8] sm:$0xf]
  %v108 = vld [vmem:[%s1 + $0xec] sm:$0xf]
  %v109 = vld [vmem:[%s1 + $0xf0] sm:$0xf]
  %v110 = vld [vmem:[%s1 + $0xf4] sm:$0xf]
  %v111 = vld [vmem:[%s1 + $0xf8] sm:$0xf]
  %v112 = vld [vmem:[%s1 + $0xfc] sm:$0xf]
  %v113 = vld [vmem:[%s1 + $0x100] sm:$0xf]
  %v114 = vld [vmem:[%s1 + $0x104] sm:$0xf]
  %v115 = vld [vmem:[%s1 + $0x108] sm:$0xf]
  %v116 = vld [vmem:[%s1 + $0x10c] sm:$0xf]
  %v117 = vld [vmem:[%s1 + $0x110] sm:$0xf]
  %v118 = vld [vmem:[%s1 + $0x114] sm:$0xf]
  %v119 = vld [vmem:[%s1 + $0x118] sm:$0xf]
  %v120 = vld [vmem:[%s1 + $0x11c] sm:$0xf]
  %v121 = vld [vmem:[%s1 + $0x120] sm:$0xf]
  %v122 = vld [vmem:[%s1 + $0x124] sm:$0xf]
  %v123 = vld [vmem:[%s1 + $0x128] sm:$0xf]
  %v124 = vld [vmem:[%s1 + $0x12c] sm:$0xf]
  %v125 = vld [vmem:[%s1 + $0x130] sm:$0xf]
  %v126 = vld [vmem:[%s1 + $0x134] sm:$0xf]
  %v127 = vld [vmem:[%s1 + $0x138] sm:$0xf]
  %v128 = vld [vmem:[%s1 + $0x13c] sm:$0xf]
  %v129 = vld [vmem:[%s1 + $0x140] sm:$0xf]
  %v130 = vld [vmem:[%s1 + $0x144] sm:$0xf]
  %v131 = vld [vmem:[%s1 + $0x148] sm:$0xf]
  %v132 = vld [vmem:[%s1 + $0x14c] sm:$0xf]
  %v133 = vld [vmem:[%s1 + $0x150] sm:$0xf]
  %v134 = vld [vmem:[%s1 + $0x154] sm:$0xf]
  %v135 = vld [vmem:[%s1 + $0x158] sm:$0xf]
  %v136 = vld [vmem:[%s1 + $0x15c] sm:$0xf]
  %v137 = vld [vmem:[%s1 + $0x160] sm:$0xf]
  %v138 = vld [vmem:[%s1 + $0x164] sm:$0xf]
  %v139 = vld [vmem:[%s1 + $0x168] sm:$0xf]
  %v140 = vld [vmem:[%s1 + $0x16c] sm:$0xf]
  %v141 = vld [vmem:[%s1 + $0x170] sm:$0xf]
  %v142 = vld [vmem:[%s1 + $0x174] sm:$0xf]
  %v143 = vld [vmem:[%s1 + $0x178] sm:$0xf]
  %v144 = vld [vmem:[%s1 + $0x17c] sm:$0xf]
  %v145 = vld [vmem:[%s1 + $0x180] sm:$0xf]
  %v146 = vld [vmem:[%s1 + $0x184] sm:$0xf]
  %v147 = vld [vmem:[%s1 + $0x188] sm:$0xf]
  %v148 = vld [vmem:[%s1 + $0x18c] sm:$0xf]
  %v149 = vld [vmem:[%s1 + $0x190] sm:$0xf]
  %v150 = vld [vmem:[%s1 + $0x194] sm:$0xf]
  %v151 = vld [vmem:[%s1 + $0x198] sm:$0xf]
  %v152 = vld [vmem:[%s1 + $0x19c] sm:$0xf]
  %v153 = vld [vmem:[%s1 + $0x1a0] sm:$0xf]
  %v154 = vld [vmem:[%s1 + $0x1a4] sm:$0xf]
  %v155 = vld [vmem:[%s1 + $0x1a8] sm:$0xf]
  %v156 = vld [vmem:[%s1 + $0x1ac] sm:$0xf]
  %v157 = vld [vmem:[%s1 + $0x1b0] sm:$0xf]
  %v158 = vld [vmem:[%s1 + $0x1b4] sm:$0xf]
  %v159 = vld [vmem:[%s1 + $0x1b8] sm:$0xf]
  %v160 = vld [vmem:[%s1 + $0x1bc] sm:$0xf]
  %v161 = vld [vmem:[%s1 + $0x1c0] sm:$0xf]
  %v162 = vld [vmem:[%s1 + $0x1c4] sm:$0xf]
  %v163 = vld [vmem:[%s1 + $0x1c8] sm:$0xf]
  %v164 = vld [vmem:[%s1 + $0x1cc] sm:$0xf]
  %v165 = vld [vmem:[%s1 + $0x1d0] sm:$0xf]
  %v166 = vld [vmem:[%s1 + $0x1d4] sm:$0xf]
  %v167 = vld [vmem:[%s1 + $0x1d8] sm:$0xf]
  %v168 = vld [vmem:[%s1 + $0x1dc] sm:$0xf]
  %v169 = vld [vmem:[%s1 + $0x1e0] sm:$0xf]
  %v170 = vld [vmem:[%s1 + $0x1e4] sm:$0xf]
  %v171 = vld [vmem:[%s1 + $0x1e8] sm:$0xf]
  %v172 = vld [vmem:[%s1 + $0x1ec] sm:$0xf]
  %v173 = vld [vmem:[%s1 + $0x1f0] sm:$0xf]
  %v174 = vld [vmem:[%s1 + $0x1f4] sm:$0xf]
  %v175 = vld [vmem:[%s1 + $0x1f8] sm:$0xf]
  %v176 = vld [vmem:[%s1 + $0x1fc] sm:$0xf]
  %v177 = vld [vmem:[%s1 + $0x200] sm:$0xf]
  %v178 = vld [vmem:[%s1 + $0x204] sm:$0xf]
  %v179 = vld [vmem:[%s1 + $0x208] sm:$0xf]
  %v180 = vld [vmem:[%s1 + $0x20c] sm:$0xf]
  %v181 = vld [vmem:[%s1 + $0x210] sm:$0xf]
  %v182 = vld [vmem:[%s1 + $0x214] sm:$0xf]
  %v183 = vld [vmem:[%s1 + $0x218] sm:$0xf]
  %v184 = vld [vmem:[%s1 + $0x21c] sm:$0xf]
  %v185 = vld [vmem:[%s1 + $0x220] sm:$0xf]
  %v186 = vld [vmem:[%s1 + $0x224] sm:$0xf]
  %v187 = vld [vmem:[%s1 + $0x228] sm:$0xf]
  %v188 = vld [vmem:[%s1 + $0x22c] sm:$0xf]
  %v189 = vld [vmem:[%s1 + $0x230] sm:$0xf]
  %v190 = vld [vmem:[%s1 + $0x234] sm:$0xf]
  %v191 = vld [vmem:[%s1 + $0x238] sm:$0xf]
  %v192 = vld [vmem:[%s1 + $0x23c] sm:$0xf]
  %v218 = vunpack.c.l.b16 %v24
  %v219 = vunpack.c.h.b16 %v24
  %v220 = vunpack.c.l.b16 %v25
  %v221 = vunpack.c.h.b16 %v25
  %v222 = vunpack.c.l.b16 %v26
  %v223 = vunpack.c.h.b16 %v26
  %v224 = vunpack.c.l.b16 %v27
  %v225 = vunpack.c.h.b16 %v27
  %v226 = vunpack.c.l.b16 %v28
  %v227 = vunpack.c.l.b16 %v29
  %v228 = vunpack.c.h.b16 %v29
  %v229 = vunpack.c.l.b16 %v30
  %v230 = vunpack.c.h.b16 %v30
  %v231 = vunpack.c.l.b16 %v31
  %v232 = vunpack.c.h.b16 %v31
  %v233 = vunpack.c.l.b16 %v32
  %v234 = vunpack.c.h.b16 %v32
  %v235 = vunpack.c.l.b16 %v33
  %v236 = vunpack.c.l.b16 %v34
  %v237 = vunpack.c.h.b16 %v34
  %v238 = vunpack.c.l.b16 %v35
  %v239 = vunpack.c.h.b16 %v35
  %v240 = vunpack.c.l.b16 %v36
  %v241 = vunpack.c.h.b16 %v36
  %v242 = vunpack.c.l.b16 %v37
  %v243 = vunpack.c.h.b16 %v37
  %v244 = vunpack.c.l.b16 %v38
  %v245 = vunpack.c.l.b16 %v39
  %v246 = vunpack.c.h.b16 %v39
  %v247 = vunpack.c.l.b16 %v40
  %v248 = vunpack.c.h.b16 %v40
  %v249 = vunpack.c.l.b16 %v41
  %v250 = vunpack.c.h.b16 %v41
  %v251 = vunpack.c.l.b16 %v42
  %v252 = vunpack.c.h.b16 %v42
  %v253 = vunpack.c.l.b16 %v43
  %v254 = vunpack.c.l.b16 %v44
  %v255 = vunpack.c.h.b16 %v44
  %v256 = vunpack.c.l.b16 %v45
  %v257 = vunpack.c.h.b16 %v45
  %v258 = vunpack.c.l.b16 %v46
  %v259 = vunpack.c.h.b16 %v46
  %v260 = vunpack.c.l.b16 %v47
  %v261 = vunpack.c.h.b16 %v47
  %v262 = vunpack.c.l.b16 %v48
  %v263 = vpack.c.b16 %v227, %v218
  %v264 = vpack.c.b16 %v228, %v219
  %v265 = vpack.c.b16 %v229, %v220
  %v266 = vpack.c.b16 %v230, %v221
  %v267 = vpack.c.b16 %v231, %v222
  %v268 = vpack.c.b16 %v232, %v223
  %v269 = vpack.c.b16 %v233, %v224
  %v270 = vpack.c.b16 %v234, %v225
  %v271 = vpack.c.b16 %v235, %v226
  %v272 = vpack.c.b16 %v245, %v236
  %v273 = vpack.c.b16 %v246, %v237
  %v274 = vpack.c.b16 %v247, %v238
  %v275 = vpack.c.b16 %v248, %v239
  %v276 = vpack.c.b16 %v249, %v240
  %v277 = vpack.c.b16 %v250, %v241
  %v278 = vpack.c.b16 %v251, %v242
  %v279 = vpack.c.b16 %v252, %v243
  %v280 = vpack.c.b16 %v253, %v244
  %v281 = vpack.c.b16 %v254, %v254
  %v282 = vpack.c.b16 %v255, %v255
  %v283 = vpack.c.b16 %v256, %v256
  %v284 = vpack.c.b16 %v257, %v257
  %v285 = vpack.c.b16 %v258, %v258
  %v286 = vpack.c.b16 %v259, %v259
  %v287 = vpack.c.b16 %v260, %v260
  %v288 = vpack.c.b16 %v261, %v261
  %v289 = vpack.c.b16 %v262, %v262
  %v461 = vunpack.c.l.b16 %v49
  %v462 = vunpack.c.l.b16 %v50
  %v463 = vunpack.c.l.b16 %v51
  %v464 = vunpack.c.l.b16 %v52
  %v465 = vunpack.c.l.b16 %v53
  %v466 = vunpack.c.l.b16 %v54
  %v467 = vunpack.c.l.b16 %v55
  %v468 = vunpack.c.l.b16 %v56
  %v469 = vunpack.c.l.b16 %v57
  %v470 = vunpack.c.l.b16 %v58
  %v471 = vunpack.c.l.b16 %v59
  %v472 = vunpack.c.l.b16 %v60
  %v473 = vunpack.c.l.b16 %v61
  %v474 = vunpack.c.l.b16 %v62
  %v475 = vunpack.c.l.b16 %v63
  %v476 = vunpack.c.l.b16 %v64
  %v477 = vunpack.c.l.b16 %v65
  %v478 = vunpack.c.l.b16 %v66
  %v479 = vunpack.c.l.b16 %v67
  %v480 = vunpack.c.l.b16 %v68
  %v481 = vunpack.c.l.b16 %v69
  %v482 = vunpack.c.l.b16 %v70
  %v483 = vunpack.c.l.b16 %v71
  %v484 = vunpack.c.l.b16 %v72
  %v485 = vunpack.c.l.b16 %v73
  %v486 = vunpack.c.l.b16 %v74
  %v487 = vunpack.c.l.b16 %v75
  %v488 = vunpack.c.l.b16 %v76
  %v489 = vunpack.c.l.b16 %v77
  %v490 = vunpack.c.l.b16 %v78
  %v491 = vunpack.c.l.b16 %v79
  %v492 = vunpack.c.l.b16 %v80
  %v493 = vunpack.c.l.b16 %v81
  %v494 = vunpack.c.l.b16 %v82
  %v495 = vunpack.c.l.b16 %v83
  %v496 = vunpack.c.l.b16 %v84
  %v497 = vunpack.c.l.b16 %v85
  %v498 = vunpack.c.l.b16 %v86
  %v499 = vunpack.c.l.b16 %v87
  %v500 = vunpack.c.l.b16 %v88
  %v501 = vunpack.c.l.b16 %v89
  %v502 = vunpack.c.l.b16 %v90
  %v503 = vunpack.c.l.b16 %v91
  %v504 = vunpack.c.l.b16 %v92
  %v505 = vunpack.c.l.b16 %v93
  %v506 = vunpack.c.l.b16 %v94
  %v507 = vunpack.c.l.b16 %v95
  %v508 = vunpack.c.l.b16 %v96
  %v509 = vunpack.c.l.b16 %v97
  %v510 = vunpack.c.l.b16 %v98
  %v511 = vunpack.c.l.b16 %v99
  %v512 = vunpack.c.l.b16 %v100
  %v513 = vunpack.c.l.b16 %v101
  %v514 = vunpack.c.l.b16 %v102
  %v515 = vunpack.c.l.b16 %v103
  %v516 = vunpack.c.l.b16 %v104
  %v517 = vunpack.c.l.b16 %v105
  %v518 = vunpack.c.l.b16 %v106
  %v519 = vunpack.c.l.b16 %v107
  %v520 = vunpack.c.l.b16 %v108
  %v521 = vunpack.c.l.b16 %v109
  %v522 = vunpack.c.l.b16 %v110
  %v523 = vunpack.c.l.b16 %v111
  %v524 = vunpack.c.l.b16 %v112
  %v525 = vunpack.c.l.b16 %v113
  %v526 = vunpack.c.l.b16 %v114
  %v527 = vunpack.c.l.b16 %v115
  %v528 = vunpack.c.l.b16 %v116
  %v529 = vunpack.c.l.b16 %v117
  %v530 = vunpack.c.l.b16 %v118
  %v531 = vunpack.c.l.b16 %v119
  %v532 = vunpack.c.l.b16 %v120
  %v533 = vunpack.c.l.b16 %v121
  %v534 = vunpack.c.l.b16 %v122
  %v535 = vunpack.c.l.b16 %v123
  %v536 = vunpack.c.l.b16 %v124
  %v537 = vunpack.c.l.b16 %v125
  %v538 = vunpack.c.l.b16 %v126
  %v539 = vunpack.c.l.b16 %v127
  %v540 = vunpack.c.l.b16 %v128
  %v541 = vunpack.c.l.b16 %v129
  %v542 = vunpack.c.l.b16 %v130
  %v543 = vunpack.c.l.b16 %v131
  %v544 = vunpack.c.l.b16 %v132
  %v545 = vunpack.c.l.b16 %v133
  %v546 = vunpack.c.l.b16 %v134
  %v547 = vunpack.c.l.b16 %v135
  %v548 = vunpack.c.l.b16 %v136
  %v549 = vunpack.c.l.b16 %v137
  %v550 = vunpack.c.l.b16 %v138
  %v551 = vunpack.c.l.b16 %v139
  %v552 = vunpack.c.l.b16 %v140
  %v553 = vunpack.c.l.b16 %v141
  %v554 = vunpack.c.l.b16 %v142
  %v555 = vunpack.c.l.b16 %v143
  %v556 = vunpack.c.l.b16 %v144
  %v557 = vunpack.c.l.b16 %v145
  %v558 = vunpack.c.l.b16 %v146
  %v559 = vunpack.c.l.b16 %v147
  %v560 = vunpack.c.l.b16 %v148
  %v561 = vunpack.c.l.b16 %v149
  %v562 = vunpack.c.l.b16 %v150
  %v563 = vunpack.c.l.b16 %v151
  %v564 = vunpack.c.l.b16 %v152
  %v565 = vunpack.c.l.b16 %v153
  %v566 = vunpack.c.l.b16 %v154
  %v567 = vunpack.c.l.b16 %v155
  %v568 = vunpack.c.l.b16 %v156
  %v569 = vunpack.c.l.b16 %v157
  %v570 = vunpack.c.l.b16 %v158
  %v571 = vunpack.c.l.b16 %v159
  %v572 = vunpack.c.l.b16 %v160
  %v573 = vunpack.c.l.b16 %v161
  %v574 = vunpack.c.l.b16 %v162
  %v575 = vunpack.c.l.b16 %v163
  %v576 = vunpack.c.l.b16 %v164
  %v577 = vunpack.c.l.b16 %v165
  %v578 = vunpack.c.l.b16 %v166
  %v579 = vunpack.c.l.b16 %v167
  %v580 = vunpack.c.l.b16 %v168
  %v581 = vunpack.c.l.b16 %v169
  %v582 = vunpack.c.l.b16 %v170
  %v583 = vunpack.c.l.b16 %v171
  %v584 = vunpack.c.l.b16 %v172
  %v585 = vunpack.c.l.b16 %v173
  %v586 = vunpack.c.l.b16 %v174
  %v587 = vunpack.c.l.b16 %v175
  %v588 = vunpack.c.l.b16 %v176
  %v589 = vunpack.c.l.b16 %v177
  %v590 = vunpack.c.l.b16 %v178
  %v591 = vunpack.c.l.b16 %v179
  %v592 = vunpack.c.l.b16 %v180
  %v593 = vunpack.c.l.b16 %v181
  %v594 = vunpack.c.l.b16 %v182
  %v595 = vunpack.c.l.b16 %v183
  %v596 = vunpack.c.l.b16 %v184
  %v597 = vunpack.c.l.b16 %v185
  %v598 = vunpack.c.l.b16 %v186
  %v599 = vunpack.c.l.b16 %v187
  %v600 = vunpack.c.l.b16 %v188
  %v601 = vunpack.c.l.b16 %v189
  %v602 = vunpack.c.l.b16 %v190
  %v603 = vunpack.c.l.b16 %v191
  %v604 = vunpack.c.l.b16 %v192
  %v605 = vpack.c.b16 %v462, %v461
  %v606 = vpack.c.b16 %v464, %v463
  %v607 = vpack.c.b16 %v466, %v465
  %v608 = vpack.c.b16 %v468, %v467
  %v609 = vpack.c.b16 %v470, %v469
  %v610 = vpack.c.b16 %v472, %v471
  %v611 = vpack.c.b16 %v474, %v473
  %v612 = vpack.c.b16 %v476, %v475
  %v613 = vpack.c.b16 %v478, %v477
  %v614 = vpack.c.b16 %v480, %v479
  %v615 = vpack.c.b16 %v482, %v481
  %v616 = vpack.c.b16 %v484, %v483
  %v617 = vpack.c.b16 %v486, %v485
  %v618 = vpack.c.b16 %v488, %v487
  %v619 = vpack.c.b16 %v490, %v489
  %v620 = vpack.c.b16 %v492, %v491
  %v621 = vpack.c.b16 %v494, %v493
  %v622 = vpack.c.b16 %v496, %v495
  %v623 = vpack.c.b16 %v498, %v497
  %v624 = vpack.c.b16 %v500, %v499
  %v625 = vpack.c.b16 %v502, %v501
  %v626 = vpack.c.b16 %v504, %v503
  %v627 = vpack.c.b16 %v506, %v505
  %v628 = vpack.c.b16 %v508, %v507
  %v629 = vpack.c.b16 %v510, %v509
  %v630 = vpack.c.b16 %v512, %v511
  %v631 = vpack.c.b16 %v514, %v513
  %v632 = vpack.c.b16 %v516, %v515
  %v633 = vpack.c.b16 %v518, %v517
  %v634 = vpack.c.b16 %v520, %v519
  %v635 = vpack.c.b16 %v522, %v521
  %v636 = vpack.c.b16 %v524, %v523
  %v637 = vpack.c.b16 %v526, %v525
  %v638 = vpack.c.b16 %v528, %v527
  %v639 = vpack.c.b16 %v530, %v529
  %v640 = vpack.c.b16 %v532, %v531
  %v641 = vpack.c.b16 %v534, %v533
  %v642 = vpack.c.b16 %v536, %v535
  %v643 = vpack.c.b16 %v538, %v537
  %v644 = vpack.c.b16 %v540, %v539
  %v645 = vpack.c.b16 %v542, %v541
  %v646 = vpack.c.b16 %v544, %v543
  %v647 = vpack.c.b16 %v546, %v545
  %v648 = vpack.c.b16 %v548, %v547
  %v649 = vpack.c.b16 %v550, %v549
  %v650 = vpack.c.b16 %v552, %v551
  %v651 = vpack.c.b16 %v554, %v553
  %v652 = vpack.c.b16 %v556, %v555
  %v653 = vpack.c.b16 %v558, %v557
  %v654 = vpack.c.b16 %v560, %v559
  %v655 = vpack.c.b16 %v562, %v561
  %v656 = vpack.c.b16 %v564, %v563
  %v657 = vpack.c.b16 %v566, %v565
  %v658 = vpack.c.b16 %v568, %v567
  %v659 = vpack.c.b16 %v570, %v569
  %v660 = vpack.c.b16 %v572, %v571
  %v661 = vpack.c.b16 %v574, %v573
  %v662 = vpack.c.b16 %v576, %v575
  %v663 = vpack.c.b16 %v578, %v577
  %v664 = vpack.c.b16 %v580, %v579
  %v665 = vpack.c.b16 %v582, %v581
  %v666 = vpack.c.b16 %v584, %v583
  %v667 = vpack.c.b16 %v586, %v585
  %v668 = vpack.c.b16 %v588, %v587
  %v669 = vpack.c.b16 %v590, %v589
  %v670 = vpack.c.b16 %v592, %v591
  %v671 = vpack.c.b16 %v594, %v593
  %v672 = vpack.c.b16 %v596, %v595
  %v673 = vpack.c.b16 %v598, %v597
  %v674 = vpack.c.b16 %v600, %v599
  %v675 = vpack.c.b16 %v602, %v601
  %v676 = vpack.c.b16 %v604, %v603
  %749 = vmatprep.subr.bf16.mxu0 0
  %750 = vmatpush1.bf16.msra.mxu0 %v605
  %751 = vmatprep.subr.bf16.mxu0 0
  %752 = vmatpush1.bf16.msra.mxu0 %v606
  %753 = vmatprep.subr.bf16.mxu0 0
  %754 = vmatpush1.bf16.msra.mxu0 %v607
  %755 = vmatprep.subr.bf16.mxu0 0
  %756 = vmatpush1.bf16.msra.mxu0 %v608
  %757 = vmatprep.subr.bf16.mxu0 0
  %758 = vmatpush1.bf16.msra.mxu0 %v609
  %759 = vmatprep.subr.bf16.mxu0 0
  %760 = vmatpush1.bf16.msra.mxu0 %v610
  %761 = vmatprep.subr.bf16.mxu0 0
  %762 = vmatpush1.bf16.msra.mxu0 %v611
  %763 = vmatprep.subr.bf16.mxu0 0
  %764 = vmatpush1.bf16.msra.mxu0 %v612
  %765 = vmatprep.subr.bf16.mxu0 0
  %766 = vmatpush1.bf16.msra.mxu0 %v613
  %767 = vmatprep.subr.bf16.mxu0 0
  %768 = vmatpush1.bf16.msra.mxu0 %v614
  %769 = vmatprep.subr.bf16.mxu0 0
  %770 = vmatpush1.bf16.msra.mxu0 %v615
  %771 = vmatprep.subr.bf16.mxu0 0
  %772 = vmatpush1.bf16.msra.mxu0 %v616
  %773 = vmatprep.subr.bf16.mxu0 0
  %774 = vmatpush1.bf16.msra.mxu0 %v617
  %775 = vmatprep.subr.bf16.mxu0 0
  %776 = vmatpush1.bf16.msra.mxu0 %v618
  %777 = vmatprep.subr.bf16.mxu0 0
  %778 = vmatpush1.bf16.msra.mxu0 %v619
  %779 = vmatprep.subr.bf16.mxu0 0
  %780 = vmatpush1.bf16.msra.mxu0 %v620
  %781 = vmatprep.mubr.bf16.mxu0 %v264
  %782 = vmatmul.mubr.bf16.gmra.mrb[0].mxu0 %v263
  %v783 = vpop.f32.mrb[0].mxu0
  %v784 = vadd.f32 0.0, %v783
  %v785 = vpop.f32.mrb[0].mxu0
  %v786 = vpop.f32.mrb[0].mxu0
  %v787 = vadd.f32 0.0, %v786
  %v788 = vpop.f32.mrb[0].mxu0
  %789 = vmatprep.mubr.bf16.mxu0 %v273
  %790 = vmatmul.mubr.bf16.gmra.mrb[0].mxu0 %v272
  %v791 = vpop.f32.mrb[0].mxu0
  %v792 = vadd.f32 0.0, %v791
  %v793 = vpop.f32.mrb[0].mxu0
  %v794 = vpop.f32.mrb[0].mxu0
  %v795 = vadd.f32 0.0, %v794
  %v796 = vpop.f32.mrb[0].mxu0
  %797 = vmatprep.mubr.bf16.mxu0 %v282
  %798 = vmatmul.mubr.bf16.gmra.mrb[0].mxu0 %v281
  %v799 = vpop.f32.mrb[0].mxu0
  %v800 = vadd.f32 0.0, %v799
  %v801 = vpop.f32.mrb[0].mxu0
  %v802 = vpop.f32.mrb[0].mxu0
  %v803 = vpop.f32.mrb[0].mxu0
  %804 = vdwg.mxu0
  %805 = vmatprep.subr.bf16.mxu0 0
  %806 = vmatpush1.bf16.msra.mxu0 %v621
  %807 = vmatprep.subr.bf16.mxu0 0
  %808 = vmatpush1.bf16.msra.mxu0 %v622
  %809 = vmatprep.subr.bf16.mxu0 0
  %810 = vmatpush1.bf16.msra.mxu0 %v623
  %811 = vmatprep.subr.bf16.mxu0 0
  %812 = vmatpush1.bf16.msra.mxu0 %v624
  %813 = vmatprep.subr.bf16.mxu0 0
  %814 = vmatpush1.bf16.msra.mxu0 %v625
  %815 = vmatprep.subr.bf16.mxu0 0
  %816 = vmatpush1.bf16.msra.mxu0 %v626
  %817 = vmatprep.subr.bf16.mxu0 0
  %818 = vmatpush1.bf16.msra.mxu0 %v627
  %819 = vmatprep.subr.bf16.mxu0 0
  %820 = vmatpush1.bf16.msra.mxu0 %v628
  %821 = vmatprep.subr.bf16.mxu0 0
  %822 = vmatpush1.bf16.msra.mxu0 %v629
  %823 = vmatprep.subr.bf16.mxu0 0
  %824 = vmatpush1.bf16.msra.mxu0 %v630
  %825 = vmatprep.subr.bf16.mxu0 0
  %826 = vmatpush1.bf16.msra.mxu0 %v631
  %827 = vmatprep.subr.bf16.mxu0 0
  %828 = vmatpush1.bf16.msra.mxu0 %v632
  %829 = vmatprep.subr.bf16.mxu0 0
  %830 = vmatpush1.bf16.msra.mxu0 %v633
  %831 = vmatprep.subr.bf16.mxu0 0
  %832 = vmatpush1.bf16.msra.mxu0 %v634
  %833 = vmatprep.subr.bf16.mxu0 0
  %834 = vmatpush1.bf16.msra.mxu0 %v635
  %835 = vmatprep.subr.bf16.mxu0 0
  %836 = vmatpush1.bf16.msra.mxu0 %v636
  %837 = vmatprep.mubr.bf16.mxu0 %v266
  %838 = vmatmul.mubr.bf16.gmra.mrb[0].mxu0 %v265
  %v839 = vpop.f32.mrb[0].mxu0
  %v840 = vadd.f32 %v784, %v839
  %v841 = vpop.f32.mrb[0].mxu0
  %v842 = vpop.f32.mrb[0].mxu0
  %v843 = vadd.f32 %v787, %v842
  %v844 = vpop.f32.mrb[0].mxu0
  %845 = vmatprep.mubr.bf16.mxu0 %v275
  %846 = vmatmul.mubr.bf16.gmra.mrb[0].mxu0 %v274
  %v847 = vpop.f32.mrb[0].mxu0
  %v848 = vadd.f32 %v792, %v847
  %v849 = vpop.f32.mrb[0].mxu0
  %v850 = vpop.f32.mrb[0].mxu0
  %v851 = vadd.f32 %v795, %v850
  %v852 = vpop.f32.mrb[0].mxu0
  %853 = vmatprep.mubr.bf16.mxu0 %v284
  %854 = vmatmul.mubr.bf16.gmra.mrb[0].mxu0 %v283
  %v855 = vpop.f32.mrb[0].mxu0
  %v856 = vadd.f32 %v800, %v855
  %v857 = vpop.f32.mrb[0].mxu0
  %v858 = vpop.f32.mrb[0].mxu0
  %v859 = vpop.f32.mrb[0].mxu0
  %860 = vdwg.mxu0
  %861 = vmatprep.subr.bf16.mxu0 0
  %862 = vmatpush1.bf16.msra.mxu0 %v637
  %863 = vmatprep.subr.bf16.mxu0 0
  %864 = vmatpush1.bf16.msra.mxu0 %v638
  %865 = vmatprep.subr.bf16.mxu0 0
  %866 = vmatpush1.bf16.msra.mxu0 %v639
  %867 = vmatprep.subr.bf16.mxu0 0
  %868 = vmatpush1.bf16.msra.mxu0 %v640
  %869 = vmatprep.subr.bf16.mxu0 0
  %870 = vmatpush1.bf16.msra.mxu0 %v641
  %871 = vmatprep.subr.bf16.mxu0 0
  %872 = vmatpush1.bf16.msra.mxu0 %v642
  %873 = vmatprep.subr.bf16.mxu0 0
  %874 = vmatpush1.bf16.msra.mxu0 %v643
  %875 = vmatprep.subr.bf16.mxu0 0
  %876 = vmatpush1.bf16.msra.mxu0 %v644
  %877 = vmatprep.subr.bf16.mxu0 0
  %878 = vmatpush1.bf16.msra.mxu0 %v645
  %879 = vmatprep.subr.bf16.mxu0 0
  %880 = vmatpush1.bf16.msra.mxu0 %v646
  %881 = vmatprep.subr.bf16.mxu0 0
  %882 = vmatpush1.bf16.msra.mxu0 %v647
  %883 = vmatprep.subr.bf16.mxu0 0
  %884 = vmatpush1.bf16.msra.mxu0 %v648
  %885 = vmatprep.subr.bf16.mxu0 0
  %886 = vmatpush1.bf16.msra.mxu0 %v649
  %887 = vmatprep.subr.bf16.mxu0 0
  %888 = vmatpush1.bf16.msra.mxu0 %v650
  %889 = vmatprep.subr.bf16.mxu0 0
  %890 = vmatpush1.bf16.msra.mxu0 %v651
  %891 = vmatprep.subr.bf16.mxu0 0
  %892 = vmatpush1.bf16.msra.mxu0 %v652
  %893 = vmatprep.mubr.bf16.mxu0 %v268
  %894 = vmatmul.mubr.bf16.gmra.mrb[0].mxu0 %v267
  %v895 = vpop.f32.mrb[0].mxu0
  %v896 = vadd.f32 %v840, %v895
  %v897 = vpop.f32.mrb[0].mxu0
  %v898 = vpop.f32.mrb[0].mxu0
  %v899 = vadd.f32 %v843, %v898
  %v900 = vpop.f32.mrb[0].mxu0
  %901 = vmatprep.mubr.bf16.mxu0 %v277
  %902 = vmatmul.mubr.bf16.gmra.mrb[0].mxu0 %v276
  %v903 = vpop.f32.mrb[0].mxu0
  %v904 = vadd.f32 %v848, %v903
  %v905 = vpop.f32.mrb[0].mxu0
  %v906 = vpop.f32.mrb[0].mxu0
  %v907 = vadd.f32 %v851, %v906
  %v908 = vpop.f32.mrb[0].mxu0
  %909 = vmatprep.mubr.bf16.mxu0 %v286
  %910 = vmatmul.mubr.bf16.gmra.mrb[0].mxu0 %v285
  %v911 = vpop.f32.mrb[0].mxu0
  %v912 = vadd.f32 %v856, %v911
  %v913 = vpop.f32.mrb[0].mxu0
  %v914 = vpop.f32.mrb[0].mxu0
  %v915 = vpop.f32.mrb[0].mxu0
  %916 = vdwg.mxu0
  %917 = vmatprep.subr.bf16.mxu0 0
  %918 = vmatpush1.bf16.msra.mxu0 %v653
  %919 = vmatprep.subr.bf16.mxu0 0
  %920 = vmatpush1.bf16.msra.mxu0 %v654
  %921 = vmatprep.subr.bf16.mxu0 0
  %922 = vmatpush1.bf16.msra.mxu0 %v655
  %923 = vmatprep.subr.bf16.mxu0 0
  %924 = vmatpush1.bf16.msra.mxu0 %v656
  %925 = vmatprep.subr.bf16.mxu0 0
  %926 = vmatpush1.bf16.msra.mxu0 %v657
  %927 = vmatprep.subr.bf16.mxu0 0
  %928 = vmatpush1.bf16.msra.mxu0 %v658
  %929 = vmatprep.subr.bf16.mxu0 0
  %930 = vmatpush1.bf16.msra.mxu0 %v659
  %931 = vmatprep.subr.bf16.mxu0 0
  %932 = vmatpush1.bf16.msra.mxu0 %v660
  %933 = vmatprep.subr.bf16.mxu0 0
  %934 = vmatpush1.bf16.msra.mxu0 %v661
  %935 = vmatprep.subr.bf16.mxu0 0
  %936 = vmatpush1.bf16.msra.mxu0 %v662
  %937 = vmatprep.subr.bf16.mxu0 0
  %938 = vmatpush1.bf16.msra.mxu0 %v663
  %939 = vmatprep.subr.bf16.mxu0 0
  %940 = vmatpush1.bf16.msra.mxu0 %v664
  %941 = vmatprep.subr.bf16.mxu0 0
  %942 = vmatpush1.bf16.msra.mxu0 %v665
  %943 = vmatprep.subr.bf16.mxu0 0
  %944 = vmatpush1.bf16.msra.mxu0 %v666
  %945 = vmatprep.subr.bf16.mxu0 0
  %946 = vmatpush1.bf16.msra.mxu0 %v667
  %947 = vmatprep.subr.bf16.mxu0 0
  %948 = vmatpush1.bf16.msra.mxu0 %v668
  %949 = vmatprep.mubr.bf16.mxu0 %v270
  %950 = vmatmul.mubr.bf16.gmra.mrb[0].mxu0 %v269
  %v951 = vpop.f32.mrb[0].mxu0
  %v952 = vadd.f32 %v896, %v951
  %v953 = vpop.f32.mrb[0].mxu0
  %v954 = vpop.f32.mrb[0].mxu0
  %v955 = vadd.f32 %v899, %v954
  %v956 = vpop.f32.mrb[0].mxu0
  %957 = vmatprep.mubr.bf16.mxu0 %v279
  %958 = vmatmul.mubr.bf16.gmra.mrb[0].mxu0 %v278
  %v959 = vpop.f32.mrb[0].mxu0
  %v960 = vadd.f32 %v904, %v959
  %v961 = vpop.f32.mrb[0].mxu0
  %v962 = vpop.f32.mrb[0].mxu0
  %v963 = vadd.f32 %v907, %v962
  %v964 = vpop.f32.mrb[0].mxu0
  %965 = vmatprep.mubr.bf16.mxu0 %v288
  %966 = vmatmul.mubr.bf16.gmra.mrb[0].mxu0 %v287
  %v967 = vpop.f32.mrb[0].mxu0
  %v968 = vadd.f32 %v912, %v967
  %v969 = vpop.f32.mrb[0].mxu0
  %v970 = vpop.f32.mrb[0].mxu0
  %v971 = vpop.f32.mrb[0].mxu0
  %972 = vdwg.mxu0
  %973 = vmatprep.subr.bf16.mxu0 0
  %974 = vmatpush1.bf16.msra.mxu0 %v669
  %975 = vmatprep.subr.bf16.mxu0 0
  %976 = vmatpush1.bf16.msra.mxu0 %v670
  %977 = vmatprep.subr.bf16.mxu0 0
  %978 = vmatpush1.bf16.msra.mxu0 %v671
  %979 = vmatprep.subr.bf16.mxu0 0
  %980 = vmatpush1.bf16.msra.mxu0 %v672
  %981 = vmatprep.subr.bf16.mxu0 0
  %982 = vmatpush1.bf16.msra.mxu0 %v673
  %983 = vmatprep.subr.bf16.mxu0 0
  %984 = vmatpush1.bf16.msra.mxu0 %v674
  %985 = vmatprep.subr.bf16.mxu0 0
  %986 = vmatpush1.bf16.msra.mxu0 %v675
  %987 = vmatprep.subr.bf16.mxu0 0
  %988 = vmatpush1.bf16.msra.mxu0 %v676
  %989 = vmatprep.subr.bf16.mxu0 0
  %990 = vmatpush1.bf16.msra.mxu0 0
  %991 = vmatprep.subr.bf16.mxu0 0
  %992 = vmatpush1.bf16.msra.mxu0 0
  %993 = vmatprep.subr.bf16.mxu0 0
  %994 = vmatpush1.bf16.msra.mxu0 0
  %995 = vmatprep.subr.bf16.mxu0 0
  %996 = vmatpush1.bf16.msra.mxu0 0
  %997 = vmatprep.subr.bf16.mxu0 0
  %998 = vmatpush1.bf16.msra.mxu0 0
  %999 = vmatprep.subr.bf16.mxu0 0
  %1000 = vmatpush1.bf16.msra.mxu0 0
  %1001 = vmatprep.subr.bf16.mxu0 0
  %1002 = vmatpush1.bf16.msra.mxu0 0
  %1003 = vmatprep.subr.bf16.mxu0 0
  %1004 = vmatpush1.bf16.msra.mxu0 0
  %1005 = vmatprep.mubr.bf16.mxu0 0
  %1006 = vmatmul.mubr.bf16.gmra.mrb[0].mxu0 %v271
  %v1007 = vpop.f32.mrb[0].mxu0
  %v1008 = vadd.f32 %v952, %v1007
  %v1009 = vpop.f32.mrb[0].mxu0
  %v1010 = vpop.f32.mrb[0].mxu0
  %v1011 = vadd.f32 %v955, %v1010
  %v1012 = vpop.f32.mrb[0].mxu0
  %1013 = vmatprep.mubr.bf16.mxu0 0
  %1014 = vmatmul.mubr.bf16.gmra.mrb[0].mxu0 %v280
  %v1015 = vpop.f32.mrb[0].mxu0
  %v1016 = vadd.f32 %v960, %v1015
  %v1017 = vpop.f32.mrb[0].mxu0
  %v1018 = vpop.f32.mrb[0].mxu0
  %v1019 = vadd.f32 %v963, %v1018
  %v1020 = vpop.f32.mrb[0].mxu0
  %1021 = vmatprep.mubr.bf16.mxu0 0
  %1022 = vmatmul.mubr.bf16.gmra.mrb[0].mxu0 %v289
  %v1023 = vpop.f32.mrb[0].mxu0
  %v1024 = vadd.f32 %v968, %v1023
  %v1025 = vpop.f32.mrb[0].mxu0
  %v1026 = vpop.f32.mrb[0].mxu0
  %v1027 = vpop.f32.mrb[0].mxu0
  %1028 = vdwg.mxu0
  %v1029 = vadd.f32 %v1008, %v1011
  %v1030 = vadd.f32 %v1029, %v1016
  %v1031 = vadd.f32 %v1030, %v1019
  %vm1032 = vcmask 1043456
  %v1033 = vsel %vm1032, %v1024, 0.0
  %v1034 = vadd.f32 %v1031, %v1033
  %v1035 = vrot.slane %v1034, 4
  %v1036 = vadd.f32 %v1034, %v1035
  %v1037 = vrot.slane %v1036, 2
  %v1038 = vadd.f32 %v1036, %v1037
  %v1039 = vrot.slane %v1038, 1
  %v1040 = vadd.f32 %v1038, %v1039
  %v1041 = vrcp.pop 36.0
  %v1042 = vmul.f32 %v1040, %v1041
  %v1043 = vsub.f32 %v1008, %v1042
  %v1044 = vsub.f32 %v1011, %v1042
  %v1045 = vsub.f32 %v1016, %v1042
  %v1046 = vsub.f32 %v1019, %v1042
  %v1047 = vsub.f32 %v1024, %v1042
  %v1048 = vmul.f32 %v1043, %v1043
  %v1049 = vmul.f32 %v1044, %v1044
  %v1050 = vmul.f32 %v1045, %v1045
  %v1051 = vmul.f32 %v1046, %v1046
  %v1052 = vmul.f32 %v1047, %v1047
  %v1053 = vadd.f32 %v1048, %v1049
  %v1054 = vadd.f32 %v1053, %v1050
  %v1055 = vadd.f32 %v1054, %v1051
  %v1056 = vsel %vm1032, %v1052, 0.0
  %v1057 = vadd.f32 %v1055, %v1056
  %v1058 = vrot.slane %v1057, 4
  %v1059 = vadd.f32 %v1057, %v1058
  %v1060 = vrot.slane %v1059, 2
  %v1061 = vadd.f32 %v1059, %v1060
  %v1062 = vrot.slane %v1061, 1
  %v1063 = vadd.f32 %v1061, %v1062
  %v1064 = vmul.f32 %v1063, %v1041
  %v1065 = vadd.f32 %v1064, 1e-05
  %v1066 = vrsqrt.pop %v1065
  %v1067 = vmul.f32 %v1043, %v1066
  %v1068 = vmul.f32 %v1044, %v1066
  %v1069 = vmul.f32 %v1045, %v1066
  %v1070 = vmul.f32 %v1046, %v1066
  %v1071 = vmul.f32 %v1047, %v1066
  %v1072 = vld [vmem:[%s2] sm:$0x1]
  %v1074 = vlaneseq
  %v1075 = vshrl.u32 %v1074, 7
  %v1076 = vsub.s32 0, %v1075
  %v1077 = vrot.slane %v1072, %v1076
  %v1079 = vmul.f32 %v1067, %v1077
  %v1080 = vmul.f32 %v1068, %v1077
  %v1081 = vmul.f32 %v1069, %v1077
  %v1082 = vmul.f32 %v1070, %v1077
  %v1083 = vmul.f32 %v1071, %v1077
  %v1084 = vld [vmem:[%s3] sm:$0x1]
  %v1086 = vlaneseq
  %v1087 = vshrl.u32 %v1086, 7
  %v1088 = vsub.s32 0, %v1087
  %v1089 = vrot.slane %v1084, %v1088
  %v1091 = vadd.f32 %v1079, %v1089
  %v1092 = vadd.f32 %v1080, %v1089
  %v1093 = vadd.f32 %v1081, %v1089
  %v1094 = vadd.f32 %v1082, %v1089
  %v1095 = vadd.f32 %v1083, %v1089
  %v1096 = vmax.f32 %v1091, 0.0
  %v1097 = vmax.f32 %v1092, 0.0
  %v1098 = vmax.f32 %v1093, 0.0
  %v1099 = vmax.f32 %v1094, 0.0
  %v1100 = vmax.f32 %v1095, 0.0
  %v1101 = vld [vmem:[%s4] sm:$0xff]
  %v1102 = vld [vmem:[%s4 + $0x8] sm:$0xff]
  %v1103 = vld [vmem:[%s4 + $0x10] sm:$0xff]
  %v1104 = vld [vmem:[%s4 + $0x18] sm:$0xff]
  %v1105 = vld [vmem:[%s4 + $0x20] sm:$0xff]
  %v1106 = vld [vmem:[%s4 + $0x28] sm:$0xff]
  %v1107 = vld [vmem:[%s4 + $0x30] sm:$0xff]
  %v1108 = vld [vmem:[%s4 + $0x38] sm:$0xff]
  %v1109 = vld [vmem:[%s4 + $0x40] sm:$0xff]
  %v1110 = vld [vmem:[%s4 + $0x48] sm:$0xff]
  %v1111 = vld [vmem:[%s4 + $0x50] sm:$0xff]
  %v1112 = vld [vmem:[%s4 + $0x58] sm:$0xff]
  %v1113 = vld [vmem:[%s4 + $0x60] sm:$0xff]
  %v1114 = vld [vmem:[%s4 + $0x68] sm:$0xff]
  %v1115 = vld [vmem:[%s4 + $0x70] sm:$0xff]
  %v1116 = vld [vmem:[%s4 + $0x78] sm:$0xff]
  %v1117 = vld [vmem:[%s4 + $0x80] sm:$0xff]
  %v1118 = vld [vmem:[%s4 + $0x88] sm:$0xff]
  %v1119 = vld [vmem:[%s5] sm:$0xff]
  %v1120 = vld [vmem:[%s5 + $0x8] sm:$0xff]
  %v1121 = vld [vmem:[%s5 + $0x10] sm:$0xff]
  %v1122 = vld [vmem:[%s5 + $0x18] sm:$0xff]
  %v1123 = vld [vmem:[%s5 + $0x20] sm:$0xff]
  %v1124 = vld [vmem:[%s5 + $0x28] sm:$0xff]
  %v1125 = vld [vmem:[%s5 + $0x30] sm:$0xff]
  %v1126 = vld [vmem:[%s5 + $0x38] sm:$0xff]
  %v1127 = vld [vmem:[%s5 + $0x40] sm:$0xff]
  %v1128 = vld [vmem:[%s5 + $0x48] sm:$0xff]
  %v1129 = vld [vmem:[%s5 + $0x50] sm:$0xff]
  %v1130 = vld [vmem:[%s5 + $0x58] sm:$0xff]
  %v1131 = vld [vmem:[%s5 + $0x60] sm:$0xff]
  %v1132 = vld [vmem:[%s5 + $0x68] sm:$0xff]
  %v1133 = vld [vmem:[%s5 + $0x70] sm:$0xff]
  %v1134 = vld [vmem:[%s5 + $0x78] sm:$0xff]
  %v1135 = vld [vmem:[%s5 + $0x80] sm:$0xff]
  %v1136 = vld [vmem:[%s5 + $0x88] sm:$0xff]
  %vm1137 = vcmask 293888
  %v1139 = vsel %vm1137, %v1101, 0
  %v1142 = vsel %vm1137, %v1102, 0
  %v1145 = vsel %vm1137, %v1103, 0
  %v1148 = vsel %vm1137, %v1104, 0
  %v1151 = vsel %vm1137, %v1105, 0
  %v1154 = vsel %vm1137, %v1106, 0
  %v1157 = vsel %vm1137, %v1107, 0
  %v1160 = vsel %vm1137, %v1108, 0
  %v1163 = vsel %vm1137, %v1109, 0
  %v1166 = vsel %vm1137, %v1110, 0
  %v1169 = vsel %vm1137, %v1111, 0
  %v1172 = vsel %vm1137, %v1112, 0
  %v1175 = vsel %vm1137, %v1113, 0
  %v1178 = vsel %vm1137, %v1114, 0
  %v1181 = vsel %vm1137, %v1115, 0
  %v1184 = vsel %vm1137, %v1116, 0
  %v1187 = vsel %vm1137, %v1117, 0
  %v1190 = vsel %vm1137, %v1118, 0
  %v1193 = vsel %vm1032, %v1100, 0
  %1195 = vmatprep.subr.mxu0 0.0
  %1196 = vmatpush1.msra.mxu0 %v1096
  %1197 = vmatprep.subr.mxu0 0.0
  %1198 = vmatpush1.msra.mxu0 %v1097
  %1199 = vmatprep.subr.mxu0 0.0
  %1200 = vmatpush1.msra.mxu0 %v1098
  %1201 = vmatprep.subr.mxu0 0.0
  %1202 = vmatpush1.msra.mxu0 %v1099
  %1203 = vmatprep.subr.mxu0 0.0
  %1204 = vmatpush1.msra.mxu0 %v1193
  %1205 = vmatprep.subr.mxu0 0.0
  %1206 = vmatpush1.msra.mxu0 0.0
  %1207 = vmatprep.subr.mxu0 0.0
  %1208 = vmatpush1.msra.mxu0 0.0
  %1209 = vmatprep.subr.mxu0 0.0
  %1210 = vmatpush1.msra.mxu0 0.0
  %1211 = vmatprep.subr.mxu0 0.0
  %1212 = vmatpush1.msra.mxu0 0.0
  %1213 = vmatprep.subr.mxu0 0.0
  %1214 = vmatpush1.msra.mxu0 0.0
  %1215 = vmatprep.subr.mxu0 0.0
  %1216 = vmatpush1.msra.mxu0 0.0
  %1217 = vmatprep.subr.mxu0 0.0
  %1218 = vmatpush1.msra.mxu0 0.0
  %1219 = vmatprep.subr.mxu0 0.0
  %1220 = vmatpush1.msra.mxu0 0.0
  %1221 = vmatprep.subr.mxu0 0.0
  %1222 = vmatpush1.msra.mxu0 0.0
  %1223 = vmatprep.subr.mxu0 0.0
  %1224 = vmatpush1.msra.mxu0 0.0
  %1225 = vmatprep.subr.mxu0 0.0
  %1226 = vmatpush1.msra.mxu0 0.0
  %1227 = vmatprep.subr.mxu0 0.0
  %1228 = vmatpush1.msra.mxu0 0.0
  %1229 = vmatprep.subr.mxu0 0.0
  %1230 = vmatpush1.msra.mxu0 0.0
  %1231 = vmatprep.subr.mxu0 0.0
  %1232 = vmatpush1.msra.mxu0 0.0
  %1233 = vmatprep.subr.mxu0 0.0
  %1234 = vmatpush1.msra.mxu0 0.0
  %1235 = vmatprep.subr.mxu0 0.0
  %1236 = vmatpush1.msra.mxu0 0.0
  %1237 = vmatprep.subr.mxu0 0.0
  %1238 = vmatpush1.msra.mxu0 0.0
  %1239 = vmatprep.subr.mxu0 0.0
  %1240 = vmatpush1.msra.mxu0 0.0
  %1241 = vmatprep.subr.mxu0 0.0
  %1242 = vmatpush1.msra.mxu0 0.0
  %1243 = vmatprep.subr.mxu0 0.0
  %1244 = vmatpush1.msra.mxu0 0.0
  %1245 = vmatprep.subr.mxu0 0.0
  %1246 = vmatpush1.msra.mxu0 0.0
  %1247 = vmatprep.subr.mxu0 0.0
  %1248 = vmatpush1.msra.mxu0 0.0
  %1249 = vmatprep.subr.mxu0 0.0
  %1250 = vmatpush1.msra.mxu0 0.0
  %1251 = vmatprep.subr.mxu0 0.0
  %1252 = vmatpush1.msra.mxu0 0.0
  %1253 = vmatprep.subr.mxu0 0.0
  %1254 = vmatpush1.msra.mxu0 0.0
  %1255 = vmatprep.subr.mxu0 0.0
  %1256 = vmatpush1.msra.mxu0 0.0
  %1257 = vmatprep.subr.mxu0 0.0
  %1258 = vmatpush1.msra.mxu0 0.0
  %1259 = vmatprep.mubr.f32.mxu0 0.0
  %1260 = vmatmul.mubr.f32.gmra.mrb[0].mxu0 %v1139
  %v1261 = vpop.f32.mrb[0].mxu0
  %v1262 = vadd.f32 %v1119, %v1261
  %v1263 = vpop.f32.mrb[0].mxu0
  %1264 = vmatprep.mubr.f32.mxu0 0.0
  %1265 = vmatmul.mubr.f32.gmra.mrb[0].mxu0 %v1142
  %v1266 = vpop.f32.mrb[0].mxu0
  %v1267 = vadd.f32 %v1120, %v1266
  %v1268 = vpop.f32.mrb[0].mxu0
  %1269 = vmatprep.mubr.f32.mxu0 0.0
  %1270 = vmatmul.mubr.f32.gmra.mrb[0].mxu0 %v1145
  %v1271 = vpop.f32.mrb[0].mxu0
  %v1272 = vadd.f32 %v1121, %v1271
  %v1273 = vpop.f32.mrb[0].mxu0
  %1274 = vmatprep.mubr.f32.mxu0 0.0
  %1275 = vmatmul.mubr.f32.gmra.mrb[0].mxu0 %v1148
  %v1276 = vpop.f32.mrb[0].mxu0
  %v1277 = vadd.f32 %v1122, %v1276
  %v1278 = vpop.f32.mrb[0].mxu0
  %1279 = vmatprep.mubr.f32.mxu0 0.0
  %1280 = vmatmul.mubr.f32.gmra.mrb[0].mxu0 %v1151
  %v1281 = vpop.f32.mrb[0].mxu0
  %v1282 = vadd.f32 %v1123, %v1281
  %v1283 = vpop.f32.mrb[0].mxu0
  %1284 = vmatprep.mubr.f32.mxu0 0.0
  %1285 = vmatmul.mubr.f32.gmra.mrb[0].mxu0 %v1154
  %v1286 = vpop.f32.mrb[0].mxu0
  %v1287 = vadd.f32 %v1124, %v1286
  %v1288 = vpop.f32.mrb[0].mxu0
  %1289 = vmatprep.mubr.f32.mxu0 0.0
  %1290 = vmatmul.mubr.f32.gmra.mrb[0].mxu0 %v1157
  %v1291 = vpop.f32.mrb[0].mxu0
  %v1292 = vadd.f32 %v1125, %v1291
  %v1293 = vpop.f32.mrb[0].mxu0
  %1294 = vmatprep.mubr.f32.mxu0 0.0
  %1295 = vmatmul.mubr.f32.gmra.mrb[0].mxu0 %v1160
  %v1296 = vpop.f32.mrb[0].mxu0
  %v1297 = vadd.f32 %v1126, %v1296
  %v1298 = vpop.f32.mrb[0].mxu0
  %1299 = vmatprep.mubr.f32.mxu0 0.0
  %1300 = vmatmul.mubr.f32.gmra.mrb[0].mxu0 %v1163
  %v1301 = vpop.f32.mrb[0].mxu0
  %v1302 = vadd.f32 %v1127, %v1301
  %v1303 = vpop.f32.mrb[0].mxu0
  %1304 = vmatprep.mubr.f32.mxu0 0.0
  %1305 = vmatmul.mubr.f32.gmra.mrb[0].mxu0 %v1166
  %v1306 = vpop.f32.mrb[0].mxu0
  %v1307 = vadd.f32 %v1128, %v1306
  %v1308 = vpop.f32.mrb[0].mxu0
  %1309 = vmatprep.mubr.f32.mxu0 0.0
  %1310 = vmatmul.mubr.f32.gmra.mrb[0].mxu0 %v1169
  %v1311 = vpop.f32.mrb[0].mxu0
  %v1312 = vadd.f32 %v1129, %v1311
  %v1313 = vpop.f32.mrb[0].mxu0
  %1314 = vmatprep.mubr.f32.mxu0 0.0
  %1315 = vmatmul.mubr.f32.gmra.mrb[0].mxu0 %v1172
  %v1316 = vpop.f32.mrb[0].mxu0
  %v1317 = vadd.f32 %v1130, %v1316
  %v1318 = vpop.f32.mrb[0].mxu0
  %1319 = vmatprep.mubr.f32.mxu0 0.0
  %1320 = vmatmul.mubr.f32.gmra.mrb[0].mxu0 %v1175
  %v1321 = vpop.f32.mrb[0].mxu0
  %v1322 = vadd.f32 %v1131, %v1321
  %v1323 = vpop.f32.mrb[0].mxu0
  %1324 = vmatprep.mubr.f32.mxu0 0.0
  %1325 = vmatmul.mubr.f32.gmra.mrb[0].mxu0 %v1178
  %v1326 = vpop.f32.mrb[0].mxu0
  %v1327 = vadd.f32 %v1132, %v1326
  %v1328 = vpop.f32.mrb[0].mxu0
  %1329 = vmatprep.mubr.f32.mxu0 0.0
  %1330 = vmatmul.mubr.f32.gmra.mrb[0].mxu0 %v1181
  %v1331 = vpop.f32.mrb[0].mxu0
  %v1332 = vadd.f32 %v1133, %v1331
  %v1333 = vpop.f32.mrb[0].mxu0
  %1334 = vmatprep.mubr.f32.mxu0 0.0
  %1335 = vmatmul.mubr.f32.gmra.mrb[0].mxu0 %v1184
  %v1336 = vpop.f32.mrb[0].mxu0
  %v1337 = vadd.f32 %v1134, %v1336
  %v1338 = vpop.f32.mrb[0].mxu0
  %1339 = vmatprep.mubr.f32.mxu0 0.0
  %1340 = vmatmul.mubr.f32.gmra.mrb[0].mxu0 %v1187
  %v1341 = vpop.f32.mrb[0].mxu0
  %v1342 = vadd.f32 %v1135, %v1341
  %v1343 = vpop.f32.mrb[0].mxu0
  %1344 = vmatprep.mubr.f32.mxu0 0.0
  %1345 = vmatmul.mubr.f32.gmra.mrb[0].mxu0 %v1190
  %v1346 = vpop.f32.mrb[0].mxu0
  %v1347 = vadd.f32 %v1136, %v1346
  %v1348 = vpop.f32.mrb[0].mxu0
  %1349 = vdwg.mxu0
  %1350 = vst [vmem:[%s6] sm:$0xff] %v1262
  %1351 = vst [vmem:[%s6 + $0x8] sm:$0xff] %v1267
  %1352 = vst [vmem:[%s6 + $0x10] sm:$0xff] %v1272
  %1353 = vst [vmem:[%s6 + $0x18] sm:$0xff] %v1277
  %1354 = vst [vmem:[%s6 + $0x20] sm:$0xff] %v1282
  %1355 = vst [vmem:[%s6 + $0x28] sm:$0xff] %v1287
  %1356 = vst [vmem:[%s6 + $0x30] sm:$0xff] %v1292
  %1357 = vst [vmem:[%s6 + $0x38] sm:$0xff] %v1297
  %1358 = vst [vmem:[%s6 + $0x40] sm:$0xff] %v1302
  %1359 = vst [vmem:[%s6 + $0x48] sm:$0xff] %v1307
  %1360 = vst [vmem:[%s6 + $0x50] sm:$0xff] %v1312
  %1361 = vst [vmem:[%s6 + $0x58] sm:$0xff] %v1317
  %1362 = vst [vmem:[%s6 + $0x60] sm:$0xff] %v1322
  %1363 = vst [vmem:[%s6 + $0x68] sm:$0xff] %v1327
  %1364 = vst [vmem:[%s6 + $0x70] sm:$0xff] %v1332
  %1365 = vst [vmem:[%s6 + $0x78] sm:$0xff] %v1337
  %1366 = vst [vmem:[%s6 + $0x80] sm:$0xff] %v1342
  %1367 = vst [vmem:[%s6 + $0x88] sm:$0xff] %v1347
  // Predicated region
  $region26: #{my_nn_forward.13} parent=0 // pred_check
    _
  $region27: #{my_nn_forward.13} parent=0 // pred_check_branch
    %1369 = sbr.rel (0) target = $region29
  $region28: #{my_nn_forward.13} parent=0 // pred_region
    _
  $region29: #{my_nn_forward.13} parent=0 // pred_fallthru
    _
  // Predicated region
  $region30: #{my_nn_forward.13} parent=0 // pred_check
    _
  $region31: #{my_nn_forward.13} parent=0 // pred_check_branch
    %1371 = sbr.rel (0) target = $region33
  $region32: #{my_nn_forward.13} parent=0 // pred_region
    _
  $region33: #{my_nn_forward.13} parent=0 // pred_fallthru
    _

// kernel: my_nn_forward.14
$region0: #{my_nn_forward.14}
  #allocation0 [shape = 'u32[]', space=smem, size = 0x4, offset = 0x4, fixed_abs, tag = 'smem constant byte address 0x4 - core index']
  #allocation1 [shape = 'u32[144,128]{1,0:T(1,128)}', space=vmem, size = 0x12000, scoped, tag = 'internal scratch']
  %s0 = inlined_call_operand.vmem [shape: bf16[144,640], index: 0, kind: input, shape index: {}]
  %s1 = inlined_call_operand.vmem [shape: bf16[640,128], index: 1, kind: input, shape index: {}]
  %s2 = inlined_call_operand.vmem [shape: f32[1,128], index: 2, kind: input, shape index: {}]
  %s3 = inlined_call_operand.vmem [shape: f32[1,128], index: 3, kind: input, shape index: {}]
  %s4 = inlined_call_operand.vmem [shape: f32[576,144], index: 4, kind: input, shape index: {}]
  %s5 = inlined_call_operand.vmem [shape: f32[1,576,128], index: 5, kind: input, shape index: {}]
  %s6 = inlined_call_operand.vmem [shape: f32[1,576,128], index: 6, kind: output, shape index: {}]
  %s7 = sld [smem:[#allocation0]]
  $region34: #{my_nn_forward.14} parent=0
    _
  %s9 = ssub.s32 1, %s7
  %s10 = scalar_select 0, %s9, %s7
  // Predicated region
  $region2: #{my_nn_forward.14} parent=0 // pred_check
    _
  $region3: #{my_nn_forward.14} parent=0 // pred_check_branch
    %12 = sbr.rel (0) target = $region5
  $region4: #{my_nn_forward.14} parent=0 // pred_region
    _
  $region5: #{my_nn_forward.14} parent=0 // pred_fallthru
    _
  // Predicated region
  $region6: #{my_nn_forward.14} parent=0 // pred_check
    _
  $region7: #{my_nn_forward.14} parent=0 // pred_check_branch
    %14 = sbr.rel (0) target = $region9
  $region8: #{my_nn_forward.14} parent=0 // pred_region
    _
  $region9: #{my_nn_forward.14} parent=0 // pred_fallthru
    _
  // Predicated region
  $region10: #{my_nn_forward.14} parent=0 // pred_check
    _
  $region11: #{my_nn_forward.14} parent=0 // pred_check_branch
    %16 = sbr.rel (0) target = $region13
  $region12: #{my_nn_forward.14} parent=0 // pred_region
    _
  $region13: #{my_nn_forward.14} parent=0 // pred_fallthru
    _
  // Predicated region
  $region14: #{my_nn_forward.14} parent=0 // pred_check
    _
  $region15: #{my_nn_forward.14} parent=0 // pred_check_branch
    %18 = sbr.rel (0) target = $region17
  $region16: #{my_nn_forward.14} parent=0 // pred_region
    _
  $region17: #{my_nn_forward.14} parent=0 // pred_fallthru
    _
  // Predicated region
  $region18: #{my_nn_forward.14} parent=0 // pred_check
    _
  $region19: #{my_nn_forward.14} parent=0 // pred_check_branch
    %20 = sbr.rel (0) target = $region21
  $region20: #{my_nn_forward.14} parent=0 // pred_region
    _
  $region21: #{my_nn_forward.14} parent=0 // pred_fallthru
    _
  // Predicated region
  $region22: #{my_nn_forward.14} parent=0 // pred_check
    _
  $region23: #{my_nn_forward.14} parent=0 // pred_check_branch
    %22 = sbr.rel (0) target = $region25
  $region24: #{my_nn_forward.14} parent=0 // pred_region
    _
  $region25: #{my_nn_forward.14} parent=0 // pred_fallthru
    _
  %v24 = vld [vmem:[%s0] sm:$0xff]
  %v25 = vld [vmem:[%s0 + $0x8] sm:$0xff]
  %v26 = vld [vmem:[%s0 + $0x10] sm:$0xf]
  %v27 = vld [vmem:[%s0 + $0x14] sm:$0xff]
  %v28 = vld [vmem:[%s0 + $0x1c] sm:$0xff]
  %v29 = vld [vmem:[%s0 + $0x24] sm:$0xf]
  %v30 = vld [vmem:[%s0 + $0x28] sm:$0xff]
  %v31 = vld [vmem:[%s0 + $0x30] sm:$0xff]
  %v32 = vld [vmem:[%s0 + $0x38] sm:$0xf]
  %v33 = vld [vmem:[%s0 + $0x3c] sm:$0xff]
  %v34 = vld [vmem:[%s0 + $0x44] sm:$0xff]
  %v35 = vld [vmem:[%s0 + $0x4c] sm:$0xf]
  %v36 = vld [vmem:[%s0 + $0x50] sm:$0xff]
  %v37 = vld [vmem:[%s0 + $0x58] sm:$0xff]
  %v38 = vld [vmem:[%s0 + $0x60] sm:$0xf]
  %v39 = vld [vmem:[%s0 + $0x64] sm:$0xff]
  %v40 = vld [vmem:[%s0 + $0x6c] sm:$0xff]
  %v41 = vld [vmem:[%s0 + $0x74] sm:$0xf]
  %v42 = vld [vmem:[%s0 + $0x78] sm:$0xff]
  %v43 = vld [vmem:[%s0 + $0x80] sm:$0xff]
  %v44 = vld [vmem:[%s0 + $0x88] sm:$0xf]
  %v45 = vld [vmem:[%s0 + $0x8c] sm:$0xff]
  %v46 = vld [vmem:[%s0 + $0x94] sm:$0xff]
  %v47 = vld [vmem:[%s0 + $0x9c] sm:$0xf]
  %v48 = vld [vmem:[%s0 + $0xa0] sm:$0xff]
  %v49 = vld [vmem:[%s0 + $0xa8] sm:$0xff]
  %v50 = vld [vmem:[%s0 + $0xb0] sm:$0xf]
  %v51 = vld [vmem:[%s0 + $0xb4] sm:$0xff]
  %v52 = vld [vmem:[%s0 + $0xbc] sm:$0xff]
  %v53 = vld [vmem:[%s0 + $0xc4] sm:$0xf]
  %v54 = vld [vmem:[%s0 + $0xc8] sm:$0xff]
  %v55 = vld [vmem:[%s0 + $0xd0] sm:$0xff]
  %v56 = vld [vmem:[%s0 + $0xd8] sm:$0xf]
  %v57 = vld [vmem:[%s0 + $0xdc] sm:$0xff]
  %v58 = vld [vmem:[%s0 + $0xe4] sm:$0xff]
  %v59 = vld [vmem:[%s0 + $0xec] sm:$0xf]
  %v60 = vld [vmem:[%s0 + $0xf0] sm:$0xff]
  %v61 = vld [vmem:[%s0 + $0xf8] sm:$0xff]
  %v62 = vld [vmem:[%s0 + $0x100] sm:$0xf]
  %v63 = vld [vmem:[%s0 + $0x104] sm:$0xff]
  %v64 = vld [vmem:[%s0 + $0x10c] sm:$0xff]
  %v65 = vld [vmem:[%s0 + $0x114] sm:$0xf]
  %v66 = vld [vmem:[%s0 + $0x118] sm:$0xff]
  %v67 = vld [vmem:[%s0 + $0x120] sm:$0xff]
  %v68 = vld [vmem:[%s0 + $0x128] sm:$0xf]
  %v69 = vld [vmem:[%s0 + $0x12c] sm:$0xff]
  %v70 = vld [vmem:[%s0 + $0x134] sm:$0xff]
  %v71 = vld [vmem:[%s0 + $0x13c] sm:$0xf]
  %v72 = vld [vmem:[%s0 + $0x140] sm:$0xff]
  %v73 = vld [vmem:[%s0 + $0x148] sm:$0xff]
  %v74 = vld [vmem:[%s0 + $0x150] sm:$0xf]
  %v75 = vld [vmem:[%s0 + $0x154] sm:$0xff]
  %v76 = vld [vmem:[%s0 + $0x15c] sm:$0xff]
  %v77 = vld [vmem:[%s0 + $0x164] sm:$0xf]
  %v78 = vld [vmem:[%s1] sm:$0xf]
  %v79 = vld [vmem:[%s1 + $0x4] sm:$0xf]
  %v80 = vld [vmem:[%s1 + $0x8] sm:$0xf]
  %v81 = vld [vmem:[%s1 + $0xc] sm:$0xf]
  %v82 = vld [vmem:[%s1 + $0x10] sm:$0xf]
  %v83 = vld [vmem:[%s1 + $0x14] sm:$0xf]
  %v84 = vld [vmem:[%s1 + $0x18] sm:$0xf]
  %v85 = vld [vmem:[%s1 + $0x1c] sm:$0xf]
  %v86 = vld [vmem:[%s1 + $0x20] sm:$0xf]
  %v87 = vld [vmem:[%s1 + $0x24] sm:$0xf]
  %v88 = vld [vmem:[%s1 + $0x28] sm:$0xf]
  %v89 = vld [vmem:[%s1 + $0x2c] sm:$0xf]
  %v90 = vld [vmem:[%s1 + $0x30] sm:$0xf]
  %v91 = vld [vmem:[%s1 + $0x34] sm:$0xf]
  %v92 = vld [vmem:[%s1 + $0x38] sm:$0xf]
  %v93 = vld [vmem:[%s1 + $0x3c] sm:$0xf]
  %v94 = vld [vmem:[%s1 + $0x40] sm:$0xf]
  %v95 = vld [vmem:[%s1 + $0x44] sm:$0xf]
  %v96 = vld [vmem:[%s1 + $0x48] sm:$0xf]
  %v97 = vld [vmem:[%s1 + $0x4c] sm:$0xf]
  %v98 = vld [vmem:[%s1 + $0x50] sm:$0xf]
  %v99 = vld [vmem:[%s1 + $0x54] sm:$0xf]
  %v100 = vld [vmem:[%s1 + $0x58] sm:$0xf]
  %v101 = vld [vmem:[%s1 + $0x5c] sm:$0xf]
  %v102 = vld [vmem:[%s1 + $0x60] sm:$0xf]
  %v103 = vld [vmem:[%s1 + $0x64] sm:$0xf]
  %v104 = vld [vmem:[%s1 + $0x68] sm:$0xf]
  %v105 = vld [vmem:[%s1 + $0x6c] sm:$0xf]
  %v106 = vld [vmem:[%s1 + $0x70] sm:$0xf]
  %v107 = vld [vmem:[%s1 + $0x74] sm:$0xf]
  %v108 = vld [vmem:[%s1 + $0x78] sm:$0xf]
  %v109 = vld [vmem:[%s1 + $0x7c] sm:$0xf]
  %v110 = vld [vmem:[%s1 + $0x80] sm:$0xf]
  %v111 = vld [vmem:[%s1 + $0x84] sm:$0xf]
  %v112 = vld [vmem:[%s1 + $0x88] sm:$0xf]
  %v113 = vld [vmem:[%s1 + $0x8c] sm:$0xf]
  %v114 = vld [vmem:[%s1 + $0x90] sm:$0xf]
  %v115 = vld [vmem:[%s1 + $0x94] sm:$0xf]
  %v116 = vld [vmem:[%s1 + $0x98] sm:$0xf]
  %v117 = vld [vmem:[%s1 + $0x9c] sm:$0xf]
  %v118 = vld [vmem:[%s1 + $0xa0] sm:$0xf]
  %v119 = vld [vmem:[%s1 + $0xa4] sm:$0xf]
  %v120 = vld [vmem:[%s1 + $0xa8] sm:$0xf]
  %v121 = vld [vmem:[%s1 + $0xac] sm:$0xf]
  %v122 = vld [vmem:[%s1 + $0xb0] sm:$0xf]
  %v123 = vld [vmem:[%s1 + $0xb4] sm:$0xf]
  %v124 = vld [vmem:[%s1 + $0xb8] sm:$0xf]
  %v125 = vld [vmem:[%s1 + $0xbc] sm:$0xf]
  %v126 = vld [vmem:[%s1 + $0xc0] sm:$0xf]
  %v127 = vld [vmem:[%s1 + $0xc4] sm:$0xf]
  %v128 = vld [vmem:[%s1 + $0xc8] sm:$0xf]
  %v129 = vld [vmem:[%s1 + $0xcc] sm:$0xf]
  %v130 = vld [vmem:[%s1 + $0xd0] sm:$0xf]
  %v131 = vld [vmem:[%s1 + $0xd4] sm:$0xf]
  %v132 = vld [vmem:[%s1 + $0xd8] sm:$0xf]
  %v133 = vld [vmem:[%s1 + $0xdc] sm:$0xf]
  %v134 = vld [vmem:[%s1 + $0xe0] sm:$0xf]
  %v135 = vld [vmem:[%s1 + $0xe4] sm:$0xf]
  %v136 = vld [vmem:[%s1 + $0xe8] sm:$0xf]
  %v137 = vld [vmem:[%s1 + $0xec] sm:$0xf]
  %v138 = vld [vmem:[%s1 + $0xf0] sm:$0xf]
  %v139 = vld [vmem:[%s1 + $0xf4] sm:$0xf]
  %v140 = vld [vmem:[%s1 + $0xf8] sm:$0xf]
  %v141 = vld [vmem:[%s1 + $0xfc] sm:$0xf]
  %v142 = vld [vmem:[%s1 + $0x100] sm:$0xf]
  %v143 = vld [vmem:[%s1 + $0x104] sm:$0xf]
  %v144 = vld [vmem:[%s1 + $0x108] sm:$0xf]
  %v145 = vld [vmem:[%s1 + $0x10c] sm:$0xf]
  %v146 = vld [vmem:[%s1 + $0x110] sm:$0xf]
  %v147 = vld [vmem:[%s1 + $0x114] sm:$0xf]
  %v148 = vld [vmem:[%s1 + $0x118] sm:$0xf]
  %v149 = vld [vmem:[%s1 + $0x11c] sm:$0xf]
  %v150 = vld [vmem:[%s1 + $0x120] sm:$0xf]
  %v151 = vld [vmem:[%s1 + $0x124] sm:$0xf]
  %v152 = vld [vmem:[%s1 + $0x128] sm:$0xf]
  %v153 = vld [vmem:[%s1 + $0x12c] sm:$0xf]
  %v154 = vld [vmem:[%s1 + $0x130] sm:$0xf]
  %v155 = vld [vmem:[%s1 + $0x134] sm:$0xf]
  %v156 = vld [vmem:[%s1 + $0x138] sm:$0xf]
  %v157 = vld [vmem:[%s1 + $0x13c] sm:$0xf]
  %v212 = vunpack.c.l.b16 %v24
  %v213 = vunpack.c.h.b16 %v24
  %v214 = vunpack.c.l.b16 %v25
  %v215 = vunpack.c.h.b16 %v25
  %v216 = vunpack.c.l.b16 %v26
  %v217 = vunpack.c.l.b16 %v27
  %v218 = vunpack.c.h.b16 %v27
  %v219 = vunpack.c.l.b16 %v28
  %v220 = vunpack.c.h.b16 %v28
  %v221 = vunpack.c.l.b16 %v29
  %v222 = vunpack.c.l.b16 %v30
  %v223 = vunpack.c.h.b16 %v30
  %v224 = vunpack.c.l.b16 %v31
  %v225 = vunpack.c.h.b16 %v31
  %v226 = vunpack.c.l.b16 %v32
  %v227 = vunpack.c.l.b16 %v33
  %v228 = vunpack.c.h.b16 %v33
  %v229 = vunpack.c.l.b16 %v34
  %v230 = vunpack.c.h.b16 %v34
  %v231 = vunpack.c.l.b16 %v35
  %v232 = vunpack.c.l.b16 %v36
  %v233 = vunpack.c.h.b16 %v36
  %v234 = vunpack.c.l.b16 %v37
  %v235 = vunpack.c.h.b16 %v37
  %v236 = vunpack.c.l.b16 %v38
  %v237 = vunpack.c.l.b16 %v39
  %v238 = vunpack.c.h.b16 %v39
  %v239 = vunpack.c.l.b16 %v40
  %v240 = vunpack.c.h.b16 %v40
  %v241 = vunpack.c.l.b16 %v41
  %v242 = vunpack.c.l.b16 %v42
  %v243 = vunpack.c.h.b16 %v42
  %v244 = vunpack.c.l.b16 %v43
  %v245 = vunpack.c.h.b16 %v43
  %v246 = vunpack.c.l.b16 %v44
  %v247 = vunpack.c.l.b16 %v45
  %v248 = vunpack.c.h.b16 %v45
  %v249 = vunpack.c.l.b16 %v46
  %v250 = vunpack.c.h.b16 %v46
  %v251 = vunpack.c.l.b16 %v47
  %v252 = vunpack.c.l.b16 %v48
  %v253 = vunpack.c.h.b16 %v48
  %v254 = vunpack.c.l.b16 %v49
  %v255 = vunpack.c.h.b16 %v49
  %v256 = vunpack.c.l.b16 %v50
  %v257 = vunpack.c.l.b16 %v51
  %v258 = vunpack.c.h.b16 %v51
  %v259 = vunpack.c.l.b16 %v52
  %v260 = vunpack.c.h.b16 %v52
  %v261 = vunpack.c.l.b16 %v53
  %v262 = vunpack.c.l.b16 %v54
  %v263 = vunpack.c.h.b16 %v54
  %v264 = vunpack.c.l.b16 %v55
  %v265 = vunpack.c.h.b16 %v55
  %v266 = vunpack.c.l.b16 %v56
  %v267 = vunpack.c.l.b16 %v57
  %v268 = vunpack.c.h.b16 %v57
  %v269 = vunpack.c.l.b16 %v58
  %v270 = vunpack.c.h.b16 %v58
  %v271 = vunpack.c.l.b16 %v59
  %v272 = vunpack.c.l.b16 %v60
  %v273 = vunpack.c.h.b16 %v60
  %v274 = vunpack.c.l.b16 %v61
  %v275 = vunpack.c.h.b16 %v61
  %v276 = vunpack.c.l.b16 %v62
  %v277 = vunpack.c.l.b16 %v63
  %v278 = vunpack.c.h.b16 %v63
  %v279 = vunpack.c.l.b16 %v64
  %v280 = vunpack.c.h.b16 %v64
  %v281 = vunpack.c.l.b16 %v65
  %v282 = vunpack.c.l.b16 %v66
  %v283 = vunpack.c.h.b16 %v66
  %v284 = vunpack.c.l.b16 %v67
  %v285 = vunpack.c.h.b16 %v67
  %v286 = vunpack.c.l.b16 %v68
  %v287 = vunpack.c.l.b16 %v69
  %v288 = vunpack.c.h.b16 %v69
  %v289 = vunpack.c.l.b16 %v70
  %v290 = vunpack.c.h.b16 %v70
  %v291 = vunpack.c.l.b16 %v71
  %v292 = vunpack.c.l.b16 %v72
  %v293 = vunpack.c.h.b16 %v72
  %v294 = vunpack.c.l.b16 %v73
  %v295 = vunpack.c.h.b16 %v73
  %v296 = vunpack.c.l.b16 %v74
  %v297 = vunpack.c.l.b16 %v75
  %v298 = vunpack.c.h.b16 %v75
  %v299 = vunpack.c.l.b16 %v76
  %v300 = vunpack.c.h.b16 %v76
  %v301 = vunpack.c.l.b16 %v77
  %v302 = vpack.c.b16 %v217, %v212
  %v303 = vpack.c.b16 %v218, %v213
  %v304 = vpack.c.b16 %v219, %v214
  %v305 = vpack.c.b16 %v220, %v215
  %v306 = vpack.c.b16 %v221, %v216
  %v307 = vpack.c.b16 %v227, %v222
  %v308 = vpack.c.b16 %v228, %v223
  %v309 = vpack.c.b16 %v229, %v224
  %v310 = vpack.c.b16 %v230, %v225
  %v311 = vpack.c.b16 %v231, %v226
  %v312 = vpack.c.b16 %v237, %v232
  %v313 = vpack.c.b16 %v238, %v233
  %v314 = vpack.c.b16 %v239, %v234
  %v315 = vpack.c.b16 %v240, %v235
  %v316 = vpack.c.b16 %v241, %v236
  %v317 = vpack.c.b16 %v247, %v242
  %v318 = vpack.c.b16 %v248, %v243
  %v319 = vpack.c.b16 %v249, %v244
  %v320 = vpack.c.b16 %v250, %v245
  %v321 = vpack.c.b16 %v251, %v246
  %v322 = vpack.c.b16 %v257, %v252
  %v323 = vpack.c.b16 %v258, %v253
  %v324 = vpack.c.b16 %v259, %v254
  %v325 = vpack.c.b16 %v260, %v255
  %v326 = vpack.c.b16 %v261, %v256
  %v327 = vpack.c.b16 %v267, %v262
  %v328 = vpack.c.b16 %v268, %v263
  %v329 = vpack.c.b16 %v269, %v264
  %v330 = vpack.c.b16 %v270, %v265
  %v331 = vpack.c.b16 %v271, %v266
  %v332 = vpack.c.b16 %v277, %v272
  %v333 = vpack.c.b16 %v278, %v273
  %v334 = vpack.c.b16 %v279, %v274
  %v335 = vpack.c.b16 %v280, %v275
  %v336 = vpack.c.b16 %v281, %v276
  %v337 = vpack.c.b16 %v287, %v282
  %v338 = vpack.c.b16 %v288, %v283
  %v339 = vpack.c.b16 %v289, %v284
  %v340 = vpack.c.b16 %v290, %v285
  %v341 = vpack.c.b16 %v291, %v286
  %v342 = vpack.c.b16 %v297, %v292
  %v343 = vpack.c.b16 %v298, %v293
  %v344 = vpack.c.b16 %v299, %v294
  %v345 = vpack.c.b16 %v300, %v295
  %v346 = vpack.c.b16 %v301, %v296
  %v472 = vunpack.c.l.b16 %v78
  %v473 = vunpack.c.l.b16 %v79
  %v474 = vunpack.c.l.b16 %v80
  %v475 = vunpack.c.l.b16 %v81
  %v476 = vunpack.c.l.b16 %v82
  %v477 = vunpack.c.l.b16 %v83
  %v478 = vunpack.c.l.b16 %v84
  %v479 = vunpack.c.l.b16 %v85
  %v480 = vunpack.c.l.b16 %v86
  %v481 = vunpack.c.l.b16 %v87
  %v482 = vunpack.c.l.b16 %v88
  %v483 = vunpack.c.l.b16 %v89
  %v484 = vunpack.c.l.b16 %v90
  %v485 = vunpack.c.l.b16 %v91
  %v486 = vunpack.c.l.b16 %v92
  %v487 = vunpack.c.l.b16 %v93
  %v488 = vunpack.c.l.b16 %v94
  %v489 = vunpack.c.l.b16 %v95
  %v490 = vunpack.c.l.b16 %v96
  %v491 = vunpack.c.l.b16 %v97
  %v492 = vunpack.c.l.b16 %v98
  %v493 = vunpack.c.l.b16 %v99
  %v494 = vunpack.c.l.b16 %v100
  %v495 = vunpack.c.l.b16 %v101
  %v496 = vunpack.c.l.b16 %v102
  %v497 = vunpack.c.l.b16 %v103
  %v498 = vunpack.c.l.b16 %v104
  %v499 = vunpack.c.l.b16 %v105
  %v500 = vunpack.c.l.b16 %v106
  %v501 = vunpack.c.l.b16 %v107
  %v502 = vunpack.c.l.b16 %v108
  %v503 = vunpack.c.l.b16 %v109
  %v504 = vunpack.c.l.b16 %v110
  %v505 = vunpack.c.l.b16 %v111
  %v506 = vunpack.c.l.b16 %v112
  %v507 = vunpack.c.l.b16 %v113
  %v508 = vunpack.c.l.b16 %v114
  %v509 = vunpack.c.l.b16 %v115
  %v510 = vunpack.c.l.b16 %v116
  %v511 = vunpack.c.l.b16 %v117
  %v512 = vunpack.c.l.b16 %v118
  %v513 = vunpack.c.l.b16 %v119
  %v514 = vunpack.c.l.b16 %v120
  %v515 = vunpack.c.l.b16 %v121
  %v516 = vunpack.c.l.b16 %v122
  %v517 = vunpack.c.l.b16 %v123
  %v518 = vunpack.c.l.b16 %v124
  %v519 = vunpack.c.l.b16 %v125
  %v520 = vunpack.c.l.b16 %v126
  %v521 = vunpack.c.l.b16 %v127
  %v522 = vunpack.c.l.b16 %v128
  %v523 = vunpack.c.l.b16 %v129
  %v524 = vunpack.c.l.b16 %v130
  %v525 = vunpack.c.l.b16 %v131
  %v526 = vunpack.c.l.b16 %v132
  %v527 = vunpack.c.l.b16 %v133
  %v528 = vunpack.c.l.b16 %v134
  %v529 = vunpack.c.l.b16 %v135
  %v530 = vunpack.c.l.b16 %v136
  %v531 = vunpack.c.l.b16 %v137
  %v532 = vunpack.c.l.b16 %v138
  %v533 = vunpack.c.l.b16 %v139
  %v534 = vunpack.c.l.b16 %v140
  %v535 = vunpack.c.l.b16 %v141
  %v536 = vunpack.c.l.b16 %v142
  %v537 = vunpack.c.l.b16 %v143
  %v538 = vunpack.c.l.b16 %v144
  %v539 = vunpack.c.l.b16 %v145
  %v540 = vunpack.c.l.b16 %v146
  %v541 = vunpack.c.l.b16 %v147
  %v542 = vunpack.c.l.b16 %v148
  %v543 = vunpack.c.l.b16 %v149
  %v544 = vunpack.c.l.b16 %v150
  %v545 = vunpack.c.l.b16 %v151
  %v546 = vunpack.c.l.b16 %v152
  %v547 = vunpack.c.l.b16 %v153
  %v548 = vunpack.c.l.b16 %v154
  %v549 = vunpack.c.l.b16 %v155
  %v550 = vunpack.c.l.b16 %v156
  %v551 = vunpack.c.l.b16 %v157
  %v552 = vpack.c.b16 %v473, %v472
  %v553 = vpack.c.b16 %v475, %v474
  %v554 = vpack.c.b16 %v477, %v476
  %v555 = vpack.c.b16 %v479, %v478
  %v556 = vpack.c.b16 %v481, %v480
  %v557 = vpack.c.b16 %v483, %v482
  %v558 = vpack.c.b16 %v485, %v484
  %v559 = vpack.c.b16 %v487, %v486
  %v560 = vpack.c.b16 %v489, %v488
  %v561 = vpack.c.b16 %v491, %v490
  %v562 = vpack.c.b16 %v493, %v492
  %v563 = vpack.c.b16 %v495, %v494
  %v564 = vpack.c.b16 %v497, %v496
  %v565 = vpack.c.b16 %v499, %v498
  %v566 = vpack.c.b16 %v501, %v500
  %v567 = vpack.c.b16 %v503, %v502
  %v568 = vpack.c.b16 %v505, %v504
  %v569 = vpack.c.b16 %v507, %v506
  %v570 = vpack.c.b16 %v509, %v508
  %v571 = vpack.c.b16 %v511, %v510
  %v572 = vpack.c.b16 %v513, %v512
  %v573 = vpack.c.b16 %v515, %v514
  %v574 = vpack.c.b16 %v517, %v516
  %v575 = vpack.c.b16 %v519, %v518
  %v576 = vpack.c.b16 %v521, %v520
  %v577 = vpack.c.b16 %v523, %v522
  %v578 = vpack.c.b16 %v525, %v524
  %v579 = vpack.c.b16 %v527, %v526
  %v580 = vpack.c.b16 %v529, %v528
  %v581 = vpack.c.b16 %v531, %v530
  %v582 = vpack.c.b16 %v533, %v532
  %v583 = vpack.c.b16 %v535, %v534
  %v584 = vpack.c.b16 %v537, %v536
  %v585 = vpack.c.b16 %v539, %v538
  %v586 = vpack.c.b16 %v541, %v540
  %v587 = vpack.c.b16 %v543, %v542
  %v588 = vpack.c.b16 %v545, %v544
  %v589 = vpack.c.b16 %v547, %v546
  %v590 = vpack.c.b16 %v549, %v548
  %v591 = vpack.c.b16 %v551, %v550
  %632 = vmatprep.subr.bf16.mxu0 0
  %633 = vmatpush1.bf16.msra.mxu0 %v552
  %634 = vmatprep.subr.bf16.mxu0 0
  %635 = vmatpush1.bf16.msra.mxu0 %v553
  %636 = vmatprep.subr.bf16.mxu0 0
  %637 = vmatpush1.bf16.msra.mxu0 %v554
  %638 = vmatprep.subr.bf16.mxu0 0
  %639 = vmatpush1.bf16.msra.mxu0 %v555
  %640 = vmatprep.subr.bf16.mxu0 0
  %641 = vmatpush1.bf16.msra.mxu0 %v556
  %642 = vmatprep.subr.bf16.mxu0 0
  %643 = vmatpush1.bf16.msra.mxu0 %v557
  %644 = vmatprep.subr.bf16.mxu0 0
  %645 = vmatpush1.bf16.msra.mxu0 %v558
  %646 = vmatprep.subr.bf16.mxu0 0
  %647 = vmatpush1.bf16.msra.mxu0 %v559
  %648 = vmatprep.subr.bf16.mxu0 0
  %649 = vmatpush1.bf16.msra.mxu0 %v560
  %650 = vmatprep.subr.bf16.mxu0 0
  %651 = vmatpush1.bf16.msra.mxu0 %v561
  %652 = vmatprep.subr.bf16.mxu0 0
  %653 = vmatpush1.bf16.msra.mxu0 %v562
  %654 = vmatprep.subr.bf16.mxu0 0
  %655 = vmatpush1.bf16.msra.mxu0 %v563
  %656 = vmatprep.subr.bf16.mxu0 0
  %657 = vmatpush1.bf16.msra.mxu0 %v564
  %658 = vmatprep.subr.bf16.mxu0 0
  %659 = vmatpush1.bf16.msra.mxu0 %v565
  %660 = vmatprep.subr.bf16.mxu0 0
  %661 = vmatpush1.bf16.msra.mxu0 %v566
  %662 = vmatprep.subr.bf16.mxu0 0
  %663 = vmatpush1.bf16.msra.mxu0 %v567
  %664 = vmatprep.mubr.bf16.mxu0 %v303
  %665 = vmatmul.mubr.bf16.gmra.mrb[0].mxu0 %v302
  %v666 = vpop.f32.mrb[0].mxu0
  %v667 = vadd.f32 0.0, %v666
  %v668 = vpop.f32.mrb[0].mxu0
  %v669 = vpop.f32.mrb[0].mxu0
  %v670 = vadd.f32 0.0, %v669
  %v671 = vpop.f32.mrb[0].mxu0
  %672 = vmatprep.mubr.bf16.mxu0 %v308
  %673 = vmatmul.mubr.bf16.gmra.mrb[0].mxu0 %v307
  %v674 = vpop.f32.mrb[0].mxu0
  %v675 = vadd.f32 0.0, %v674
  %v676 = vpop.f32.mrb[0].mxu0
  %v677 = vpop.f32.mrb[0].mxu0
  %v678 = vadd.f32 0.0, %v677
  %v679 = vpop.f32.mrb[0].mxu0
  %680 = vmatprep.mubr.bf16.mxu0 %v313
  %681 = vmatmul.mubr.bf16.gmra.mrb[0].mxu0 %v312
  %v682 = vpop.f32.mrb[0].mxu0
  %v683 = vadd.f32 0.0, %v682
  %v684 = vpop.f32.mrb[0].mxu0
  %v685 = vpop.f32.mrb[0].mxu0
  %v686 = vadd.f32 0.0, %v685
  %v687 = vpop.f32.mrb[0].mxu0
  %688 = vmatprep.mubr.bf16.mxu0 %v318
  %689 = vmatmul.mubr.bf16.gmra.mrb[0].mxu0 %v317
  %v690 = vpop.f32.mrb[0].mxu0
  %v691 = vadd.f32 0.0, %v690
  %v692 = vpop.f32.mrb[0].mxu0
  %v693 = vpop.f32.mrb[0].mxu0
  %v694 = vadd.f32 0.0, %v693
  %v695 = vpop.f32.mrb[0].mxu0
  %696 = vmatprep.mubr.bf16.mxu0 %v323
  %697 = vmatmul.mubr.bf16.gmra.mrb[0].mxu0 %v322
  %v698 = vpop.f32.mrb[0].mxu0
  %v699 = vadd.f32 0.0, %v698
  %v700 = vpop.f32.mrb[0].mxu0
  %v701 = vpop.f32.mrb[0].mxu0
  %v702 = vadd.f32 0.0, %v701
  %v703 = vpop.f32.mrb[0].mxu0
  %704 = vmatprep.mubr.bf16.mxu0 %v328
  %705 = vmatmul.mubr.bf16.gmra.mrb[0].mxu0 %v327
  %v706 = vpop.f32.mrb[0].mxu0
  %v707 = vadd.f32 0.0, %v706
  %v708 = vpop.f32.mrb[0].mxu0
  %v709 = vpop.f32.mrb[0].mxu0
  %v710 = vadd.f32 0.0, %v709
  %v711 = vpop.f32.mrb[0].mxu0
  %712 = vmatprep.mubr.bf16.mxu0 %v333
  %713 = vmatmul.mubr.bf16.gmra.mrb[0].mxu0 %v332
  %v714 = vpop.f32.mrb[0].mxu0
  %v715 = vadd.f32 0.0, %v714
  %v716 = vpop.f32.mrb[0].mxu0
  %v717 = vpop.f32.mrb[0].mxu0
  %v718 = vadd.f32 0.0, %v717
  %v719 = vpop.f32.mrb[0].mxu0
  %720 = vmatprep.mubr.bf16.mxu0 %v338
  %721 = vmatmul.mubr.bf16.gmra.mrb[0].mxu0 %v337
  %v722 = vpop.f32.mrb[0].mxu0
  %v723 = vadd.f32 0.0, %v722
  %v724 = vpop.f32.mrb[0].mxu0
  %v725 = vpop.f32.mrb[0].mxu0
  %v726 = vadd.f32 0.0, %v725
  %v727 = vpop.f32.mrb[0].mxu0
  %728 = vmatprep.mubr.bf16.mxu0 %v343
  %729 = vmatmul.mubr.bf16.gmra.mrb[0].mxu0 %v342
  %v730 = vpop.f32.mrb[0].mxu0
  %v731 = vadd.f32 0.0, %v730
  %v732 = vpop.f32.mrb[0].mxu0
  %v733 = vpop.f32.mrb[0].mxu0
  %v734 = vadd.f32 0.0, %v733
  %v735 = vpop.f32.mrb[0].mxu0
  %736 = vdwg.mxu0
  %737 = vmatprep.subr.bf16.mxu0 0
  %738 = vmatpush1.bf16.msra.mxu0 %v568
  %739 = vmatprep.subr.bf16.mxu0 0
  %740 = vmatpush1.bf16.msra.mxu0 %v569
  %741 = vmatprep.subr.bf16.mxu0 0
  %742 = vmatpush1.bf16.msra.mxu0 %v570
  %743 = vmatprep.subr.bf16.mxu0 0
  %744 = vmatpush1.bf16.msra.mxu0 %v571
  %745 = vmatprep.subr.bf16.mxu0 0
  %746 = vmatpush1.bf16.msra.mxu0 %v572
  %747 = vmatprep.subr.bf16.mxu0 0
  %748 = vmatpush1.bf16.msra.mxu0 %v573
  %749 = vmatprep.subr.bf16.mxu0 0
  %750 = vmatpush1.bf16.msra.mxu0 %v574
  %751 = vmatprep.subr.bf16.mxu0 0
  %752 = vmatpush1.bf16.msra.mxu0 %v575
  %753 = vmatprep.subr.bf16.mxu0 0
  %754 = vmatpush1.bf16.msra.mxu0 %v576
  %755 = vmatprep.subr.bf16.mxu0 0
  %756 = vmatpush1.bf16.msra.mxu0 %v577
  %757 = vmatprep.subr.bf16.mxu0 0
  %758 = vmatpush1.bf16.msra.mxu0 %v578
  %759 = vmatprep.subr.bf16.mxu0 0
  %760 = vmatpush1.bf16.msra.mxu0 %v579
  %761 = vmatprep.subr.bf16.mxu0 0
  %762 = vmatpush1.bf16.msra.mxu0 %v580
  %763 = vmatprep.subr.bf16.mxu0 0
  %764 = vmatpush1.bf16.msra.mxu0 %v581
  %765 = vmatprep.subr.bf16.mxu0 0
  %766 = vmatpush1.bf16.msra.mxu0 %v582
  %767 = vmatprep.subr.bf16.mxu0 0
  %768 = vmatpush1.bf16.msra.mxu0 %v583
  %769 = vmatprep.mubr.bf16.mxu0 %v305
  %770 = vmatmul.mubr.bf16.gmra.mrb[0].mxu0 %v304
  %v771 = vpop.f32.mrb[0].mxu0
  %v772 = vadd.f32 %v667, %v771
  %v773 = vpop.f32.mrb[0].mxu0
  %v774 = vpop.f32.mrb[0].mxu0
  %v775 = vadd.f32 %v670, %v774
  %v776 = vpop.f32.mrb[0].mxu0
  %777 = vmatprep.mubr.bf16.mxu0 %v310
  %778 = vmatmul.mubr.bf16.gmra.mrb[0].mxu0 %v309
  %v779 = vpop.f32.mrb[0].mxu0
  %v780 = vadd.f32 %v675, %v779
  %v781 = vpop.f32.mrb[0].mxu0
  %v782 = vpop.f32.mrb[0].mxu0
  %v783 = vadd.f32 %v678, %v782
  %v784 = vpop.f32.mrb[0].mxu0
  %785 = vmatprep.mubr.bf16.mxu0 %v315
  %786 = vmatmul.mubr.bf16.gmra.mrb[0].mxu0 %v314
  %v787 = vpop.f32.mrb[0].mxu0
  %v788 = vadd.f32 %v683, %v787
  %v789 = vpop.f32.mrb[0].mxu0
  %v790 = vpop.f32.mrb[0].mxu0
  %v791 = vadd.f32 %v686, %v790
  %v792 = vpop.f32.mrb[0].mxu0
  %793 = vmatprep.mubr.bf16.mxu0 %v320
  %794 = vmatmul.mubr.bf16.gmra.mrb[0].mxu0 %v319
  %v795 = vpop.f32.mrb[0].mxu0
  %v796 = vadd.f32 %v691, %v795
  %v797 = vpop.f32.mrb[0].mxu0
  %v798 = vpop.f32.mrb[0].mxu0
  %v799 = vadd.f32 %v694, %v798
  %v800 = vpop.f32.mrb[0].mxu0
  %801 = vmatprep.mubr.bf16.mxu0 %v325
  %802 = vmatmul.mubr.bf16.gmra.mrb[0].mxu0 %v324
  %v803 = vpop.f32.mrb[0].mxu0
  %v804 = vadd.f32 %v699, %v803
  %v805 = vpop.f32.mrb[0].mxu0
  %v806 = vpop.f32.mrb[0].mxu0
  %v807 = vadd.f32 %v702, %v806
  %v808 = vpop.f32.mrb[0].mxu0
  %809 = vmatprep.mubr.bf16.mxu0 %v330
  %810 = vmatmul.mubr.bf16.gmra.mrb[0].mxu0 %v329
  %v811 = vpop.f32.mrb[0].mxu0
  %v812 = vadd.f32 %v707, %v811
  %v813 = vpop.f32.mrb[0].mxu0
  %v814 = vpop.f32.mrb[0].mxu0
  %v815 = vadd.f32 %v710, %v814
  %v816 = vpop.f32.mrb[0].mxu0
  %817 = vmatprep.mubr.bf16.mxu0 %v335
  %818 = vmatmul.mubr.bf16.gmra.mrb[0].mxu0 %v334
  %v819 = vpop.f32.mrb[0].mxu0
  %v820 = vadd.f32 %v715, %v819
  %v821 = vpop.f32.mrb[0].mxu0
  %v822 = vpop.f32.mrb[0].mxu0
  %v823 = vadd.f32 %v718, %v822
  %v824 = vpop.f32.mrb[0].mxu0
  %825 = vmatprep.mubr.bf16.mxu0 %v340
  %826 = vmatmul.mubr.bf16.gmra.mrb[0].mxu0 %v339
  %v827 = vpop.f32.mrb[0].mxu0
  %v828 = vadd.f32 %v723, %v827
  %v829 = vpop.f32.mrb[0].mxu0
  %v830 = vpop.f32.mrb[0].mxu0
  %v831 = vadd.f32 %v726, %v830
  %v832 = vpop.f32.mrb[0].mxu0
  %833 = vmatprep.mubr.bf16.mxu0 %v345
  %834 = vmatmul.mubr.bf16.gmra.mrb[0].mxu0 %v344
  %v835 = vpop.f32.mrb[0].mxu0
  %v836 = vadd.f32 %v731, %v835
  %v837 = vpop.f32.mrb[0].mxu0
  %v838 = vpop.f32.mrb[0].mxu0
  %v839 = vadd.f32 %v734, %v838
  %v840 = vpop.f32.mrb[0].mxu0
  %841 = vdwg.mxu0
  %842 = vmatprep.subr.bf16.mxu0 0
  %843 = vmatpush1.bf16.msra.mxu0 %v584
  %844 = vmatprep.subr.bf16.mxu0 0
  %845 = vmatpush1.bf16.msra.mxu0 %v585
  %846 = vmatprep.subr.bf16.mxu0 0
  %847 = vmatpush1.bf16.msra.mxu0 %v586
  %848 = vmatprep.subr.bf16.mxu0 0
  %849 = vmatpush1.bf16.msra.mxu0 %v587
  %850 = vmatprep.subr.bf16.mxu0 0
  %851 = vmatpush1.bf16.msra.mxu0 %v588
  %852 = vmatprep.subr.bf16.mxu0 0
  %853 = vmatpush1.bf16.msra.mxu0 %v589
  %854 = vmatprep.subr.bf16.mxu0 0
  %855 = vmatpush1.bf16.msra.mxu0 %v590
  %856 = vmatprep.subr.bf16.mxu0 0
  %857 = vmatpush1.bf16.msra.mxu0 %v591
  %858 = vmatprep.subr.bf16.mxu0 0
  %859 = vmatpush1.bf16.msra.mxu0 0
  %860 = vmatprep.subr.bf16.mxu0 0
  %861 = vmatpush1.bf16.msra.mxu0 0
  %862 = vmatprep.subr.bf16.mxu0 0
  %863 = vmatpush1.bf16.msra.mxu0 0
  %864 = vmatprep.subr.bf16.mxu0 0
  %865 = vmatpush1.bf16.msra.mxu0 0
  %866 = vmatprep.subr.bf16.mxu0 0
  %867 = vmatpush1.bf16.msra.mxu0 0
  %868 = vmatprep.subr.bf16.mxu0 0
  %869 = vmatpush1.bf16.msra.mxu0 0
  %870 = vmatprep.subr.bf16.mxu0 0
  %871 = vmatpush1.bf16.msra.mxu0 0
  %872 = vmatprep.subr.bf16.mxu0 0
  %873 = vmatpush1.bf16.msra.mxu0 0
  %874 = vmatprep.mubr.bf16.mxu0 0
  %875 = vmatmul.mubr.bf16.gmra.mrb[0].mxu0 %v306
  %v876 = vpop.f32.mrb[0].mxu0
  %v877 = vadd.f32 %v772, %v876
  %v878 = vpop.f32.mrb[0].mxu0
  %v879 = vpop.f32.mrb[0].mxu0
  %v880 = vadd.f32 %v775, %v879
  %v881 = vpop.f32.mrb[0].mxu0
  %882 = vmatprep.mubr.bf16.mxu0 0
  %883 = vmatmul.mubr.bf16.gmra.mrb[0].mxu0 %v311
  %v884 = vpop.f32.mrb[0].mxu0
  %v885 = vadd.f32 %v780, %v884
  %v886 = vpop.f32.mrb[0].mxu0
  %v887 = vpop.f32.mrb[0].mxu0
  %v888 = vadd.f32 %v783, %v887
  %v889 = vpop.f32.mrb[0].mxu0
  %890 = vmatprep.mubr.bf16.mxu0 0
  %891 = vmatmul.mubr.bf16.gmra.mrb[0].mxu0 %v316
  %v892 = vpop.f32.mrb[0].mxu0
  %v893 = vadd.f32 %v788, %v892
  %v894 = vpop.f32.mrb[0].mxu0
  %v895 = vpop.f32.mrb[0].mxu0
  %v896 = vadd.f32 %v791, %v895
  %v897 = vpop.f32.mrb[0].mxu0
  %898 = vmatprep.mubr.bf16.mxu0 0
  %899 = vmatmul.mubr.bf16.gmra.mrb[0].mxu0 %v321
  %v900 = vpop.f32.mrb[0].mxu0
  %v901 = vadd.f32 %v796, %v900
  %v902 = vpop.f32.mrb[0].mxu0
  %v903 = vpop.f32.mrb[0].mxu0
  %v904 = vadd.f32 %v799, %v903
  %v905 = vpop.f32.mrb[0].mxu0
  %906 = vmatprep.mubr.bf16.mxu0 0
  %907 = vmatmul.mubr.bf16.gmra.mrb[0].mxu0 %v326
  %v908 = vpop.f32.mrb[0].mxu0
  %v909 = vadd.f32 %v804, %v908
  %v910 = vpop.f32.mrb[0].mxu0
  %v911 = vpop.f32.mrb[0].mxu0
  %v912 = vadd.f32 %v807, %v911
  %v913 = vpop.f32.mrb[0].mxu0
  %914 = vmatprep.mubr.bf16.mxu0 0
  %915 = vmatmul.mubr.bf16.gmra.mrb[0].mxu0 %v331
  %v916 = vpop.f32.mrb[0].mxu0
  %v917 = vadd.f32 %v812, %v916
  %v918 = vpop.f32.mrb[0].mxu0
  %v919 = vpop.f32.mrb[0].mxu0
  %v920 = vadd.f32 %v815, %v919
  %v921 = vpop.f32.mrb[0].mxu0
  %922 = vmatprep.mubr.bf16.mxu0 0
  %923 = vmatmul.mubr.bf16.gmra.mrb[0].mxu0 %v336
  %v924 = vpop.f32.mrb[0].mxu0
  %v925 = vadd.f32 %v820, %v924
  %v926 = vpop.f32.mrb[0].mxu0
  %v927 = vpop.f32.mrb[0].mxu0
  %v928 = vadd.f32 %v823, %v927
  %v929 = vpop.f32.mrb[0].mxu0
  %930 = vmatprep.mubr.bf16.mxu0 0
  %931 = vmatmul.mubr.bf16.gmra.mrb[0].mxu0 %v341
  %v932 = vpop.f32.mrb[0].mxu0
  %v933 = vadd.f32 %v828, %v932
  %v934 = vpop.f32.mrb[0].mxu0
  %v935 = vpop.f32.mrb[0].mxu0
  %v936 = vadd.f32 %v831, %v935
  %v937 = vpop.f32.mrb[0].mxu0
  %938 = vmatprep.mubr.bf16.mxu0 0
  %939 = vmatmul.mubr.bf16.gmra.mrb[0].mxu0 %v346
  %v940 = vpop.f32.mrb[0].mxu0
  %v941 = vadd.f32 %v836, %v940
  %v942 = vpop.f32.mrb[0].mxu0
  %v943 = vpop.f32.mrb[0].mxu0
  %v944 = vadd.f32 %v839, %v943
  %v945 = vpop.f32.mrb[0].mxu0
  %946 = vdwg.mxu0
  %v947 = vadd.f32 %v877, %v880
  %v948 = vadd.f32 %v947, %v885
  %v949 = vadd.f32 %v948, %v888
  %v950 = vadd.f32 %v949, %v893
  %v951 = vadd.f32 %v950, %v896
  %v952 = vadd.f32 %v951, %v901
  %v953 = vadd.f32 %v952, %v904
  %v954 = vadd.f32 %v953, %v909
  %v955 = vadd.f32 %v954, %v912
  %v956 = vadd.f32 %v955, %v917
  %v957 = vadd.f32 %v956, %v920
  %v958 = vadd.f32 %v957, %v925
  %v959 = vadd.f32 %v958, %v928
  %v960 = vadd.f32 %v959, %v933
  %v961 = vadd.f32 %v960, %v936
  %v962 = vadd.f32 %v961, %v941
  %v963 = vadd.f32 %v962, %v944
  %v964 = vrot.slane %v963, 4
  %v965 = vadd.f32 %v963, %v964
  %v966 = vrot.slane %v965, 2
  %v967 = vadd.f32 %v965, %v966
  %v968 = vrot.slane %v967, 1
  %v969 = vadd.f32 %v967, %v968
  %v970 = vrcp.pop 144.0
  %v971 = vmul.f32 %v969, %v970
  %v972 = vsub.f32 %v877, %v971
  %v973 = vsub.f32 %v880, %v971
  %v974 = vsub.f32 %v885, %v971
  %v975 = vsub.f32 %v888, %v971
  %v976 = vsub.f32 %v893, %v971
  %v977 = vsub.f32 %v896, %v971
  %v978 = vsub.f32 %v901, %v971
  %v979 = vsub.f32 %v904, %v971
  %v980 = vsub.f32 %v909, %v971
  %v981 = vsub.f32 %v912, %v971
  %v982 = vsub.f32 %v917, %v971
  %v983 = vsub.f32 %v920, %v971
  %v984 = vsub.f32 %v925, %v971
  %v985 = vsub.f32 %v928, %v971
  %v986 = vsub.f32 %v933, %v971
  %v987 = vsub.f32 %v936, %v971
  %v988 = vsub.f32 %v941, %v971
  %v989 = vsub.f32 %v944, %v971
  %v990 = vmul.f32 %v972, %v972
  %v991 = vmul.f32 %v973, %v973
  %v992 = vmul.f32 %v974, %v974
  %v993 = vmul.f32 %v975, %v975
  %v994 = vmul.f32 %v976, %v976
  %v995 = vmul.f32 %v977, %v977
  %v996 = vmul.f32 %v978, %v978
  %v997 = vmul.f32 %v979, %v979
  %v998 = vmul.f32 %v980, %v980
  %v999 = vmul.f32 %v981, %v981
  %v1000 = vmul.f32 %v982, %v982
  %v1001 = vmul.f32 %v983, %v983
  %v1002 = vmul.f32 %v984, %v984
  %v1003 = vmul.f32 %v985, %v985
  %v1004 = vmul.f32 %v986, %v986
  %v1005 = vmul.f32 %v987, %v987
  %v1006 = vmul.f32 %v988, %v988
  %v1007 = vmul.f32 %v989, %v989
  %v1008 = vadd.f32 %v990, %v991
  %v1009 = vadd.f32 %v1008, %v992
  %v1010 = vadd.f32 %v1009, %v993
  %v1011 = vadd.f32 %v1010, %v994
  %v1012 = vadd.f32 %v1011, %v995
  %v1013 = vadd.f32 %v1012, %v996
  %v1014 = vadd.f32 %v1013, %v997
  %v1015 = vadd.f32 %v1014, %v998
  %v1016 = vadd.f32 %v1015, %v999
  %v1017 = vadd.f32 %v1016, %v1000
  %v1018 = vadd.f32 %v1017, %v1001
  %v1019 = vadd.f32 %v1018, %v1002
  %v1020 = vadd.f32 %v1019, %v1003
  %v1021 = vadd.f32 %v1020, %v1004
  %v1022 = vadd.f32 %v1021, %v1005
  %v1023 = vadd.f32 %v1022, %v1006
  %v1024 = vadd.f32 %v1023, %v1007
  %v1025 = vrot.slane %v1024, 4
  %v1026 = vadd.f32 %v1024, %v1025
  %v1027 = vrot.slane %v1026, 2
  %v1028 = vadd.f32 %v1026, %v1027
  %v1029 = vrot.slane %v1028, 1
  %v1030 = vadd.f32 %v1028, %v1029
  %v1031 = vmul.f32 %v1030, %v970
  %v1032 = vadd.f32 %v1031, 1e-05
  %v1033 = vrsqrt.pop %v1032
  %v1034 = vmul.f32 %v972, %v1033
  %v1035 = vmul.f32 %v973, %v1033
  %v1036 = vmul.f32 %v974, %v1033
  %v1037 = vmul.f32 %v975, %v1033
  %v1038 = vmul.f32 %v976, %v1033
  %v1039 = vmul.f32 %v977, %v1033
  %v1040 = vmul.f32 %v978, %v1033
  %v1041 = vmul.f32 %v979, %v1033
  %v1042 = vmul.f32 %v980, %v1033
  %v1043 = vmul.f32 %v981, %v1033
  %v1044 = vmul.f32 %v982, %v1033
  %v1045 = vmul.f32 %v983, %v1033
  %v1046 = vmul.f32 %v984, %v1033
  %v1047 = vmul.f32 %v985, %v1033
  %v1048 = vmul.f32 %v986, %v1033
  %v1049 = vmul.f32 %v987, %v1033
  %v1050 = vmul.f32 %v988, %v1033
  %v1051 = vmul.f32 %v989, %v1033
  %v1052 = vld [vmem:[%s2] sm:$0x1]
  %v1054 = vlaneseq
  %v1055 = vshrl.u32 %v1054, 7
  %v1056 = vsub.s32 0, %v1055
  %v1057 = vrot.slane %v1052, %v1056
  %v1059 = vmul.f32 %v1034, %v1057
  %v1060 = vmul.f32 %v1035, %v1057
  %v1061 = vmul.f32 %v1036, %v1057
  %v1062 = vmul.f32 %v1037, %v1057
  %v1063 = vmul.f32 %v1038, %v1057
  %v1064 = vmul.f32 %v1039, %v1057
  %v1065 = vmul.f32 %v1040, %v1057
  %v1066 = vmul.f32 %v1041, %v1057
  %v1067 = vmul.f32 %v1042, %v1057
  %v1068 = vmul.f32 %v1043, %v1057
  %v1069 = vmul.f32 %v1044, %v1057
  %v1070 = vmul.f32 %v1045, %v1057
  %v1071 = vmul.f32 %v1046, %v1057
  %v1072 = vmul.f32 %v1047, %v1057
  %v1073 = vmul.f32 %v1048, %v1057
  %v1074 = vmul.f32 %v1049, %v1057
  %v1075 = vmul.f32 %v1050, %v1057
  %v1076 = vmul.f32 %v1051, %v1057
  %v1077 = vld [vmem:[%s3] sm:$0x1]
  %v1079 = vlaneseq
  %v1080 = vshrl.u32 %v1079, 7
  %v1081 = vsub.s32 0, %v1080
  %v1082 = vrot.slane %v1077, %v1081
  %v1084 = vadd.f32 %v1059, %v1082
  %v1085 = vadd.f32 %v1060, %v1082
  %v1086 = vadd.f32 %v1061, %v1082
  %v1087 = vadd.f32 %v1062, %v1082
  %v1088 = vadd.f32 %v1063, %v1082
  %v1089 = vadd.f32 %v1064, %v1082
  %v1090 = vadd.f32 %v1065, %v1082
  %v1091 = vadd.f32 %v1066, %v1082
  %v1092 = vadd.f32 %v1067, %v1082
  %v1093 = vadd.f32 %v1068, %v1082
  %v1094 = vadd.f32 %v1069, %v1082
  %v1095 = vadd.f32 %v1070, %v1082
  %v1096 = vadd.f32 %v1071, %v1082
  %v1097 = vadd.f32 %v1072, %v1082
  %v1098 = vadd.f32 %v1073, %v1082
  %v1099 = vadd.f32 %v1074, %v1082
  %v1100 = vadd.f32 %v1075, %v1082
  %v1101 = vadd.f32 %v1076, %v1082
  %v1102 = vmax.f32 %v1084, 0.0
  %v1103 = vmax.f32 %v1085, 0.0
  %v1104 = vmax.f32 %v1086, 0.0
  %v1105 = vmax.f32 %v1087, 0.0
  %v1106 = vmax.f32 %v1088, 0.0
  %v1107 = vmax.f32 %v1089, 0.0
  %v1108 = vmax.f32 %v1090, 0.0
  %v1109 = vmax.f32 %v1091, 0.0
  %v1110 = vmax.f32 %v1092, 0.0
  %v1111 = vmax.f32 %v1093, 0.0
  %v1112 = vmax.f32 %v1094, 0.0
  %v1113 = vmax.f32 %v1095, 0.0
  %v1114 = vmax.f32 %v1096, 0.0
  %v1115 = vmax.f32 %v1097, 0.0
  %v1116 = vmax.f32 %v1098, 0.0
  %v1117 = vmax.f32 %v1099, 0.0
  %v1118 = vmax.f32 %v1100, 0.0
  %v1119 = vmax.f32 %v1101, 0.0
  %v1120 = vld [vmem:[%s4] sm:$0xff]
  %v1121 = vld [vmem:[%s4 + $0x8] sm:$0xff]
  %v1122 = vld [vmem:[%s4 + $0x10] sm:$0xff]
  %v1123 = vld [vmem:[%s4 + $0x18] sm:$0xff]
  %v1124 = vld [vmem:[%s4 + $0x20] sm:$0xff]
  %v1125 = vld [vmem:[%s4 + $0x28] sm:$0xff]
  %v1126 = vld [vmem:[%s4 + $0x30] sm:$0xff]
  %v1127 = vld [vmem:[%s4 + $0x38] sm:$0xff]
  %v1128 = vld [vmem:[%s4 + $0x40] sm:$0xff]
  %v1129 = vld [vmem:[%s4 + $0x48] sm:$0xff]
  %v1130 = vld [vmem:[%s4 + $0x50] sm:$0xff]
  %v1131 = vld [vmem:[%s4 + $0x58] sm:$0xff]
  %v1132 = vld [vmem:[%s4 + $0x60] sm:$0xff]
  %v1133 = vld [vmem:[%s4 + $0x68] sm:$0xff]
  %v1134 = vld [vmem:[%s4 + $0x70] sm:$0xff]
  %v1135 = vld [vmem:[%s4 + $0x78] sm:$0xff]
  %v1136 = vld [vmem:[%s4 + $0x80] sm:$0xff]
  %v1137 = vld [vmem:[%s4 + $0x88] sm:$0xff]
  %v1138 = vld [vmem:[%s4 + $0x90] sm:$0xff]
  %v1139 = vld [vmem:[%s4 + $0x98] sm:$0xff]
  %v1140 = vld [vmem:[%s4 + $0xa0] sm:$0xff]
  %v1141 = vld [vmem:[%s4 + $0xa8] sm:$0xff]
  %v1142 = vld [vmem:[%s4 + $0xb0] sm:$0xff]
  %v1143 = vld [vmem:[%s4 + $0xb8] sm:$0xff]
  %v1144 = vld [vmem:[%s4 + $0xc0] sm:$0xff]
  %v1145 = vld [vmem:[%s4 + $0xc8] sm:$0xff]
  %v1146 = vld [vmem:[%s4 + $0xd0] sm:$0xff]
  %v1147 = vld [vmem:[%s4 + $0xd8] sm:$0xff]
  %v1148 = vld [vmem:[%s4 + $0xe0] sm:$0xff]
  %v1149 = vld [vmem:[%s4 + $0xe8] sm:$0xff]
  %v1150 = vld [vmem:[%s4 + $0xf0] sm:$0xff]
  %v1151 = vld [vmem:[%s4 + $0xf8] sm:$0xff]
  %v1152 = vld [vmem:[%s4 + $0x100] sm:$0xff]
  %v1153 = vld [vmem:[%s4 + $0x108] sm:$0xff]
  %v1154 = vld [vmem:[%s4 + $0x110] sm:$0xff]
  %v1155 = vld [vmem:[%s4 + $0x118] sm:$0xff]
  %v1156 = vld [vmem:[%s4 + $0x120] sm:$0xff]
  %v1157 = vld [vmem:[%s4 + $0x128] sm:$0xff]
  %v1158 = vld [vmem:[%s4 + $0x130] sm:$0xff]
  %v1159 = vld [vmem:[%s4 + $0x138] sm:$0xff]
  %v1160 = vld [vmem:[%s4 + $0x140] sm:$0xff]
  %v1161 = vld [vmem:[%s4 + $0x148] sm:$0xff]
  %v1162 = vld [vmem:[%s4 + $0x150] sm:$0xff]
  %v1163 = vld [vmem:[%s4 + $0x158] sm:$0xff]
  %v1164 = vld [vmem:[%s4 + $0x160] sm:$0xff]
  %v1165 = vld [vmem:[%s4 + $0x168] sm:$0xff]
  %v1166 = vld [vmem:[%s4 + $0x170] sm:$0xff]
  %v1167 = vld [vmem:[%s4 + $0x178] sm:$0xff]
  %v1168 = vld [vmem:[%s4 + $0x180] sm:$0xff]
  %v1169 = vld [vmem:[%s4 + $0x188] sm:$0xff]
  %v1170 = vld [vmem:[%s4 + $0x190] sm:$0xff]
  %v1171 = vld [vmem:[%s4 + $0x198] sm:$0xff]
  %v1172 = vld [vmem:[%s4 + $0x1a0] sm:$0xff]
  %v1173 = vld [vmem:[%s4 + $0x1a8] sm:$0xff]
  %v1174 = vld [vmem:[%s4 + $0x1b0] sm:$0xff]
  %v1175 = vld [vmem:[%s4 + $0x1b8] sm:$0xff]
  %v1176 = vld [vmem:[%s4 + $0x1c0] sm:$0xff]
  %v1177 = vld [vmem:[%s4 + $0x1c8] sm:$0xff]
  %v1178 = vld [vmem:[%s4 + $0x1d0] sm:$0xff]
  %v1179 = vld [vmem:[%s4 + $0x1d8] sm:$0xff]
  %v1180 = vld [vmem:[%s4 + $0x1e0] sm:$0xff]
  %v1181 = vld [vmem:[%s4 + $0x1e8] sm:$0xff]
  %v1182 = vld [vmem:[%s4 + $0x1f0] sm:$0xff]
  %v1183 = vld [vmem:[%s4 + $0x1f8] sm:$0xff]
  %v1184 = vld [vmem:[%s4 + $0x200] sm:$0xff]
  %v1185 = vld [vmem:[%s4 + $0x208] sm:$0xff]
  %v1186 = vld [vmem:[%s4 + $0x210] sm:$0xff]
  %v1187 = vld [vmem:[%s4 + $0x218] sm:$0xff]
  %v1188 = vld [vmem:[%s4 + $0x220] sm:$0xff]
  %v1189 = vld [vmem:[%s4 + $0x228] sm:$0xff]
  %v1190 = vld [vmem:[%s4 + $0x230] sm:$0xff]
  %v1191 = vld [vmem:[%s4 + $0x238] sm:$0xff]
  %v1192 = vld [vmem:[%s4 + $0x240] sm:$0xff]
  %v1193 = vld [vmem:[%s4 + $0x248] sm:$0xff]
  %v1194 = vld [vmem:[%s4 + $0x250] sm:$0xff]
  %v1195 = vld [vmem:[%s4 + $0x258] sm:$0xff]
  %v1196 = vld [vmem:[%s4 + $0x260] sm:$0xff]
  %v1197 = vld [vmem:[%s4 + $0x268] sm:$0xff]
  %v1198 = vld [vmem:[%s4 + $0x270] sm:$0xff]
  %v1199 = vld [vmem:[%s4 + $0x278] sm:$0xff]
  %v1200 = vld [vmem:[%s4 + $0x280] sm:$0xff]
  %v1201 = vld [vmem:[%s4 + $0x288] sm:$0xff]
  %v1202 = vld [vmem:[%s4 + $0x290] sm:$0xff]
  %v1203 = vld [vmem:[%s4 + $0x298] sm:$0xff]
  %v1204 = vld [vmem:[%s4 + $0x2a0] sm:$0xff]
  %v1205 = vld [vmem:[%s4 + $0x2a8] sm:$0xff]
  %v1206 = vld [vmem:[%s4 + $0x2b0] sm:$0xff]
  %v1207 = vld [vmem:[%s4 + $0x2b8] sm:$0xff]
  %v1208 = vld [vmem:[%s4 + $0x2c0] sm:$0xff]
  %v1209 = vld [vmem:[%s4 + $0x2c8] sm:$0xff]
  %v1210 = vld [vmem:[%s4 + $0x2d0] sm:$0xff]
  %v1211 = vld [vmem:[%s4 + $0x2d8] sm:$0xff]
  %v1212 = vld [vmem:[%s4 + $0x2e0] sm:$0xff]
  %v1213 = vld [vmem:[%s4 + $0x2e8] sm:$0xff]
  %v1214 = vld [vmem:[%s4 + $0x2f0] sm:$0xff]
  %v1215 = vld [vmem:[%s4 + $0x2f8] sm:$0xff]
  %v1216 = vld [vmem:[%s4 + $0x300] sm:$0xff]
  %v1217 = vld [vmem:[%s4 + $0x308] sm:$0xff]
  %v1218 = vld [vmem:[%s4 + $0x310] sm:$0xff]
  %v1219 = vld [vmem:[%s4 + $0x318] sm:$0xff]
  %v1220 = vld [vmem:[%s4 + $0x320] sm:$0xff]
  %v1221 = vld [vmem:[%s4 + $0x328] sm:$0xff]
  %v1222 = vld [vmem:[%s4 + $0x330] sm:$0xff]
  %v1223 = vld [vmem:[%s4 + $0x338] sm:$0xff]
  %v1224 = vld [vmem:[%s4 + $0x340] sm:$0xff]
  %v1225 = vld [vmem:[%s4 + $0x348] sm:$0xff]
  %v1226 = vld [vmem:[%s4 + $0x350] sm:$0xff]
  %v1227 = vld [vmem:[%s4 + $0x358] sm:$0xff]
  %v1228 = vld [vmem:[%s4 + $0x360] sm:$0xff]
  %v1229 = vld [vmem:[%s4 + $0x368] sm:$0xff]
  %v1230 = vld [vmem:[%s4 + $0x370] sm:$0xff]
  %v1231 = vld [vmem:[%s4 + $0x378] sm:$0xff]
  %v1232 = vld [vmem:[%s4 + $0x380] sm:$0xff]
  %v1233 = vld [vmem:[%s4 + $0x388] sm:$0xff]
  %v1234 = vld [vmem:[%s4 + $0x390] sm:$0xff]
  %v1235 = vld [vmem:[%s4 + $0x398] sm:$0xff]
  %v1236 = vld [vmem:[%s4 + $0x3a0] sm:$0xff]
  %v1237 = vld [vmem:[%s4 + $0x3a8] sm:$0xff]
  %v1238 = vld [vmem:[%s4 + $0x3b0] sm:$0xff]
  %v1239 = vld [vmem:[%s4 + $0x3b8] sm:$0xff]
  %v1240 = vld [vmem:[%s4 + $0x3c0] sm:$0xff]
  %v1241 = vld [vmem:[%s4 + $0x3c8] sm:$0xff]
  %v1242 = vld [vmem:[%s4 + $0x3d0] sm:$0xff]
  %v1243 = vld [vmem:[%s4 + $0x3d8] sm:$0xff]
  %v1244 = vld [vmem:[%s4 + $0x3e0] sm:$0xff]
  %v1245 = vld [vmem:[%s4 + $0x3e8] sm:$0xff]
  %v1246 = vld [vmem:[%s4 + $0x3f0] sm:$0xff]
  %v1247 = vld [vmem:[%s4 + $0x3f8] sm:$0xff]
  %v1248 = vld [vmem:[%s4 + $0x400] sm:$0xff]
  %v1249 = vld [vmem:[%s4 + $0x408] sm:$0xff]
  %v1250 = vld [vmem:[%s4 + $0x410] sm:$0xff]
  %v1251 = vld [vmem:[%s4 + $0x418] sm:$0xff]
  %v1252 = vld [vmem:[%s4 + $0x420] sm:$0xff]
  %v1253 = vld [vmem:[%s4 + $0x428] sm:$0xff]
  %v1254 = vld [vmem:[%s4 + $0x430] sm:$0xff]
  %v1255 = vld [vmem:[%s4 + $0x438] sm:$0xff]
  %v1256 = vld [vmem:[%s4 + $0x440] sm:$0xff]
  %v1257 = vld [vmem:[%s4 + $0x448] sm:$0xff]
  %v1258 = vld [vmem:[%s4 + $0x450] sm:$0xff]
  %v1259 = vld [vmem:[%s4 + $0x458] sm:$0xff]
  %v1260 = vld [vmem:[%s4 + $0x460] sm:$0xff]
  %v1261 = vld [vmem:[%s4 + $0x468] sm:$0xff]
  %v1262 = vld [vmem:[%s4 + $0x470] sm:$0xff]
  %v1263 = vld [vmem:[%s4 + $0x478] sm:$0xff]
  %v1264 = vld [vmem:[%s5] sm:$0xff]
  %v1265 = vld [vmem:[%s5 + $0x8] sm:$0xff]
  %v1266 = vld [vmem:[%s5 + $0x10] sm:$0xff]
  %v1267 = vld [vmem:[%s5 + $0x18] sm:$0xff]
  %v1268 = vld [vmem:[%s5 + $0x20] sm:$0xff]
  %v1269 = vld [vmem:[%s5 + $0x28] sm:$0xff]
  %v1270 = vld [vmem:[%s5 + $0x30] sm:$0xff]
  %v1271 = vld [vmem:[%s5 + $0x38] sm:$0xff]
  %v1272 = vld [vmem:[%s5 + $0x40] sm:$0xff]
  %v1273 = vld [vmem:[%s5 + $0x48] sm:$0xff]
  %v1274 = vld [vmem:[%s5 + $0x50] sm:$0xff]
  %v1275 = vld [vmem:[%s5 + $0x58] sm:$0xff]
  %v1276 = vld [vmem:[%s5 + $0x60] sm:$0xff]
  %v1277 = vld [vmem:[%s5 + $0x68] sm:$0xff]
  %v1278 = vld [vmem:[%s5 + $0x70] sm:$0xff]
  %v1279 = vld [vmem:[%s5 + $0x78] sm:$0xff]
  %v1280 = vld [vmem:[%s5 + $0x80] sm:$0xff]
  %v1281 = vld [vmem:[%s5 + $0x88] sm:$0xff]
  %v1282 = vld [vmem:[%s5 + $0x90] sm:$0xff]
  %v1283 = vld [vmem:[%s5 + $0x98] sm:$0xff]
  %v1284 = vld [vmem:[%s5 + $0xa0] sm:$0xff]
  %v1285 = vld [vmem:[%s5 + $0xa8] sm:$0xff]
  %v1286 = vld [vmem:[%s5 + $0xb0] sm:$0xff]
  %v1287 = vld [vmem:[%s5 + $0xb8] sm:$0xff]
  %v1288 = vld [vmem:[%s5 + $0xc0] sm:$0xff]
  %v1289 = vld [vmem:[%s5 + $0xc8] sm:$0xff]
  %v1290 = vld [vmem:[%s5 + $0xd0] sm:$0xff]
  %v1291 = vld [vmem:[%s5 + $0xd8] sm:$0xff]
  %v1292 = vld [vmem:[%s5 + $0xe0] sm:$0xff]
  %v1293 = vld [vmem:[%s5 + $0xe8] sm:$0xff]
  %v1294 = vld [vmem:[%s5 + $0xf0] sm:$0xff]
  %v1295 = vld [vmem:[%s5 + $0xf8] sm:$0xff]
  %v1296 = vld [vmem:[%s5 + $0x100] sm:$0xff]
  %v1297 = vld [vmem:[%s5 + $0x108] sm:$0xff]
  %v1298 = vld [vmem:[%s5 + $0x110] sm:$0xff]
  %v1299 = vld [vmem:[%s5 + $0x118] sm:$0xff]
  %v1300 = vld [vmem:[%s5 + $0x120] sm:$0xff]
  %v1301 = vld [vmem:[%s5 + $0x128] sm:$0xff]
  %v1302 = vld [vmem:[%s5 + $0x130] sm:$0xff]
  %v1303 = vld [vmem:[%s5 + $0x138] sm:$0xff]
  %v1304 = vld [vmem:[%s5 + $0x140] sm:$0xff]
  %v1305 = vld [vmem:[%s5 + $0x148] sm:$0xff]
  %v1306 = vld [vmem:[%s5 + $0x150] sm:$0xff]
  %v1307 = vld [vmem:[%s5 + $0x158] sm:$0xff]
  %v1308 = vld [vmem:[%s5 + $0x160] sm:$0xff]
  %v1309 = vld [vmem:[%s5 + $0x168] sm:$0xff]
  %v1310 = vld [vmem:[%s5 + $0x170] sm:$0xff]
  %v1311 = vld [vmem:[%s5 + $0x178] sm:$0xff]
  %v1312 = vld [vmem:[%s5 + $0x180] sm:$0xff]
  %v1313 = vld [vmem:[%s5 + $0x188] sm:$0xff]
  %v1314 = vld [vmem:[%s5 + $0x190] sm:$0xff]
  %v1315 = vld [vmem:[%s5 + $0x198] sm:$0xff]
  %v1316 = vld [vmem:[%s5 + $0x1a0] sm:$0xff]
  %v1317 = vld [vmem:[%s5 + $0x1a8] sm:$0xff]
  %v1318 = vld [vmem:[%s5 + $0x1b0] sm:$0xff]
  %v1319 = vld [vmem:[%s5 + $0x1b8] sm:$0xff]
  %v1320 = vld [vmem:[%s5 + $0x1c0] sm:$0xff]
  %v1321 = vld [vmem:[%s5 + $0x1c8] sm:$0xff]
  %v1322 = vld [vmem:[%s5 + $0x1d0] sm:$0xff]
  %v1323 = vld [vmem:[%s5 + $0x1d8] sm:$0xff]
  %v1324 = vld [vmem:[%s5 + $0x1e0] sm:$0xff]
  %v1325 = vld [vmem:[%s5 + $0x1e8] sm:$0xff]
  %v1326 = vld [vmem:[%s5 + $0x1f0] sm:$0xff]
  %v1327 = vld [vmem:[%s5 + $0x1f8] sm:$0xff]
  %v1328 = vld [vmem:[%s5 + $0x200] sm:$0xff]
  %v1329 = vld [vmem:[%s5 + $0x208] sm:$0xff]
  %v1330 = vld [vmem:[%s5 + $0x210] sm:$0xff]
  %v1331 = vld [vmem:[%s5 + $0x218] sm:$0xff]
  %v1332 = vld [vmem:[%s5 + $0x220] sm:$0xff]
  %v1333 = vld [vmem:[%s5 + $0x228] sm:$0xff]
  %v1334 = vld [vmem:[%s5 + $0x230] sm:$0xff]
  %v1335 = vld [vmem:[%s5 + $0x238] sm:$0xff]
  %vm1336 = vcmask 130048
  %v1338 = vsel %vm1336, %v1121, 0
  %v1341 = vsel %vm1336, %v1123, 0
  %v1344 = vsel %vm1336, %v1125, 0
  %v1347 = vsel %vm1336, %v1127, 0
  %v1350 = vsel %vm1336, %v1129, 0
  %v1353 = vsel %vm1336, %v1131, 0
  %v1356 = vsel %vm1336, %v1133, 0
  %v1359 = vsel %vm1336, %v1135, 0
  %v1362 = vsel %vm1336, %v1137, 0
  %v1365 = vsel %vm1336, %v1139, 0
  %v1368 = vsel %vm1336, %v1141, 0
  %v1371 = vsel %vm1336, %v1143, 0
  %v1374 = vsel %vm1336, %v1145, 0
  %v1377 = vsel %vm1336, %v1147, 0
  %v1380 = vsel %vm1336, %v1149, 0
  %v1383 = vsel %vm1336, %v1151, 0
  %v1386 = vsel %vm1336, %v1153, 0
  %v1389 = vsel %vm1336, %v1155, 0
  %v1392 = vsel %vm1336, %v1157, 0
  %v1395 = vsel %vm1336, %v1159, 0
  %v1398 = vsel %vm1336, %v1161, 0
  %v1401 = vsel %vm1336, %v1163, 0
  %v1404 = vsel %vm1336, %v1165, 0
  %v1407 = vsel %vm1336, %v1167, 0
  %v1410 = vsel %vm1336, %v1169, 0
  %v1413 = vsel %vm1336, %v1171, 0
  %v1416 = vsel %vm1336, %v1173, 0
  %v1419 = vsel %vm1336, %v1175, 0
  %v1422 = vsel %vm1336, %v1177, 0
  %v1425 = vsel %vm1336, %v1179, 0
  %v1428 = vsel %vm1336, %v1181, 0
  %v1431 = vsel %vm1336, %v1183, 0
  %v1434 = vsel %vm1336, %v1185, 0
  %v1437 = vsel %vm1336, %v1187, 0
  %v1440 = vsel %vm1336, %v1189, 0
  %v1443 = vsel %vm1336, %v1191, 0
  %v1446 = vsel %vm1336, %v1193, 0
  %v1449 = vsel %vm1336, %v1195, 0
  %v1452 = vsel %vm1336, %v1197, 0
  %v1455 = vsel %vm1336, %v1199, 0
  %v1458 = vsel %vm1336, %v1201, 0
  %v1461 = vsel %vm1336, %v1203, 0
  %v1464 = vsel %vm1336, %v1205, 0
  %v1467 = vsel %vm1336, %v1207, 0
  %v1470 = vsel %vm1336, %v1209, 0
  %v1473 = vsel %vm1336, %v1211, 0
  %v1476 = vsel %vm1336, %v1213, 0
  %v1479 = vsel %vm1336, %v1215, 0
  %v1482 = vsel %vm1336, %v1217, 0
  %v1485 = vsel %vm1336, %v1219, 0
  %v1488 = vsel %vm1336, %v1221, 0
  %v1491 = vsel %vm1336, %v1223, 0
  %v1494 = vsel %vm1336, %v1225, 0
  %v1497 = vsel %vm1336, %v1227, 0
  %v1500 = vsel %vm1336, %v1229, 0
  %v1503 = vsel %vm1336, %v1231, 0
  %v1506 = vsel %vm1336, %v1233, 0
  %v1509 = vsel %vm1336, %v1235, 0
  %v1512 = vsel %vm1336, %v1237, 0
  %v1515 = vsel %vm1336, %v1239, 0
  %v1518 = vsel %vm1336, %v1241, 0
  %v1521 = vsel %vm1336, %v1243, 0
  %v1524 = vsel %vm1336, %v1245, 0
  %v1527 = vsel %vm1336, %v1247, 0
  %v1530 = vsel %vm1336, %v1249, 0
  %v1533 = vsel %vm1336, %v1251, 0
  %v1536 = vsel %vm1336, %v1253, 0
  %v1539 = vsel %vm1336, %v1255, 0
  %v1542 = vsel %vm1336, %v1257, 0
  %v1545 = vsel %vm1336, %v1259, 0
  %v1548 = vsel %vm1336, %v1261, 0
  %v1551 = vsel %vm1336, %v1263, 0
  %1553 = vmatprep.subr.mxu0 0.0
  %1554 = vmatpush1.msra.mxu0 %v1102
  %1555 = vmatprep.subr.mxu0 0.0
  %1556 = vmatpush1.msra.mxu0 %v1103
  %1557 = vmatprep.subr.mxu0 0.0
  %1558 = vmatpush1.msra.mxu0 %v1104
  %1559 = vmatprep.subr.mxu0 0.0
  %1560 = vmatpush1.msra.mxu0 %v1105
  %1561 = vmatprep.subr.mxu0 0.0
  %1562 = vmatpush1.msra.mxu0 %v1106
  %1563 = vmatprep.subr.mxu0 0.0
  %1564 = vmatpush1.msra.mxu0 %v1107
  %1565 = vmatprep.subr.mxu0 0.0
  %1566 = vmatpush1.msra.mxu0 %v1108
  %1567 = vmatprep.subr.mxu0 0.0
  %1568 = vmatpush1.msra.mxu0 %v1109
  %1569 = vmatprep.subr.mxu0 0.0
  %1570 = vmatpush1.msra.mxu0 %v1110
  %1571 = vmatprep.subr.mxu0 0.0
  %1572 = vmatpush1.msra.mxu0 %v1111
  %1573 = vmatprep.subr.mxu0 0.0
  %1574 = vmatpush1.msra.mxu0 %v1112
  %1575 = vmatprep.subr.mxu0 0.0
  %1576 = vmatpush1.msra.mxu0 %v1113
  %1577 = vmatprep.subr.mxu0 0.0
  %1578 = vmatpush1.msra.mxu0 %v1114
  %1579 = vmatprep.subr.mxu0 0.0
  %1580 = vmatpush1.msra.mxu0 %v1115
  %1581 = vmatprep.subr.mxu0 0.0
  %1582 = vmatpush1.msra.mxu0 %v1116
  %1583 = vmatprep.subr.mxu0 0.0
  %1584 = vmatpush1.msra.mxu0 %v1117
  %1585 = vmatprep.subr.mxu0 0.0
  %1586 = vmatpush1.msra.mxu0 %v1118
  %1587 = vmatprep.subr.mxu0 0.0
  %1588 = vmatpush1.msra.mxu0 %v1119
  %1589 = vmatprep.subr.mxu0 0.0
  %1590 = vmatpush1.msra.mxu0 0.0
  %1591 = vmatprep.subr.mxu0 0.0
  %1592 = vmatpush1.msra.mxu0 0.0
  %1593 = vmatprep.subr.mxu0 0.0
  %1594 = vmatpush1.msra.mxu0 0.0
  %1595 = vmatprep.subr.mxu0 0.0
  %1596 = vmatpush1.msra.mxu0 0.0
  %1597 = vmatprep.subr.mxu0 0.0
  %1598 = vmatpush1.msra.mxu0 0.0
  %1599 = vmatprep.subr.mxu0 0.0
  %1600 = vmatpush1.msra.mxu0 0.0
  %1601 = vmatprep.subr.mxu0 0.0
  %1602 = vmatpush1.msra.mxu0 0.0
  %1603 = vmatprep.subr.mxu0 0.0
  %1604 = vmatpush1.msra.mxu0 0.0
  %1605 = vmatprep.subr.mxu0 0.0
  %1606 = vmatpush1.msra.mxu0 0.0
  %1607 = vmatprep.subr.mxu0 0.0
  %1608 = vmatpush1.msra.mxu0 0.0
  %1609 = vmatprep.subr.mxu0 0.0
  %1610 = vmatpush1.msra.mxu0 0.0
  %1611 = vmatprep.subr.mxu0 0.0
  %1612 = vmatpush1.msra.mxu0 0.0
  %1613 = vmatprep.subr.mxu0 0.0
  %1614 = vmatpush1.msra.mxu0 0.0
  %1615 = vmatprep.subr.mxu0 0.0
  %1616 = vmatpush1.msra.mxu0 0.0
  %1617 = vmatprep.mubr.f32.mxu0 %v1338
  %1618 = vmatmul.mubr.f32.gmra.mrb[0].mxu0 %v1120
  %v1619 = vpop.f32.mrb[0].mxu0
  %v1620 = vadd.f32 %v1264, %v1619
  %v1621 = vpop.f32.mrb[0].mxu0
  %1622 = vmatprep.mubr.f32.mxu0 %v1341
  %1623 = vmatmul.mubr.f32.gmra.mrb[0].mxu0 %v1122
  %v1624 = vpop.f32.mrb[0].mxu0
  %v1625 = vadd.f32 %v1265, %v1624
  %v1626 = vpop.f32.mrb[0].mxu0
  %1627 = vmatprep.mubr.f32.mxu0 %v1344
  %1628 = vmatmul.mubr.f32.gmra.mrb[0].mxu0 %v1124
  %v1629 = vpop.f32.mrb[0].mxu0
  %v1630 = vadd.f32 %v1266, %v1629
  %v1631 = vpop.f32.mrb[0].mxu0
  %1632 = vmatprep.mubr.f32.mxu0 %v1347
  %1633 = vmatmul.mubr.f32.gmra.mrb[0].mxu0 %v1126
  %v1634 = vpop.f32.mrb[0].mxu0
  %v1635 = vadd.f32 %v1267, %v1634
  %v1636 = vpop.f32.mrb[0].mxu0
  %1637 = vmatprep.mubr.f32.mxu0 %v1350
  %1638 = vmatmul.mubr.f32.gmra.mrb[0].mxu0 %v1128
  %v1639 = vpop.f32.mrb[0].mxu0
  %v1640 = vadd.f32 %v1268, %v1639
  %v1641 = vpop.f32.mrb[0].mxu0
  %1642 = vmatprep.mubr.f32.mxu0 %v1353
  %1643 = vmatmul.mubr.f32.gmra.mrb[0].mxu0 %v1130
  %v1644 = vpop.f32.mrb[0].mxu0
  %v1645 = vadd.f32 %v1269, %v1644
  %v1646 = vpop.f32.mrb[0].mxu0
  %1647 = vmatprep.mubr.f32.mxu0 %v1356
  %1648 = vmatmul.mubr.f32.gmra.mrb[0].mxu0 %v1132
  %v1649 = vpop.f32.mrb[0].mxu0
  %v1650 = vadd.f32 %v1270, %v1649
  %v1651 = vpop.f32.mrb[0].mxu0
  %1652 = vmatprep.mubr.f32.mxu0 %v1359
  %1653 = vmatmul.mubr.f32.gmra.mrb[0].mxu0 %v1134
  %v1654 = vpop.f32.mrb[0].mxu0
  %v1655 = vadd.f32 %v1271, %v1654
  %v1656 = vpop.f32.mrb[0].mxu0
  %1657 = vmatprep.mubr.f32.mxu0 %v1362
  %1658 = vmatmul.mubr.f32.gmra.mrb[0].mxu0 %v1136
  %v1659 = vpop.f32.mrb[0].mxu0
  %v1660 = vadd.f32 %v1272, %v1659
  %v1661 = vpop.f32.mrb[0].mxu0
  %1662 = vmatprep.mubr.f32.mxu0 %v1365
  %1663 = vmatmul.mubr.f32.gmra.mrb[0].mxu0 %v1138
  %v1664 = vpop.f32.mrb[0].mxu0
  %v1665 = vadd.f32 %v1273, %v1664
  %v1666 = vpop.f32.mrb[0].mxu0
  %1667 = vmatprep.mubr.f32.mxu0 %v1368
  %1668 = vmatmul.mubr.f32.gmra.mrb[0].mxu0 %v1140
  %v1669 = vpop.f32.mrb[0].mxu0
  %v1670 = vadd.f32 %v1274, %v1669
  %v1671 = vpop.f32.mrb[0].mxu0
  %1672 = vmatprep.mubr.f32.mxu0 %v1371
  %1673 = vmatmul.mubr.f32.gmra.mrb[0].mxu0 %v1142
  %v1674 = vpop.f32.mrb[0].mxu0
  %v1675 = vadd.f32 %v1275, %v1674
  %v1676 = vpop.f32.mrb[0].mxu0
  %1677 = vmatprep.mubr.f32.mxu0 %v1374
  %1678 = vmatmul.mubr.f32.gmra.mrb[0].mxu0 %v1144
  %v1679 = vpop.f32.mrb[0].mxu0
  %v1680 = vadd.f32 %v1276, %v1679
  %v1681 = vpop.f32.mrb[0].mxu0
  %1682 = vmatprep.mubr.f32.mxu0 %v1377
  %1683 = vmatmul.mubr.f32.gmra.mrb[0].mxu0 %v1146
  %v1684 = vpop.f32.mrb[0].mxu0
  %v1685 = vadd.f32 %v1277, %v1684
  %v1686 = vpop.f32.mrb[0].mxu0
  %1687 = vmatprep.mubr.f32.mxu0 %v1380
  %1688 = vmatmul.mubr.f32.gmra.mrb[0].mxu0 %v1148
  %v1689 = vpop.f32.mrb[0].mxu0
  %v1690 = vadd.f32 %v1278, %v1689
  %v1691 = vpop.f32.mrb[0].mxu0
  %1692 = vmatprep.mubr.f32.mxu0 %v1383
  %1693 = vmatmul.mubr.f32.gmra.mrb[0].mxu0 %v1150
  %v1694 = vpop.f32.mrb[0].mxu0
  %v1695 = vadd.f32 %v1279, %v1694
  %v1696 = vpop.f32.mrb[0].mxu0
  %1697 = vmatprep.mubr.f32.mxu0 %v1386
  %1698 = vmatmul.mubr.f32.gmra.mrb[0].mxu0 %v1152
  %v1699 = vpop.f32.mrb[0].mxu0
  %v1700 = vadd.f32 %v1280, %v1699
  %v1701 = vpop.f32.mrb[0].mxu0
  %1702 = vmatprep.mubr.f32.mxu0 %v1389
  %1703 = vmatmul.mubr.f32.gmra.mrb[0].mxu0 %v1154
  %v1704 = vpop.f32.mrb[0].mxu0
  %v1705 = vadd.f32 %v1281, %v1704
  %v1706 = vpop.f32.mrb[0].mxu0
  %1707 = vmatprep.mubr.f32.mxu0 %v1392
  %1708 = vmatmul.mubr.f32.gmra.mrb[0].mxu0 %v1156
  %v1709 = vpop.f32.mrb[0].mxu0
  %v1710 = vadd.f32 %v1282, %v1709
  %v1711 = vpop.f32.mrb[0].mxu0
  %1712 = vmatprep.mubr.f32.mxu0 %v1395
  %1713 = vmatmul.mubr.f32.gmra.mrb[0].mxu0 %v1158
  %v1714 = vpop.f32.mrb[0].mxu0
  %v1715 = vadd.f32 %v1283, %v1714
  %v1716 = vpop.f32.mrb[0].mxu0
  %1717 = vmatprep.mubr.f32.mxu0 %v1398
  %1718 = vmatmul.mubr.f32.gmra.mrb[0].mxu0 %v1160
  %v1719 = vpop.f32.mrb[0].mxu0
  %v1720 = vadd.f32 %v1284, %v1719
  %v1721 = vpop.f32.mrb[0].mxu0
  %1722 = vmatprep.mubr.f32.mxu0 %v1401
  %1723 = vmatmul.mubr.f32.gmra.mrb[0].mxu0 %v1162
  %v1724 = vpop.f32.mrb[0].mxu0
  %v1725 = vadd.f32 %v1285, %v1724
  %v1726 = vpop.f32.mrb[0].mxu0
  %1727 = vmatprep.mubr.f32.mxu0 %v1404
  %1728 = vmatmul.mubr.f32.gmra.mrb[0].mxu0 %v1164
  %v1729 = vpop.f32.mrb[0].mxu0
  %v1730 = vadd.f32 %v1286, %v1729
  %v1731 = vpop.f32.mrb[0].mxu0
  %1732 = vmatprep.mubr.f32.mxu0 %v1407
  %1733 = vmatmul.mubr.f32.gmra.mrb[0].mxu0 %v1166
  %v1734 = vpop.f32.mrb[0].mxu0
  %v1735 = vadd.f32 %v1287, %v1734
  %v1736 = vpop.f32.mrb[0].mxu0
  %1737 = vmatprep.mubr.f32.mxu0 %v1410
  %1738 = vmatmul.mubr.f32.gmra.mrb[0].mxu0 %v1168
  %v1739 = vpop.f32.mrb[0].mxu0
  %v1740 = vadd.f32 %v1288, %v1739
  %v1741 = vpop.f32.mrb[0].mxu0
  %1742 = vmatprep.mubr.f32.mxu0 %v1413
  %1743 = vmatmul.mubr.f32.gmra.mrb[0].mxu0 %v1170
  %v1744 = vpop.f32.mrb[0].mxu0
  %v1745 = vadd.f32 %v1289, %v1744
  %v1746 = vpop.f32.mrb[0].mxu0
  %1747 = vmatprep.mubr.f32.mxu0 %v1416
  %1748 = vmatmul.mubr.f32.gmra.mrb[0].mxu0 %v1172
  %v1749 = vpop.f32.mrb[0].mxu0
  %v1750 = vadd.f32 %v1290, %v1749
  %v1751 = vpop.f32.mrb[0].mxu0
  %1752 = vmatprep.mubr.f32.mxu0 %v1419
  %1753 = vmatmul.mubr.f32.gmra.mrb[0].mxu0 %v1174
  %v1754 = vpop.f32.mrb[0].mxu0
  %v1755 = vadd.f32 %v1291, %v1754
  %v1756 = vpop.f32.mrb[0].mxu0
  %1757 = vmatprep.mubr.f32.mxu0 %v1422
  %1758 = vmatmul.mubr.f32.gmra.mrb[0].mxu0 %v1176
  %v1759 = vpop.f32.mrb[0].mxu0
  %v1760 = vadd.f32 %v1292, %v1759
  %v1761 = vpop.f32.mrb[0].mxu0
  %1762 = vmatprep.mubr.f32.mxu0 %v1425
  %1763 = vmatmul.mubr.f32.gmra.mrb[0].mxu0 %v1178
  %v1764 = vpop.f32.mrb[0].mxu0
  %v1765 = vadd.f32 %v1293, %v1764
  %v1766 = vpop.f32.mrb[0].mxu0
  %1767 = vmatprep.mubr.f32.mxu0 %v1428
  %1768 = vmatmul.mubr.f32.gmra.mrb[0].mxu0 %v1180
  %v1769 = vpop.f32.mrb[0].mxu0
  %v1770 = vadd.f32 %v1294, %v1769
  %v1771 = vpop.f32.mrb[0].mxu0
  %1772 = vmatprep.mubr.f32.mxu0 %v1431
  %1773 = vmatmul.mubr.f32.gmra.mrb[0].mxu0 %v1182
  %v1774 = vpop.f32.mrb[0].mxu0
  %v1775 = vadd.f32 %v1295, %v1774
  %v1776 = vpop.f32.mrb[0].mxu0
  %1777 = vmatprep.mubr.f32.mxu0 %v1434
  %1778 = vmatmul.mubr.f32.gmra.mrb[0].mxu0 %v1184
  %v1779 = vpop.f32.mrb[0].mxu0
  %v1780 = vadd.f32 %v1296, %v1779
  %v1781 = vpop.f32.mrb[0].mxu0
  %1782 = vmatprep.mubr.f32.mxu0 %v1437
  %1783 = vmatmul.mubr.f32.gmra.mrb[0].mxu0 %v1186
  %v1784 = vpop.f32.mrb[0].mxu0
  %v1785 = vadd.f32 %v1297, %v1784
  %v1786 = vpop.f32.mrb[0].mxu0
  %1787 = vmatprep.mubr.f32.mxu0 %v1440
  %1788 = vmatmul.mubr.f32.gmra.mrb[0].mxu0 %v1188
  %v1789 = vpop.f32.mrb[0].mxu0
  %v1790 = vadd.f32 %v1298, %v1789
  %v1791 = vpop.f32.mrb[0].mxu0
  %1792 = vmatprep.mubr.f32.mxu0 %v1443
  %1793 = vmatmul.mubr.f32.gmra.mrb[0].mxu0 %v1190
  %v1794 = vpop.f32.mrb[0].mxu0
  %v1795 = vadd.f32 %v1299, %v1794
  %v1796 = vpop.f32.mrb[0].mxu0
  %1797 = vmatprep.mubr.f32.mxu0 %v1446
  %1798 = vmatmul.mubr.f32.gmra.mrb[0].mxu0 %v1192
  %v1799 = vpop.f32.mrb[0].mxu0
  %v1800 = vadd.f32 %v1300, %v1799
  %v1801 = vpop.f32.mrb[0].mxu0
  %1802 = vmatprep.mubr.f32.mxu0 %v1449
  %1803 = vmatmul.mubr.f32.gmra.mrb[0].mxu0 %v1194
  %v1804 = vpop.f32.mrb[0].mxu0
  %v1805 = vadd.f32 %v1301, %v1804
  %v1806 = vpop.f32.mrb[0].mxu0
  %1807 = vmatprep.mubr.f32.mxu0 %v1452
  %1808 = vmatmul.mubr.f32.gmra.mrb[0].mxu0 %v1196
  %v1809 = vpop.f32.mrb[0].mxu0
  %v1810 = vadd.f32 %v1302, %v1809
  %v1811 = vpop.f32.mrb[0].mxu0
  %1812 = vmatprep.mubr.f32.mxu0 %v1455
  %1813 = vmatmul.mubr.f32.gmra.mrb[0].mxu0 %v1198
  %v1814 = vpop.f32.mrb[0].mxu0
  %v1815 = vadd.f32 %v1303, %v1814
  %v1816 = vpop.f32.mrb[0].mxu0
  %1817 = vmatprep.mubr.f32.mxu0 %v1458
  %1818 = vmatmul.mubr.f32.gmra.mrb[0].mxu0 %v1200
  %v1819 = vpop.f32.mrb[0].mxu0
  %v1820 = vadd.f32 %v1304, %v1819
  %v1821 = vpop.f32.mrb[0].mxu0
  %1822 = vmatprep.mubr.f32.mxu0 %v1461
  %1823 = vmatmul.mubr.f32.gmra.mrb[0].mxu0 %v1202
  %v1824 = vpop.f32.mrb[0].mxu0
  %v1825 = vadd.f32 %v1305, %v1824
  %v1826 = vpop.f32.mrb[0].mxu0
  %1827 = vmatprep.mubr.f32.mxu0 %v1464
  %1828 = vmatmul.mubr.f32.gmra.mrb[0].mxu0 %v1204
  %v1829 = vpop.f32.mrb[0].mxu0
  %v1830 = vadd.f32 %v1306, %v1829
  %v1831 = vpop.f32.mrb[0].mxu0
  %1832 = vmatprep.mubr.f32.mxu0 %v1467
  %1833 = vmatmul.mubr.f32.gmra.mrb[0].mxu0 %v1206
  %v1834 = vpop.f32.mrb[0].mxu0
  %v1835 = vadd.f32 %v1307, %v1834
  %v1836 = vpop.f32.mrb[0].mxu0
  %1837 = vmatprep.mubr.f32.mxu0 %v1470
  %1838 = vmatmul.mubr.f32.gmra.mrb[0].mxu0 %v1208
  %v1839 = vpop.f32.mrb[0].mxu0
  %v1840 = vadd.f32 %v1308, %v1839
  %v1841 = vpop.f32.mrb[0].mxu0
  %1842 = vmatprep.mubr.f32.mxu0 %v1473
  %1843 = vmatmul.mubr.f32.gmra.mrb[0].mxu0 %v1210
  %v1844 = vpop.f32.mrb[0].mxu0
  %v1845 = vadd.f32 %v1309, %v1844
  %v1846 = vpop.f32.mrb[0].mxu0
  %1847 = vmatprep.mubr.f32.mxu0 %v1476
  %1848 = vmatmul.mubr.f32.gmra.mrb[0].mxu0 %v1212
  %v1849 = vpop.f32.mrb[0].mxu0
  %v1850 = vadd.f32 %v1310, %v1849
  %v1851 = vpop.f32.mrb[0].mxu0
  %1852 = vmatprep.mubr.f32.mxu0 %v1479
  %1853 = vmatmul.mubr.f32.gmra.mrb[0].mxu0 %v1214
  %v1854 = vpop.f32.mrb[0].mxu0
  %v1855 = vadd.f32 %v1311, %v1854
  %v1856 = vpop.f32.mrb[0].mxu0
  %1857 = vmatprep.mubr.f32.mxu0 %v1482
  %1858 = vmatmul.mubr.f32.gmra.mrb[0].mxu0 %v1216
  %v1859 = vpop.f32.mrb[0].mxu0
  %v1860 = vadd.f32 %v1312, %v1859
  %v1861 = vpop.f32.mrb[0].mxu0
  %1862 = vmatprep.mubr.f32.mxu0 %v1485
  %1863 = vmatmul.mubr.f32.gmra.mrb[0].mxu0 %v1218
  %v1864 = vpop.f32.mrb[0].mxu0
  %v1865 = vadd.f32 %v1313, %v1864
  %v1866 = vpop.f32.mrb[0].mxu0
  %1867 = vmatprep.mubr.f32.mxu0 %v1488
  %1868 = vmatmul.mubr.f32.gmra.mrb[0].mxu0 %v1220
  %v1869 = vpop.f32.mrb[0].mxu0
  %v1870 = vadd.f32 %v1314, %v1869
  %v1871 = vpop.f32.mrb[0].mxu0
  %1872 = vmatprep.mubr.f32.mxu0 %v1491
  %1873 = vmatmul.mubr.f32.gmra.mrb[0].mxu0 %v1222
  %v1874 = vpop.f32.mrb[0].mxu0
  %v1875 = vadd.f32 %v1315, %v1874
  %v1876 = vpop.f32.mrb[0].mxu0
  %1877 = vmatprep.mubr.f32.mxu0 %v1494
  %1878 = vmatmul.mubr.f32.gmra.mrb[0].mxu0 %v1224
  %v1879 = vpop.f32.mrb[0].mxu0
  %v1880 = vadd.f32 %v1316, %v1879
  %v1881 = vpop.f32.mrb[0].mxu0
  %1882 = vmatprep.mubr.f32.mxu0 %v1497
  %1883 = vmatmul.mubr.f32.gmra.mrb[0].mxu0 %v1226
  %v1884 = vpop.f32.mrb[0].mxu0
  %v1885 = vadd.f32 %v1317, %v1884
  %v1886 = vpop.f32.mrb[0].mxu0
  %1887 = vmatprep.mubr.f32.mxu0 %v1500
  %1888 = vmatmul.mubr.f32.gmra.mrb[0].mxu0 %v1228
  %v1889 = vpop.f32.mrb[0].mxu0
  %v1890 = vadd.f32 %v1318, %v1889
  %v1891 = vpop.f32.mrb[0].mxu0
  %1892 = vmatprep.mubr.f32.mxu0 %v1503
  %1893 = vmatmul.mubr.f32.gmra.mrb[0].mxu0 %v1230
  %v1894 = vpop.f32.mrb[0].mxu0
  %v1895 = vadd.f32 %v1319, %v1894
  %v1896 = vpop.f32.mrb[0].mxu0
  %1897 = vmatprep.mubr.f32.mxu0 %v1506
  %1898 = vmatmul.mubr.f32.gmra.mrb[0].mxu0 %v1232
  %v1899 = vpop.f32.mrb[0].mxu0
  %v1900 = vadd.f32 %v1320, %v1899
  %v1901 = vpop.f32.mrb[0].mxu0
  %1902 = vmatprep.mubr.f32.mxu0 %v1509
  %1903 = vmatmul.mubr.f32.gmra.mrb[0].mxu0 %v1234
  %v1904 = vpop.f32.mrb[0].mxu0
  %v1905 = vadd.f32 %v1321, %v1904
  %v1906 = vpop.f32.mrb[0].mxu0
  %1907 = vmatprep.mubr.f32.mxu0 %v1512
  %1908 = vmatmul.mubr.f32.gmra.mrb[0].mxu0 %v1236
  %v1909 = vpop.f32.mrb[0].mxu0
  %v1910 = vadd.f32 %v1322, %v1909
  %v1911 = vpop.f32.mrb[0].mxu0
  %1912 = vmatprep.mubr.f32.mxu0 %v1515
  %1913 = vmatmul.mubr.f32.gmra.mrb[0].mxu0 %v1238
  %v1914 = vpop.f32.mrb[0].mxu0
  %v1915 = vadd.f32 %v1323, %v1914
  %v1916 = vpop.f32.mrb[0].mxu0
  %1917 = vmatprep.mubr.f32.mxu0 %v1518
  %1918 = vmatmul.mubr.f32.gmra.mrb[0].mxu0 %v1240
  %v1919 = vpop.f32.mrb[0].mxu0
  %v1920 = vadd.f32 %v1324, %v1919
  %v1921 = vpop.f32.mrb[0].mxu0
  %1922 = vmatprep.mubr.f32.mxu0 %v1521
  %1923 = vmatmul.mubr.f32.gmra.mrb[0].mxu0 %v1242
  %v1924 = vpop.f32.mrb[0].mxu0
  %v1925 = vadd.f32 %v1325, %v1924
  %v1926 = vpop.f32.mrb[0].mxu0
  %1927 = vmatprep.mubr.f32.mxu0 %v1524
  %1928 = vmatmul.mubr.f32.gmra.mrb[0].mxu0 %v1244
  %v1929 = vpop.f32.mrb[0].mxu0
  %v1930 = vadd.f32 %v1326, %v1929
  %v1931 = vpop.f32.mrb[0].mxu0
  %1932 = vmatprep.mubr.f32.mxu0 %v1527
  %1933 = vmatmul.mubr.f32.gmra.mrb[0].mxu0 %v1246
  %v1934 = vpop.f32.mrb[0].mxu0
  %v1935 = vadd.f32 %v1327, %v1934
  %v1936 = vpop.f32.mrb[0].mxu0
  %1937 = vmatprep.mubr.f32.mxu0 %v1530
  %1938 = vmatmul.mubr.f32.gmra.mrb[0].mxu0 %v1248
  %v1939 = vpop.f32.mrb[0].mxu0
  %v1940 = vadd.f32 %v1328, %v1939
  %v1941 = vpop.f32.mrb[0].mxu0
  %1942 = vmatprep.mubr.f32.mxu0 %v1533
  %1943 = vmatmul.mubr.f32.gmra.mrb[0].mxu0 %v1250
  %v1944 = vpop.f32.mrb[0].mxu0
  %v1945 = vadd.f32 %v1329, %v1944
  %v1946 = vpop.f32.mrb[0].mxu0
  %1947 = vmatprep.mubr.f32.mxu0 %v1536
  %1948 = vmatmul.mubr.f32.gmra.mrb[0].mxu0 %v1252
  %v1949 = vpop.f32.mrb[0].mxu0
  %v1950 = vadd.f32 %v1330, %v1949
  %v1951 = vpop.f32.mrb[0].mxu0
  %1952 = vmatprep.mubr.f32.mxu0 %v1539
  %1953 = vmatmul.mubr.f32.gmra.mrb[0].mxu0 %v1254
  %v1954 = vpop.f32.mrb[0].mxu0
  %v1955 = vadd.f32 %v1331, %v1954
  %v1956 = vpop.f32.mrb[0].mxu0
  %1957 = vmatprep.mubr.f32.mxu0 %v1542
  %1958 = vmatmul.mubr.f32.gmra.mrb[0].mxu0 %v1256
  %v1959 = vpop.f32.mrb[0].mxu0
  %v1960 = vadd.f32 %v1332, %v1959
  %v1961 = vpop.f32.mrb[0].mxu0
  %1962 = vmatprep.mubr.f32.mxu0 %v1545
  %1963 = vmatmul.mubr.f32.gmra.mrb[0].mxu0 %v1258
  %v1964 = vpop.f32.mrb[0].mxu0
  %v1965 = vadd.f32 %v1333, %v1964
  %v1966 = vpop.f32.mrb[0].mxu0
  %1967 = vmatprep.mubr.f32.mxu0 %v1548
  %1968 = vmatmul.mubr.f32.gmra.mrb[0].mxu0 %v1260
  %v1969 = vpop.f32.mrb[0].mxu0
  %v1970 = vadd.f32 %v1334, %v1969
  %v1971 = vpop.f32.mrb[0].mxu0
  %1972 = vmatprep.mubr.f32.mxu0 %v1551
  %1973 = vmatmul.mubr.f32.gmra.mrb[0].mxu0 %v1262
  %v1974 = vpop.f32.mrb[0].mxu0
  %v1975 = vadd.f32 %v1335, %v1974
  %v1976 = vpop.f32.mrb[0].mxu0
  %1977 = vdwg.mxu0
  %1978 = vst [vmem:[%s6] sm:$0xff] %v1620
  %1979 = vst [vmem:[%s6 + $0x8] sm:$0xff] %v1625
  %1980 = vst [vmem:[%s6 + $0x10] sm:$0xff] %v1630
  %1981 = vst [vmem:[%s6 + $0x18] sm:$0xff] %v1635
  %1982 = vst [vmem:[%s6 + $0x20] sm:$0xff] %v1640
  %1983 = vst [vmem:[%s6 + $0x28] sm:$0xff] %v1645
  %1984 = vst [vmem:[%s6 + $0x30] sm:$0xff] %v1650
  %1985 = vst [vmem:[%s6 + $0x38] sm:$0xff] %v1655
  %1986 = vst [vmem:[%s6 + $0x40] sm:$0xff] %v1660
  %1987 = vst [vmem:[%s6 + $0x48] sm:$0xff] %v1665
  %1988 = vst [vmem:[%s6 + $0x50] sm:$0xff] %v1670
  %1989 = vst [vmem:[%s6 + $0x58] sm:$0xff] %v1675
  %1990 = vst [vmem:[%s6 + $0x60] sm:$0xff] %v1680
  %1991 = vst [vmem:[%s6 + $0x68] sm:$0xff] %v1685
  %1992 = vst [vmem:[%s6 + $0x70] sm:$0xff] %v1690
  %1993 = vst [vmem:[%s6 + $0x78] sm:$0xff] %v1695
  %1994 = vst [vmem:[%s6 + $0x80] sm:$0xff] %v1700
  %1995 = vst [vmem:[%s6 + $0x88] sm:$0xff] %v1705
  %1996 = vst [vmem:[%s6 + $0x90] sm:$0xff] %v1710
  %1997 = vst [vmem:[%s6 + $0x98] sm:$0xff] %v1715
  %1998 = vst [vmem:[%s6 + $0xa0] sm:$0xff] %v1720
  %1999 = vst [vmem:[%s6 + $0xa8] sm:$0xff] %v1725
  %2000 = vst [vmem:[%s6 + $0xb0] sm:$0xff] %v1730
  %2001 = vst [vmem:[%s6 + $0xb8] sm:$0xff] %v1735
  %2002 = vst [vmem:[%s6 + $0xc0] sm:$0xff] %v1740
  %2003 = vst [vmem:[%s6 + $0xc8] sm:$0xff] %v1745
  %2004 = vst [vmem:[%s6 + $0xd0] sm:$0xff] %v1750
  %2005 = vst [vmem:[%s6 + $0xd8] sm:$0xff] %v1755
  %2006 = vst [vmem:[%s6 + $0xe0] sm:$0xff] %v1760
  %2007 = vst [vmem:[%s6 + $0xe8] sm:$0xff] %v1765
  %2008 = vst [vmem:[%s6 + $0xf0] sm:$0xff] %v1770
  %2009 = vst [vmem:[%s6 + $0xf8] sm:$0xff] %v1775
  %2010 = vst [vmem:[%s6 + $0x100] sm:$0xff] %v1780
  %2011 = vst [vmem:[%s6 + $0x108] sm:$0xff] %v1785
  %2012 = vst [vmem:[%s6 + $0x110] sm:$0xff] %v1790
  %2013 = vst [vmem:[%s6 + $0x118] sm:$0xff] %v1795
  %2014 = vst [vmem:[%s6 + $0x120] sm:$0xff] %v1800
  %2015 = vst [vmem:[%s6 + $0x128] sm:$0xff] %v1805
  %2016 = vst [vmem:[%s6 + $0x130] sm:$0xff] %v1810
  %2017 = vst [vmem:[%s6 + $0x138] sm:$0xff] %v1815
  %2018 = vst [vmem:[%s6 + $0x140] sm:$0xff] %v1820
  %2019 = vst [vmem:[%s6 + $0x148] sm:$0xff] %v1825
  %2020 = vst [vmem:[%s6 + $0x150] sm:$0xff] %v1830
  %2021 = vst [vmem:[%s6 + $0x158] sm:$0xff] %v1835
  %2022 = vst [vmem:[%s6 + $0x160] sm:$0xff] %v1840
  %2023 = vst [vmem:[%s6 + $0x168] sm:$0xff] %v1845
  %2024 = vst [vmem:[%s6 + $0x170] sm:$0xff] %v1850
  %2025 = vst [vmem:[%s6 + $0x178] sm:$0xff] %v1855
  %2026 = vst [vmem:[%s6 + $0x180] sm:$0xff] %v1860
  %2027 = vst [vmem:[%s6 + $0x188] sm:$0xff] %v1865
  %2028 = vst [vmem:[%s6 + $0x190] sm:$0xff] %v1870
  %2029 = vst [vmem:[%s6 + $0x198] sm:$0xff] %v1875
  %2030 = vst [vmem:[%s6 + $0x1a0] sm:$0xff] %v1880
  %2031 = vst [vmem:[%s6 + $0x1a8] sm:$0xff] %v1885
  %2032 = vst [vmem:[%s6 + $0x1b0] sm:$0xff] %v1890
  %2033 = vst [vmem:[%s6 + $0x1b8] sm:$0xff] %v1895
  %2034 = vst [vmem:[%s6 + $0x1c0] sm:$0xff] %v1900
  %2035 = vst [vmem:[%s6 + $0x1c8] sm:$0xff] %v1905
  %2036 = vst [vmem:[%s6 + $0x1d0] sm:$0xff] %v1910
  %2037 = vst [vmem:[%s6 + $0x1d8] sm:$0xff] %v1915
  %2038 = vst [vmem:[%s6 + $0x1e0] sm:$0xff] %v1920
  %2039 = vst [vmem:[%s6 + $0x1e8] sm:$0xff] %v1925
  %2040 = vst [vmem:[%s6 + $0x1f0] sm:$0xff] %v1930
  %2041 = vst [vmem:[%s6 + $0x1f8] sm:$0xff] %v1935
  %2042 = vst [vmem:[%s6 + $0x200] sm:$0xff] %v1940
  %2043 = vst [vmem:[%s6 + $0x208] sm:$0xff] %v1945
  %2044 = vst [vmem:[%s6 + $0x210] sm:$0xff] %v1950
  %2045 = vst [vmem:[%s6 + $0x218] sm:$0xff] %v1955
  %2046 = vst [vmem:[%s6 + $0x220] sm:$0xff] %v1960
  %2047 = vst [vmem:[%s6 + $0x228] sm:$0xff] %v1965
  %2048 = vst [vmem:[%s6 + $0x230] sm:$0xff] %v1970
  %2049 = vst [vmem:[%s6 + $0x238] sm:$0xff] %v1975
  // Predicated region
  $region26: #{my_nn_forward.14} parent=0 // pred_check
    _
  $region27: #{my_nn_forward.14} parent=0 // pred_check_branch
    %2051 = sbr.rel (0) target = $region29
  $region28: #{my_nn_forward.14} parent=0 // pred_region
    _
  $region29: #{my_nn_forward.14} parent=0 // pred_fallthru
    _
  // Predicated region
  $region30: #{my_nn_forward.14} parent=0 // pred_check
    _
  $region31: #{my_nn_forward.14} parent=0 // pred_check_branch
    %2053 = sbr.rel (0) target = $region33
  $region32: #{my_nn_forward.14} parent=0 // pred_region
    _
  $region33: #{my_nn_forward.14} parent=0 // pred_fallthru
    _

// kernel: my_nn_forward.15
$region0: #{my_nn_forward.15}
  #allocation0 [shape = 'u32[]', space=smem, size = 0x4, offset = 0x4, fixed_abs, tag = 'smem constant byte address 0x4 - core index']
  #allocation1 [shape = 'u32[144,128]{1,0:T(1,128)}', space=vmem, size = 0x12000, scoped, tag = 'internal scratch']
  %s0 = inlined_call_operand.vmem [shape: bf16[576,384], index: 0, kind: input, shape index: {}]
  %s1 = inlined_call_operand.vmem [shape: bf16[384,128], index: 1, kind: input, shape index: {}]
  %s2 = inlined_call_operand.vmem [shape: f32[1,128], index: 2, kind: input, shape index: {}]
  %s3 = inlined_call_operand.vmem [shape: f32[576,128], index: 3, kind: input, shape index: {}]
  %s4 = inlined_call_operand.hbm [shape: f32[576,128], index: 4, kind: output, shape index: {}]
  %s5 = sld [smem:[#allocation0]]
  $region26: #{my_nn_forward.15} parent=0
    _
  %s7 = ssub.s32 1, %s5
  %s8 = scalar_select 0, %s7, %s5
  $region1: #{my_nn_forward.15} parent=0
    #allocation2 [shape = 'u8[294912]{0}', space=vmem, size = 0x48000, scoped, tag = 'output window, operand 0, single buffered']
    #allocation3 [shape = 's32[1]{0}', space=sflag, size = 0x4, scoped, tag = 'scoped memory for my_nn_forward.15']
    %9 = vsyncpa [#allocation3], 0
    // Predicated region
    $region2: #{my_nn_forward.15} parent=1 // pred_check
      _
    $region3: #{my_nn_forward.15} parent=1 // pred_check_branch
      %11 = sbr.rel (0) target = $region5
    $region4: #{my_nn_forward.15} parent=1 // pred_region
      _
    $region5: #{my_nn_forward.15} parent=1 // pred_fallthru
      _
    // Predicated region
    $region6: #{my_nn_forward.15} parent=1 // pred_check
      _
    $region7: #{my_nn_forward.15} parent=1 // pred_check_branch
      %13 = sbr.rel (0) target = $region9
    $region8: #{my_nn_forward.15} parent=1 // pred_region
      _
    $region9: #{my_nn_forward.15} parent=1 // pred_fallthru
      _
    // Predicated region
    $region10: #{my_nn_forward.15} parent=1 // pred_check
      _
    $region11: #{my_nn_forward.15} parent=1 // pred_check_branch
      %15 = sbr.rel (0) target = $region13
    $region12: #{my_nn_forward.15} parent=1 // pred_region
      _
    $region13: #{my_nn_forward.15} parent=1 // pred_fallthru
      _
    // Predicated region
    $region14: #{my_nn_forward.15} parent=1 // pred_check
      _
    $region15: #{my_nn_forward.15} parent=1 // pred_check_branch
      %17 = sbr.rel (0) target = $region17
    $region16: #{my_nn_forward.15} parent=1 // pred_region
      _
    $region17: #{my_nn_forward.15} parent=1 // pred_fallthru
      _
    %v19 = vld [vmem:[%s0] sm:$0xff]
    %v20 = vld [vmem:[%s0 + $0x8] sm:$0xf]
    %v21 = vld [vmem:[%s0 + $0xc] sm:$0xff]
    %v22 = vld [vmem:[%s0 + $0x14] sm:$0xf]
    %v23 = vld [vmem:[%s0 + $0x18] sm:$0xff]
    %v24 = vld [vmem:[%s0 + $0x20] sm:$0xf]
    %v25 = vld [vmem:[%s0 + $0x24] sm:$0xff]
    %v26 = vld [vmem:[%s0 + $0x2c] sm:$0xf]
    %v27 = vld [vmem:[%s0 + $0x30] sm:$0xff]
    %v28 = vld [vmem:[%s0 + $0x38] sm:$0xf]
    %v29 = vld [vmem:[%s0 + $0x3c] sm:$0xff]
    %v30 = vld [vmem:[%s0 + $0x44] sm:$0xf]
    %v31 = vld [vmem:[%s0 + $0x48] sm:$0xff]
    %v32 = vld [vmem:[%s0 + $0x50] sm:$0xf]
    %v33 = vld [vmem:[%s0 + $0x54] sm:$0xff]
    %v34 = vld [vmem:[%s0 + $0x5c] sm:$0xf]
    %v35 = vld [vmem:[%s0 + $0x60] sm:$0xff]
    %v36 = vld [vmem:[%s0 + $0x68] sm:$0xf]
    %v37 = vld [vmem:[%s0 + $0x6c] sm:$0xff]
    %v38 = vld [vmem:[%s0 + $0x74] sm:$0xf]
    %v39 = vld [vmem:[%s0 + $0x78] sm:$0xff]
    %v40 = vld [vmem:[%s0 + $0x80] sm:$0xf]
    %v41 = vld [vmem:[%s0 + $0x84] sm:$0xff]
    %v42 = vld [vmem:[%s0 + $0x8c] sm:$0xf]
    %v43 = vld [vmem:[%s0 + $0x90] sm:$0xff]
    %v44 = vld [vmem:[%s0 + $0x98] sm:$0xf]
    %v45 = vld [vmem:[%s0 + $0x9c] sm:$0xff]
    %v46 = vld [vmem:[%s0 + $0xa4] sm:$0xf]
    %v47 = vld [vmem:[%s0 + $0xa8] sm:$0xff]
    %v48 = vld [vmem:[%s0 + $0xb0] sm:$0xf]
    %v49 = vld [vmem:[%s0 + $0xb4] sm:$0xff]
    %v50 = vld [vmem:[%s0 + $0xbc] sm:$0xf]
    %v51 = vld [vmem:[%s0 + $0xc0] sm:$0xff]
    %v52 = vld [vmem:[%s0 + $0xc8] sm:$0xf]
    %v53 = vld [vmem:[%s0 + $0xcc] sm:$0xff]
    %v54 = vld [vmem:[%s0 + $0xd4] sm:$0xf]
    %v55 = vld [vmem:[%s0 + $0xd8] sm:$0xff]
    %v56 = vld [vmem:[%s0 + $0xe0] sm:$0xf]
    %v57 = vld [vmem:[%s0 + $0xe4] sm:$0xff]
    %v58 = vld [vmem:[%s0 + $0xec] sm:$0xf]
    %v59 = vld [vmem:[%s0 + $0xf0] sm:$0xff]
    %v60 = vld [vmem:[%s0 + $0xf8] sm:$0xf]
    %v61 = vld [vmem:[%s0 + $0xfc] sm:$0xff]
    %v62 = vld [vmem:[%s0 + $0x104] sm:$0xf]
    %v63 = vld [vmem:[%s0 + $0x108] sm:$0xff]
    %v64 = vld [vmem:[%s0 + $0x110] sm:$0xf]
    %v65 = vld [vmem:[%s0 + $0x114] sm:$0xff]
    %v66 = vld [vmem:[%s0 + $0x11c] sm:$0xf]
    %v67 = vld [vmem:[%s0 + $0x120] sm:$0xff]
    %v68 = vld [vmem:[%s0 + $0x128] sm:$0xf]
    %v69 = vld [vmem:[%s0 + $0x12c] sm:$0xff]
    %v70 = vld [vmem:[%s0 + $0x134] sm:$0xf]
    %v71 = vld [vmem:[%s0 + $0x138] sm:$0xff]
    %v72 = vld [vmem:[%s0 + $0x140] sm:$0xf]
    %v73 = vld [vmem:[%s0 + $0x144] sm:$0xff]
    %v74 = vld [vmem:[%s0 + $0x14c] sm:$0xf]
    %v75 = vld [vmem:[%s0 + $0x150] sm:$0xff]
    %v76 = vld [vmem:[%s0 + $0x158] sm:$0xf]
    %v77 = vld [vmem:[%s0 + $0x15c] sm:$0xff]
    %v78 = vld [vmem:[%s0 + $0x164] sm:$0xf]
    %v79 = vld [vmem:[%s0 + $0x168] sm:$0xff]
    %v80 = vld [vmem:[%s0 + $0x170] sm:$0xf]
    %v81 = vld [vmem:[%s0 + $0x174] sm:$0xff]
    %v82 = vld [vmem:[%s0 + $0x17c] sm:$0xf]
    %v83 = vld [vmem:[%s0 + $0x180] sm:$0xff]
    %v84 = vld [vmem:[%s0 + $0x188] sm:$0xf]
    %v85 = vld [vmem:[%s0 + $0x18c] sm:$0xff]
    %v86 = vld [vmem:[%s0 + $0x194] sm:$0xf]
    %v87 = vld [vmem:[%s0 + $0x198] sm:$0xff]
    %v88 = vld [vmem:[%s0 + $0x1a0] sm:$0xf]
    %v89 = vld [vmem:[%s0 + $0x1a4] sm:$0xff]
    %v90 = vld [vmem:[%s0 + $0x1ac] sm:$0xf]
    %v91 = vld [vmem:[%s0 + $0x1b0] sm:$0xff]
    %v92 = vld [vmem:[%s0 + $0x1b8] sm:$0xf]
    %v93 = vld [vmem:[%s0 + $0x1bc] sm:$0xff]
    %v94 = vld [vmem:[%s0 + $0x1c4] sm:$0xf]
    %v95 = vld [vmem:[%s0 + $0x1c8] sm:$0xff]
    %v96 = vld [vmem:[%s0 + $0x1d0] sm:$0xf]
    %v97 = vld [vmem:[%s0 + $0x1d4] sm:$0xff]
    %v98 = vld [vmem:[%s0 + $0x1dc] sm:$0xf]
    %v99 = vld [vmem:[%s0 + $0x1e0] sm:$0xff]
    %v100 = vld [vmem:[%s0 + $0x1e8] sm:$0xf]
    %v101 = vld [vmem:[%s0 + $0x1ec] sm:$0xff]
    %v102 = vld [vmem:[%s0 + $0x1f4] sm:$0xf]
    %v103 = vld [vmem:[%s0 + $0x1f8] sm:$0xff]
    %v104 = vld [vmem:[%s0 + $0x200] sm:$0xf]
    %v105 = vld [vmem:[%s0 + $0x204] sm:$0xff]
    %v106 = vld [vmem:[%s0 + $0x20c] sm:$0xf]
    %v107 = vld [vmem:[%s0 + $0x210] sm:$0xff]
    %v108 = vld [vmem:[%s0 + $0x218] sm:$0xf]
    %v109 = vld [vmem:[%s0 + $0x21c] sm:$0xff]
    %v110 = vld [vmem:[%s0 + $0x224] sm:$0xf]
    %v111 = vld [vmem:[%s0 + $0x228] sm:$0xff]
    %v112 = vld [vmem:[%s0 + $0x230] sm:$0xf]
    %v113 = vld [vmem:[%s0 + $0x234] sm:$0xff]
    %v114 = vld [vmem:[%s0 + $0x23c] sm:$0xf]
    %v115 = vld [vmem:[%s0 + $0x240] sm:$0xff]
    %v116 = vld [vmem:[%s0 + $0x248] sm:$0xf]
    %v117 = vld [vmem:[%s0 + $0x24c] sm:$0xff]
    %v118 = vld [vmem:[%s0 + $0x254] sm:$0xf]
    %v119 = vld [vmem:[%s0 + $0x258] sm:$0xff]
    %v120 = vld [vmem:[%s0 + $0x260] sm:$0xf]
    %v121 = vld [vmem:[%s0 + $0x264] sm:$0xff]
    %v122 = vld [vmem:[%s0 + $0x26c] sm:$0xf]
    %v123 = vld [vmem:[%s0 + $0x270] sm:$0xff]
    %v124 = vld [vmem:[%s0 + $0x278] sm:$0xf]
    %v125 = vld [vmem:[%s0 + $0x27c] sm:$0xff]
    %v126 = vld [vmem:[%s0 + $0x284] sm:$0xf]
    %v127 = vld [vmem:[%s0 + $0x288] sm:$0xff]
    %v128 = vld [vmem:[%s0 + $0x290] sm:$0xf]
    %v129 = vld [vmem:[%s0 + $0x294] sm:$0xff]
    %v130 = vld [vmem:[%s0 + $0x29c] sm:$0xf]
    %v131 = vld [vmem:[%s0 + $0x2a0] sm:$0xff]
    %v132 = vld [vmem:[%s0 + $0x2a8] sm:$0xf]
    %v133 = vld [vmem:[%s0 + $0x2ac] sm:$0xff]
    %v134 = vld [vmem:[%s0 + $0x2b4] sm:$0xf]
    %v135 = vld [vmem:[%s0 + $0x2b8] sm:$0xff]
    %v136 = vld [vmem:[%s0 + $0x2c0] sm:$0xf]
    %v137 = vld [vmem:[%s0 + $0x2c4] sm:$0xff]
    %v138 = vld [vmem:[%s0 + $0x2cc] sm:$0xf]
    %v139 = vld [vmem:[%s0 + $0x2d0] sm:$0xff]
    %v140 = vld [vmem:[%s0 + $0x2d8] sm:$0xf]
    %v141 = vld [vmem:[%s0 + $0x2dc] sm:$0xff]
    %v142 = vld [vmem:[%s0 + $0x2e4] sm:$0xf]
    %v143 = vld [vmem:[%s0 + $0x2e8] sm:$0xff]
    %v144 = vld [vmem:[%s0 + $0x2f0] sm:$0xf]
    %v145 = vld [vmem:[%s0 + $0x2f4] sm:$0xff]
    %v146 = vld [vmem:[%s0 + $0x2fc] sm:$0xf]
    %v147 = vld [vmem:[%s0 + $0x300] sm:$0xff]
    %v148 = vld [vmem:[%s0 + $0x308] sm:$0xf]
    %v149 = vld [vmem:[%s0 + $0x30c] sm:$0xff]
    %v150 = vld [vmem:[%s0 + $0x314] sm:$0xf]
    %v151 = vld [vmem:[%s0 + $0x318] sm:$0xff]
    %v152 = vld [vmem:[%s0 + $0x320] sm:$0xf]
    %v153 = vld [vmem:[%s0 + $0x324] sm:$0xff]
    %v154 = vld [vmem:[%s0 + $0x32c] sm:$0xf]
    %v155 = vld [vmem:[%s0 + $0x330] sm:$0xff]
    %v156 = vld [vmem:[%s0 + $0x338] sm:$0xf]
    %v157 = vld [vmem:[%s0 + $0x33c] sm:$0xff]
    %v158 = vld [vmem:[%s0 + $0x344] sm:$0xf]
    %v159 = vld [vmem:[%s0 + $0x348] sm:$0xff]
    %v160 = vld [vmem:[%s0 + $0x350] sm:$0xf]
    %v161 = vld [vmem:[%s0 + $0x354] sm:$0xff]
    %v162 = vld [vmem:[%s0 + $0x35c] sm:$0xf]
    %v163 = vld [vmem:[%s1] sm:$0xf]
    %v164 = vld [vmem:[%s1 + $0x4] sm:$0xf]
    %v165 = vld [vmem:[%s1 + $0x8] sm:$0xf]
    %v166 = vld [vmem:[%s1 + $0xc] sm:$0xf]
    %v167 = vld [vmem:[%s1 + $0x10] sm:$0xf]
    %v168 = vld [vmem:[%s1 + $0x14] sm:$0xf]
    %v169 = vld [vmem:[%s1 + $0x18] sm:$0xf]
    %v170 = vld [vmem:[%s1 + $0x1c] sm:$0xf]
    %v171 = vld [vmem:[%s1 + $0x20] sm:$0xf]
    %v172 = vld [vmem:[%s1 + $0x24] sm:$0xf]
    %v173 = vld [vmem:[%s1 + $0x28] sm:$0xf]
    %v174 = vld [vmem:[%s1 + $0x2c] sm:$0xf]
    %v175 = vld [vmem:[%s1 + $0x30] sm:$0xf]
    %v176 = vld [vmem:[%s1 + $0x34] sm:$0xf]
    %v177 = vld [vmem:[%s1 + $0x38] sm:$0xf]
    %v178 = vld [vmem:[%s1 + $0x3c] sm:$0xf]
    %v179 = vld [vmem:[%s1 + $0x40] sm:$0xf]
    %v180 = vld [vmem:[%s1 + $0x44] sm:$0xf]
    %v181 = vld [vmem:[%s1 + $0x48] sm:$0xf]
    %v182 = vld [vmem:[%s1 + $0x4c] sm:$0xf]
    %v183 = vld [vmem:[%s1 + $0x50] sm:$0xf]
    %v184 = vld [vmem:[%s1 + $0x54] sm:$0xf]
    %v185 = vld [vmem:[%s1 + $0x58] sm:$0xf]
    %v186 = vld [vmem:[%s1 + $0x5c] sm:$0xf]
    %v187 = vld [vmem:[%s1 + $0x60] sm:$0xf]
    %v188 = vld [vmem:[%s1 + $0x64] sm:$0xf]
    %v189 = vld [vmem:[%s1 + $0x68] sm:$0xf]
    %v190 = vld [vmem:[%s1 + $0x6c] sm:$0xf]
    %v191 = vld [vmem:[%s1 + $0x70] sm:$0xf]
    %v192 = vld [vmem:[%s1 + $0x74] sm:$0xf]
    %v193 = vld [vmem:[%s1 + $0x78] sm:$0xf]
    %v194 = vld [vmem:[%s1 + $0x7c] sm:$0xf]
    %v195 = vld [vmem:[%s1 + $0x80] sm:$0xf]
    %v196 = vld [vmem:[%s1 + $0x84] sm:$0xf]
    %v197 = vld [vmem:[%s1 + $0x88] sm:$0xf]
    %v198 = vld [vmem:[%s1 + $0x8c] sm:$0xf]
    %v199 = vld [vmem:[%s1 + $0x90] sm:$0xf]
    %v200 = vld [vmem:[%s1 + $0x94] sm:$0xf]
    %v201 = vld [vmem:[%s1 + $0x98] sm:$0xf]
    %v202 = vld [vmem:[%s1 + $0x9c] sm:$0xf]
    %v203 = vld [vmem:[%s1 + $0xa0] sm:$0xf]
    %v204 = vld [vmem:[%s1 + $0xa4] sm:$0xf]
    %v205 = vld [vmem:[%s1 + $0xa8] sm:$0xf]
    %v206 = vld [vmem:[%s1 + $0xac] sm:$0xf]
    %v207 = vld [vmem:[%s1 + $0xb0] sm:$0xf]
    %v208 = vld [vmem:[%s1 + $0xb4] sm:$0xf]
    %v209 = vld [vmem:[%s1 + $0xb8] sm:$0xf]
    %v210 = vld [vmem:[%s1 + $0xbc] sm:$0xf]
    %v211 = vld [vmem:[%s2] sm:$0x1]
    %v213 = vlaneseq
    %v214 = vshrl.u32 %v213, 7
    %v215 = vsub.s32 0, %v214
    %v216 = vrot.slane %v211, %v215
    %v362 = vunpack.c.l.b16 %v19
    %v363 = vunpack.c.h.b16 %v19
    %v364 = vunpack.c.l.b16 %v20
    %v365 = vunpack.c.l.b16 %v21
    %v366 = vunpack.c.h.b16 %v21
    %v367 = vunpack.c.l.b16 %v22
    %v368 = vunpack.c.l.b16 %v23
    %v369 = vunpack.c.h.b16 %v23
    %v370 = vunpack.c.l.b16 %v24
    %v371 = vunpack.c.l.b16 %v25
    %v372 = vunpack.c.h.b16 %v25
    %v373 = vunpack.c.l.b16 %v26
    %v374 = vunpack.c.l.b16 %v27
    %v375 = vunpack.c.h.b16 %v27
    %v376 = vunpack.c.l.b16 %v28
    %v377 = vunpack.c.l.b16 %v29
    %v378 = vunpack.c.h.b16 %v29
    %v379 = vunpack.c.l.b16 %v30
    %v380 = vunpack.c.l.b16 %v31
    %v381 = vunpack.c.h.b16 %v31
    %v382 = vunpack.c.l.b16 %v32
    %v383 = vunpack.c.l.b16 %v33
    %v384 = vunpack.c.h.b16 %v33
    %v385 = vunpack.c.l.b16 %v34
    %v386 = vunpack.c.l.b16 %v35
    %v387 = vunpack.c.h.b16 %v35
    %v388 = vunpack.c.l.b16 %v36
    %v389 = vunpack.c.l.b16 %v37
    %v390 = vunpack.c.h.b16 %v37
    %v391 = vunpack.c.l.b16 %v38
    %v392 = vunpack.c.l.b16 %v39
    %v393 = vunpack.c.h.b16 %v39
    %v394 = vunpack.c.l.b16 %v40
    %v395 = vunpack.c.l.b16 %v41
    %v396 = vunpack.c.h.b16 %v41
    %v397 = vunpack.c.l.b16 %v42
    %v398 = vunpack.c.l.b16 %v43
    %v399 = vunpack.c.h.b16 %v43
    %v400 = vunpack.c.l.b16 %v44
    %v401 = vunpack.c.l.b16 %v45
    %v402 = vunpack.c.h.b16 %v45
    %v403 = vunpack.c.l.b16 %v46
    %v404 = vunpack.c.l.b16 %v47
    %v405 = vunpack.c.h.b16 %v47
    %v406 = vunpack.c.l.b16 %v48
    %v407 = vunpack.c.l.b16 %v49
    %v408 = vunpack.c.h.b16 %v49
    %v409 = vunpack.c.l.b16 %v50
    %v410 = vunpack.c.l.b16 %v51
    %v411 = vunpack.c.h.b16 %v51
    %v412 = vunpack.c.l.b16 %v52
    %v413 = vunpack.c.l.b16 %v53
    %v414 = vunpack.c.h.b16 %v53
    %v415 = vunpack.c.l.b16 %v54
    %v416 = vunpack.c.l.b16 %v55
    %v417 = vunpack.c.h.b16 %v55
    %v418 = vunpack.c.l.b16 %v56
    %v419 = vunpack.c.l.b16 %v57
    %v420 = vunpack.c.h.b16 %v57
    %v421 = vunpack.c.l.b16 %v58
    %v422 = vunpack.c.l.b16 %v59
    %v423 = vunpack.c.h.b16 %v59
    %v424 = vunpack.c.l.b16 %v60
    %v425 = vunpack.c.l.b16 %v61
    %v426 = vunpack.c.h.b16 %v61
    %v427 = vunpack.c.l.b16 %v62
    %v428 = vunpack.c.l.b16 %v63
    %v429 = vunpack.c.h.b16 %v63
    %v430 = vunpack.c.l.b16 %v64
    %v431 = vunpack.c.l.b16 %v65
    %v432 = vunpack.c.h.b16 %v65
    %v433 = vunpack.c.l.b16 %v66
    %v434 = vunpack.c.l.b16 %v67
    %v435 = vunpack.c.h.b16 %v67
    %v436 = vunpack.c.l.b16 %v68
    %v437 = vunpack.c.l.b16 %v69
    %v438 = vunpack.c.h.b16 %v69
    %v439 = vunpack.c.l.b16 %v70
    %v440 = vunpack.c.l.b16 %v71
    %v441 = vunpack.c.h.b16 %v71
    %v442 = vunpack.c.l.b16 %v72
    %v443 = vunpack.c.l.b16 %v73
    %v444 = vunpack.c.h.b16 %v73
    %v445 = vunpack.c.l.b16 %v74
    %v446 = vunpack.c.l.b16 %v75
    %v447 = vunpack.c.h.b16 %v75
    %v448 = vunpack.c.l.b16 %v76
    %v449 = vunpack.c.l.b16 %v77
    %v450 = vunpack.c.h.b16 %v77
    %v451 = vunpack.c.l.b16 %v78
    %v452 = vunpack.c.l.b16 %v79
    %v453 = vunpack.c.h.b16 %v79
    %v454 = vunpack.c.l.b16 %v80
    %v455 = vunpack.c.l.b16 %v81
    %v456 = vunpack.c.h.b16 %v81
    %v457 = vunpack.c.l.b16 %v82
    %v458 = vunpack.c.l.b16 %v83
    %v459 = vunpack.c.h.b16 %v83
    %v460 = vunpack.c.l.b16 %v84
    %v461 = vunpack.c.l.b16 %v85
    %v462 = vunpack.c.h.b16 %v85
    %v463 = vunpack.c.l.b16 %v86
    %v464 = vunpack.c.l.b16 %v87
    %v465 = vunpack.c.h.b16 %v87
    %v466 = vunpack.c.l.b16 %v88
    %v467 = vunpack.c.l.b16 %v89
    %v468 = vunpack.c.h.b16 %v89
    %v469 = vunpack.c.l.b16 %v90
    %v470 = vunpack.c.l.b16 %v91
    %v471 = vunpack.c.h.b16 %v91
    %v472 = vunpack.c.l.b16 %v92
    %v473 = vunpack.c.l.b16 %v93
    %v474 = vunpack.c.h.b16 %v93
    %v475 = vunpack.c.l.b16 %v94
    %v476 = vunpack.c.l.b16 %v95
    %v477 = vunpack.c.h.b16 %v95
    %v478 = vunpack.c.l.b16 %v96
    %v479 = vunpack.c.l.b16 %v97
    %v480 = vunpack.c.h.b16 %v97
    %v481 = vunpack.c.l.b16 %v98
    %v482 = vunpack.c.l.b16 %v99
    %v483 = vunpack.c.h.b16 %v99
    %v484 = vunpack.c.l.b16 %v100
    %v485 = vunpack.c.l.b16 %v101
    %v486 = vunpack.c.h.b16 %v101
    %v487 = vunpack.c.l.b16 %v102
    %v488 = vunpack.c.l.b16 %v103
    %v489 = vunpack.c.h.b16 %v103
    %v490 = vunpack.c.l.b16 %v104
    %v491 = vunpack.c.l.b16 %v105
    %v492 = vunpack.c.h.b16 %v105
    %v493 = vunpack.c.l.b16 %v106
    %v494 = vunpack.c.l.b16 %v107
    %v495 = vunpack.c.h.b16 %v107
    %v496 = vunpack.c.l.b16 %v108
    %v497 = vunpack.c.l.b16 %v109
    %v498 = vunpack.c.h.b16 %v109
    %v499 = vunpack.c.l.b16 %v110
    %v500 = vunpack.c.l.b16 %v111
    %v501 = vunpack.c.h.b16 %v111
    %v502 = vunpack.c.l.b16 %v112
    %v503 = vunpack.c.l.b16 %v113
    %v504 = vunpack.c.h.b16 %v113
    %v505 = vunpack.c.l.b16 %v114
    %v506 = vunpack.c.l.b16 %v115
    %v507 = vunpack.c.h.b16 %v115
    %v508 = vunpack.c.l.b16 %v116
    %v509 = vunpack.c.l.b16 %v117
    %v510 = vunpack.c.h.b16 %v117
    %v511 = vunpack.c.l.b16 %v118
    %v512 = vunpack.c.l.b16 %v119
    %v513 = vunpack.c.h.b16 %v119
    %v514 = vunpack.c.l.b16 %v120
    %v515 = vunpack.c.l.b16 %v121
    %v516 = vunpack.c.h.b16 %v121
    %v517 = vunpack.c.l.b16 %v122
    %v518 = vunpack.c.l.b16 %v123
    %v519 = vunpack.c.h.b16 %v123
    %v520 = vunpack.c.l.b16 %v124
    %v521 = vunpack.c.l.b16 %v125
    %v522 = vunpack.c.h.b16 %v125
    %v523 = vunpack.c.l.b16 %v126
    %v524 = vunpack.c.l.b16 %v127
    %v525 = vunpack.c.h.b16 %v127
    %v526 = vunpack.c.l.b16 %v128
    %v527 = vunpack.c.l.b16 %v129
    %v528 = vunpack.c.h.b16 %v129
    %v529 = vunpack.c.l.b16 %v130
    %v530 = vunpack.c.l.b16 %v131
    %v531 = vunpack.c.h.b16 %v131
    %v532 = vunpack.c.l.b16 %v132
    %v533 = vunpack.c.l.b16 %v133
    %v534 = vunpack.c.h.b16 %v133
    %v535 = vunpack.c.l.b16 %v134
    %v536 = vunpack.c.l.b16 %v135
    %v537 = vunpack.c.h.b16 %v135
    %v538 = vunpack.c.l.b16 %v136
    %v539 = vunpack.c.l.b16 %v137
    %v540 = vunpack.c.h.b16 %v137
    %v541 = vunpack.c.l.b16 %v138
    %v542 = vunpack.c.l.b16 %v139
    %v543 = vunpack.c.h.b16 %v139
    %v544 = vunpack.c.l.b16 %v140
    %v545 = vunpack.c.l.b16 %v141
    %v546 = vunpack.c.h.b16 %v141
    %v547 = vunpack.c.l.b16 %v142
    %v548 = vunpack.c.l.b16 %v143
    %v549 = vunpack.c.h.b16 %v143
    %v550 = vunpack.c.l.b16 %v144
    %v551 = vunpack.c.l.b16 %v145
    %v552 = vunpack.c.h.b16 %v145
    %v553 = vunpack.c.l.b16 %v146
    %v554 = vunpack.c.l.b16 %v147
    %v555 = vunpack.c.h.b16 %v147
    %v556 = vunpack.c.l.b16 %v148
    %v557 = vunpack.c.l.b16 %v149
    %v558 = vunpack.c.h.b16 %v149
    %v559 = vunpack.c.l.b16 %v150
    %v560 = vunpack.c.l.b16 %v151
    %v561 = vunpack.c.h.b16 %v151
    %v562 = vunpack.c.l.b16 %v152
    %v563 = vunpack.c.l.b16 %v153
    %v564 = vunpack.c.h.b16 %v153
    %v565 = vunpack.c.l.b16 %v154
    %v566 = vunpack.c.l.b16 %v155
    %v567 = vunpack.c.h.b16 %v155
    %v568 = vunpack.c.l.b16 %v156
    %v569 = vunpack.c.l.b16 %v157
    %v570 = vunpack.c.h.b16 %v157
    %v571 = vunpack.c.l.b16 %v158
    %v572 = vunpack.c.l.b16 %v159
    %v573 = vunpack.c.h.b16 %v159
    %v574 = vunpack.c.l.b16 %v160
    %v575 = vunpack.c.l.b16 %v161
    %v576 = vunpack.c.h.b16 %v161
    %v577 = vunpack.c.l.b16 %v162
    %v578 = vpack.c.b16 %v365, %v362
    %v579 = vpack.c.b16 %v366, %v363
    %v580 = vpack.c.b16 %v367, %v364
    %v581 = vpack.c.b16 %v371, %v368
    %v582 = vpack.c.b16 %v372, %v369
    %v583 = vpack.c.b16 %v373, %v370
    %v584 = vpack.c.b16 %v377, %v374
    %v585 = vpack.c.b16 %v378, %v375
    %v586 = vpack.c.b16 %v379, %v376
    %v587 = vpack.c.b16 %v383, %v380
    %v588 = vpack.c.b16 %v384, %v381
    %v589 = vpack.c.b16 %v385, %v382
    %v590 = vpack.c.b16 %v389, %v386
    %v591 = vpack.c.b16 %v390, %v387
    %v592 = vpack.c.b16 %v391, %v388
    %v593 = vpack.c.b16 %v395, %v392
    %v594 = vpack.c.b16 %v396, %v393
    %v595 = vpack.c.b16 %v397, %v394
    %v596 = vpack.c.b16 %v401, %v398
    %v597 = vpack.c.b16 %v402, %v399
    %v598 = vpack.c.b16 %v403, %v400
    %v599 = vpack.c.b16 %v407, %v404
    %v600 = vpack.c.b16 %v408, %v405
    %v601 = vpack.c.b16 %v409, %v406
    %v602 = vpack.c.b16 %v413, %v410
    %v603 = vpack.c.b16 %v414, %v411
    %v604 = vpack.c.b16 %v415, %v412
    %v605 = vpack.c.b16 %v419, %v416
    %v606 = vpack.c.b16 %v420, %v417
    %v607 = vpack.c.b16 %v421, %v418
    %v608 = vpack.c.b16 %v425, %v422
    %v609 = vpack.c.b16 %v426, %v423
    %v610 = vpack.c.b16 %v427, %v424
    %v611 = vpack.c.b16 %v431, %v428
    %v612 = vpack.c.b16 %v432, %v429
    %v613 = vpack.c.b16 %v433, %v430
    %v614 = vpack.c.b16 %v437, %v434
    %v615 = vpack.c.b16 %v438, %v435
    %v616 = vpack.c.b16 %v439, %v436
    %v617 = vpack.c.b16 %v443, %v440
    %v618 = vpack.c.b16 %v444, %v441
    %v619 = vpack.c.b16 %v445, %v442
    %v620 = vpack.c.b16 %v449, %v446
    %v621 = vpack.c.b16 %v450, %v447
    %v622 = vpack.c.b16 %v451, %v448
    %v623 = vpack.c.b16 %v455, %v452
    %v624 = vpack.c.b16 %v456, %v453
    %v625 = vpack.c.b16 %v457, %v454
    %v626 = vpack.c.b16 %v461, %v458
    %v627 = vpack.c.b16 %v462, %v459
    %v628 = vpack.c.b16 %v463, %v460
    %v629 = vpack.c.b16 %v467, %v464
    %v630 = vpack.c.b16 %v468, %v465
    %v631 = vpack.c.b16 %v469, %v466
    %v632 = vpack.c.b16 %v473, %v470
    %v633 = vpack.c.b16 %v474, %v471
    %v634 = vpack.c.b16 %v475, %v472
    %v635 = vpack.c.b16 %v479, %v476
    %v636 = vpack.c.b16 %v480, %v477
    %v637 = vpack.c.b16 %v481, %v478
    %v638 = vpack.c.b16 %v485, %v482
    %v639 = vpack.c.b16 %v486, %v483
    %v640 = vpack.c.b16 %v487, %v484
    %v641 = vpack.c.b16 %v491, %v488
    %v642 = vpack.c.b16 %v492, %v489
    %v643 = vpack.c.b16 %v493, %v490
    %v644 = vpack.c.b16 %v497, %v494
    %v645 = vpack.c.b16 %v498, %v495
    %v646 = vpack.c.b16 %v499, %v496
    %v647 = vpack.c.b16 %v503, %v500
    %v648 = vpack.c.b16 %v504, %v501
    %v649 = vpack.c.b16 %v505, %v502
    %v650 = vpack.c.b16 %v509, %v506
    %v651 = vpack.c.b16 %v510, %v507
    %v652 = vpack.c.b16 %v511, %v508
    %v653 = vpack.c.b16 %v515, %v512
    %v654 = vpack.c.b16 %v516, %v513
    %v655 = vpack.c.b16 %v517, %v514
    %v656 = vpack.c.b16 %v521, %v518
    %v657 = vpack.c.b16 %v522, %v519
    %v658 = vpack.c.b16 %v523, %v520
    %v659 = vpack.c.b16 %v527, %v524
    %v660 = vpack.c.b16 %v528, %v525
    %v661 = vpack.c.b16 %v529, %v526
    %v662 = vpack.c.b16 %v533, %v530
    %v663 = vpack.c.b16 %v534, %v531
    %v664 = vpack.c.b16 %v535, %v532
    %v665 = vpack.c.b16 %v539, %v536
    %v666 = vpack.c.b16 %v540, %v537
    %v667 = vpack.c.b16 %v541, %v538
    %v668 = vpack.c.b16 %v545, %v542
    %v669 = vpack.c.b16 %v546, %v543
    %v670 = vpack.c.b16 %v547, %v544
    %v671 = vpack.c.b16 %v551, %v548
    %v672 = vpack.c.b16 %v552, %v549
    %v673 = vpack.c.b16 %v553, %v550
    %v674 = vpack.c.b16 %v557, %v554
    %v675 = vpack.c.b16 %v558, %v555
    %v676 = vpack.c.b16 %v559, %v556
    %v677 = vpack.c.b16 %v563, %v560
    %v678 = vpack.c.b16 %v564, %v561
    %v679 = vpack.c.b16 %v565, %v562
    %v680 = vpack.c.b16 %v569, %v566
    %v681 = vpack.c.b16 %v570, %v567
    %v682 = vpack.c.b16 %v571, %v568
    %v683 = vpack.c.b16 %v575, %v572
    %v684 = vpack.c.b16 %v576, %v573
    %v685 = vpack.c.b16 %v577, %v574
    %v842 = vunpack.c.l.b16 %v163
    %v843 = vunpack.c.l.b16 %v164
    %v844 = vunpack.c.l.b16 %v165
    %v845 = vunpack.c.l.b16 %v166
    %v846 = vunpack.c.l.b16 %v167
    %v847 = vunpack.c.l.b16 %v168
    %v848 = vunpack.c.l.b16 %v169
    %v849 = vunpack.c.l.b16 %v170
    %v850 = vunpack.c.l.b16 %v171
    %v851 = vunpack.c.l.b16 %v172
    %v852 = vunpack.c.l.b16 %v173
    %v853 = vunpack.c.l.b16 %v174
    %v854 = vunpack.c.l.b16 %v175
    %v855 = vunpack.c.l.b16 %v176
    %v856 = vunpack.c.l.b16 %v177
    %v857 = vunpack.c.l.b16 %v178
    %v858 = vunpack.c.l.b16 %v179
    %v859 = vunpack.c.l.b16 %v180
    %v860 = vunpack.c.l.b16 %v181
    %v861 = vunpack.c.l.b16 %v182
    %v862 = vunpack.c.l.b16 %v183
    %v863 = vunpack.c.l.b16 %v184
    %v864 = vunpack.c.l.b16 %v185
    %v865 = vunpack.c.l.b16 %v186
    %v866 = vunpack.c.l.b16 %v187
    %v867 = vunpack.c.l.b16 %v188
    %v868 = vunpack.c.l.b16 %v189
    %v869 = vunpack.c.l.b16 %v190
    %v870 = vunpack.c.l.b16 %v191
    %v871 = vunpack.c.l.b16 %v192
    %v872 = vunpack.c.l.b16 %v193
    %v873 = vunpack.c.l.b16 %v194
    %v874 = vunpack.c.l.b16 %v195
    %v875 = vunpack.c.l.b16 %v196
    %v876 = vunpack.c.l.b16 %v197
    %v877 = vunpack.c.l.b16 %v198
    %v878 = vunpack.c.l.b16 %v199
    %v879 = vunpack.c.l.b16 %v200
    %v880 = vunpack.c.l.b16 %v201
    %v881 = vunpack.c.l.b16 %v202
    %v882 = vunpack.c.l.b16 %v203
    %v883 = vunpack.c.l.b16 %v204
    %v884 = vunpack.c.l.b16 %v205
    %v885 = vunpack.c.l.b16 %v206
    %v886 = vunpack.c.l.b16 %v207
    %v887 = vunpack.c.l.b16 %v208
    %v888 = vunpack.c.l.b16 %v209
    %v889 = vunpack.c.l.b16 %v210
    %v890 = vpack.c.b16 %v843, %v842
    %v891 = vpack.c.b16 %v845, %v844
    %v892 = vpack.c.b16 %v847, %v846
    %v893 = vpack.c.b16 %v849, %v848
    %v894 = vpack.c.b16 %v851, %v850
    %v895 = vpack.c.b16 %v853, %v852
    %v896 = vpack.c.b16 %v855, %v854
    %v897 = vpack.c.b16 %v857, %v856
    %v898 = vpack.c.b16 %v859, %v858
    %v899 = vpack.c.b16 %v861, %v860
    %v900 = vpack.c.b16 %v863, %v862
    %v901 = vpack.c.b16 %v865, %v864
    %v902 = vpack.c.b16 %v867, %v866
    %v903 = vpack.c.b16 %v869, %v868
    %v904 = vpack.c.b16 %v871, %v870
    %v905 = vpack.c.b16 %v873, %v872
    %v906 = vpack.c.b16 %v875, %v874
    %v907 = vpack.c.b16 %v877, %v876
    %v908 = vpack.c.b16 %v879, %v878
    %v909 = vpack.c.b16 %v881, %v880
    %v910 = vpack.c.b16 %v883, %v882
    %v911 = vpack.c.b16 %v885, %v884
    %v912 = vpack.c.b16 %v887, %v886
    %v913 = vpack.c.b16 %v889, %v888
    %938 = vmatprep.subr.bf16.mxu0 0
    %939 = vmatpush1.bf16.msra.mxu0 %v890
    %940 = vmatprep.subr.bf16.mxu0 0
    %941 = vmatpush1.bf16.msra.mxu0 %v891
    %942 = vmatprep.subr.bf16.mxu0 0
    %943 = vmatpush1.bf16.msra.mxu0 %v892
    %944 = vmatprep.subr.bf16.mxu0 0
    %945 = vmatpush1.bf16.msra.mxu0 %v893
    %946 = vmatprep.subr.bf16.mxu0 0
    %947 = vmatpush1.bf16.msra.mxu0 %v894
    %948 = vmatprep.subr.bf16.mxu0 0
    %949 = vmatpush1.bf16.msra.mxu0 %v895
    %950 = vmatprep.subr.bf16.mxu0 0
    %951 = vmatpush1.bf16.msra.mxu0 %v896
    %952 = vmatprep.subr.bf16.mxu0 0
    %953 = vmatpush1.bf16.msra.mxu0 %v897
    %954 = vmatprep.subr.bf16.mxu0 0
    %955 = vmatpush1.bf16.msra.mxu0 %v898
    %956 = vmatprep.subr.bf16.mxu0 0
    %957 = vmatpush1.bf16.msra.mxu0 %v899
    %958 = vmatprep.subr.bf16.mxu0 0
    %959 = vmatpush1.bf16.msra.mxu0 %v900
    %960 = vmatprep.subr.bf16.mxu0 0
    %961 = vmatpush1.bf16.msra.mxu0 %v901
    %962 = vmatprep.subr.bf16.mxu0 0
    %963 = vmatpush1.bf16.msra.mxu0 %v902
    %964 = vmatprep.subr.bf16.mxu0 0
    %965 = vmatpush1.bf16.msra.mxu0 %v903
    %966 = vmatprep.subr.bf16.mxu0 0
    %967 = vmatpush1.bf16.msra.mxu0 %v904
    %968 = vmatprep.subr.bf16.mxu0 0
    %969 = vmatpush1.bf16.msra.mxu0 %v905
    %970 = vmatprep.mubr.bf16.mxu0 %v579
    %971 = vmatmul.mubr.bf16.gmra.mrb[0].mxu0 %v578
    %v972 = vpop.f32.mrb[0].mxu0
    %v973 = vadd.f32 %v216, %v972
    %v974 = vpop.f32.mrb[0].mxu0
    %v975 = vpop.f32.mrb[0].mxu0
    %v976 = vadd.f32 %v216, %v975
    %v977 = vpop.f32.mrb[0].mxu0
    %978 = vmatprep.mubr.bf16.mxu0 %v582
    %979 = vmatmul.mubr.bf16.gmra.mrb[0].mxu0 %v581
    %v980 = vpop.f32.mrb[0].mxu0
    %v981 = vadd.f32 %v216, %v980
    %v982 = vpop.f32.mrb[0].mxu0
    %v983 = vpop.f32.mrb[0].mxu0
    %v984 = vadd.f32 %v216, %v983
    %v985 = vpop.f32.mrb[0].mxu0
    %986 = vmatprep.mubr.bf16.mxu0 %v585
    %987 = vmatmul.mubr.bf16.gmra.mrb[0].mxu0 %v584
    %v988 = vpop.f32.mrb[0].mxu0
    %v989 = vadd.f32 %v216, %v988
    %v990 = vpop.f32.mrb[0].mxu0
    %v991 = vpop.f32.mrb[0].mxu0
    %v992 = vadd.f32 %v216, %v991
    %v993 = vpop.f32.mrb[0].mxu0
    %994 = vmatprep.mubr.bf16.mxu0 %v588
    %995 = vmatmul.mubr.bf16.gmra.mrb[0].mxu0 %v587
    %v996 = vpop.f32.mrb[0].mxu0
    %v997 = vadd.f32 %v216, %v996
    %v998 = vpop.f32.mrb[0].mxu0
    %v999 = vpop.f32.mrb[0].mxu0
    %v1000 = vadd.f32 %v216, %v999
    %v1001 = vpop.f32.mrb[0].mxu0
    %1002 = vmatprep.mubr.bf16.mxu0 %v591
    %1003 = vmatmul.mubr.bf16.gmra.mrb[0].mxu0 %v590
    %v1004 = vpop.f32.mrb[0].mxu0
    %v1005 = vadd.f32 %v216, %v1004
    %v1006 = vpop.f32.mrb[0].mxu0
    %v1007 = vpop.f32.mrb[0].mxu0
    %v1008 = vadd.f32 %v216, %v1007
    %v1009 = vpop.f32.mrb[0].mxu0
    %1010 = vmatprep.mubr.bf16.mxu0 %v594
    %1011 = vmatmul.mubr.bf16.gmra.mrb[0].mxu0 %v593
    %v1012 = vpop.f32.mrb[0].mxu0
    %v1013 = vadd.f32 %v216, %v1012
    %v1014 = vpop.f32.mrb[0].mxu0
    %v1015 = vpop.f32.mrb[0].mxu0
    %v1016 = vadd.f32 %v216, %v1015
    %v1017 = vpop.f32.mrb[0].mxu0
    %1018 = vmatprep.mubr.bf16.mxu0 %v597
    %1019 = vmatmul.mubr.bf16.gmra.mrb[0].mxu0 %v596
    %v1020 = vpop.f32.mrb[0].mxu0
    %v1021 = vadd.f32 %v216, %v1020
    %v1022 = vpop.f32.mrb[0].mxu0
    %v1023 = vpop.f32.mrb[0].mxu0
    %v1024 = vadd.f32 %v216, %v1023
    %v1025 = vpop.f32.mrb[0].mxu0
    %1026 = vmatprep.mubr.bf16.mxu0 %v600
    %1027 = vmatmul.mubr.bf16.gmra.mrb[0].mxu0 %v599
    %v1028 = vpop.f32.mrb[0].mxu0
    %v1029 = vadd.f32 %v216, %v1028
    %v1030 = vpop.f32.mrb[0].mxu0
    %v1031 = vpop.f32.mrb[0].mxu0
    %v1032 = vadd.f32 %v216, %v1031
    %v1033 = vpop.f32.mrb[0].mxu0
    %1034 = vmatprep.mubr.bf16.mxu0 %v603
    %1035 = vmatmul.mubr.bf16.gmra.mrb[0].mxu0 %v602
    %v1036 = vpop.f32.mrb[0].mxu0
    %v1037 = vadd.f32 %v216, %v1036
    %v1038 = vpop.f32.mrb[0].mxu0
    %v1039 = vpop.f32.mrb[0].mxu0
    %v1040 = vadd.f32 %v216, %v1039
    %v1041 = vpop.f32.mrb[0].mxu0
    %1042 = vmatprep.mubr.bf16.mxu0 %v606
    %1043 = vmatmul.mubr.bf16.gmra.mrb[0].mxu0 %v605
    %v1044 = vpop.f32.mrb[0].mxu0
    %v1045 = vadd.f32 %v216, %v1044
    %v1046 = vpop.f32.mrb[0].mxu0
    %v1047 = vpop.f32.mrb[0].mxu0
    %v1048 = vadd.f32 %v216, %v1047
    %v1049 = vpop.f32.mrb[0].mxu0
    %1050 = vmatprep.mubr.bf16.mxu0 %v609
    %1051 = vmatmul.mubr.bf16.gmra.mrb[0].mxu0 %v608
    %v1052 = vpop.f32.mrb[0].mxu0
    %v1053 = vadd.f32 %v216, %v1052
    %v1054 = vpop.f32.mrb[0].mxu0
    %v1055 = vpop.f32.mrb[0].mxu0
    %v1056 = vadd.f32 %v216, %v1055
    %v1057 = vpop.f32.mrb[0].mxu0
    %1058 = vmatprep.mubr.bf16.mxu0 %v612
    %1059 = vmatmul.mubr.bf16.gmra.mrb[0].mxu0 %v611
    %v1060 = vpop.f32.mrb[0].mxu0
    %v1061 = vadd.f32 %v216, %v1060
    %v1062 = vpop.f32.mrb[0].mxu0
    %v1063 = vpop.f32.mrb[0].mxu0
    %v1064 = vadd.f32 %v216, %v1063
    %v1065 = vpop.f32.mrb[0].mxu0
    %1066 = vmatprep.mubr.bf16.mxu0 %v615
    %1067 = vmatmul.mubr.bf16.gmra.mrb[0].mxu0 %v614
    %v1068 = vpop.f32.mrb[0].mxu0
    %v1069 = vadd.f32 %v216, %v1068
    %v1070 = vpop.f32.mrb[0].mxu0
    %v1071 = vpop.f32.mrb[0].mxu0
    %v1072 = vadd.f32 %v216, %v1071
    %v1073 = vpop.f32.mrb[0].mxu0
    %1074 = vmatprep.mubr.bf16.mxu0 %v618
    %1075 = vmatmul.mubr.bf16.gmra.mrb[0].mxu0 %v617
    %v1076 = vpop.f32.mrb[0].mxu0
    %v1077 = vadd.f32 %v216, %v1076
    %v1078 = vpop.f32.mrb[0].mxu0
    %v1079 = vpop.f32.mrb[0].mxu0
    %v1080 = vadd.f32 %v216, %v1079
    %v1081 = vpop.f32.mrb[0].mxu0
    %1082 = vmatprep.mubr.bf16.mxu0 %v621
    %1083 = vmatmul.mubr.bf16.gmra.mrb[0].mxu0 %v620
    %v1084 = vpop.f32.mrb[0].mxu0
    %v1085 = vadd.f32 %v216, %v1084
    %v1086 = vpop.f32.mrb[0].mxu0
    %v1087 = vpop.f32.mrb[0].mxu0
    %v1088 = vadd.f32 %v216, %v1087
    %v1089 = vpop.f32.mrb[0].mxu0
    %1090 = vmatprep.mubr.bf16.mxu0 %v624
    %1091 = vmatmul.mubr.bf16.gmra.mrb[0].mxu0 %v623
    %v1092 = vpop.f32.mrb[0].mxu0
    %v1093 = vadd.f32 %v216, %v1092
    %v1094 = vpop.f32.mrb[0].mxu0
    %v1095 = vpop.f32.mrb[0].mxu0
    %v1096 = vadd.f32 %v216, %v1095
    %v1097 = vpop.f32.mrb[0].mxu0
    %1098 = vmatprep.mubr.bf16.mxu0 %v627
    %1099 = vmatmul.mubr.bf16.gmra.mrb[0].mxu0 %v626
    %v1100 = vpop.f32.mrb[0].mxu0
    %v1101 = vadd.f32 %v216, %v1100
    %v1102 = vpop.f32.mrb[0].mxu0
    %v1103 = vpop.f32.mrb[0].mxu0
    %v1104 = vadd.f32 %v216, %v1103
    %v1105 = vpop.f32.mrb[0].mxu0
    %1106 = vmatprep.mubr.bf16.mxu0 %v630
    %1107 = vmatmul.mubr.bf16.gmra.mrb[0].mxu0 %v629
    %v1108 = vpop.f32.mrb[0].mxu0
    %v1109 = vadd.f32 %v216, %v1108
    %v1110 = vpop.f32.mrb[0].mxu0
    %v1111 = vpop.f32.mrb[0].mxu0
    %v1112 = vadd.f32 %v216, %v1111
    %v1113 = vpop.f32.mrb[0].mxu0
    %1114 = vmatprep.mubr.bf16.mxu0 %v633
    %1115 = vmatmul.mubr.bf16.gmra.mrb[0].mxu0 %v632
    %v1116 = vpop.f32.mrb[0].mxu0
    %v1117 = vadd.f32 %v216, %v1116
    %v1118 = vpop.f32.mrb[0].mxu0
    %v1119 = vpop.f32.mrb[0].mxu0
    %v1120 = vadd.f32 %v216, %v1119
    %v1121 = vpop.f32.mrb[0].mxu0
    %1122 = vmatprep.mubr.bf16.mxu0 %v636
    %1123 = vmatmul.mubr.bf16.gmra.mrb[0].mxu0 %v635
    %v1124 = vpop.f32.mrb[0].mxu0
    %v1125 = vadd.f32 %v216, %v1124
    %v1126 = vpop.f32.mrb[0].mxu0
    %v1127 = vpop.f32.mrb[0].mxu0
    %v1128 = vadd.f32 %v216, %v1127
    %v1129 = vpop.f32.mrb[0].mxu0
    %1130 = vmatprep.mubr.bf16.mxu0 %v639
    %1131 = vmatmul.mubr.bf16.gmra.mrb[0].mxu0 %v638
    %v1132 = vpop.f32.mrb[0].mxu0
    %v1133 = vadd.f32 %v216, %v1132
    %v1134 = vpop.f32.mrb[0].mxu0
    %v1135 = vpop.f32.mrb[0].mxu0
    %v1136 = vadd.f32 %v216, %v1135
    %v1137 = vpop.f32.mrb[0].mxu0
    %1138 = vmatprep.mubr.bf16.mxu0 %v642
    %1139 = vmatmul.mubr.bf16.gmra.mrb[0].mxu0 %v641
    %v1140 = vpop.f32.mrb[0].mxu0
    %v1141 = vadd.f32 %v216, %v1140
    %v1142 = vpop.f32.mrb[0].mxu0
    %v1143 = vpop.f32.mrb[0].mxu0
    %v1144 = vadd.f32 %v216, %v1143
    %v1145 = vpop.f32.mrb[0].mxu0
    %1146 = vmatprep.mubr.bf16.mxu0 %v645
    %1147 = vmatmul.mubr.bf16.gmra.mrb[0].mxu0 %v644
    %v1148 = vpop.f32.mrb[0].mxu0
    %v1149 = vadd.f32 %v216, %v1148
    %v1150 = vpop.f32.mrb[0].mxu0
    %v1151 = vpop.f32.mrb[0].mxu0
    %v1152 = vadd.f32 %v216, %v1151
    %v1153 = vpop.f32.mrb[0].mxu0
    %1154 = vmatprep.mubr.bf16.mxu0 %v648
    %1155 = vmatmul.mubr.bf16.gmra.mrb[0].mxu0 %v647
    %v1156 = vpop.f32.mrb[0].mxu0
    %v1157 = vadd.f32 %v216, %v1156
    %v1158 = vpop.f32.mrb[0].mxu0
    %v1159 = vpop.f32.mrb[0].mxu0
    %v1160 = vadd.f32 %v216, %v1159
    %v1161 = vpop.f32.mrb[0].mxu0
    %1162 = vmatprep.mubr.bf16.mxu0 %v651
    %1163 = vmatmul.mubr.bf16.gmra.mrb[0].mxu0 %v650
    %v1164 = vpop.f32.mrb[0].mxu0
    %v1165 = vadd.f32 %v216, %v1164
    %v1166 = vpop.f32.mrb[0].mxu0
    %v1167 = vpop.f32.mrb[0].mxu0
    %v1168 = vadd.f32 %v216, %v1167
    %v1169 = vpop.f32.mrb[0].mxu0
    %1170 = vmatprep.mubr.bf16.mxu0 %v654
    %1171 = vmatmul.mubr.bf16.gmra.mrb[0].mxu0 %v653
    %v1172 = vpop.f32.mrb[0].mxu0
    %v1173 = vadd.f32 %v216, %v1172
    %v1174 = vpop.f32.mrb[0].mxu0
    %v1175 = vpop.f32.mrb[0].mxu0
    %v1176 = vadd.f32 %v216, %v1175
    %v1177 = vpop.f32.mrb[0].mxu0
    %1178 = vmatprep.mubr.bf16.mxu0 %v657
    %1179 = vmatmul.mubr.bf16.gmra.mrb[0].mxu0 %v656
    %v1180 = vpop.f32.mrb[0].mxu0
    %v1181 = vadd.f32 %v216, %v1180
    %v1182 = vpop.f32.mrb[0].mxu0
    %v1183 = vpop.f32.mrb[0].mxu0
    %v1184 = vadd.f32 %v216, %v1183
    %v1185 = vpop.f32.mrb[0].mxu0
    %1186 = vmatprep.mubr.bf16.mxu0 %v660
    %1187 = vmatmul.mubr.bf16.gmra.mrb[0].mxu0 %v659
    %v1188 = vpop.f32.mrb[0].mxu0
    %v1189 = vadd.f32 %v216, %v1188
    %v1190 = vpop.f32.mrb[0].mxu0
    %v1191 = vpop.f32.mrb[0].mxu0
    %v1192 = vadd.f32 %v216, %v1191
    %v1193 = vpop.f32.mrb[0].mxu0
    %1194 = vmatprep.mubr.bf16.mxu0 %v663
    %1195 = vmatmul.mubr.bf16.gmra.mrb[0].mxu0 %v662
    %v1196 = vpop.f32.mrb[0].mxu0
    %v1197 = vadd.f32 %v216, %v1196
    %v1198 = vpop.f32.mrb[0].mxu0
    %v1199 = vpop.f32.mrb[0].mxu0
    %v1200 = vadd.f32 %v216, %v1199
    %v1201 = vpop.f32.mrb[0].mxu0
    %1202 = vmatprep.mubr.bf16.mxu0 %v666
    %1203 = vmatmul.mubr.bf16.gmra.mrb[0].mxu0 %v665
    %v1204 = vpop.f32.mrb[0].mxu0
    %v1205 = vadd.f32 %v216, %v1204
    %v1206 = vpop.f32.mrb[0].mxu0
    %v1207 = vpop.f32.mrb[0].mxu0
    %v1208 = vadd.f32 %v216, %v1207
    %v1209 = vpop.f32.mrb[0].mxu0
    %1210 = vmatprep.mubr.bf16.mxu0 %v669
    %1211 = vmatmul.mubr.bf16.gmra.mrb[0].mxu0 %v668
    %v1212 = vpop.f32.mrb[0].mxu0
    %v1213 = vadd.f32 %v216, %v1212
    %v1214 = vpop.f32.mrb[0].mxu0
    %v1215 = vpop.f32.mrb[0].mxu0
    %v1216 = vadd.f32 %v216, %v1215
    %v1217 = vpop.f32.mrb[0].mxu0
    %1218 = vmatprep.mubr.bf16.mxu0 %v672
    %1219 = vmatmul.mubr.bf16.gmra.mrb[0].mxu0 %v671
    %v1220 = vpop.f32.mrb[0].mxu0
    %v1221 = vadd.f32 %v216, %v1220
    %v1222 = vpop.f32.mrb[0].mxu0
    %v1223 = vpop.f32.mrb[0].mxu0
    %v1224 = vadd.f32 %v216, %v1223
    %v1225 = vpop.f32.mrb[0].mxu0
    %1226 = vmatprep.mubr.bf16.mxu0 %v675
    %1227 = vmatmul.mubr.bf16.gmra.mrb[0].mxu0 %v674
    %v1228 = vpop.f32.mrb[0].mxu0
    %v1229 = vadd.f32 %v216, %v1228
    %v1230 = vpop.f32.mrb[0].mxu0
    %v1231 = vpop.f32.mrb[0].mxu0
    %v1232 = vadd.f32 %v216, %v1231
    %v1233 = vpop.f32.mrb[0].mxu0
    %1234 = vmatprep.mubr.bf16.mxu0 %v678
    %1235 = vmatmul.mubr.bf16.gmra.mrb[0].mxu0 %v677
    %v1236 = vpop.f32.mrb[0].mxu0
    %v1237 = vadd.f32 %v216, %v1236
    %v1238 = vpop.f32.mrb[0].mxu0
    %v1239 = vpop.f32.mrb[0].mxu0
    %v1240 = vadd.f32 %v216, %v1239
    %v1241 = vpop.f32.mrb[0].mxu0
    %1242 = vmatprep.mubr.bf16.mxu0 %v681
    %1243 = vmatmul.mubr.bf16.gmra.mrb[0].mxu0 %v680
    %v1244 = vpop.f32.mrb[0].mxu0
    %v1245 = vadd.f32 %v216, %v1244
    %v1246 = vpop.f32.mrb[0].mxu0
    %v1247 = vpop.f32.mrb[0].mxu0
    %v1248 = vadd.f32 %v216, %v1247
    %v1249 = vpop.f32.mrb[0].mxu0
    %1250 = vmatprep.mubr.bf16.mxu0 %v684
    %1251 = vmatmul.mubr.bf16.gmra.mrb[0].mxu0 %v683
    %v1252 = vpop.f32.mrb[0].mxu0
    %v1253 = vadd.f32 %v216, %v1252
    %v1254 = vpop.f32.mrb[0].mxu0
    %v1255 = vpop.f32.mrb[0].mxu0
    %v1256 = vadd.f32 %v216, %v1255
    %v1257 = vpop.f32.mrb[0].mxu0
    %1258 = vdwg.mxu0
    %1259 = vmatprep.subr.bf16.mxu0 0
    %1260 = vmatpush1.bf16.msra.mxu0 %v906
    %1261 = vmatprep.subr.bf16.mxu0 0
    %1262 = vmatpush1.bf16.msra.mxu0 %v907
    %1263 = vmatprep.subr.bf16.mxu0 0
    %1264 = vmatpush1.bf16.msra.mxu0 %v908
    %1265 = vmatprep.subr.bf16.mxu0 0
    %1266 = vmatpush1.bf16.msra.mxu0 %v909
    %1267 = vmatprep.subr.bf16.mxu0 0
    %1268 = vmatpush1.bf16.msra.mxu0 %v910
    %1269 = vmatprep.subr.bf16.mxu0 0
    %1270 = vmatpush1.bf16.msra.mxu0 %v911
    %1271 = vmatprep.subr.bf16.mxu0 0
    %1272 = vmatpush1.bf16.msra.mxu0 %v912
    %1273 = vmatprep.subr.bf16.mxu0 0
    %1274 = vmatpush1.bf16.msra.mxu0 %v913
    %1275 = vmatprep.subr.bf16.mxu0 0
    %1276 = vmatpush1.bf16.msra.mxu0 0
    %1277 = vmatprep.subr.bf16.mxu0 0
    %1278 = vmatpush1.bf16.msra.mxu0 0
    %1279 = vmatprep.subr.bf16.mxu0 0
    %1280 = vmatpush1.bf16.msra.mxu0 0
    %1281 = vmatprep.subr.bf16.mxu0 0
    %1282 = vmatpush1.bf16.msra.mxu0 0
    %1283 = vmatprep.subr.bf16.mxu0 0
    %1284 = vmatpush1.bf16.msra.mxu0 0
    %1285 = vmatprep.subr.bf16.mxu0 0
    %1286 = vmatpush1.bf16.msra.mxu0 0
    %1287 = vmatprep.subr.bf16.mxu0 0
    %1288 = vmatpush1.bf16.msra.mxu0 0
    %1289 = vmatprep.subr.bf16.mxu0 0
    %1290 = vmatpush1.bf16.msra.mxu0 0
    %1291 = vmatprep.mubr.bf16.mxu0 0
    %1292 = vmatmul.mubr.bf16.gmra.mrb[0].mxu0 %v580
    %v1293 = vpop.f32.mrb[0].mxu0
    %v1294 = vadd.f32 %v973, %v1293
    %v1295 = vpop.f32.mrb[0].mxu0
    %v1296 = vpop.f32.mrb[0].mxu0
    %v1297 = vadd.f32 %v976, %v1296
    %v1298 = vpop.f32.mrb[0].mxu0
    %1299 = vmatprep.mubr.bf16.mxu0 0
    %1300 = vmatmul.mubr.bf16.gmra.mrb[0].mxu0 %v583
    %v1301 = vpop.f32.mrb[0].mxu0
    %v1302 = vadd.f32 %v981, %v1301
    %v1303 = vpop.f32.mrb[0].mxu0
    %v1304 = vpop.f32.mrb[0].mxu0
    %v1305 = vadd.f32 %v984, %v1304
    %v1306 = vpop.f32.mrb[0].mxu0
    %1307 = vmatprep.mubr.bf16.mxu0 0
    %1308 = vmatmul.mubr.bf16.gmra.mrb[0].mxu0 %v586
    %v1309 = vpop.f32.mrb[0].mxu0
    %v1310 = vadd.f32 %v989, %v1309
    %v1311 = vpop.f32.mrb[0].mxu0
    %v1312 = vpop.f32.mrb[0].mxu0
    %v1313 = vadd.f32 %v992, %v1312
    %v1314 = vpop.f32.mrb[0].mxu0
    %1315 = vmatprep.mubr.bf16.mxu0 0
    %1316 = vmatmul.mubr.bf16.gmra.mrb[0].mxu0 %v589
    %v1317 = vpop.f32.mrb[0].mxu0
    %v1318 = vadd.f32 %v997, %v1317
    %v1319 = vpop.f32.mrb[0].mxu0
    %v1320 = vpop.f32.mrb[0].mxu0
    %v1321 = vadd.f32 %v1000, %v1320
    %v1322 = vpop.f32.mrb[0].mxu0
    %1323 = vmatprep.mubr.bf16.mxu0 0
    %1324 = vmatmul.mubr.bf16.gmra.mrb[0].mxu0 %v592
    %v1325 = vpop.f32.mrb[0].mxu0
    %v1326 = vadd.f32 %v1005, %v1325
    %v1327 = vpop.f32.mrb[0].mxu0
    %v1328 = vpop.f32.mrb[0].mxu0
    %v1329 = vadd.f32 %v1008, %v1328
    %v1330 = vpop.f32.mrb[0].mxu0
    %1331 = vmatprep.mubr.bf16.mxu0 0
    %1332 = vmatmul.mubr.bf16.gmra.mrb[0].mxu0 %v595
    %v1333 = vpop.f32.mrb[0].mxu0
    %v1334 = vadd.f32 %v1013, %v1333
    %v1335 = vpop.f32.mrb[0].mxu0
    %v1336 = vpop.f32.mrb[0].mxu0
    %v1337 = vadd.f32 %v1016, %v1336
    %v1338 = vpop.f32.mrb[0].mxu0
    %1339 = vmatprep.mubr.bf16.mxu0 0
    %1340 = vmatmul.mubr.bf16.gmra.mrb[0].mxu0 %v598
    %v1341 = vpop.f32.mrb[0].mxu0
    %v1342 = vadd.f32 %v1021, %v1341
    %v1343 = vpop.f32.mrb[0].mxu0
    %v1344 = vpop.f32.mrb[0].mxu0
    %v1345 = vadd.f32 %v1024, %v1344
    %v1346 = vpop.f32.mrb[0].mxu0
    %1347 = vmatprep.mubr.bf16.mxu0 0
    %1348 = vmatmul.mubr.bf16.gmra.mrb[0].mxu0 %v601
    %v1349 = vpop.f32.mrb[0].mxu0
    %v1350 = vadd.f32 %v1029, %v1349
    %v1351 = vpop.f32.mrb[0].mxu0
    %v1352 = vpop.f32.mrb[0].mxu0
    %v1353 = vadd.f32 %v1032, %v1352
    %v1354 = vpop.f32.mrb[0].mxu0
    %1355 = vmatprep.mubr.bf16.mxu0 0
    %1356 = vmatmul.mubr.bf16.gmra.mrb[0].mxu0 %v604
    %v1357 = vpop.f32.mrb[0].mxu0
    %v1358 = vadd.f32 %v1037, %v1357
    %v1359 = vpop.f32.mrb[0].mxu0
    %v1360 = vpop.f32.mrb[0].mxu0
    %v1361 = vadd.f32 %v1040, %v1360
    %v1362 = vpop.f32.mrb[0].mxu0
    %1363 = vmatprep.mubr.bf16.mxu0 0
    %1364 = vmatmul.mubr.bf16.gmra.mrb[0].mxu0 %v607
    %v1365 = vpop.f32.mrb[0].mxu0
    %v1366 = vadd.f32 %v1045, %v1365
    %v1367 = vpop.f32.mrb[0].mxu0
    %v1368 = vpop.f32.mrb[0].mxu0
    %v1369 = vadd.f32 %v1048, %v1368
    %v1370 = vpop.f32.mrb[0].mxu0
    %1371 = vmatprep.mubr.bf16.mxu0 0
    %1372 = vmatmul.mubr.bf16.gmra.mrb[0].mxu0 %v610
    %v1373 = vpop.f32.mrb[0].mxu0
    %v1374 = vadd.f32 %v1053, %v1373
    %v1375 = vpop.f32.mrb[0].mxu0
    %v1376 = vpop.f32.mrb[0].mxu0
    %v1377 = vadd.f32 %v1056, %v1376
    %v1378 = vpop.f32.mrb[0].mxu0
    %1379 = vmatprep.mubr.bf16.mxu0 0
    %1380 = vmatmul.mubr.bf16.gmra.mrb[0].mxu0 %v613
    %v1381 = vpop.f32.mrb[0].mxu0
    %v1382 = vadd.f32 %v1061, %v1381
    %v1383 = vpop.f32.mrb[0].mxu0
    %v1384 = vpop.f32.mrb[0].mxu0
    %v1385 = vadd.f32 %v1064, %v1384
    %v1386 = vpop.f32.mrb[0].mxu0
    %1387 = vmatprep.mubr.bf16.mxu0 0
    %1388 = vmatmul.mubr.bf16.gmra.mrb[0].mxu0 %v616
    %v1389 = vpop.f32.mrb[0].mxu0
    %v1390 = vadd.f32 %v1069, %v1389
    %v1391 = vpop.f32.mrb[0].mxu0
    %v1392 = vpop.f32.mrb[0].mxu0
    %v1393 = vadd.f32 %v1072, %v1392
    %v1394 = vpop.f32.mrb[0].mxu0
    %1395 = vmatprep.mubr.bf16.mxu0 0
    %1396 = vmatmul.mubr.bf16.gmra.mrb[0].mxu0 %v619
    %v1397 = vpop.f32.mrb[0].mxu0
    %v1398 = vadd.f32 %v1077, %v1397
    %v1399 = vpop.f32.mrb[0].mxu0
    %v1400 = vpop.f32.mrb[0].mxu0
    %v1401 = vadd.f32 %v1080, %v1400
    %v1402 = vpop.f32.mrb[0].mxu0
    %1403 = vmatprep.mubr.bf16.mxu0 0
    %1404 = vmatmul.mubr.bf16.gmra.mrb[0].mxu0 %v622
    %v1405 = vpop.f32.mrb[0].mxu0
    %v1406 = vadd.f32 %v1085, %v1405
    %v1407 = vpop.f32.mrb[0].mxu0
    %v1408 = vpop.f32.mrb[0].mxu0
    %v1409 = vadd.f32 %v1088, %v1408
    %v1410 = vpop.f32.mrb[0].mxu0
    %1411 = vmatprep.mubr.bf16.mxu0 0
    %1412 = vmatmul.mubr.bf16.gmra.mrb[0].mxu0 %v625
    %v1413 = vpop.f32.mrb[0].mxu0
    %v1414 = vadd.f32 %v1093, %v1413
    %v1415 = vpop.f32.mrb[0].mxu0
    %v1416 = vpop.f32.mrb[0].mxu0
    %v1417 = vadd.f32 %v1096, %v1416
    %v1418 = vpop.f32.mrb[0].mxu0
    %1419 = vmatprep.mubr.bf16.mxu0 0
    %1420 = vmatmul.mubr.bf16.gmra.mrb[0].mxu0 %v628
    %v1421 = vpop.f32.mrb[0].mxu0
    %v1422 = vadd.f32 %v1101, %v1421
    %v1423 = vpop.f32.mrb[0].mxu0
    %v1424 = vpop.f32.mrb[0].mxu0
    %v1425 = vadd.f32 %v1104, %v1424
    %v1426 = vpop.f32.mrb[0].mxu0
    %1427 = vmatprep.mubr.bf16.mxu0 0
    %1428 = vmatmul.mubr.bf16.gmra.mrb[0].mxu0 %v631
    %v1429 = vpop.f32.mrb[0].mxu0
    %v1430 = vadd.f32 %v1109, %v1429
    %v1431 = vpop.f32.mrb[0].mxu0
    %v1432 = vpop.f32.mrb[0].mxu0
    %v1433 = vadd.f32 %v1112, %v1432
    %v1434 = vpop.f32.mrb[0].mxu0
    %1435 = vmatprep.mubr.bf16.mxu0 0
    %1436 = vmatmul.mubr.bf16.gmra.mrb[0].mxu0 %v634
    %v1437 = vpop.f32.mrb[0].mxu0
    %v1438 = vadd.f32 %v1117, %v1437
    %v1439 = vpop.f32.mrb[0].mxu0
    %v1440 = vpop.f32.mrb[0].mxu0
    %v1441 = vadd.f32 %v1120, %v1440
    %v1442 = vpop.f32.mrb[0].mxu0
    %1443 = vmatprep.mubr.bf16.mxu0 0
    %1444 = vmatmul.mubr.bf16.gmra.mrb[0].mxu0 %v637
    %v1445 = vpop.f32.mrb[0].mxu0
    %v1446 = vadd.f32 %v1125, %v1445
    %v1447 = vpop.f32.mrb[0].mxu0
    %v1448 = vpop.f32.mrb[0].mxu0
    %v1449 = vadd.f32 %v1128, %v1448
    %v1450 = vpop.f32.mrb[0].mxu0
    %1451 = vmatprep.mubr.bf16.mxu0 0
    %1452 = vmatmul.mubr.bf16.gmra.mrb[0].mxu0 %v640
    %v1453 = vpop.f32.mrb[0].mxu0
    %v1454 = vadd.f32 %v1133, %v1453
    %v1455 = vpop.f32.mrb[0].mxu0
    %v1456 = vpop.f32.mrb[0].mxu0
    %v1457 = vadd.f32 %v1136, %v1456
    %v1458 = vpop.f32.mrb[0].mxu0
    %1459 = vmatprep.mubr.bf16.mxu0 0
    %1460 = vmatmul.mubr.bf16.gmra.mrb[0].mxu0 %v643
    %v1461 = vpop.f32.mrb[0].mxu0
    %v1462 = vadd.f32 %v1141, %v1461
    %v1463 = vpop.f32.mrb[0].mxu0
    %v1464 = vpop.f32.mrb[0].mxu0
    %v1465 = vadd.f32 %v1144, %v1464
    %v1466 = vpop.f32.mrb[0].mxu0
    %1467 = vmatprep.mubr.bf16.mxu0 0
    %1468 = vmatmul.mubr.bf16.gmra.mrb[0].mxu0 %v646
    %v1469 = vpop.f32.mrb[0].mxu0
    %v1470 = vadd.f32 %v1149, %v1469
    %v1471 = vpop.f32.mrb[0].mxu0
    %v1472 = vpop.f32.mrb[0].mxu0
    %v1473 = vadd.f32 %v1152, %v1472
    %v1474 = vpop.f32.mrb[0].mxu0
    %1475 = vmatprep.mubr.bf16.mxu0 0
    %1476 = vmatmul.mubr.bf16.gmra.mrb[0].mxu0 %v649
    %v1477 = vpop.f32.mrb[0].mxu0
    %v1478 = vadd.f32 %v1157, %v1477
    %v1479 = vpop.f32.mrb[0].mxu0
    %v1480 = vpop.f32.mrb[0].mxu0
    %v1481 = vadd.f32 %v1160, %v1480
    %v1482 = vpop.f32.mrb[0].mxu0
    %1483 = vmatprep.mubr.bf16.mxu0 0
    %1484 = vmatmul.mubr.bf16.gmra.mrb[0].mxu0 %v652
    %v1485 = vpop.f32.mrb[0].mxu0
    %v1486 = vadd.f32 %v1165, %v1485
    %v1487 = vpop.f32.mrb[0].mxu0
    %v1488 = vpop.f32.mrb[0].mxu0
    %v1489 = vadd.f32 %v1168, %v1488
    %v1490 = vpop.f32.mrb[0].mxu0
    %1491 = vmatprep.mubr.bf16.mxu0 0
    %1492 = vmatmul.mubr.bf16.gmra.mrb[0].mxu0 %v655
    %v1493 = vpop.f32.mrb[0].mxu0
    %v1494 = vadd.f32 %v1173, %v1493
    %v1495 = vpop.f32.mrb[0].mxu0
    %v1496 = vpop.f32.mrb[0].mxu0
    %v1497 = vadd.f32 %v1176, %v1496
    %v1498 = vpop.f32.mrb[0].mxu0
    %1499 = vmatprep.mubr.bf16.mxu0 0
    %1500 = vmatmul.mubr.bf16.gmra.mrb[0].mxu0 %v658
    %v1501 = vpop.f32.mrb[0].mxu0
    %v1502 = vadd.f32 %v1181, %v1501
    %v1503 = vpop.f32.mrb[0].mxu0
    %v1504 = vpop.f32.mrb[0].mxu0
    %v1505 = vadd.f32 %v1184, %v1504
    %v1506 = vpop.f32.mrb[0].mxu0
    %1507 = vmatprep.mubr.bf16.mxu0 0
    %1508 = vmatmul.mubr.bf16.gmra.mrb[0].mxu0 %v661
    %v1509 = vpop.f32.mrb[0].mxu0
    %v1510 = vadd.f32 %v1189, %v1509
    %v1511 = vpop.f32.mrb[0].mxu0
    %v1512 = vpop.f32.mrb[0].mxu0
    %v1513 = vadd.f32 %v1192, %v1512
    %v1514 = vpop.f32.mrb[0].mxu0
    %1515 = vmatprep.mubr.bf16.mxu0 0
    %1516 = vmatmul.mubr.bf16.gmra.mrb[0].mxu0 %v664
    %v1517 = vpop.f32.mrb[0].mxu0
    %v1518 = vadd.f32 %v1197, %v1517
    %v1519 = vpop.f32.mrb[0].mxu0
    %v1520 = vpop.f32.mrb[0].mxu0
    %v1521 = vadd.f32 %v1200, %v1520
    %v1522 = vpop.f32.mrb[0].mxu0
    %1523 = vmatprep.mubr.bf16.mxu0 0
    %1524 = vmatmul.mubr.bf16.gmra.mrb[0].mxu0 %v667
    %v1525 = vpop.f32.mrb[0].mxu0
    %v1526 = vadd.f32 %v1205, %v1525
    %v1527 = vpop.f32.mrb[0].mxu0
    %v1528 = vpop.f32.mrb[0].mxu0
    %v1529 = vadd.f32 %v1208, %v1528
    %v1530 = vpop.f32.mrb[0].mxu0
    %1531 = vmatprep.mubr.bf16.mxu0 0
    %1532 = vmatmul.mubr.bf16.gmra.mrb[0].mxu0 %v670
    %v1533 = vpop.f32.mrb[0].mxu0
    %v1534 = vadd.f32 %v1213, %v1533
    %v1535 = vpop.f32.mrb[0].mxu0
    %v1536 = vpop.f32.mrb[0].mxu0
    %v1537 = vadd.f32 %v1216, %v1536
    %v1538 = vpop.f32.mrb[0].mxu0
    %1539 = vmatprep.mubr.bf16.mxu0 0
    %1540 = vmatmul.mubr.bf16.gmra.mrb[0].mxu0 %v673
    %v1541 = vpop.f32.mrb[0].mxu0
    %v1542 = vadd.f32 %v1221, %v1541
    %v1543 = vpop.f32.mrb[0].mxu0
    %v1544 = vpop.f32.mrb[0].mxu0
    %v1545 = vadd.f32 %v1224, %v1544
    %v1546 = vpop.f32.mrb[0].mxu0
    %1547 = vmatprep.mubr.bf16.mxu0 0
    %1548 = vmatmul.mubr.bf16.gmra.mrb[0].mxu0 %v676
    %v1549 = vpop.f32.mrb[0].mxu0
    %v1550 = vadd.f32 %v1229, %v1549
    %v1551 = vpop.f32.mrb[0].mxu0
    %v1552 = vpop.f32.mrb[0].mxu0
    %v1553 = vadd.f32 %v1232, %v1552
    %v1554 = vpop.f32.mrb[0].mxu0
    %1555 = vmatprep.mubr.bf16.mxu0 0
    %1556 = vmatmul.mubr.bf16.gmra.mrb[0].mxu0 %v679
    %v1557 = vpop.f32.mrb[0].mxu0
    %v1558 = vadd.f32 %v1237, %v1557
    %v1559 = vpop.f32.mrb[0].mxu0
    %v1560 = vpop.f32.mrb[0].mxu0
    %v1561 = vadd.f32 %v1240, %v1560
    %v1562 = vpop.f32.mrb[0].mxu0
    %1563 = vmatprep.mubr.bf16.mxu0 0
    %1564 = vmatmul.mubr.bf16.gmra.mrb[0].mxu0 %v682
    %v1565 = vpop.f32.mrb[0].mxu0
    %v1566 = vadd.f32 %v1245, %v1565
    %v1567 = vpop.f32.mrb[0].mxu0
    %v1568 = vpop.f32.mrb[0].mxu0
    %v1569 = vadd.f32 %v1248, %v1568
    %v1570 = vpop.f32.mrb[0].mxu0
    %1571 = vmatprep.mubr.bf16.mxu0 0
    %1572 = vmatmul.mubr.bf16.gmra.mrb[0].mxu0 %v685
    %v1573 = vpop.f32.mrb[0].mxu0
    %v1574 = vadd.f32 %v1253, %v1573
    %v1575 = vpop.f32.mrb[0].mxu0
    %v1576 = vpop.f32.mrb[0].mxu0
    %v1577 = vadd.f32 %v1256, %v1576
    %v1578 = vpop.f32.mrb[0].mxu0
    %1579 = vdwg.mxu0
    %v1580 = vld [vmem:[%s3] sm:$0xff]
    %v1581 = vld [vmem:[%s3 + $0x8] sm:$0xff]
    %v1582 = vld [vmem:[%s3 + $0x10] sm:$0xff]
    %v1583 = vld [vmem:[%s3 + $0x18] sm:$0xff]
    %v1584 = vld [vmem:[%s3 + $0x20] sm:$0xff]
    %v1585 = vld [vmem:[%s3 + $0x28] sm:$0xff]
    %v1586 = vld [vmem:[%s3 + $0x30] sm:$0xff]
    %v1587 = vld [vmem:[%s3 + $0x38] sm:$0xff]
    %v1588 = vld [vmem:[%s3 + $0x40] sm:$0xff]
    %v1589 = vld [vmem:[%s3 + $0x48] sm:$0xff]
    %v1590 = vld [vmem:[%s3 + $0x50] sm:$0xff]
    %v1591 = vld [vmem:[%s3 + $0x58] sm:$0xff]
    %v1592 = vld [vmem:[%s3 + $0x60] sm:$0xff]
    %v1593 = vld [vmem:[%s3 + $0x68] sm:$0xff]
    %v1594 = vld [vmem:[%s3 + $0x70] sm:$0xff]
    %v1595 = vld [vmem:[%s3 + $0x78] sm:$0xff]
    %v1596 = vld [vmem:[%s3 + $0x80] sm:$0xff]
    %v1597 = vld [vmem:[%s3 + $0x88] sm:$0xff]
    %v1598 = vld [vmem:[%s3 + $0x90] sm:$0xff]
    %v1599 = vld [vmem:[%s3 + $0x98] sm:$0xff]
    %v1600 = vld [vmem:[%s3 + $0xa0] sm:$0xff]
    %v1601 = vld [vmem:[%s3 + $0xa8] sm:$0xff]
    %v1602 = vld [vmem:[%s3 + $0xb0] sm:$0xff]
    %v1603 = vld [vmem:[%s3 + $0xb8] sm:$0xff]
    %v1604 = vld [vmem:[%s3 + $0xc0] sm:$0xff]
    %v1605 = vld [vmem:[%s3 + $0xc8] sm:$0xff]
    %v1606 = vld [vmem:[%s3 + $0xd0] sm:$0xff]
    %v1607 = vld [vmem:[%s3 + $0xd8] sm:$0xff]
    %v1608 = vld [vmem:[%s3 + $0xe0] sm:$0xff]
    %v1609 = vld [vmem:[%s3 + $0xe8] sm:$0xff]
    %v1610 = vld [vmem:[%s3 + $0xf0] sm:$0xff]
    %v1611 = vld [vmem:[%s3 + $0xf8] sm:$0xff]
    %v1612 = vld [vmem:[%s3 + $0x100] sm:$0xff]
    %v1613 = vld [vmem:[%s3 + $0x108] sm:$0xff]
    %v1614 = vld [vmem:[%s3 + $0x110] sm:$0xff]
    %v1615 = vld [vmem:[%s3 + $0x118] sm:$0xff]
    %v1616 = vld [vmem:[%s3 + $0x120] sm:$0xff]
    %v1617 = vld [vmem:[%s3 + $0x128] sm:$0xff]
    %v1618 = vld [vmem:[%s3 + $0x130] sm:$0xff]
    %v1619 = vld [vmem:[%s3 + $0x138] sm:$0xff]
    %v1620 = vld [vmem:[%s3 + $0x140] sm:$0xff]
    %v1621 = vld [vmem:[%s3 + $0x148] sm:$0xff]
    %v1622 = vld [vmem:[%s3 + $0x150] sm:$0xff]
    %v1623 = vld [vmem:[%s3 + $0x158] sm:$0xff]
    %v1624 = vld [vmem:[%s3 + $0x160] sm:$0xff]
    %v1625 = vld [vmem:[%s3 + $0x168] sm:$0xff]
    %v1626 = vld [vmem:[%s3 + $0x170] sm:$0xff]
    %v1627 = vld [vmem:[%s3 + $0x178] sm:$0xff]
    %v1628 = vld [vmem:[%s3 + $0x180] sm:$0xff]
    %v1629 = vld [vmem:[%s3 + $0x188] sm:$0xff]
    %v1630 = vld [vmem:[%s3 + $0x190] sm:$0xff]
    %v1631 = vld [vmem:[%s3 + $0x198] sm:$0xff]
    %v1632 = vld [vmem:[%s3 + $0x1a0] sm:$0xff]
    %v1633 = vld [vmem:[%s3 + $0x1a8] sm:$0xff]
    %v1634 = vld [vmem:[%s3 + $0x1b0] sm:$0xff]
    %v1635 = vld [vmem:[%s3 + $0x1b8] sm:$0xff]
    %v1636 = vld [vmem:[%s3 + $0x1c0] sm:$0xff]
    %v1637 = vld [vmem:[%s3 + $0x1c8] sm:$0xff]
    %v1638 = vld [vmem:[%s3 + $0x1d0] sm:$0xff]
    %v1639 = vld [vmem:[%s3 + $0x1d8] sm:$0xff]
    %v1640 = vld [vmem:[%s3 + $0x1e0] sm:$0xff]
    %v1641 = vld [vmem:[%s3 + $0x1e8] sm:$0xff]
    %v1642 = vld [vmem:[%s3 + $0x1f0] sm:$0xff]
    %v1643 = vld [vmem:[%s3 + $0x1f8] sm:$0xff]
    %v1644 = vld [vmem:[%s3 + $0x200] sm:$0xff]
    %v1645 = vld [vmem:[%s3 + $0x208] sm:$0xff]
    %v1646 = vld [vmem:[%s3 + $0x210] sm:$0xff]
    %v1647 = vld [vmem:[%s3 + $0x218] sm:$0xff]
    %v1648 = vld [vmem:[%s3 + $0x220] sm:$0xff]
    %v1649 = vld [vmem:[%s3 + $0x228] sm:$0xff]
    %v1650 = vld [vmem:[%s3 + $0x230] sm:$0xff]
    %v1651 = vld [vmem:[%s3 + $0x238] sm:$0xff]
    %v1652 = vadd.f32 %v1294, %v1580
    %v1653 = vadd.f32 %v1297, %v1581
    %v1654 = vadd.f32 %v1302, %v1582
    %v1655 = vadd.f32 %v1305, %v1583
    %v1656 = vadd.f32 %v1310, %v1584
    %v1657 = vadd.f32 %v1313, %v1585
    %v1658 = vadd.f32 %v1318, %v1586
    %v1659 = vadd.f32 %v1321, %v1587
    %v1660 = vadd.f32 %v1326, %v1588
    %v1661 = vadd.f32 %v1329, %v1589
    %v1662 = vadd.f32 %v1334, %v1590
    %v1663 = vadd.f32 %v1337, %v1591
    %v1664 = vadd.f32 %v1342, %v1592
    %v1665 = vadd.f32 %v1345, %v1593
    %v1666 = vadd.f32 %v1350, %v1594
    %v1667 = vadd.f32 %v1353, %v1595
    %v1668 = vadd.f32 %v1358, %v1596
    %v1669 = vadd.f32 %v1361, %v1597
    %v1670 = vadd.f32 %v1366, %v1598
    %v1671 = vadd.f32 %v1369, %v1599
    %v1672 = vadd.f32 %v1374, %v1600
    %v1673 = vadd.f32 %v1377, %v1601
    %v1674 = vadd.f32 %v1382, %v1602
    %v1675 = vadd.f32 %v1385, %v1603
    %v1676 = vadd.f32 %v1390, %v1604
    %v1677 = vadd.f32 %v1393, %v1605
    %v1678 = vadd.f32 %v1398, %v1606
    %v1679 = vadd.f32 %v1401, %v1607
    %v1680 = vadd.f32 %v1406, %v1608
    %v1681 = vadd.f32 %v1409, %v1609
    %v1682 = vadd.f32 %v1414, %v1610
    %v1683 = vadd.f32 %v1417, %v1611
    %v1684 = vadd.f32 %v1422, %v1612
    %v1685 = vadd.f32 %v1425, %v1613
    %v1686 = vadd.f32 %v1430, %v1614
    %v1687 = vadd.f32 %v1433, %v1615
    %v1688 = vadd.f32 %v1438, %v1616
    %v1689 = vadd.f32 %v1441, %v1617
    %v1690 = vadd.f32 %v1446, %v1618
    %v1691 = vadd.f32 %v1449, %v1619
    %v1692 = vadd.f32 %v1454, %v1620
    %v1693 = vadd.f32 %v1457, %v1621
    %v1694 = vadd.f32 %v1462, %v1622
    %v1695 = vadd.f32 %v1465, %v1623
    %v1696 = vadd.f32 %v1470, %v1624
    %v1697 = vadd.f32 %v1473, %v1625
    %v1698 = vadd.f32 %v1478, %v1626
    %v1699 = vadd.f32 %v1481, %v1627
    %v1700 = vadd.f32 %v1486, %v1628
    %v1701 = vadd.f32 %v1489, %v1629
    %v1702 = vadd.f32 %v1494, %v1630
    %v1703 = vadd.f32 %v1497, %v1631
    %v1704 = vadd.f32 %v1502, %v1632
    %v1705 = vadd.f32 %v1505, %v1633
    %v1706 = vadd.f32 %v1510, %v1634
    %v1707 = vadd.f32 %v1513, %v1635
    %v1708 = vadd.f32 %v1518, %v1636
    %v1709 = vadd.f32 %v1521, %v1637
    %v1710 = vadd.f32 %v1526, %v1638
    %v1711 = vadd.f32 %v1529, %v1639
    %v1712 = vadd.f32 %v1534, %v1640
    %v1713 = vadd.f32 %v1537, %v1641
    %v1714 = vadd.f32 %v1542, %v1642
    %v1715 = vadd.f32 %v1545, %v1643
    %v1716 = vadd.f32 %v1550, %v1644
    %v1717 = vadd.f32 %v1553, %v1645
    %v1718 = vadd.f32 %v1558, %v1646
    %v1719 = vadd.f32 %v1561, %v1647
    %v1720 = vadd.f32 %v1566, %v1648
    %v1721 = vadd.f32 %v1569, %v1649
    %v1722 = vadd.f32 %v1574, %v1650
    %v1723 = vadd.f32 %v1577, %v1651
    %1724 = vst [vmem:[#allocation2] sm:$0xff] %v1652
    %1725 = vst [vmem:[#allocation2 + $0x8] sm:$0xff] %v1653
    %1726 = vst [vmem:[#allocation2 + $0x10] sm:$0xff] %v1654
    %1727 = vst [vmem:[#allocation2 + $0x18] sm:$0xff] %v1655
    %1728 = vst [vmem:[#allocation2 + $0x20] sm:$0xff] %v1656
    %1729 = vst [vmem:[#allocation2 + $0x28] sm:$0xff] %v1657
    %1730 = vst [vmem:[#allocation2 + $0x30] sm:$0xff] %v1658
    %1731 = vst [vmem:[#allocation2 + $0x38] sm:$0xff] %v1659
    %1732 = vst [vmem:[#allocation2 + $0x40] sm:$0xff] %v1660
    %1733 = vst [vmem:[#allocation2 + $0x48] sm:$0xff] %v1661
    %1734 = vst [vmem:[#allocation2 + $0x50] sm:$0xff] %v1662
    %1735 = vst [vmem:[#allocation2 + $0x58] sm:$0xff] %v1663
    %1736 = vst [vmem:[#allocation2 + $0x60] sm:$0xff] %v1664
    %1737 = vst [vmem:[#allocation2 + $0x68] sm:$0xff] %v1665
    %1738 = vst [vmem:[#allocation2 + $0x70] sm:$0xff] %v1666
    %1739 = vst [vmem:[#allocation2 + $0x78] sm:$0xff] %v1667
    %1740 = vst [vmem:[#allocation2 + $0x80] sm:$0xff] %v1668
    %1741 = vst [vmem:[#allocation2 + $0x88] sm:$0xff] %v1669
    %1742 = vst [vmem:[#allocation2 + $0x90] sm:$0xff] %v1670
    %1743 = vst [vmem:[#allocation2 + $0x98] sm:$0xff] %v1671
    %1744 = vst [vmem:[#allocation2 + $0xa0] sm:$0xff] %v1672
    %1745 = vst [vmem:[#allocation2 + $0xa8] sm:$0xff] %v1673
    %1746 = vst [vmem:[#allocation2 + $0xb0] sm:$0xff] %v1674
    %1747 = vst [vmem:[#allocation2 + $0xb8] sm:$0xff] %v1675
    %1748 = vst [vmem:[#allocation2 + $0xc0] sm:$0xff] %v1676
    %1749 = vst [vmem:[#allocation2 + $0xc8] sm:$0xff] %v1677
    %1750 = vst [vmem:[#allocation2 + $0xd0] sm:$0xff] %v1678
    %1751 = vst [vmem:[#allocation2 + $0xd8] sm:$0xff] %v1679
    %1752 = vst [vmem:[#allocation2 + $0xe0] sm:$0xff] %v1680
    %1753 = vst [vmem:[#allocation2 + $0xe8] sm:$0xff] %v1681
    %1754 = vst [vmem:[#allocation2 + $0xf0] sm:$0xff] %v1682
    %1755 = vst [vmem:[#allocation2 + $0xf8] sm:$0xff] %v1683
    %1756 = vst [vmem:[#allocation2 + $0x100] sm:$0xff] %v1684
    %1757 = vst [vmem:[#allocation2 + $0x108] sm:$0xff] %v1685
    %1758 = vst [vmem:[#allocation2 + $0x110] sm:$0xff] %v1686
    %1759 = vst [vmem:[#allocation2 + $0x118] sm:$0xff] %v1687
    %1760 = vst [vmem:[#allocation2 + $0x120] sm:$0xff] %v1688
    %1761 = vst [vmem:[#allocation2 + $0x128] sm:$0xff] %v1689
    %1762 = vst [vmem:[#allocation2 + $0x130] sm:$0xff] %v1690
    %1763 = vst [vmem:[#allocation2 + $0x138] sm:$0xff] %v1691
    %1764 = vst [vmem:[#allocation2 + $0x140] sm:$0xff] %v1692
    %1765 = vst [vmem:[#allocation2 + $0x148] sm:$0xff] %v1693
    %1766 = vst [vmem:[#allocation2 + $0x150] sm:$0xff] %v1694
    %1767 = vst [vmem:[#allocation2 + $0x158] sm:$0xff] %v1695
    %1768 = vst [vmem:[#allocation2 + $0x160] sm:$0xff] %v1696
    %1769 = vst [vmem:[#allocation2 + $0x168] sm:$0xff] %v1697
    %1770 = vst [vmem:[#allocation2 + $0x170] sm:$0xff] %v1698
    %1771 = vst [vmem:[#allocation2 + $0x178] sm:$0xff] %v1699
    %1772 = vst [vmem:[#allocation2 + $0x180] sm:$0xff] %v1700
    %1773 = vst [vmem:[#allocation2 + $0x188] sm:$0xff] %v1701
    %1774 = vst [vmem:[#allocation2 + $0x190] sm:$0xff] %v1702
    %1775 = vst [vmem:[#allocation2 + $0x198] sm:$0xff] %v1703
    %1776 = vst [vmem:[#allocation2 + $0x1a0] sm:$0xff] %v1704
    %1777 = vst [vmem:[#allocation2 + $0x1a8] sm:$0xff] %v1705
    %1778 = vst [vmem:[#allocation2 + $0x1b0] sm:$0xff] %v1706
    %1779 = vst [vmem:[#allocation2 + $0x1b8] sm:$0xff] %v1707
    %1780 = vst [vmem:[#allocation2 + $0x1c0] sm:$0xff] %v1708
    %1781 = vst [vmem:[#allocation2 + $0x1c8] sm:$0xff] %v1709
    %1782 = vst [vmem:[#allocation2 + $0x1d0] sm:$0xff] %v1710
    %1783 = vst [vmem:[#allocation2 + $0x1d8] sm:$0xff] %v1711
    %1784 = vst [vmem:[#allocation2 + $0x1e0] sm:$0xff] %v1712
    %1785 = vst [vmem:[#allocation2 + $0x1e8] sm:$0xff] %v1713
    %1786 = vst [vmem:[#allocation2 + $0x1f0] sm:$0xff] %v1714
    %1787 = vst [vmem:[#allocation2 + $0x1f8] sm:$0xff] %v1715
    %1788 = vst [vmem:[#allocation2 + $0x200] sm:$0xff] %v1716
    %1789 = vst [vmem:[#allocation2 + $0x208] sm:$0xff] %v1717
    %1790 = vst [vmem:[#allocation2 + $0x210] sm:$0xff] %v1718
    %1791 = vst [vmem:[#allocation2 + $0x218] sm:$0xff] %v1719
    %1792 = vst [vmem:[#allocation2 + $0x220] sm:$0xff] %v1720
    %1793 = vst [vmem:[#allocation2 + $0x228] sm:$0xff] %v1721
    %1794 = vst [vmem:[#allocation2 + $0x230] sm:$0xff] %v1722
    %1795 = vst [vmem:[#allocation2 + $0x238] sm:$0xff] %v1723
    // Predicated region
    $region18: #{my_nn_forward.15} parent=1 // pred_check
      _
    $region19: #{my_nn_forward.15} parent=1 // pred_check_branch
      %1797 = sbr.rel (0) target = $region21
    $region20: #{my_nn_forward.15} parent=1 // pred_region
      %s1799 = ssub.s32 9216, 9216
      %1800 = vsyncadd [#allocation3], %s1799
      %s1801 = sshll.u32 [#allocation2], 4
      %s1802 = int_to_ptr.vmem [resolvable:$true] %s1801
      %1807 = dma.vmem_to_hbm [thread:$0]  %s1802, 9216, %s4, [#allocation3], 128, 128, 8
    $region21: #{my_nn_forward.15} parent=1 // pred_fallthru
      _
    // Predicated region
    $region22: #{my_nn_forward.15} parent=1 // pred_check
      _
    $region23: #{my_nn_forward.15} parent=1 // pred_check_branch
      %1809 = sbr.rel (0) target = $region25
    $region24: #{my_nn_forward.15} parent=1 // pred_region
      %1810 = dma.done [#allocation3], 9216
    $region25: #{my_nn_forward.15} parent=1 // pred_fallthru
      _
    %1811 = vsyncpa [#allocation3], 1

</llo_original>
